<compile_context>
chip_gen: v7x
topology: tpu7x:2x2x1
jax: 0.10.0
libtpu: 0.0.40
codegen_flags: <defaults>
</compile_context>

<pallas_src>
import math
import functools

import jax
import jax.numpy as jnp
from jax import lax
from jax.experimental import pallas as pl
from jax.experimental.pallas import tpu as pltpu

# ----------------------------- configuration --------------------------------
BATCH = 8
X1_DIM = 16
X2_DIM = 16
HIDDEN_DIM = 32
EMBED_DIM = 8
NUM_LABELS = 4
MLP_LAYERS = 1           # "layers" arg of mlp(): total linear layers = layers + 2
ACTIVATION = "relu"
SINKHORN_ITERS = 50      # TODO(synk): sinkhorn_probs() source is not provided in the
                         # reference; a fixed-iteration row/col Sinkhorn
                         # (rows -> p_y_x1[:, c], cols -> p_y_x2[:, c]) is used.
EPS = 1e-8


# ----------------------------- fused forward kernel -------------------------
def _fused_ce_pid_kernel(
        xcat_ref,
        w0_ref, b0_ref, w1_ref, b1_ref, w2_ref, b2_ref,
        py_ref, g2_ref, gB_ref, GG_ref, selmask_ref, selmaskT_ref, bmaskT_ref,
        p_out_ref, stats_ref,
        *, num_labels, embed_dim, n_iters, activation):
    bsz = xcat_ref.shape[1]
    C, E = num_labels, embed_dim
    CE = C * E
    CB = C * bsz

    if activation == "relu":
        act = lambda z: jnp.maximum(z, 0.0)
    else:
        act = jnp.tanh

    x = xcat_ref[0]                                   # [B, X1+X2]

    # ---- ALL five MLPs as three wide matmuls (block-diag fused weights) ----
    # output columns: [ q1 (C*E) | q2 (C*E) | logits1 (C) | logits2 (C) | logits12 (C) ]
    h = act(jnp.dot(x, w0_ref[...], preferred_element_type=jnp.float32) + b0_ref[...])
    h = act(jnp.dot(h, w1_ref[...], preferred_element_type=jnp.float32) + b1_ref[...])
    out = jnp.dot(h, w2_ref[...], preferred_element_type=jnp.float32) + b2_ref[...]

    q_all = out[:, :2 * CE]                            # [B, 2*C*E]  (q1 | q2)
    logits1 = out[:, 2 * CE:2 * CE + C]
    logits2 = out[:, 2 * CE + C:2 * CE + 2 * C]
    logits12 = out[:, 2 * CE + 2 * C:2 * CE + 3 * C]

    # ---- softmaxes + per-sample KL mutual-information estimates ------------
    def softmax_rows(z):
        z = z - jnp.max(z, axis=1, keepdims=True)
        e = jnp.exp(z)
        return e / jnp.sum(e, axis=1, keepdims=True)

    p1 = softmax_rows(logits1)        # p(y|x1)     [B, C]
    p2 = softmax_rows(logits2)        # p(y|x2)     [B, C]
    p12 = softmax_rows(logits12)      # p(y|x1,x2)  [B, C]

    py = py_ref[...]                  # [1, C]
    mi1 = jnp.sum(p1 * jnp.log(p1 / py + EPS), axis=1, keepdims=True)       # [B, 1]
    mi2 = jnp.sum(p2 * jnp.log(p2 / py + EPS), axis=1, keepdims=True)       # [B, 1]
    mi12_d = jnp.sum(p12 * jnp.log(p12 / py + EPS), axis=1, keepdims=True)  # [B, 1]

    # ---- per-label feature normalisation of q1 AND q2 in one pass ----------
    # g2[k, j] = 1 iff feature column k belongs to group j (2C groups of E).
    g2 = g2_ref[...]                                            # [2*C*E, 2*C]
    mean = jnp.dot(q_all, g2, preferred_element_type=jnp.float32) * (1.0 / E)   # [B, 2C]
    mean_full = lax.dot_general(mean, g2, (((1,), (1,)), ((), ())),
                                preferred_element_type=jnp.float32)              # [B, 2CE]
    cent = q_all - mean_full
    # torch.var default is unbiased (ddof = 1)
    var = jnp.dot(cent * cent, g2, preferred_element_type=jnp.float32) * (1.0 / (E - 1))
    inv_std = lax.rsqrt(var + EPS)                                                # [B, 2C]
    inv_full = lax.dot_general(inv_std, g2, (((1,), (1,)), ((), ())),
                               preferred_element_type=jnp.float32)
    qn = cent * inv_full                                                          # [B, 2CE]
    qn1 = qn[:, :CE]
    qn2 = qn[:, CE:]

    # ---- packed per-label affinity: ONE contraction into [B, C*B] ----------
    # MT[c*B+d, c'*E+e] = qn2[d, c'*E+e] * (c == c'); built with two tiny matmuls,
    # no in-kernel transposes.
    MT = jnp.dot(selmaskT_ref[...], qn2,
                 preferred_element_type=jnp.float32) * bmaskT_ref[...]            # [CB, CE]
    aff = lax.dot_general(qn1, MT, (((1,), (1,)), ((), ())),
                          preferred_element_type=jnp.float32) * (1.0 / math.sqrt(E))  # [B, CB]
    # Single global max instead of per-label maxes: Sinkhorn normalisation removes
    # any per-label constant scale (up to the 1e-8 denominators).
    a0 = jnp.exp(aff - jnp.max(aff))

    # ---- Sinkhorn targets, built ONCE, in the packed layout -----------------
    gB = gB_ref[...]                                            # [C, CB]   label -> lanes
    selmask = selmask_ref[...]                                  # [B, CB]   (d == lane % B)
    GG = GG_ref[...]                                            # [CB, CB]  (same-label block of ones)
    p1_full = jnp.dot(p1, gB, preferred_element_type=jnp.float32)        # [B, CB] : p1[b, c]
    p2_full = jnp.dot(p2, gB, preferred_element_type=jnp.float32)        # [B, CB] : p2[b, c]
    p2_packed = jnp.sum(p2_full * selmask, axis=0, keepdims=True)         # [1, CB] : p2[d, c]

    # ---- Sinkhorn: rows -> p(y|x1)[:, c], cols -> p(y|x2)[:, c] -------------
    def sinkhorn_body(_, m):
        rs = jnp.dot(m, GG, preferred_element_type=jnp.float32)           # segmented row sums over d
        m = m * (p1_full * pl.reciprocal(rs + EPS, approx=True))
        cs = jnp.sum(m, axis=0, keepdims=True)                            # column sums over b
        m = m * (p2_packed * pl.reciprocal(cs + EPS, approx=True))
        return m

    m = lax.fori_loop(0, n_iters - 1, sinkhorn_body, a0, unroll=True)
    # final iteration with exact divides (keeps the emitted coupling clean of
    # approx-reciprocal error)
    rs = jnp.dot(m, GG, preferred_element_type=jnp.float32)
    m = m * (p1_full / (rs + EPS))
    cs = jnp.sum(m, axis=0, keepdims=True)
    coupling = m * (p2_packed / (cs + EPS))                               # [B, CB]

    p_out_ref[0] = coupling                                               # lane-dense store

    # ---- coupling-based MI + PID (packed layout, one-time) ------------------
    # per-(b, d) sum over labels, re-expanded to the packed layout (2 tiny matmuls)
    p_sum_bd = jnp.dot(coupling, selmaskT_ref[...], preferred_element_type=jnp.float32)  # [B, B]
    p_sum_full = jnp.dot(p_sum_bd, selmask, preferred_element_type=jnp.float32)          # [B, CB]
    p_cond = coupling / (p_sum_full + EPS)
    py_full = jnp.dot(jnp.broadcast_to(py, (bsz, C)), gB,
                      preferred_element_type=jnp.float32)                                # [B, CB]
    log_ratio = jnp.log(p_cond + EPS) - jnp.log(py_full + EPS)
    mi_q_vec = jnp.sum(coupling * log_ratio, axis=1, keepdims=True)                      # [B, 1]

    redundancy = jnp.maximum(mi1 + mi2 - mi_q_vec, 0.0)
    unique1 = jnp.maximum(mi1 - redundancy, 0.0)
    unique2 = jnp.maximum(mi2 - redundancy, 0.0)

    inv_b = 1.0 / bsz
    mi_p_mean = jnp.sum(mi12_d) * inv_b
    mi_q_mean = jnp.sum(mi_q_vec) * inv_b
    synergy = jnp.maximum(mi_p_mean - mi_q_mean, 0.0)

    stats_ref[0, 0, 0] = mi_q_mean                      # loss
    stats_ref[0, 0, 1] = jnp.sum(redundancy) * inv_b
    stats_ref[0, 0, 2] = jnp.sum(unique1) * inv_b
    stats_ref[0, 0, 3] = jnp.sum(unique2) * inv_b
    stats_ref[0, 0, 4] = synergy
    stats_ref[0, 0, 5] = 0.0
    stats_ref[0, 0, 6] = 0.0
    stats_ref[0, 0, 7] = 0.0


# ----------------------------- parameter init (deterministic) ---------------
def init_mlp_params(key, in_dim, hidden_dim, out_dim, layers):
    dims = [in_dim, hidden_dim] + [hidden_dim] * layers + [out_dim]
    params = []
    for i in range(len(dims) - 1):
        key, k_w, k_b = jax.random.split(key, 3)
        bound = 1.0 / math.sqrt(dims[i])
        w = jax.random.uniform(k_w, (dims[i], dims[i + 1]), jnp.float32, -bound, bound)
        b = jax.random.uniform(k_b, (1, dims[i + 1]), jnp.float32, -bound, bound)
        params.append((w, b))
    return params


def init_params(key):
    keys = jax.random.split(key, 5)
    p_y = jnp.arange(1, NUM_LABELS + 1, dtype=jnp.float32)
    p_y = p_y / jnp.sum(p_y)
    return {
        "mlp1": init_mlp_params(keys[0], X1_DIM, HIDDEN_DIM, EMBED_DIM * NUM_LABELS, MLP_LAYERS),
        "mlp2": init_mlp_params(keys[1], X2_DIM, HIDDEN_DIM, EMBED_DIM * NUM_LABELS, MLP_LAYERS),
        "discrim_1": init_mlp_params(keys[2], X1_DIM, HIDDEN_DIM, NUM_LABELS, MLP_LAYERS),
        "discrim_2": init_mlp_params(keys[3], X2_DIM, HIDDEN_DIM, NUM_LABELS, MLP_LAYERS),
        "discrim_12": init_mlp_params(keys[4], X1_DIM + X2_DIM, HIDDEN_DIM, NUM_LABELS, MLP_LAYERS),
        "p_y": p_y,
    }


# ----------------------------- host-side weight fusion ----------------------
def fuse_params(params):
    """Fuse ALL five MLPs into one 3-layer wide stack (done once, host-side).

    Hidden column order: [mlp1 | discrim_1 | mlp2 | discrim_2 | discrim_12].
    Output column order: [q1 (C*E) | q2 (C*E) | logits1 (C) | logits2 (C) | logits12 (C)].
    The fused stack consumes concat([x1, x2]).
    """
    H, C, E = HIDDEN_DIM, NUM_LABELS, EMBED_DIM
    X1, X2 = X1_DIM, X2_DIM
    CE = C * E
    nets = [params["mlp1"], params["discrim_1"], params["mlp2"],
            params["discrim_2"], params["discrim_12"]]
    assert all(len(n) == 3 for n in nets), "kernel hardcodes 3 linear layers (MLP_LAYERS == 1)"

    # layer 0: [X1+X2, 5H]
    w0 = jnp.zeros((X1 + X2, 5 * H), jnp.float32)
    w0 = w0.at[:X1, 0:H].set(params["mlp1"][0][0])
    w0 = w0.at[:X1, H:2 * H].set(params["discrim_1"][0][0])
    w0 = w0.at[X1:, 2 * H:3 * H].set(params["mlp2"][0][0])
    w0 = w0.at[X1:, 3 * H:4 * H].set(params["discrim_2"][0][0])
    w0 = w0.at[:, 4 * H:5 * H].set(params["discrim_12"][0][0])
    b0 = jnp.concatenate([n[0][1] for n in nets], axis=1)

    # layer 1: block-diagonal [5H, 5H]
    w1 = jnp.zeros((5 * H, 5 * H), jnp.float32)
    for idx, net in enumerate(nets):
        w1 = w1.at[idx * H:(idx + 1) * H, idx * H:(idx + 1) * H].set(net[1][0])
    b1 = jnp.concatenate([n[1][1] for n in nets], axis=1)

    # layer 2: [5H, 2*C*E + 3*C]
    out_dim = 2 * CE + 3 * C
    w2 = jnp.zeros((5 * H, out_dim), jnp.float32)
    w2 = w2.at[0:H, 0:CE].set(params["mlp1"][2][0])
    w2 = w2.at[2 * H:3 * H, CE:2 * CE].set(params["mlp2"][2][0])
    w2 = w2.at[H:2 * H, 2 * CE:2 * CE + C].set(params["discrim_1"][2][0])
    w2 = w2.at[3 * H:4 * H, 2 * CE + C:2 * CE + 2 * C].set(params["discrim_2"][2][0])
    w2 = w2.at[4 * H:5 * H, 2 * CE + 2 * C:2 * CE + 3 * C].set(params["discrim_12"][2][0])
    b2 = jnp.concatenate([params["mlp1"][2][1], params["mlp2"][2][1],
                          params["discrim_1"][2][1], params["discrim_2"][2][1],
                          params["discrim_12"][2][1]], axis=1)

    return {"w0": w0, "b0": b0, "w1": w1, "b1": b1, "w2": w2, "b2": b2,
            "p_y": params["p_y"].reshape(1, C)}


# ----------------------------- forward ---------------------------------------
def ce_alignment_information_forward_batched(fused, x1s, x2s):
    """Process a stack of instances [N, B, x_dim] with ONE pallas_call (grid over N)."""
    n_inst, bsz, _ = x1s.shape
    C, E = NUM_LABELS, EMBED_DIM
    CE, CB = C * E, C * bsz
    xcat = jnp.concatenate([x1s, x2s], axis=-1)      # concat folded on the host
    xdim = xcat.shape[-1]

    # indicator constants (trace-time constants; depend only on static shapes)
    c_of_lane = jnp.arange(CB) // bsz
    d_of_lane = jnp.arange(CB) % bsz
    gB = (jnp.arange(C)[:, None] == c_of_lane[None, :]).astype(jnp.float32)         # [C, CB]
    GG = (c_of_lane[:, None] == c_of_lane[None, :]).astype(jnp.float32)             # [CB, CB]
    selmask = (jnp.arange(bsz)[:, None] == d_of_lane[None, :]).astype(jnp.float32)  # [B, CB]
    selmaskT = selmask.T                                                             # [CB, B]
    bmaskT = (c_of_lane[:, None] ==
              (jnp.arange(CE) // E)[None, :]).astype(jnp.float32)                    # [CB, CE]
    g2 = ((jnp.arange(2 * CE) // E)[:, None] ==
          jnp.arange(2 * C)[None, :]).astype(jnp.float32)                            # [2CE, 2C]

    consts = (fused["w0"], fused["b0"], fused["w1"], fused["b1"],
              fused["w2"], fused["b2"], fused["p_y"],
              g2, gB, GG, selmask, selmaskT, bmaskT)

    def _resident(a):
        return pl.BlockSpec(a.shape, lambda n, nd=a.ndim: (0,) * nd)

    p_packed, stats = pl.pallas_call(
        functools.partial(_fused_ce_pid_kernel,
                          num_labels=C, embed_dim=E,
                          n_iters=SINKHORN_ITERS, activation=ACTIVATION),
        grid=(n_inst,),
        out_shape=(
            jax.ShapeDtypeStruct((n_inst, bsz, CB), jnp.float32),
            jax.ShapeDtypeStruct((n_inst, 1, 8), jnp.float32),
        ),
        in_specs=[pl.BlockSpec((1, bsz, xdim), lambda n: (n, 0, 0))]
                 + [_resident(a) for a in consts],
        out_specs=(
            pl.BlockSpec((1, bsz, CB), lambda n: (n, 0, 0)),
            pl.BlockSpec((1, 1, 8), lambda n: (n, 0, 0),
                         memory_space=pltpu.MemorySpace.SMEM),
        ),
        compiler_params=pltpu.CompilerParams(dimension_semantics=("parallel",)),
    )(xcat, *consts)

    loss = stats[:, 0, 0]
    pid_vals = stats[:, 0, 1:5]                      # [redundancy, unique1, unique2, synergy]
    # packed [N, B, c*B + d]  ->  PyTorch layout [N, B, B, C]
    P = p_packed.reshape(n_inst, bsz, C, bsz).transpose(0, 1, 3, 2)
    return loss, pid_vals, P


def ce_alignment_information_forward(fused, x1, x2, y):
    del y  # y is an argument of the PyTorch forward but is never used
    loss, pid_vals, P = ce_alignment_information_forward_batched(fused, x1[None], x2[None])
    return loss[0], pid_vals[0], P[0]


# ----------------------------- main ------------------------------------------
if __name__ == "__main__":
    assert MLP_LAYERS == 1, "fused kernel hardcodes 3 linear layers per MLP"
    key = jax.random.PRNGKey(0)
    k_params, k_x1, k_x2, k_y = jax.random.split(key, 4)

    params = init_params(k_params)
    fused = fuse_params(params)      # one-time weight fusion, outside the jitted forward
    x1 = jax.random.normal(k_x1, (BATCH, X1_DIM), dtype=jnp.float32)
    x2 = jax.random.normal(k_x2, (BATCH, X2_DIM), dtype=jnp.float32)
    y = jax.random.randint(k_y, (BATCH,), 0, NUM_LABELS)

    # single-instance forward (matches the PyTorch module's forward)
    fwd = jax.jit(ce_alignment_information_forward)
    loss, pid_vals, P = fwd(fused, x1, x2, y)
    jax.block_until_ready((loss, pid_vals, P))

    assert P.shape == (BATCH, BATCH, NUM_LABELS)
    assert pid_vals.shape == (4,)
    assert bool(jnp.isfinite(loss))
    assert bool(jnp.all(jnp.isfinite(pid_vals)))
    assert bool(jnp.all(jnp.isfinite(P)))

    # batched path: several minibatch instances amortised over ONE pallas_call
    # (leading "parallel" grid axis; shards across both TensorCores on v7x).
    x1b = jnp.stack([x1, x1 * 0.5 + 0.1])
    x2b = jnp.stack([x2, x2 * -0.25])
    fwd_b = jax.jit(ce_alignment_information_forward_batched)
    loss_b, pid_b, P_b = fwd_b(fused, x1b, x2b)
    jax.block_until_ready((loss_b, pid_b, P_b))
    assert P_b.shape == (2, BATCH, BATCH, NUM_LABELS)
    assert pid_b.shape == (2, 4)
    assert bool(jnp.allclose(loss_b[0], loss, rtol=1e-4, atol=1e-6))

    print("KERNEL_OK")
</pallas_src>

<mosaic_0001>
module attributes {stable_mosaic.version = 11 : i64} {
  func.func @_fused_ce_pid_kernel(%arg0: i32, %arg1: memref<1x8x32xf32, #tpu.memory_space<vmem>>, %arg2: memref<32x160xf32, #tpu.memory_space<vmem>>, %arg3: memref<1x160xf32, #tpu.memory_space<vmem>>, %arg4: memref<160x160xf32, #tpu.memory_space<vmem>>, %arg5: memref<1x160xf32, #tpu.memory_space<vmem>>, %arg6: memref<160x76xf32, #tpu.memory_space<vmem>>, %arg7: memref<1x76xf32, #tpu.memory_space<vmem>>, %arg8: memref<1x4xf32, #tpu.memory_space<vmem>>, %arg9: memref<64x8xf32, #tpu.memory_space<vmem>>, %arg10: memref<4x32xf32, #tpu.memory_space<vmem>>, %arg11: memref<32x32xf32, #tpu.memory_space<vmem>>, %arg12: memref<8x32xf32, #tpu.memory_space<vmem>>, %arg13: memref<32x8xf32, #tpu.memory_space<vmem>>, %arg14: memref<32x32xf32, #tpu.memory_space<vmem>>, %arg15: memref<1x8x32xf32, #tpu.memory_space<vmem>>, %arg16: memref<1x1x8xf32, #tpu.memory_space<smem>>) attributes {dimension_semantics = [#tpu.dimension_semantics<parallel>], iteration_bounds = array<i64: 1>, scalar_prefetch = 0 : i64, scratch_operands = 0 : i64, tpu.core_type = #tpu.core_type<tc>, window_params = [{transform_indices = @transform_0, window_bounds = array<i64: 1, 8, 32>}, {pipeline_mode = #tpu.pipeline_mode<synchronous>, transform_indices = @transform_1, window_bounds = array<i64: 32, 160>}, {pipeline_mode = #tpu.pipeline_mode<synchronous>, transform_indices = @transform_2, window_bounds = array<i64: 1, 160>}, {pipeline_mode = #tpu.pipeline_mode<synchronous>, transform_indices = @transform_3, window_bounds = array<i64: 160, 160>}, {pipeline_mode = #tpu.pipeline_mode<synchronous>, transform_indices = @transform_4, window_bounds = array<i64: 1, 160>}, {pipeline_mode = #tpu.pipeline_mode<synchronous>, transform_indices = @transform_5, window_bounds = array<i64: 160, 76>}, {pipeline_mode = #tpu.pipeline_mode<synchronous>, transform_indices = @transform_6, window_bounds = array<i64: 1, 76>}, {pipeline_mode = #tpu.pipeline_mode<synchronous>, transform_indices = @transform_7, window_bounds = array<i64: 1, 4>}, {pipeline_mode = #tpu.pipeline_mode<synchronous>, transform_indices = @transform_8, window_bounds = array<i64: 64, 8>}, {pipeline_mode = #tpu.pipeline_mode<synchronous>, transform_indices = @transform_9, window_bounds = array<i64: 4, 32>}, {pipeline_mode = #tpu.pipeline_mode<synchronous>, transform_indices = @transform_10, window_bounds = array<i64: 32, 32>}, {pipeline_mode = #tpu.pipeline_mode<synchronous>, transform_indices = @transform_11, window_bounds = array<i64: 8, 32>}, {pipeline_mode = #tpu.pipeline_mode<synchronous>, transform_indices = @transform_12, window_bounds = array<i64: 32, 8>}, {pipeline_mode = #tpu.pipeline_mode<synchronous>, transform_indices = @transform_13, window_bounds = array<i64: 32, 32>}, {transform_indices = @transform_14, window_bounds = array<i64: 1, 8, 32>}, {transform_indices = @transform_15, window_bounds = array<i64: 1, 1, 8>}]} {
    %c0 = arith.constant 0 : index
    %c0_0 = arith.constant 0 : index
    %c0_1 = arith.constant 0 : index
    %0 = vector.load %arg1[%c0, %c0_0, %c0_1] : memref<1x8x32xf32, #tpu.memory_space<vmem>>, vector<1x8x32xf32>
    %1 = vector.shape_cast %0 : vector<1x8x32xf32> to vector<8x32xf32>
    %c0_2 = arith.constant 0 : index
    %c0_3 = arith.constant 0 : index
    %2 = vector.load %arg2[%c0_2, %c0_3] : memref<32x160xf32, #tpu.memory_space<vmem>>, vector<32x160xf32>
    %cst = arith.constant dense<0.000000e+00> : vector<8x160xf32>
    %3 = tpu.matmul %1, %2, %cst {dimension_numbers = #tpu.dot_dimension_numbers<[1], [0], [0], [1], [0, 0, 1, 1], [], []>} : vector<8x32xf32>, vector<32x160xf32>, vector<8x160xf32> -> vector<8x160xf32>
    %c0_4 = arith.constant 0 : index
    %c0_5 = arith.constant 0 : index
    %4 = vector.load %arg3[%c0_4, %c0_5] : memref<1x160xf32, #tpu.memory_space<vmem>>, vector<1x160xf32>
    %5 = vector.broadcast %4 : vector<1x160xf32> to vector<8x160xf32>
    %6 = arith.addf %3, %5 : vector<8x160xf32>
    %cst_6 = arith.constant 0.000000e+00 : f32
    %7 = vector.broadcast %cst_6 : f32 to vector<8x160xf32>
    %8 = arith.maximumf %6, %7 : vector<8x160xf32>
    %c0_7 = arith.constant 0 : index
    %c0_8 = arith.constant 0 : index
    %9 = vector.load %arg4[%c0_7, %c0_8] : memref<160x160xf32, #tpu.memory_space<vmem>>, vector<160x160xf32>
    %cst_9 = arith.constant dense<0.000000e+00> : vector<8x160xf32>
    %10 = tpu.matmul %8, %9, %cst_9 {dimension_numbers = #tpu.dot_dimension_numbers<[1], [0], [0], [1], [0, 0, 1, 1], [], []>} : vector<8x160xf32>, vector<160x160xf32>, vector<8x160xf32> -> vector<8x160xf32>
    %c0_10 = arith.constant 0 : index
    %c0_11 = arith.constant 0 : index
    %11 = vector.load %arg5[%c0_10, %c0_11] : memref<1x160xf32, #tpu.memory_space<vmem>>, vector<1x160xf32>
    %12 = vector.broadcast %11 : vector<1x160xf32> to vector<8x160xf32>
    %13 = arith.addf %10, %12 : vector<8x160xf32>
    %cst_12 = arith.constant 0.000000e+00 : f32
    %14 = vector.broadcast %cst_12 : f32 to vector<8x160xf32>
    %15 = arith.maximumf %13, %14 : vector<8x160xf32>
    %c0_13 = arith.constant 0 : index
    %c0_14 = arith.constant 0 : index
    %16 = vector.load %arg6[%c0_13, %c0_14] : memref<160x76xf32, #tpu.memory_space<vmem>>, vector<160x76xf32>
    %cst_15 = arith.constant dense<0.000000e+00> : vector<8x76xf32>
    %17 = tpu.matmul %15, %16, %cst_15 {dimension_numbers = #tpu.dot_dimension_numbers<[1], [0], [0], [1], [0, 0, 1, 1], [], []>} : vector<8x160xf32>, vector<160x76xf32>, vector<8x76xf32> -> vector<8x76xf32>
    %c0_16 = arith.constant 0 : index
    %c0_17 = arith.constant 0 : index
    %18 = vector.load %arg7[%c0_16, %c0_17] : memref<1x76xf32, #tpu.memory_space<vmem>>, vector<1x76xf32>
    %19 = vector.broadcast %18 : vector<1x76xf32> to vector<8x76xf32>
    %20 = arith.addf %17, %19 : vector<8x76xf32>
    %21 = vector.extract_strided_slice %20 {offsets = [0, 0], sizes = [8, 64], strides = [1, 1]} : vector<8x76xf32> to vector<8x64xf32>
    %22 = vector.extract_strided_slice %20 {offsets = [0, 64], sizes = [8, 4], strides = [1, 1]} : vector<8x76xf32> to vector<8x4xf32>
    %23 = vector.extract_strided_slice %20 {offsets = [0, 68], sizes = [8, 4], strides = [1, 1]} : vector<8x76xf32> to vector<8x4xf32>
    %24 = vector.extract_strided_slice %20 {offsets = [0, 72], sizes = [8, 4], strides = [1, 1]} : vector<8x76xf32> to vector<8x4xf32>
    %cst_18 = arith.constant dense<0xFF800000> : vector<8xf32>
    %25 = vector.multi_reduction <maximumf>, %22, %cst_18 [1] : vector<8x4xf32> to vector<8xf32>
    %26 = vector.shape_cast %25 : vector<8xf32> to vector<8x1xf32>
    %27 = vector.broadcast %26 : vector<8x1xf32> to vector<8x4xf32>
    %28 = arith.subf %22, %27 : vector<8x4xf32>
    %29 = math.exp %28 : vector<8x4xf32>
    %cst_19 = arith.constant dense<0.000000e+00> : vector<8xf32>
    %30 = vector.multi_reduction <add>, %29, %cst_19 [1] : vector<8x4xf32> to vector<8xf32>
    %31 = vector.shape_cast %30 : vector<8xf32> to vector<8x1xf32>
    %32 = vector.broadcast %31 : vector<8x1xf32> to vector<8x4xf32>
    %33 = arith.divf %29, %32 : vector<8x4xf32>
    %cst_20 = arith.constant dense<0xFF800000> : vector<8xf32>
    %34 = vector.multi_reduction <maximumf>, %23, %cst_20 [1] : vector<8x4xf32> to vector<8xf32>
    %35 = vector.shape_cast %34 : vector<8xf32> to vector<8x1xf32>
    %36 = vector.broadcast %35 : vector<8x1xf32> to vector<8x4xf32>
    %37 = arith.subf %23, %36 : vector<8x4xf32>
    %38 = math.exp %37 : vector<8x4xf32>
    %cst_21 = arith.constant dense<0.000000e+00> : vector<8xf32>
    %39 = vector.multi_reduction <add>, %38, %cst_21 [1] : vector<8x4xf32> to vector<8xf32>
    %40 = vector.shape_cast %39 : vector<8xf32> to vector<8x1xf32>
    %41 = vector.broadcast %40 : vector<8x1xf32> to vector<8x4xf32>
    %42 = arith.divf %38, %41 : vector<8x4xf32>
    %cst_22 = arith.constant dense<0xFF800000> : vector<8xf32>
    %43 = vector.multi_reduction <maximumf>, %24, %cst_22 [1] : vector<8x4xf32> to vector<8xf32>
    %44 = vector.shape_cast %43 : vector<8xf32> to vector<8x1xf32>
    %45 = vector.broadcast %44 : vector<8x1xf32> to vector<8x4xf32>
    %46 = arith.subf %24, %45 : vector<8x4xf32>
    %47 = math.exp %46 : vector<8x4xf32>
    %cst_23 = arith.constant dense<0.000000e+00> : vector<8xf32>
    %48 = vector.multi_reduction <add>, %47, %cst_23 [1] : vector<8x4xf32> to vector<8xf32>
    %49 = vector.shape_cast %48 : vector<8xf32> to vector<8x1xf32>
    %50 = vector.broadcast %49 : vector<8x1xf32> to vector<8x4xf32>
    %51 = arith.divf %47, %50 : vector<8x4xf32>
    %c0_24 = arith.constant 0 : index
    %c0_25 = arith.constant 0 : index
    %52 = vector.load %arg8[%c0_24, %c0_25] : memref<1x4xf32, #tpu.memory_space<vmem>>, vector<1x4xf32>
    %53 = vector.broadcast %52 : vector<1x4xf32> to vector<8x4xf32>
    %54 = arith.divf %33, %53 : vector<8x4xf32>
    %cst_26 = arith.constant 9.99999993E-9 : f32
    %55 = vector.broadcast %cst_26 : f32 to vector<8x4xf32>
    %56 = arith.addf %54, %55 : vector<8x4xf32>
    %57 = math.log %56 : vector<8x4xf32>
    %58 = arith.mulf %33, %57 : vector<8x4xf32>
    %cst_27 = arith.constant dense<0.000000e+00> : vector<8xf32>
    %59 = vector.multi_reduction <add>, %58, %cst_27 [1] : vector<8x4xf32> to vector<8xf32>
    %60 = vector.shape_cast %59 : vector<8xf32> to vector<8x1xf32>
    %61 = vector.broadcast %52 : vector<1x4xf32> to vector<8x4xf32>
    %62 = arith.divf %42, %61 : vector<8x4xf32>
    %cst_28 = arith.constant 9.99999993E-9 : f32
    %63 = vector.broadcast %cst_28 : f32 to vector<8x4xf32>
    %64 = arith.addf %62, %63 : vector<8x4xf32>
    %65 = math.log %64 : vector<8x4xf32>
    %66 = arith.mulf %42, %65 : vector<8x4xf32>
    %cst_29 = arith.constant dense<0.000000e+00> : vector<8xf32>
    %67 = vector.multi_reduction <add>, %66, %cst_29 [1] : vector<8x4xf32> to vector<8xf32>
    %68 = vector.shape_cast %67 : vector<8xf32> to vector<8x1xf32>
    %69 = vector.broadcast %52 : vector<1x4xf32> to vector<8x4xf32>
    %70 = arith.divf %51, %69 : vector<8x4xf32>
    %cst_30 = arith.constant 9.99999993E-9 : f32
    %71 = vector.broadcast %cst_30 : f32 to vector<8x4xf32>
    %72 = arith.addf %70, %71 : vector<8x4xf32>
    %73 = math.log %72 : vector<8x4xf32>
    %74 = arith.mulf %51, %73 : vector<8x4xf32>
    %cst_31 = arith.constant dense<0.000000e+00> : vector<8xf32>
    %75 = vector.multi_reduction <add>, %74, %cst_31 [1] : vector<8x4xf32> to vector<8xf32>
    %76 = vector.shape_cast %75 : vector<8xf32> to vector<8x1xf32>
    %c0_32 = arith.constant 0 : index
    %c0_33 = arith.constant 0 : index
    %77 = vector.load %arg9[%c0_32, %c0_33] : memref<64x8xf32, #tpu.memory_space<vmem>>, vector<64x8xf32>
    %cst_34 = arith.constant dense<0.000000e+00> : vector<8x8xf32>
    %78 = tpu.matmul %21, %77, %cst_34 {dimension_numbers = #tpu.dot_dimension_numbers<[1], [0], [0], [1], [0, 0, 1, 1], [], []>} : vector<8x64xf32>, vector<64x8xf32>, vector<8x8xf32> -> vector<8x8xf32>
    %cst_35 = arith.constant 1.250000e-01 : f32
    %79 = vector.broadcast %cst_35 : f32 to vector<8x8xf32>
    %80 = arith.mulf %78, %79 : vector<8x8xf32>
    %cst_36 = arith.constant dense<0.000000e+00> : vector<8x64xf32>
    %81 = tpu.matmul %80, %77, %cst_36 {dimension_numbers = #tpu.dot_dimension_numbers<[1], [1], [0], [0], [0, 0, 1, 0], [], []>} : vector<8x8xf32>, vector<64x8xf32>, vector<8x64xf32> -> vector<8x64xf32>
    %82 = arith.subf %21, %81 : vector<8x64xf32>
    %83 = arith.mulf %82, %82 : vector<8x64xf32>
    %cst_37 = arith.constant dense<0.000000e+00> : vector<8x8xf32>
    %84 = tpu.matmul %83, %77, %cst_37 {dimension_numbers = #tpu.dot_dimension_numbers<[1], [0], [0], [1], [0, 0, 1, 1], [], []>} : vector<8x64xf32>, vector<64x8xf32>, vector<8x8xf32> -> vector<8x8xf32>
    %cst_38 = arith.constant 0.142857149 : f32
    %85 = vector.broadcast %cst_38 : f32 to vector<8x8xf32>
    %86 = arith.mulf %84, %85 : vector<8x8xf32>
    %cst_39 = arith.constant 9.99999993E-9 : f32
    %87 = vector.broadcast %cst_39 : f32 to vector<8x8xf32>
    %88 = arith.addf %86, %87 : vector<8x8xf32>
    %89 = math.rsqrt %88 : vector<8x8xf32>
    %cst_40 = arith.constant dense<0.000000e+00> : vector<8x64xf32>
    %90 = tpu.matmul %89, %77, %cst_40 {dimension_numbers = #tpu.dot_dimension_numbers<[1], [1], [0], [0], [0, 0, 1, 0], [], []>} : vector<8x8xf32>, vector<64x8xf32>, vector<8x64xf32> -> vector<8x64xf32>
    %91 = arith.mulf %82, %90 : vector<8x64xf32>
    %92 = vector.extract_strided_slice %91 {offsets = [0, 0], sizes = [8, 32], strides = [1, 1]} : vector<8x64xf32> to vector<8x32xf32>
    %93 = vector.extract_strided_slice %91 {offsets = [0, 32], sizes = [8, 32], strides = [1, 1]} : vector<8x64xf32> to vector<8x32xf32>
    %c0_41 = arith.constant 0 : index
    %c0_42 = arith.constant 0 : index
    %94 = vector.load %arg13[%c0_41, %c0_42] : memref<32x8xf32, #tpu.memory_space<vmem>>, vector<32x8xf32>
    %cst_43 = arith.constant dense<0.000000e+00> : vector<32x32xf32>
    %95 = tpu.matmul %94, %93, %cst_43 {dimension_numbers = #tpu.dot_dimension_numbers<[1], [0], [0], [1], [0, 0, 1, 1], [], []>} : vector<32x8xf32>, vector<8x32xf32>, vector<32x32xf32> -> vector<32x32xf32>
    %c0_44 = arith.constant 0 : index
    %c0_45 = arith.constant 0 : index
    %96 = vector.load %arg14[%c0_44, %c0_45] : memref<32x32xf32, #tpu.memory_space<vmem>>, vector<32x32xf32>
    %97 = arith.mulf %95, %96 : vector<32x32xf32>
    %cst_46 = arith.constant dense<0.000000e+00> : vector<8x32xf32>
    %98 = tpu.matmul %92, %97, %cst_46 {dimension_numbers = #tpu.dot_dimension_numbers<[1], [1], [0], [0], [0, 0, 1, 0], [], []>} : vector<8x32xf32>, vector<32x32xf32>, vector<8x32xf32> -> vector<8x32xf32>
    %cst_47 = arith.constant 0.353553385 : f32
    %99 = vector.broadcast %cst_47 : f32 to vector<8x32xf32>
    %100 = arith.mulf %98, %99 : vector<8x32xf32>
    %101 = vector.shape_cast %100 : vector<8x32xf32> to vector<1x8x32xf32>
    %cst_48 = arith.constant dense<0xFF800000> : vector<1xf32>
    %102 = vector.multi_reduction <maximumf>, %101, %cst_48 [1, 2] : vector<1x8x32xf32> to vector<1xf32>
    %103 = vector.shape_cast %102 : vector<1xf32> to vector<1x1x1xf32>
    %104 = vector.extract %103[0, 0, 0] : f32 from vector<1x1x1xf32>
    %105 = vector.broadcast %104 : f32 to vector<8x32xf32>
    %106 = arith.subf %100, %105 : vector<8x32xf32>
    %107 = math.exp %106 : vector<8x32xf32>
    %c0_49 = arith.constant 0 : index
    %c0_50 = arith.constant 0 : index
    %108 = vector.load %arg10[%c0_49, %c0_50] : memref<4x32xf32, #tpu.memory_space<vmem>>, vector<4x32xf32>
    %c0_51 = arith.constant 0 : index
    %c0_52 = arith.constant 0 : index
    %109 = vector.load %arg12[%c0_51, %c0_52] : memref<8x32xf32, #tpu.memory_space<vmem>>, vector<8x32xf32>
    %c0_53 = arith.constant 0 : index
    %c0_54 = arith.constant 0 : index
    %110 = vector.load %arg11[%c0_53, %c0_54] : memref<32x32xf32, #tpu.memory_space<vmem>>, vector<32x32xf32>
    %cst_55 = arith.constant dense<0.000000e+00> : vector<8x32xf32>
    %111 = tpu.matmul %33, %108, %cst_55 {dimension_numbers = #tpu.dot_dimension_numbers<[1], [0], [0], [1], [0, 0, 1, 1], [], []>} : vector<8x4xf32>, vector<4x32xf32>, vector<8x32xf32> -> vector<8x32xf32>
    %cst_56 = arith.constant dense<0.000000e+00> : vector<8x32xf32>
    %112 = tpu.matmul %42, %108, %cst_56 {dimension_numbers = #tpu.dot_dimension_numbers<[1], [0], [0], [1], [0, 0, 1, 1], [], []>} : vector<8x4xf32>, vector<4x32xf32>, vector<8x32xf32> -> vector<8x32xf32>
    %113 = arith.mulf %112, %109 : vector<8x32xf32>
    %cst_57 = arith.constant dense<0.000000e+00> : vector<32xf32>
    %114 = vector.multi_reduction <add>, %113, %cst_57 [0] : vector<8x32xf32> to vector<32xf32>
    %115 = vector.shape_cast %114 : vector<32xf32> to vector<1x32xf32>
    %c0_i32 = arith.constant 0 : i32
    %cst_58 = arith.constant dense<0.000000e+00> : vector<8x32xf32>
    %116 = tpu.matmul %107, %110, %cst_58 {dimension_numbers = #tpu.dot_dimension_numbers<[1], [0], [0], [1], [0, 0, 1, 1], [], []>} : vector<8x32xf32>, vector<32x32xf32>, vector<8x32xf32> -> vector<8x32xf32>
    %cst_59 = arith.constant 9.99999993E-9 : f32
    %117 = vector.broadcast %cst_59 : f32 to vector<8x32xf32>
    %118 = arith.addf %116, %117 : vector<8x32xf32>
    %119 = tpu.reciprocal %118 {approx = true} : vector<8x32xf32> -> vector<8x32xf32>
    %120 = arith.mulf %111, %119 : vector<8x32xf32>
    %121 = arith.mulf %107, %120 : vector<8x32xf32>
    %cst_60 = arith.constant dense<0.000000e+00> : vector<32xf32>
    %122 = vector.multi_reduction <add>, %121, %cst_60 [0] : vector<8x32xf32> to vector<32xf32>
    %123 = vector.shape_cast %122 : vector<32xf32> to vector<1x32xf32>
    %cst_61 = arith.constant 9.99999993E-9 : f32
    %124 = vector.broadcast %cst_61 : f32 to vector<1x32xf32>
    %125 = arith.addf %123, %124 : vector<1x32xf32>
    %126 = tpu.reciprocal %125 {approx = true} : vector<1x32xf32> -> vector<1x32xf32>
    %127 = arith.mulf %115, %126 : vector<1x32xf32>
    %128 = vector.broadcast %127 : vector<1x32xf32> to vector<8x32xf32>
    %129 = arith.mulf %121, %128 : vector<8x32xf32>
    %c1_i32 = arith.constant 1 : i32
    %cst_62 = arith.constant dense<0.000000e+00> : vector<8x32xf32>
    %130 = tpu.matmul %129, %110, %cst_62 {dimension_numbers = #tpu.dot_dimension_numbers<[1], [0], [0], [1], [0, 0, 1, 1], [], []>} : vector<8x32xf32>, vector<32x32xf32>, vector<8x32xf32> -> vector<8x32xf32>
    %cst_63 = arith.constant 9.99999993E-9 : f32
    %131 = vector.broadcast %cst_63 : f32 to vector<8x32xf32>
    %132 = arith.addf %130, %131 : vector<8x32xf32>
    %133 = tpu.reciprocal %132 {approx = true} : vector<8x32xf32> -> vector<8x32xf32>
    %134 = arith.mulf %111, %133 : vector<8x32xf32>
    %135 = arith.mulf %129, %134 : vector<8x32xf32>
    %cst_64 = arith.constant dense<0.000000e+00> : vector<32xf32>
    %136 = vector.multi_reduction <add>, %135, %cst_64 [0] : vector<8x32xf32> to vector<32xf32>
    %137 = vector.shape_cast %136 : vector<32xf32> to vector<1x32xf32>
    %cst_65 = arith.constant 9.99999993E-9 : f32
    %138 = vector.broadcast %cst_65 : f32 to vector<1x32xf32>
    %139 = arith.addf %137, %138 : vector<1x32xf32>
    %140 = tpu.reciprocal %139 {approx = true} : vector<1x32xf32> -> vector<1x32xf32>
    %141 = arith.mulf %115, %140 : vector<1x32xf32>
    %142 = vector.broadcast %141 : vector<1x32xf32> to vector<8x32xf32>
    %143 = arith.mulf %135, %142 : vector<8x32xf32>
    %c2_i32 = arith.constant 2 : i32
    %cst_66 = arith.constant dense<0.000000e+00> : vector<8x32xf32>
    %144 = tpu.matmul %143, %110, %cst_66 {dimension_numbers = #tpu.dot_dimension_numbers<[1], [0], [0], [1], [0, 0, 1, 1], [], []>} : vector<8x32xf32>, vector<32x32xf32>, vector<8x32xf32> -> vector<8x32xf32>
    %cst_67 = arith.constant 9.99999993E-9 : f32
    %145 = vector.broadcast %cst_67 : f32 to vector<8x32xf32>
    %146 = arith.addf %144, %145 : vector<8x32xf32>
    %147 = tpu.reciprocal %146 {approx = true} : vector<8x32xf32> -> vector<8x32xf32>
    %148 = arith.mulf %111, %147 : vector<8x32xf32>
    %149 = arith.mulf %143, %148 : vector<8x32xf32>
    %cst_68 = arith.constant dense<0.000000e+00> : vector<32xf32>
    %150 = vector.multi_reduction <add>, %149, %cst_68 [0] : vector<8x32xf32> to vector<32xf32>
    %151 = vector.shape_cast %150 : vector<32xf32> to vector<1x32xf32>
    %cst_69 = arith.constant 9.99999993E-9 : f32
    %152 = vector.broadcast %cst_69 : f32 to vector<1x32xf32>
    %153 = arith.addf %151, %152 : vector<1x32xf32>
    %154 = tpu.reciprocal %153 {approx = true} : vector<1x32xf32> -> vector<1x32xf32>
    %155 = arith.mulf %115, %154 : vector<1x32xf32>
    %156 = vector.broadcast %155 : vector<1x32xf32> to vector<8x32xf32>
    %157 = arith.mulf %149, %156 : vector<8x32xf32>
    %c3_i32 = arith.constant 3 : i32
    %cst_70 = arith.constant dense<0.000000e+00> : vector<8x32xf32>
    %158 = tpu.matmul %157, %110, %cst_70 {dimension_numbers = #tpu.dot_dimension_numbers<[1], [0], [0], [1], [0, 0, 1, 1], [], []>} : vector<8x32xf32>, vector<32x32xf32>, vector<8x32xf32> -> vector<8x32xf32>
    %cst_71 = arith.constant 9.99999993E-9 : f32
    %159 = vector.broadcast %cst_71 : f32 to vector<8x32xf32>
    %160 = arith.addf %158, %159 : vector<8x32xf32>
    %161 = tpu.reciprocal %160 {approx = true} : vector<8x32xf32> -> vector<8x32xf32>
    %162 = arith.mulf %111, %161 : vector<8x32xf32>
    %163 = arith.mulf %157, %162 : vector<8x32xf32>
    %cst_72 = arith.constant dense<0.000000e+00> : vector<32xf32>
    %164 = vector.multi_reduction <add>, %163, %cst_72 [0] : vector<8x32xf32> to vector<32xf32>
    %165 = vector.shape_cast %164 : vector<32xf32> to vector<1x32xf32>
    %cst_73 = arith.constant 9.99999993E-9 : f32
    %166 = vector.broadcast %cst_73 : f32 to vector<1x32xf32>
    %167 = arith.addf %165, %166 : vector<1x32xf32>
    %168 = tpu.reciprocal %167 {approx = true} : vector<1x32xf32> -> vector<1x32xf32>
    %169 = arith.mulf %115, %168 : vector<1x32xf32>
    %170 = vector.broadcast %169 : vector<1x32xf32> to vector<8x32xf32>
    %171 = arith.mulf %163, %170 : vector<8x32xf32>
    %c4_i32 = arith.constant 4 : i32
    %cst_74 = arith.constant dense<0.000000e+00> : vector<8x32xf32>
    %172 = tpu.matmul %171, %110, %cst_74 {dimension_numbers = #tpu.dot_dimension_numbers<[1], [0], [0], [1], [0, 0, 1, 1], [], []>} : vector<8x32xf32>, vector<32x32xf32>, vector<8x32xf32> -> vector<8x32xf32>
    %cst_75 = arith.constant 9.99999993E-9 : f32
    %173 = vector.broadcast %cst_75 : f32 to vector<8x32xf32>
    %174 = arith.addf %172, %173 : vector<8x32xf32>
    %175 = tpu.reciprocal %174 {approx = true} : vector<8x32xf32> -> vector<8x32xf32>
    %176 = arith.mulf %111, %175 : vector<8x32xf32>
    %177 = arith.mulf %171, %176 : vector<8x32xf32>
    %cst_76 = arith.constant dense<0.000000e+00> : vector<32xf32>
    %178 = vector.multi_reduction <add>, %177, %cst_76 [0] : vector<8x32xf32> to vector<32xf32>
    %179 = vector.shape_cast %178 : vector<32xf32> to vector<1x32xf32>
    %cst_77 = arith.constant 9.99999993E-9 : f32
    %180 = vector.broadcast %cst_77 : f32 to vector<1x32xf32>
    %181 = arith.addf %179, %180 : vector<1x32xf32>
    %182 = tpu.reciprocal %181 {approx = true} : vector<1x32xf32> -> vector<1x32xf32>
    %183 = arith.mulf %115, %182 : vector<1x32xf32>
    %184 = vector.broadcast %183 : vector<1x32xf32> to vector<8x32xf32>
    %185 = arith.mulf %177, %184 : vector<8x32xf32>
    %c5_i32 = arith.constant 5 : i32
    %cst_78 = arith.constant dense<0.000000e+00> : vector<8x32xf32>
    %186 = tpu.matmul %185, %110, %cst_78 {dimension_numbers = #tpu.dot_dimension_numbers<[1], [0], [0], [1], [0, 0, 1, 1], [], []>} : vector<8x32xf32>, vector<32x32xf32>, vector<8x32xf32> -> vector<8x32xf32>
    %cst_79 = arith.constant 9.99999993E-9 : f32
    %187 = vector.broadcast %cst_79 : f32 to vector<8x32xf32>
    %188 = arith.addf %186, %187 : vector<8x32xf32>
    %189 = tpu.reciprocal %188 {approx = true} : vector<8x32xf32> -> vector<8x32xf32>
    %190 = arith.mulf %111, %189 : vector<8x32xf32>
    %191 = arith.mulf %185, %190 : vector<8x32xf32>
    %cst_80 = arith.constant dense<0.000000e+00> : vector<32xf32>
    %192 = vector.multi_reduction <add>, %191, %cst_80 [0] : vector<8x32xf32> to vector<32xf32>
    %193 = vector.shape_cast %192 : vector<32xf32> to vector<1x32xf32>
    %cst_81 = arith.constant 9.99999993E-9 : f32
    %194 = vector.broadcast %cst_81 : f32 to vector<1x32xf32>
    %195 = arith.addf %193, %194 : vector<1x32xf32>
    %196 = tpu.reciprocal %195 {approx = true} : vector<1x32xf32> -> vector<1x32xf32>
    %197 = arith.mulf %115, %196 : vector<1x32xf32>
    %198 = vector.broadcast %197 : vector<1x32xf32> to vector<8x32xf32>
    %199 = arith.mulf %191, %198 : vector<8x32xf32>
    %c6_i32 = arith.constant 6 : i32
    %cst_82 = arith.constant dense<0.000000e+00> : vector<8x32xf32>
    %200 = tpu.matmul %199, %110, %cst_82 {dimension_numbers = #tpu.dot_dimension_numbers<[1], [0], [0], [1], [0, 0, 1, 1], [], []>} : vector<8x32xf32>, vector<32x32xf32>, vector<8x32xf32> -> vector<8x32xf32>
    %cst_83 = arith.constant 9.99999993E-9 : f32
    %201 = vector.broadcast %cst_83 : f32 to vector<8x32xf32>
    %202 = arith.addf %200, %201 : vector<8x32xf32>
    %203 = tpu.reciprocal %202 {approx = true} : vector<8x32xf32> -> vector<8x32xf32>
    %204 = arith.mulf %111, %203 : vector<8x32xf32>
    %205 = arith.mulf %199, %204 : vector<8x32xf32>
    %cst_84 = arith.constant dense<0.000000e+00> : vector<32xf32>
    %206 = vector.multi_reduction <add>, %205, %cst_84 [0] : vector<8x32xf32> to vector<32xf32>
    %207 = vector.shape_cast %206 : vector<32xf32> to vector<1x32xf32>
    %cst_85 = arith.constant 9.99999993E-9 : f32
    %208 = vector.broadcast %cst_85 : f32 to vector<1x32xf32>
    %209 = arith.addf %207, %208 : vector<1x32xf32>
    %210 = tpu.reciprocal %209 {approx = true} : vector<1x32xf32> -> vector<1x32xf32>
    %211 = arith.mulf %115, %210 : vector<1x32xf32>
    %212 = vector.broadcast %211 : vector<1x32xf32> to vector<8x32xf32>
    %213 = arith.mulf %205, %212 : vector<8x32xf32>
    %c7_i32 = arith.constant 7 : i32
    %cst_86 = arith.constant dense<0.000000e+00> : vector<8x32xf32>
    %214 = tpu.matmul %213, %110, %cst_86 {dimension_numbers = #tpu.dot_dimension_numbers<[1], [0], [0], [1], [0, 0, 1, 1], [], []>} : vector<8x32xf32>, vector<32x32xf32>, vector<8x32xf32> -> vector<8x32xf32>
    %cst_87 = arith.constant 9.99999993E-9 : f32
    %215 = vector.broadcast %cst_87 : f32 to vector<8x32xf32>
    %216 = arith.addf %214, %215 : vector<8x32xf32>
    %217 = tpu.reciprocal %216 {approx = true} : vector<8x32xf32> -> vector<8x32xf32>
    %218 = arith.mulf %111, %217 : vector<8x32xf32>
    %219 = arith.mulf %213, %218 : vector<8x32xf32>
    %cst_88 = arith.constant dense<0.000000e+00> : vector<32xf32>
    %220 = vector.multi_reduction <add>, %219, %cst_88 [0] : vector<8x32xf32> to vector<32xf32>
    %221 = vector.shape_cast %220 : vector<32xf32> to vector<1x32xf32>
    %cst_89 = arith.constant 9.99999993E-9 : f32
    %222 = vector.broadcast %cst_89 : f32 to vector<1x32xf32>
    %223 = arith.addf %221, %222 : vector<1x32xf32>
    %224 = tpu.reciprocal %223 {approx = true} : vector<1x32xf32> -> vector<1x32xf32>
    %225 = arith.mulf %115, %224 : vector<1x32xf32>
    %226 = vector.broadcast %225 : vector<1x32xf32> to vector<8x32xf32>
    %227 = arith.mulf %219, %226 : vector<8x32xf32>
    %c8_i32 = arith.constant 8 : i32
    %cst_90 = arith.constant dense<0.000000e+00> : vector<8x32xf32>
    %228 = tpu.matmul %227, %110, %cst_90 {dimension_numbers = #tpu.dot_dimension_numbers<[1], [0], [0], [1], [0, 0, 1, 1], [], []>} : vector<8x32xf32>, vector<32x32xf32>, vector<8x32xf32> -> vector<8x32xf32>
    %cst_91 = arith.constant 9.99999993E-9 : f32
    %229 = vector.broadcast %cst_91 : f32 to vector<8x32xf32>
    %230 = arith.addf %228, %229 : vector<8x32xf32>
    %231 = tpu.reciprocal %230 {approx = true} : vector<8x32xf32> -> vector<8x32xf32>
    %232 = arith.mulf %111, %231 : vector<8x32xf32>
    %233 = arith.mulf %227, %232 : vector<8x32xf32>
    %cst_92 = arith.constant dense<0.000000e+00> : vector<32xf32>
    %234 = vector.multi_reduction <add>, %233, %cst_92 [0] : vector<8x32xf32> to vector<32xf32>
    %235 = vector.shape_cast %234 : vector<32xf32> to vector<1x32xf32>
    %cst_93 = arith.constant 9.99999993E-9 : f32
    %236 = vector.broadcast %cst_93 : f32 to vector<1x32xf32>
    %237 = arith.addf %235, %236 : vector<1x32xf32>
    %238 = tpu.reciprocal %237 {approx = true} : vector<1x32xf32> -> vector<1x32xf32>
    %239 = arith.mulf %115, %238 : vector<1x32xf32>
    %240 = vector.broadcast %239 : vector<1x32xf32> to vector<8x32xf32>
    %241 = arith.mulf %233, %240 : vector<8x32xf32>
    %c9_i32 = arith.constant 9 : i32
    %cst_94 = arith.constant dense<0.000000e+00> : vector<8x32xf32>
    %242 = tpu.matmul %241, %110, %cst_94 {dimension_numbers = #tpu.dot_dimension_numbers<[1], [0], [0], [1], [0, 0, 1, 1], [], []>} : vector<8x32xf32>, vector<32x32xf32>, vector<8x32xf32> -> vector<8x32xf32>
    %cst_95 = arith.constant 9.99999993E-9 : f32
    %243 = vector.broadcast %cst_95 : f32 to vector<8x32xf32>
    %244 = arith.addf %242, %243 : vector<8x32xf32>
    %245 = tpu.reciprocal %244 {approx = true} : vector<8x32xf32> -> vector<8x32xf32>
    %246 = arith.mulf %111, %245 : vector<8x32xf32>
    %247 = arith.mulf %241, %246 : vector<8x32xf32>
    %cst_96 = arith.constant dense<0.000000e+00> : vector<32xf32>
    %248 = vector.multi_reduction <add>, %247, %cst_96 [0] : vector<8x32xf32> to vector<32xf32>
    %249 = vector.shape_cast %248 : vector<32xf32> to vector<1x32xf32>
    %cst_97 = arith.constant 9.99999993E-9 : f32
    %250 = vector.broadcast %cst_97 : f32 to vector<1x32xf32>
    %251 = arith.addf %249, %250 : vector<1x32xf32>
    %252 = tpu.reciprocal %251 {approx = true} : vector<1x32xf32> -> vector<1x32xf32>
    %253 = arith.mulf %115, %252 : vector<1x32xf32>
    %254 = vector.broadcast %253 : vector<1x32xf32> to vector<8x32xf32>
    %255 = arith.mulf %247, %254 : vector<8x32xf32>
    %c10_i32 = arith.constant 10 : i32
    %cst_98 = arith.constant dense<0.000000e+00> : vector<8x32xf32>
    %256 = tpu.matmul %255, %110, %cst_98 {dimension_numbers = #tpu.dot_dimension_numbers<[1], [0], [0], [1], [0, 0, 1, 1], [], []>} : vector<8x32xf32>, vector<32x32xf32>, vector<8x32xf32> -> vector<8x32xf32>
    %cst_99 = arith.constant 9.99999993E-9 : f32
    %257 = vector.broadcast %cst_99 : f32 to vector<8x32xf32>
    %258 = arith.addf %256, %257 : vector<8x32xf32>
    %259 = tpu.reciprocal %258 {approx = true} : vector<8x32xf32> -> vector<8x32xf32>
    %260 = arith.mulf %111, %259 : vector<8x32xf32>
    %261 = arith.mulf %255, %260 : vector<8x32xf32>
    %cst_100 = arith.constant dense<0.000000e+00> : vector<32xf32>
    %262 = vector.multi_reduction <add>, %261, %cst_100 [0] : vector<8x32xf32> to vector<32xf32>
    %263 = vector.shape_cast %262 : vector<32xf32> to vector<1x32xf32>
    %cst_101 = arith.constant 9.99999993E-9 : f32
    %264 = vector.broadcast %cst_101 : f32 to vector<1x32xf32>
    %265 = arith.addf %263, %264 : vector<1x32xf32>
    %266 = tpu.reciprocal %265 {approx = true} : vector<1x32xf32> -> vector<1x32xf32>
    %267 = arith.mulf %115, %266 : vector<1x32xf32>
    %268 = vector.broadcast %267 : vector<1x32xf32> to vector<8x32xf32>
    %269 = arith.mulf %261, %268 : vector<8x32xf32>
    %c11_i32 = arith.constant 11 : i32
    %cst_102 = arith.constant dense<0.000000e+00> : vector<8x32xf32>
    %270 = tpu.matmul %269, %110, %cst_102 {dimension_numbers = #tpu.dot_dimension_numbers<[1], [0], [0], [1], [0, 0, 1, 1], [], []>} : vector<8x32xf32>, vector<32x32xf32>, vector<8x32xf32> -> vector<8x32xf32>
    %cst_103 = arith.constant 9.99999993E-9 : f32
    %271 = vector.broadcast %cst_103 : f32 to vector<8x32xf32>
    %272 = arith.addf %270, %271 : vector<8x32xf32>
    %273 = tpu.reciprocal %272 {approx = true} : vector<8x32xf32> -> vector<8x32xf32>
    %274 = arith.mulf %111, %273 : vector<8x32xf32>
    %275 = arith.mulf %269, %274 : vector<8x32xf32>
    %cst_104 = arith.constant dense<0.000000e+00> : vector<32xf32>
    %276 = vector.multi_reduction <add>, %275, %cst_104 [0] : vector<8x32xf32> to vector<32xf32>
    %277 = vector.shape_cast %276 : vector<32xf32> to vector<1x32xf32>
    %cst_105 = arith.constant 9.99999993E-9 : f32
    %278 = vector.broadcast %cst_105 : f32 to vector<1x32xf32>
    %279 = arith.addf %277, %278 : vector<1x32xf32>
    %280 = tpu.reciprocal %279 {approx = true} : vector<1x32xf32> -> vector<1x32xf32>
    %281 = arith.mulf %115, %280 : vector<1x32xf32>
    %282 = vector.broadcast %281 : vector<1x32xf32> to vector<8x32xf32>
    %283 = arith.mulf %275, %282 : vector<8x32xf32>
    %c12_i32 = arith.constant 12 : i32
    %cst_106 = arith.constant dense<0.000000e+00> : vector<8x32xf32>
    %284 = tpu.matmul %283, %110, %cst_106 {dimension_numbers = #tpu.dot_dimension_numbers<[1], [0], [0], [1], [0, 0, 1, 1], [], []>} : vector<8x32xf32>, vector<32x32xf32>, vector<8x32xf32> -> vector<8x32xf32>
    %cst_107 = arith.constant 9.99999993E-9 : f32
    %285 = vector.broadcast %cst_107 : f32 to vector<8x32xf32>
    %286 = arith.addf %284, %285 : vector<8x32xf32>
    %287 = tpu.reciprocal %286 {approx = true} : vector<8x32xf32> -> vector<8x32xf32>
    %288 = arith.mulf %111, %287 : vector<8x32xf32>
    %289 = arith.mulf %283, %288 : vector<8x32xf32>
    %cst_108 = arith.constant dense<0.000000e+00> : vector<32xf32>
    %290 = vector.multi_reduction <add>, %289, %cst_108 [0] : vector<8x32xf32> to vector<32xf32>
    %291 = vector.shape_cast %290 : vector<32xf32> to vector<1x32xf32>
    %cst_109 = arith.constant 9.99999993E-9 : f32
    %292 = vector.broadcast %cst_109 : f32 to vector<1x32xf32>
    %293 = arith.addf %291, %292 : vector<1x32xf32>
    %294 = tpu.reciprocal %293 {approx = true} : vector<1x32xf32> -> vector<1x32xf32>
    %295 = arith.mulf %115, %294 : vector<1x32xf32>
    %296 = vector.broadcast %295 : vector<1x32xf32> to vector<8x32xf32>
    %297 = arith.mulf %289, %296 : vector<8x32xf32>
    %c13_i32 = arith.constant 13 : i32
    %cst_110 = arith.constant dense<0.000000e+00> : vector<8x32xf32>
    %298 = tpu.matmul %297, %110, %cst_110 {dimension_numbers = #tpu.dot_dimension_numbers<[1], [0], [0], [1], [0, 0, 1, 1], [], []>} : vector<8x32xf32>, vector<32x32xf32>, vector<8x32xf32> -> vector<8x32xf32>
    %cst_111 = arith.constant 9.99999993E-9 : f32
    %299 = vector.broadcast %cst_111 : f32 to vector<8x32xf32>
    %300 = arith.addf %298, %299 : vector<8x32xf32>
    %301 = tpu.reciprocal %300 {approx = true} : vector<8x32xf32> -> vector<8x32xf32>
    %302 = arith.mulf %111, %301 : vector<8x32xf32>
    %303 = arith.mulf %297, %302 : vector<8x32xf32>
    %cst_112 = arith.constant dense<0.000000e+00> : vector<32xf32>
    %304 = vector.multi_reduction <add>, %303, %cst_112 [0] : vector<8x32xf32> to vector<32xf32>
    %305 = vector.shape_cast %304 : vector<32xf32> to vector<1x32xf32>
    %cst_113 = arith.constant 9.99999993E-9 : f32
    %306 = vector.broadcast %cst_113 : f32 to vector<1x32xf32>
    %307 = arith.addf %305, %306 : vector<1x32xf32>
    %308 = tpu.reciprocal %307 {approx = true} : vector<1x32xf32> -> vector<1x32xf32>
    %309 = arith.mulf %115, %308 : vector<1x32xf32>
    %310 = vector.broadcast %309 : vector<1x32xf32> to vector<8x32xf32>
    %311 = arith.mulf %303, %310 : vector<8x32xf32>
    %c14_i32 = arith.constant 14 : i32
    %cst_114 = arith.constant dense<0.000000e+00> : vector<8x32xf32>
    %312 = tpu.matmul %311, %110, %cst_114 {dimension_numbers = #tpu.dot_dimension_numbers<[1], [0], [0], [1], [0, 0, 1, 1], [], []>} : vector<8x32xf32>, vector<32x32xf32>, vector<8x32xf32> -> vector<8x32xf32>
    %cst_115 = arith.constant 9.99999993E-9 : f32
    %313 = vector.broadcast %cst_115 : f32 to vector<8x32xf32>
    %314 = arith.addf %312, %313 : vector<8x32xf32>
    %315 = tpu.reciprocal %314 {approx = true} : vector<8x32xf32> -> vector<8x32xf32>
    %316 = arith.mulf %111, %315 : vector<8x32xf32>
    %317 = arith.mulf %311, %316 : vector<8x32xf32>
    %cst_116 = arith.constant dense<0.000000e+00> : vector<32xf32>
    %318 = vector.multi_reduction <add>, %317, %cst_116 [0] : vector<8x32xf32> to vector<32xf32>
    %319 = vector.shape_cast %318 : vector<32xf32> to vector<1x32xf32>
    %cst_117 = arith.constant 9.99999993E-9 : f32
    %320 = vector.broadcast %cst_117 : f32 to vector<1x32xf32>
    %321 = arith.addf %319, %320 : vector<1x32xf32>
    %322 = tpu.reciprocal %321 {approx = true} : vector<1x32xf32> -> vector<1x32xf32>
    %323 = arith.mulf %115, %322 : vector<1x32xf32>
    %324 = vector.broadcast %323 : vector<1x32xf32> to vector<8x32xf32>
    %325 = arith.mulf %317, %324 : vector<8x32xf32>
    %c15_i32 = arith.constant 15 : i32
    %cst_118 = arith.constant dense<0.000000e+00> : vector<8x32xf32>
    %326 = tpu.matmul %325, %110, %cst_118 {dimension_numbers = #tpu.dot_dimension_numbers<[1], [0], [0], [1], [0, 0, 1, 1], [], []>} : vector<8x32xf32>, vector<32x32xf32>, vector<8x32xf32> -> vector<8x32xf32>
    %cst_119 = arith.constant 9.99999993E-9 : f32
    %327 = vector.broadcast %cst_119 : f32 to vector<8x32xf32>
    %328 = arith.addf %326, %327 : vector<8x32xf32>
    %329 = tpu.reciprocal %328 {approx = true} : vector<8x32xf32> -> vector<8x32xf32>
    %330 = arith.mulf %111, %329 : vector<8x32xf32>
    %331 = arith.mulf %325, %330 : vector<8x32xf32>
    %cst_120 = arith.constant dense<0.000000e+00> : vector<32xf32>
    %332 = vector.multi_reduction <add>, %331, %cst_120 [0] : vector<8x32xf32> to vector<32xf32>
    %333 = vector.shape_cast %332 : vector<32xf32> to vector<1x32xf32>
    %cst_121 = arith.constant 9.99999993E-9 : f32
    %334 = vector.broadcast %cst_121 : f32 to vector<1x32xf32>
    %335 = arith.addf %333, %334 : vector<1x32xf32>
    %336 = tpu.reciprocal %335 {approx = true} : vector<1x32xf32> -> vector<1x32xf32>
    %337 = arith.mulf %115, %336 : vector<1x32xf32>
    %338 = vector.broadcast %337 : vector<1x32xf32> to vector<8x32xf32>
    %339 = arith.mulf %331, %338 : vector<8x32xf32>
    %c16_i32 = arith.constant 16 : i32
    %cst_122 = arith.constant dense<0.000000e+00> : vector<8x32xf32>
    %340 = tpu.matmul %339, %110, %cst_122 {dimension_numbers = #tpu.dot_dimension_numbers<[1], [0], [0], [1], [0, 0, 1, 1], [], []>} : vector<8x32xf32>, vector<32x32xf32>, vector<8x32xf32> -> vector<8x32xf32>
    %cst_123 = arith.constant 9.99999993E-9 : f32
    %341 = vector.broadcast %cst_123 : f32 to vector<8x32xf32>
    %342 = arith.addf %340, %341 : vector<8x32xf32>
    %343 = tpu.reciprocal %342 {approx = true} : vector<8x32xf32> -> vector<8x32xf32>
    %344 = arith.mulf %111, %343 : vector<8x32xf32>
    %345 = arith.mulf %339, %344 : vector<8x32xf32>
    %cst_124 = arith.constant dense<0.000000e+00> : vector<32xf32>
    %346 = vector.multi_reduction <add>, %345, %cst_124 [0] : vector<8x32xf32> to vector<32xf32>
    %347 = vector.shape_cast %346 : vector<32xf32> to vector<1x32xf32>
    %cst_125 = arith.constant 9.99999993E-9 : f32
    %348 = vector.broadcast %cst_125 : f32 to vector<1x32xf32>
    %349 = arith.addf %347, %348 : vector<1x32xf32>
    %350 = tpu.reciprocal %349 {approx = true} : vector<1x32xf32> -> vector<1x32xf32>
    %351 = arith.mulf %115, %350 : vector<1x32xf32>
    %352 = vector.broadcast %351 : vector<1x32xf32> to vector<8x32xf32>
    %353 = arith.mulf %345, %352 : vector<8x32xf32>
    %c17_i32 = arith.constant 17 : i32
    %cst_126 = arith.constant dense<0.000000e+00> : vector<8x32xf32>
    %354 = tpu.matmul %353, %110, %cst_126 {dimension_numbers = #tpu.dot_dimension_numbers<[1], [0], [0], [1], [0, 0, 1, 1], [], []>} : vector<8x32xf32>, vector<32x32xf32>, vector<8x32xf32> -> vector<8x32xf32>
    %cst_127 = arith.constant 9.99999993E-9 : f32
    %355 = vector.broadcast %cst_127 : f32 to vector<8x32xf32>
    %356 = arith.addf %354, %355 : vector<8x32xf32>
    %357 = tpu.reciprocal %356 {approx = true} : vector<8x32xf32> -> vector<8x32xf32>
    %358 = arith.mulf %111, %357 : vector<8x32xf32>
    %359 = arith.mulf %353, %358 : vector<8x32xf32>
    %cst_128 = arith.constant dense<0.000000e+00> : vector<32xf32>
    %360 = vector.multi_reduction <add>, %359, %cst_128 [0] : vector<8x32xf32> to vector<32xf32>
    %361 = vector.shape_cast %360 : vector<32xf32> to vector<1x32xf32>
    %cst_129 = arith.constant 9.99999993E-9 : f32
    %362 = vector.broadcast %cst_129 : f32 to vector<1x32xf32>
    %363 = arith.addf %361, %362 : vector<1x32xf32>
    %364 = tpu.reciprocal %363 {approx = true} : vector<1x32xf32> -> vector<1x32xf32>
    %365 = arith.mulf %115, %364 : vector<1x32xf32>
    %366 = vector.broadcast %365 : vector<1x32xf32> to vector<8x32xf32>
    %367 = arith.mulf %359, %366 : vector<8x32xf32>
    %c18_i32 = arith.constant 18 : i32
    %cst_130 = arith.constant dense<0.000000e+00> : vector<8x32xf32>
    %368 = tpu.matmul %367, %110, %cst_130 {dimension_numbers = #tpu.dot_dimension_numbers<[1], [0], [0], [1], [0, 0, 1, 1], [], []>} : vector<8x32xf32>, vector<32x32xf32>, vector<8x32xf32> -> vector<8x32xf32>
    %cst_131 = arith.constant 9.99999993E-9 : f32
    %369 = vector.broadcast %cst_131 : f32 to vector<8x32xf32>
    %370 = arith.addf %368, %369 : vector<8x32xf32>
    %371 = tpu.reciprocal %370 {approx = true} : vector<8x32xf32> -> vector<8x32xf32>
    %372 = arith.mulf %111, %371 : vector<8x32xf32>
    %373 = arith.mulf %367, %372 : vector<8x32xf32>
    %cst_132 = arith.constant dense<0.000000e+00> : vector<32xf32>
    %374 = vector.multi_reduction <add>, %373, %cst_132 [0] : vector<8x32xf32> to vector<32xf32>
    %375 = vector.shape_cast %374 : vector<32xf32> to vector<1x32xf32>
    %cst_133 = arith.constant 9.99999993E-9 : f32
    %376 = vector.broadcast %cst_133 : f32 to vector<1x32xf32>
    %377 = arith.addf %375, %376 : vector<1x32xf32>
    %378 = tpu.reciprocal %377 {approx = true} : vector<1x32xf32> -> vector<1x32xf32>
    %379 = arith.mulf %115, %378 : vector<1x32xf32>
    %380 = vector.broadcast %379 : vector<1x32xf32> to vector<8x32xf32>
    %381 = arith.mulf %373, %380 : vector<8x32xf32>
    %c19_i32 = arith.constant 19 : i32
    %cst_134 = arith.constant dense<0.000000e+00> : vector<8x32xf32>
    %382 = tpu.matmul %381, %110, %cst_134 {dimension_numbers = #tpu.dot_dimension_numbers<[1], [0], [0], [1], [0, 0, 1, 1], [], []>} : vector<8x32xf32>, vector<32x32xf32>, vector<8x32xf32> -> vector<8x32xf32>
    %cst_135 = arith.constant 9.99999993E-9 : f32
    %383 = vector.broadcast %cst_135 : f32 to vector<8x32xf32>
    %384 = arith.addf %382, %383 : vector<8x32xf32>
    %385 = tpu.reciprocal %384 {approx = true} : vector<8x32xf32> -> vector<8x32xf32>
    %386 = arith.mulf %111, %385 : vector<8x32xf32>
    %387 = arith.mulf %381, %386 : vector<8x32xf32>
    %cst_136 = arith.constant dense<0.000000e+00> : vector<32xf32>
    %388 = vector.multi_reduction <add>, %387, %cst_136 [0] : vector<8x32xf32> to vector<32xf32>
    %389 = vector.shape_cast %388 : vector<32xf32> to vector<1x32xf32>
    %cst_137 = arith.constant 9.99999993E-9 : f32
    %390 = vector.broadcast %cst_137 : f32 to vector<1x32xf32>
    %391 = arith.addf %389, %390 : vector<1x32xf32>
    %392 = tpu.reciprocal %391 {approx = true} : vector<1x32xf32> -> vector<1x32xf32>
    %393 = arith.mulf %115, %392 : vector<1x32xf32>
    %394 = vector.broadcast %393 : vector<1x32xf32> to vector<8x32xf32>
    %395 = arith.mulf %387, %394 : vector<8x32xf32>
    %c20_i32 = arith.constant 20 : i32
    %cst_138 = arith.constant dense<0.000000e+00> : vector<8x32xf32>
    %396 = tpu.matmul %395, %110, %cst_138 {dimension_numbers = #tpu.dot_dimension_numbers<[1], [0], [0], [1], [0, 0, 1, 1], [], []>} : vector<8x32xf32>, vector<32x32xf32>, vector<8x32xf32> -> vector<8x32xf32>
    %cst_139 = arith.constant 9.99999993E-9 : f32
    %397 = vector.broadcast %cst_139 : f32 to vector<8x32xf32>
    %398 = arith.addf %396, %397 : vector<8x32xf32>
    %399 = tpu.reciprocal %398 {approx = true} : vector<8x32xf32> -> vector<8x32xf32>
    %400 = arith.mulf %111, %399 : vector<8x32xf32>
    %401 = arith.mulf %395, %400 : vector<8x32xf32>
    %cst_140 = arith.constant dense<0.000000e+00> : vector<32xf32>
    %402 = vector.multi_reduction <add>, %401, %cst_140 [0] : vector<8x32xf32> to vector<32xf32>
    %403 = vector.shape_cast %402 : vector<32xf32> to vector<1x32xf32>
    %cst_141 = arith.constant 9.99999993E-9 : f32
    %404 = vector.broadcast %cst_141 : f32 to vector<1x32xf32>
    %405 = arith.addf %403, %404 : vector<1x32xf32>
    %406 = tpu.reciprocal %405 {approx = true} : vector<1x32xf32> -> vector<1x32xf32>
    %407 = arith.mulf %115, %406 : vector<1x32xf32>
    %408 = vector.broadcast %407 : vector<1x32xf32> to vector<8x32xf32>
    %409 = arith.mulf %401, %408 : vector<8x32xf32>
    %c21_i32 = arith.constant 21 : i32
    %cst_142 = arith.constant dense<0.000000e+00> : vector<8x32xf32>
    %410 = tpu.matmul %409, %110, %cst_142 {dimension_numbers = #tpu.dot_dimension_numbers<[1], [0], [0], [1], [0, 0, 1, 1], [], []>} : vector<8x32xf32>, vector<32x32xf32>, vector<8x32xf32> -> vector<8x32xf32>
    %cst_143 = arith.constant 9.99999993E-9 : f32
    %411 = vector.broadcast %cst_143 : f32 to vector<8x32xf32>
    %412 = arith.addf %410, %411 : vector<8x32xf32>
    %413 = tpu.reciprocal %412 {approx = true} : vector<8x32xf32> -> vector<8x32xf32>
    %414 = arith.mulf %111, %413 : vector<8x32xf32>
    %415 = arith.mulf %409, %414 : vector<8x32xf32>
    %cst_144 = arith.constant dense<0.000000e+00> : vector<32xf32>
    %416 = vector.multi_reduction <add>, %415, %cst_144 [0] : vector<8x32xf32> to vector<32xf32>
    %417 = vector.shape_cast %416 : vector<32xf32> to vector<1x32xf32>
    %cst_145 = arith.constant 9.99999993E-9 : f32
    %418 = vector.broadcast %cst_145 : f32 to vector<1x32xf32>
    %419 = arith.addf %417, %418 : vector<1x32xf32>
    %420 = tpu.reciprocal %419 {approx = true} : vector<1x32xf32> -> vector<1x32xf32>
    %421 = arith.mulf %115, %420 : vector<1x32xf32>
    %422 = vector.broadcast %421 : vector<1x32xf32> to vector<8x32xf32>
    %423 = arith.mulf %415, %422 : vector<8x32xf32>
    %c22_i32 = arith.constant 22 : i32
    %cst_146 = arith.constant dense<0.000000e+00> : vector<8x32xf32>
    %424 = tpu.matmul %423, %110, %cst_146 {dimension_numbers = #tpu.dot_dimension_numbers<[1], [0], [0], [1], [0, 0, 1, 1], [], []>} : vector<8x32xf32>, vector<32x32xf32>, vector<8x32xf32> -> vector<8x32xf32>
    %cst_147 = arith.constant 9.99999993E-9 : f32
    %425 = vector.broadcast %cst_147 : f32 to vector<8x32xf32>
    %426 = arith.addf %424, %425 : vector<8x32xf32>
    %427 = tpu.reciprocal %426 {approx = true} : vector<8x32xf32> -> vector<8x32xf32>
    %428 = arith.mulf %111, %427 : vector<8x32xf32>
    %429 = arith.mulf %423, %428 : vector<8x32xf32>
    %cst_148 = arith.constant dense<0.000000e+00> : vector<32xf32>
    %430 = vector.multi_reduction <add>, %429, %cst_148 [0] : vector<8x32xf32> to vector<32xf32>
    %431 = vector.shape_cast %430 : vector<32xf32> to vector<1x32xf32>
    %cst_149 = arith.constant 9.99999993E-9 : f32
    %432 = vector.broadcast %cst_149 : f32 to vector<1x32xf32>
    %433 = arith.addf %431, %432 : vector<1x32xf32>
    %434 = tpu.reciprocal %433 {approx = true} : vector<1x32xf32> -> vector<1x32xf32>
    %435 = arith.mulf %115, %434 : vector<1x32xf32>
    %436 = vector.broadcast %435 : vector<1x32xf32> to vector<8x32xf32>
    %437 = arith.mulf %429, %436 : vector<8x32xf32>
    %c23_i32 = arith.constant 23 : i32
    %cst_150 = arith.constant dense<0.000000e+00> : vector<8x32xf32>
    %438 = tpu.matmul %437, %110, %cst_150 {dimension_numbers = #tpu.dot_dimension_numbers<[1], [0], [0], [1], [0, 0, 1, 1], [], []>} : vector<8x32xf32>, vector<32x32xf32>, vector<8x32xf32> -> vector<8x32xf32>
    %cst_151 = arith.constant 9.99999993E-9 : f32
    %439 = vector.broadcast %cst_151 : f32 to vector<8x32xf32>
    %440 = arith.addf %438, %439 : vector<8x32xf32>
    %441 = tpu.reciprocal %440 {approx = true} : vector<8x32xf32> -> vector<8x32xf32>
    %442 = arith.mulf %111, %441 : vector<8x32xf32>
    %443 = arith.mulf %437, %442 : vector<8x32xf32>
    %cst_152 = arith.constant dense<0.000000e+00> : vector<32xf32>
    %444 = vector.multi_reduction <add>, %443, %cst_152 [0] : vector<8x32xf32> to vector<32xf32>
    %445 = vector.shape_cast %444 : vector<32xf32> to vector<1x32xf32>
    %cst_153 = arith.constant 9.99999993E-9 : f32
    %446 = vector.broadcast %cst_153 : f32 to vector<1x32xf32>
    %447 = arith.addf %445, %446 : vector<1x32xf32>
    %448 = tpu.reciprocal %447 {approx = true} : vector<1x32xf32> -> vector<1x32xf32>
    %449 = arith.mulf %115, %448 : vector<1x32xf32>
    %450 = vector.broadcast %449 : vector<1x32xf32> to vector<8x32xf32>
    %451 = arith.mulf %443, %450 : vector<8x32xf32>
    %c24_i32 = arith.constant 24 : i32
    %cst_154 = arith.constant dense<0.000000e+00> : vector<8x32xf32>
    %452 = tpu.matmul %451, %110, %cst_154 {dimension_numbers = #tpu.dot_dimension_numbers<[1], [0], [0], [1], [0, 0, 1, 1], [], []>} : vector<8x32xf32>, vector<32x32xf32>, vector<8x32xf32> -> vector<8x32xf32>
    %cst_155 = arith.constant 9.99999993E-9 : f32
    %453 = vector.broadcast %cst_155 : f32 to vector<8x32xf32>
    %454 = arith.addf %452, %453 : vector<8x32xf32>
    %455 = tpu.reciprocal %454 {approx = true} : vector<8x32xf32> -> vector<8x32xf32>
    %456 = arith.mulf %111, %455 : vector<8x32xf32>
    %457 = arith.mulf %451, %456 : vector<8x32xf32>
    %cst_156 = arith.constant dense<0.000000e+00> : vector<32xf32>
    %458 = vector.multi_reduction <add>, %457, %cst_156 [0] : vector<8x32xf32> to vector<32xf32>
    %459 = vector.shape_cast %458 : vector<32xf32> to vector<1x32xf32>
    %cst_157 = arith.constant 9.99999993E-9 : f32
    %460 = vector.broadcast %cst_157 : f32 to vector<1x32xf32>
    %461 = arith.addf %459, %460 : vector<1x32xf32>
    %462 = tpu.reciprocal %461 {approx = true} : vector<1x32xf32> -> vector<1x32xf32>
    %463 = arith.mulf %115, %462 : vector<1x32xf32>
    %464 = vector.broadcast %463 : vector<1x32xf32> to vector<8x32xf32>
    %465 = arith.mulf %457, %464 : vector<8x32xf32>
    %c25_i32 = arith.constant 25 : i32
    %cst_158 = arith.constant dense<0.000000e+00> : vector<8x32xf32>
    %466 = tpu.matmul %465, %110, %cst_158 {dimension_numbers = #tpu.dot_dimension_numbers<[1], [0], [0], [1], [0, 0, 1, 1], [], []>} : vector<8x32xf32>, vector<32x32xf32>, vector<8x32xf32> -> vector<8x32xf32>
    %cst_159 = arith.constant 9.99999993E-9 : f32
    %467 = vector.broadcast %cst_159 : f32 to vector<8x32xf32>
    %468 = arith.addf %466, %467 : vector<8x32xf32>
    %469 = tpu.reciprocal %468 {approx = true} : vector<8x32xf32> -> vector<8x32xf32>
    %470 = arith.mulf %111, %469 : vector<8x32xf32>
    %471 = arith.mulf %465, %470 : vector<8x32xf32>
    %cst_160 = arith.constant dense<0.000000e+00> : vector<32xf32>
    %472 = vector.multi_reduction <add>, %471, %cst_160 [0] : vector<8x32xf32> to vector<32xf32>
    %473 = vector.shape_cast %472 : vector<32xf32> to vector<1x32xf32>
    %cst_161 = arith.constant 9.99999993E-9 : f32
    %474 = vector.broadcast %cst_161 : f32 to vector<1x32xf32>
    %475 = arith.addf %473, %474 : vector<1x32xf32>
    %476 = tpu.reciprocal %475 {approx = true} : vector<1x32xf32> -> vector<1x32xf32>
    %477 = arith.mulf %115, %476 : vector<1x32xf32>
    %478 = vector.broadcast %477 : vector<1x32xf32> to vector<8x32xf32>
    %479 = arith.mulf %471, %478 : vector<8x32xf32>
    %c26_i32 = arith.constant 26 : i32
    %cst_162 = arith.constant dense<0.000000e+00> : vector<8x32xf32>
    %480 = tpu.matmul %479, %110, %cst_162 {dimension_numbers = #tpu.dot_dimension_numbers<[1], [0], [0], [1], [0, 0, 1, 1], [], []>} : vector<8x32xf32>, vector<32x32xf32>, vector<8x32xf32> -> vector<8x32xf32>
    %cst_163 = arith.constant 9.99999993E-9 : f32
    %481 = vector.broadcast %cst_163 : f32 to vector<8x32xf32>
    %482 = arith.addf %480, %481 : vector<8x32xf32>
    %483 = tpu.reciprocal %482 {approx = true} : vector<8x32xf32> -> vector<8x32xf32>
    %484 = arith.mulf %111, %483 : vector<8x32xf32>
    %485 = arith.mulf %479, %484 : vector<8x32xf32>
    %cst_164 = arith.constant dense<0.000000e+00> : vector<32xf32>
    %486 = vector.multi_reduction <add>, %485, %cst_164 [0] : vector<8x32xf32> to vector<32xf32>
    %487 = vector.shape_cast %486 : vector<32xf32> to vector<1x32xf32>
    %cst_165 = arith.constant 9.99999993E-9 : f32
    %488 = vector.broadcast %cst_165 : f32 to vector<1x32xf32>
    %489 = arith.addf %487, %488 : vector<1x32xf32>
    %490 = tpu.reciprocal %489 {approx = true} : vector<1x32xf32> -> vector<1x32xf32>
    %491 = arith.mulf %115, %490 : vector<1x32xf32>
    %492 = vector.broadcast %491 : vector<1x32xf32> to vector<8x32xf32>
    %493 = arith.mulf %485, %492 : vector<8x32xf32>
    %c27_i32 = arith.constant 27 : i32
    %cst_166 = arith.constant dense<0.000000e+00> : vector<8x32xf32>
    %494 = tpu.matmul %493, %110, %cst_166 {dimension_numbers = #tpu.dot_dimension_numbers<[1], [0], [0], [1], [0, 0, 1, 1], [], []>} : vector<8x32xf32>, vector<32x32xf32>, vector<8x32xf32> -> vector<8x32xf32>
    %cst_167 = arith.constant 9.99999993E-9 : f32
    %495 = vector.broadcast %cst_167 : f32 to vector<8x32xf32>
    %496 = arith.addf %494, %495 : vector<8x32xf32>
    %497 = tpu.reciprocal %496 {approx = true} : vector<8x32xf32> -> vector<8x32xf32>
    %498 = arith.mulf %111, %497 : vector<8x32xf32>
    %499 = arith.mulf %493, %498 : vector<8x32xf32>
    %cst_168 = arith.constant dense<0.000000e+00> : vector<32xf32>
    %500 = vector.multi_reduction <add>, %499, %cst_168 [0] : vector<8x32xf32> to vector<32xf32>
    %501 = vector.shape_cast %500 : vector<32xf32> to vector<1x32xf32>
    %cst_169 = arith.constant 9.99999993E-9 : f32
    %502 = vector.broadcast %cst_169 : f32 to vector<1x32xf32>
    %503 = arith.addf %501, %502 : vector<1x32xf32>
    %504 = tpu.reciprocal %503 {approx = true} : vector<1x32xf32> -> vector<1x32xf32>
    %505 = arith.mulf %115, %504 : vector<1x32xf32>
    %506 = vector.broadcast %505 : vector<1x32xf32> to vector<8x32xf32>
    %507 = arith.mulf %499, %506 : vector<8x32xf32>
    %c28_i32 = arith.constant 28 : i32
    %cst_170 = arith.constant dense<0.000000e+00> : vector<8x32xf32>
    %508 = tpu.matmul %507, %110, %cst_170 {dimension_numbers = #tpu.dot_dimension_numbers<[1], [0], [0], [1], [0, 0, 1, 1], [], []>} : vector<8x32xf32>, vector<32x32xf32>, vector<8x32xf32> -> vector<8x32xf32>
    %cst_171 = arith.constant 9.99999993E-9 : f32
    %509 = vector.broadcast %cst_171 : f32 to vector<8x32xf32>
    %510 = arith.addf %508, %509 : vector<8x32xf32>
    %511 = tpu.reciprocal %510 {approx = true} : vector<8x32xf32> -> vector<8x32xf32>
    %512 = arith.mulf %111, %511 : vector<8x32xf32>
    %513 = arith.mulf %507, %512 : vector<8x32xf32>
    %cst_172 = arith.constant dense<0.000000e+00> : vector<32xf32>
    %514 = vector.multi_reduction <add>, %513, %cst_172 [0] : vector<8x32xf32> to vector<32xf32>
    %515 = vector.shape_cast %514 : vector<32xf32> to vector<1x32xf32>
    %cst_173 = arith.constant 9.99999993E-9 : f32
    %516 = vector.broadcast %cst_173 : f32 to vector<1x32xf32>
    %517 = arith.addf %515, %516 : vector<1x32xf32>
    %518 = tpu.reciprocal %517 {approx = true} : vector<1x32xf32> -> vector<1x32xf32>
    %519 = arith.mulf %115, %518 : vector<1x32xf32>
    %520 = vector.broadcast %519 : vector<1x32xf32> to vector<8x32xf32>
    %521 = arith.mulf %513, %520 : vector<8x32xf32>
    %c29_i32 = arith.constant 29 : i32
    %cst_174 = arith.constant dense<0.000000e+00> : vector<8x32xf32>
    %522 = tpu.matmul %521, %110, %cst_174 {dimension_numbers = #tpu.dot_dimension_numbers<[1], [0], [0], [1], [0, 0, 1, 1], [], []>} : vector<8x32xf32>, vector<32x32xf32>, vector<8x32xf32> -> vector<8x32xf32>
    %cst_175 = arith.constant 9.99999993E-9 : f32
    %523 = vector.broadcast %cst_175 : f32 to vector<8x32xf32>
    %524 = arith.addf %522, %523 : vector<8x32xf32>
    %525 = tpu.reciprocal %524 {approx = true} : vector<8x32xf32> -> vector<8x32xf32>
    %526 = arith.mulf %111, %525 : vector<8x32xf32>
    %527 = arith.mulf %521, %526 : vector<8x32xf32>
    %cst_176 = arith.constant dense<0.000000e+00> : vector<32xf32>
    %528 = vector.multi_reduction <add>, %527, %cst_176 [0] : vector<8x32xf32> to vector<32xf32>
    %529 = vector.shape_cast %528 : vector<32xf32> to vector<1x32xf32>
    %cst_177 = arith.constant 9.99999993E-9 : f32
    %530 = vector.broadcast %cst_177 : f32 to vector<1x32xf32>
    %531 = arith.addf %529, %530 : vector<1x32xf32>
    %532 = tpu.reciprocal %531 {approx = true} : vector<1x32xf32> -> vector<1x32xf32>
    %533 = arith.mulf %115, %532 : vector<1x32xf32>
    %534 = vector.broadcast %533 : vector<1x32xf32> to vector<8x32xf32>
    %535 = arith.mulf %527, %534 : vector<8x32xf32>
    %c30_i32 = arith.constant 30 : i32
    %cst_178 = arith.constant dense<0.000000e+00> : vector<8x32xf32>
    %536 = tpu.matmul %535, %110, %cst_178 {dimension_numbers = #tpu.dot_dimension_numbers<[1], [0], [0], [1], [0, 0, 1, 1], [], []>} : vector<8x32xf32>, vector<32x32xf32>, vector<8x32xf32> -> vector<8x32xf32>
    %cst_179 = arith.constant 9.99999993E-9 : f32
    %537 = vector.broadcast %cst_179 : f32 to vector<8x32xf32>
    %538 = arith.addf %536, %537 : vector<8x32xf32>
    %539 = tpu.reciprocal %538 {approx = true} : vector<8x32xf32> -> vector<8x32xf32>
    %540 = arith.mulf %111, %539 : vector<8x32xf32>
    %541 = arith.mulf %535, %540 : vector<8x32xf32>
    %cst_180 = arith.constant dense<0.000000e+00> : vector<32xf32>
    %542 = vector.multi_reduction <add>, %541, %cst_180 [0] : vector<8x32xf32> to vector<32xf32>
    %543 = vector.shape_cast %542 : vector<32xf32> to vector<1x32xf32>
    %cst_181 = arith.constant 9.99999993E-9 : f32
    %544 = vector.broadcast %cst_181 : f32 to vector<1x32xf32>
    %545 = arith.addf %543, %544 : vector<1x32xf32>
    %546 = tpu.reciprocal %545 {approx = true} : vector<1x32xf32> -> vector<1x32xf32>
    %547 = arith.mulf %115, %546 : vector<1x32xf32>
    %548 = vector.broadcast %547 : vector<1x32xf32> to vector<8x32xf32>
    %549 = arith.mulf %541, %548 : vector<8x32xf32>
    %c31_i32 = arith.constant 31 : i32
    %cst_182 = arith.constant dense<0.000000e+00> : vector<8x32xf32>
    %550 = tpu.matmul %549, %110, %cst_182 {dimension_numbers = #tpu.dot_dimension_numbers<[1], [0], [0], [1], [0, 0, 1, 1], [], []>} : vector<8x32xf32>, vector<32x32xf32>, vector<8x32xf32> -> vector<8x32xf32>
    %cst_183 = arith.constant 9.99999993E-9 : f32
    %551 = vector.broadcast %cst_183 : f32 to vector<8x32xf32>
    %552 = arith.addf %550, %551 : vector<8x32xf32>
    %553 = tpu.reciprocal %552 {approx = true} : vector<8x32xf32> -> vector<8x32xf32>
    %554 = arith.mulf %111, %553 : vector<8x32xf32>
    %555 = arith.mulf %549, %554 : vector<8x32xf32>
    %cst_184 = arith.constant dense<0.000000e+00> : vector<32xf32>
    %556 = vector.multi_reduction <add>, %555, %cst_184 [0] : vector<8x32xf32> to vector<32xf32>
    %557 = vector.shape_cast %556 : vector<32xf32> to vector<1x32xf32>
    %cst_185 = arith.constant 9.99999993E-9 : f32
    %558 = vector.broadcast %cst_185 : f32 to vector<1x32xf32>
    %559 = arith.addf %557, %558 : vector<1x32xf32>
    %560 = tpu.reciprocal %559 {approx = true} : vector<1x32xf32> -> vector<1x32xf32>
    %561 = arith.mulf %115, %560 : vector<1x32xf32>
    %562 = vector.broadcast %561 : vector<1x32xf32> to vector<8x32xf32>
    %563 = arith.mulf %555, %562 : vector<8x32xf32>
    %c32_i32 = arith.constant 32 : i32
    %cst_186 = arith.constant dense<0.000000e+00> : vector<8x32xf32>
    %564 = tpu.matmul %563, %110, %cst_186 {dimension_numbers = #tpu.dot_dimension_numbers<[1], [0], [0], [1], [0, 0, 1, 1], [], []>} : vector<8x32xf32>, vector<32x32xf32>, vector<8x32xf32> -> vector<8x32xf32>
    %cst_187 = arith.constant 9.99999993E-9 : f32
    %565 = vector.broadcast %cst_187 : f32 to vector<8x32xf32>
    %566 = arith.addf %564, %565 : vector<8x32xf32>
    %567 = tpu.reciprocal %566 {approx = true} : vector<8x32xf32> -> vector<8x32xf32>
    %568 = arith.mulf %111, %567 : vector<8x32xf32>
    %569 = arith.mulf %563, %568 : vector<8x32xf32>
    %cst_188 = arith.constant dense<0.000000e+00> : vector<32xf32>
    %570 = vector.multi_reduction <add>, %569, %cst_188 [0] : vector<8x32xf32> to vector<32xf32>
    %571 = vector.shape_cast %570 : vector<32xf32> to vector<1x32xf32>
    %cst_189 = arith.constant 9.99999993E-9 : f32
    %572 = vector.broadcast %cst_189 : f32 to vector<1x32xf32>
    %573 = arith.addf %571, %572 : vector<1x32xf32>
    %574 = tpu.reciprocal %573 {approx = true} : vector<1x32xf32> -> vector<1x32xf32>
    %575 = arith.mulf %115, %574 : vector<1x32xf32>
    %576 = vector.broadcast %575 : vector<1x32xf32> to vector<8x32xf32>
    %577 = arith.mulf %569, %576 : vector<8x32xf32>
    %c33_i32 = arith.constant 33 : i32
    %cst_190 = arith.constant dense<0.000000e+00> : vector<8x32xf32>
    %578 = tpu.matmul %577, %110, %cst_190 {dimension_numbers = #tpu.dot_dimension_numbers<[1], [0], [0], [1], [0, 0, 1, 1], [], []>} : vector<8x32xf32>, vector<32x32xf32>, vector<8x32xf32> -> vector<8x32xf32>
    %cst_191 = arith.constant 9.99999993E-9 : f32
    %579 = vector.broadcast %cst_191 : f32 to vector<8x32xf32>
    %580 = arith.addf %578, %579 : vector<8x32xf32>
    %581 = tpu.reciprocal %580 {approx = true} : vector<8x32xf32> -> vector<8x32xf32>
    %582 = arith.mulf %111, %581 : vector<8x32xf32>
    %583 = arith.mulf %577, %582 : vector<8x32xf32>
    %cst_192 = arith.constant dense<0.000000e+00> : vector<32xf32>
    %584 = vector.multi_reduction <add>, %583, %cst_192 [0] : vector<8x32xf32> to vector<32xf32>
    %585 = vector.shape_cast %584 : vector<32xf32> to vector<1x32xf32>
    %cst_193 = arith.constant 9.99999993E-9 : f32
    %586 = vector.broadcast %cst_193 : f32 to vector<1x32xf32>
    %587 = arith.addf %585, %586 : vector<1x32xf32>
    %588 = tpu.reciprocal %587 {approx = true} : vector<1x32xf32> -> vector<1x32xf32>
    %589 = arith.mulf %115, %588 : vector<1x32xf32>
    %590 = vector.broadcast %589 : vector<1x32xf32> to vector<8x32xf32>
    %591 = arith.mulf %583, %590 : vector<8x32xf32>
    %c34_i32 = arith.constant 34 : i32
    %cst_194 = arith.constant dense<0.000000e+00> : vector<8x32xf32>
    %592 = tpu.matmul %591, %110, %cst_194 {dimension_numbers = #tpu.dot_dimension_numbers<[1], [0], [0], [1], [0, 0, 1, 1], [], []>} : vector<8x32xf32>, vector<32x32xf32>, vector<8x32xf32> -> vector<8x32xf32>
    %cst_195 = arith.constant 9.99999993E-9 : f32
    %593 = vector.broadcast %cst_195 : f32 to vector<8x32xf32>
    %594 = arith.addf %592, %593 : vector<8x32xf32>
    %595 = tpu.reciprocal %594 {approx = true} : vector<8x32xf32> -> vector<8x32xf32>
    %596 = arith.mulf %111, %595 : vector<8x32xf32>
    %597 = arith.mulf %591, %596 : vector<8x32xf32>
    %cst_196 = arith.constant dense<0.000000e+00> : vector<32xf32>
    %598 = vector.multi_reduction <add>, %597, %cst_196 [0] : vector<8x32xf32> to vector<32xf32>
    %599 = vector.shape_cast %598 : vector<32xf32> to vector<1x32xf32>
    %cst_197 = arith.constant 9.99999993E-9 : f32
    %600 = vector.broadcast %cst_197 : f32 to vector<1x32xf32>
    %601 = arith.addf %599, %600 : vector<1x32xf32>
    %602 = tpu.reciprocal %601 {approx = true} : vector<1x32xf32> -> vector<1x32xf32>
    %603 = arith.mulf %115, %602 : vector<1x32xf32>
    %604 = vector.broadcast %603 : vector<1x32xf32> to vector<8x32xf32>
    %605 = arith.mulf %597, %604 : vector<8x32xf32>
    %c35_i32 = arith.constant 35 : i32
    %cst_198 = arith.constant dense<0.000000e+00> : vector<8x32xf32>
    %606 = tpu.matmul %605, %110, %cst_198 {dimension_numbers = #tpu.dot_dimension_numbers<[1], [0], [0], [1], [0, 0, 1, 1], [], []>} : vector<8x32xf32>, vector<32x32xf32>, vector<8x32xf32> -> vector<8x32xf32>
    %cst_199 = arith.constant 9.99999993E-9 : f32
    %607 = vector.broadcast %cst_199 : f32 to vector<8x32xf32>
    %608 = arith.addf %606, %607 : vector<8x32xf32>
    %609 = tpu.reciprocal %608 {approx = true} : vector<8x32xf32> -> vector<8x32xf32>
    %610 = arith.mulf %111, %609 : vector<8x32xf32>
    %611 = arith.mulf %605, %610 : vector<8x32xf32>
    %cst_200 = arith.constant dense<0.000000e+00> : vector<32xf32>
    %612 = vector.multi_reduction <add>, %611, %cst_200 [0] : vector<8x32xf32> to vector<32xf32>
    %613 = vector.shape_cast %612 : vector<32xf32> to vector<1x32xf32>
    %cst_201 = arith.constant 9.99999993E-9 : f32
    %614 = vector.broadcast %cst_201 : f32 to vector<1x32xf32>
    %615 = arith.addf %613, %614 : vector<1x32xf32>
    %616 = tpu.reciprocal %615 {approx = true} : vector<1x32xf32> -> vector<1x32xf32>
    %617 = arith.mulf %115, %616 : vector<1x32xf32>
    %618 = vector.broadcast %617 : vector<1x32xf32> to vector<8x32xf32>
    %619 = arith.mulf %611, %618 : vector<8x32xf32>
    %c36_i32 = arith.constant 36 : i32
    %cst_202 = arith.constant dense<0.000000e+00> : vector<8x32xf32>
    %620 = tpu.matmul %619, %110, %cst_202 {dimension_numbers = #tpu.dot_dimension_numbers<[1], [0], [0], [1], [0, 0, 1, 1], [], []>} : vector<8x32xf32>, vector<32x32xf32>, vector<8x32xf32> -> vector<8x32xf32>
    %cst_203 = arith.constant 9.99999993E-9 : f32
    %621 = vector.broadcast %cst_203 : f32 to vector<8x32xf32>
    %622 = arith.addf %620, %621 : vector<8x32xf32>
    %623 = tpu.reciprocal %622 {approx = true} : vector<8x32xf32> -> vector<8x32xf32>
    %624 = arith.mulf %111, %623 : vector<8x32xf32>
    %625 = arith.mulf %619, %624 : vector<8x32xf32>
    %cst_204 = arith.constant dense<0.000000e+00> : vector<32xf32>
    %626 = vector.multi_reduction <add>, %625, %cst_204 [0] : vector<8x32xf32> to vector<32xf32>
    %627 = vector.shape_cast %626 : vector<32xf32> to vector<1x32xf32>
    %cst_205 = arith.constant 9.99999993E-9 : f32
    %628 = vector.broadcast %cst_205 : f32 to vector<1x32xf32>
    %629 = arith.addf %627, %628 : vector<1x32xf32>
    %630 = tpu.reciprocal %629 {approx = true} : vector<1x32xf32> -> vector<1x32xf32>
    %631 = arith.mulf %115, %630 : vector<1x32xf32>
    %632 = vector.broadcast %631 : vector<1x32xf32> to vector<8x32xf32>
    %633 = arith.mulf %625, %632 : vector<8x32xf32>
    %c37_i32 = arith.constant 37 : i32
    %cst_206 = arith.constant dense<0.000000e+00> : vector<8x32xf32>
    %634 = tpu.matmul %633, %110, %cst_206 {dimension_numbers = #tpu.dot_dimension_numbers<[1], [0], [0], [1], [0, 0, 1, 1], [], []>} : vector<8x32xf32>, vector<32x32xf32>, vector<8x32xf32> -> vector<8x32xf32>
    %cst_207 = arith.constant 9.99999993E-9 : f32
    %635 = vector.broadcast %cst_207 : f32 to vector<8x32xf32>
    %636 = arith.addf %634, %635 : vector<8x32xf32>
    %637 = tpu.reciprocal %636 {approx = true} : vector<8x32xf32> -> vector<8x32xf32>
    %638 = arith.mulf %111, %637 : vector<8x32xf32>
    %639 = arith.mulf %633, %638 : vector<8x32xf32>
    %cst_208 = arith.constant dense<0.000000e+00> : vector<32xf32>
    %640 = vector.multi_reduction <add>, %639, %cst_208 [0] : vector<8x32xf32> to vector<32xf32>
    %641 = vector.shape_cast %640 : vector<32xf32> to vector<1x32xf32>
    %cst_209 = arith.constant 9.99999993E-9 : f32
    %642 = vector.broadcast %cst_209 : f32 to vector<1x32xf32>
    %643 = arith.addf %641, %642 : vector<1x32xf32>
    %644 = tpu.reciprocal %643 {approx = true} : vector<1x32xf32> -> vector<1x32xf32>
    %645 = arith.mulf %115, %644 : vector<1x32xf32>
    %646 = vector.broadcast %645 : vector<1x32xf32> to vector<8x32xf32>
    %647 = arith.mulf %639, %646 : vector<8x32xf32>
    %c38_i32 = arith.constant 38 : i32
    %cst_210 = arith.constant dense<0.000000e+00> : vector<8x32xf32>
    %648 = tpu.matmul %647, %110, %cst_210 {dimension_numbers = #tpu.dot_dimension_numbers<[1], [0], [0], [1], [0, 0, 1, 1], [], []>} : vector<8x32xf32>, vector<32x32xf32>, vector<8x32xf32> -> vector<8x32xf32>
    %cst_211 = arith.constant 9.99999993E-9 : f32
    %649 = vector.broadcast %cst_211 : f32 to vector<8x32xf32>
    %650 = arith.addf %648, %649 : vector<8x32xf32>
    %651 = tpu.reciprocal %650 {approx = true} : vector<8x32xf32> -> vector<8x32xf32>
    %652 = arith.mulf %111, %651 : vector<8x32xf32>
    %653 = arith.mulf %647, %652 : vector<8x32xf32>
    %cst_212 = arith.constant dense<0.000000e+00> : vector<32xf32>
    %654 = vector.multi_reduction <add>, %653, %cst_212 [0] : vector<8x32xf32> to vector<32xf32>
    %655 = vector.shape_cast %654 : vector<32xf32> to vector<1x32xf32>
    %cst_213 = arith.constant 9.99999993E-9 : f32
    %656 = vector.broadcast %cst_213 : f32 to vector<1x32xf32>
    %657 = arith.addf %655, %656 : vector<1x32xf32>
    %658 = tpu.reciprocal %657 {approx = true} : vector<1x32xf32> -> vector<1x32xf32>
    %659 = arith.mulf %115, %658 : vector<1x32xf32>
    %660 = vector.broadcast %659 : vector<1x32xf32> to vector<8x32xf32>
    %661 = arith.mulf %653, %660 : vector<8x32xf32>
    %c39_i32 = arith.constant 39 : i32
    %cst_214 = arith.constant dense<0.000000e+00> : vector<8x32xf32>
    %662 = tpu.matmul %661, %110, %cst_214 {dimension_numbers = #tpu.dot_dimension_numbers<[1], [0], [0], [1], [0, 0, 1, 1], [], []>} : vector<8x32xf32>, vector<32x32xf32>, vector<8x32xf32> -> vector<8x32xf32>
    %cst_215 = arith.constant 9.99999993E-9 : f32
    %663 = vector.broadcast %cst_215 : f32 to vector<8x32xf32>
    %664 = arith.addf %662, %663 : vector<8x32xf32>
    %665 = tpu.reciprocal %664 {approx = true} : vector<8x32xf32> -> vector<8x32xf32>
    %666 = arith.mulf %111, %665 : vector<8x32xf32>
    %667 = arith.mulf %661, %666 : vector<8x32xf32>
    %cst_216 = arith.constant dense<0.000000e+00> : vector<32xf32>
    %668 = vector.multi_reduction <add>, %667, %cst_216 [0] : vector<8x32xf32> to vector<32xf32>
    %669 = vector.shape_cast %668 : vector<32xf32> to vector<1x32xf32>
    %cst_217 = arith.constant 9.99999993E-9 : f32
    %670 = vector.broadcast %cst_217 : f32 to vector<1x32xf32>
    %671 = arith.addf %669, %670 : vector<1x32xf32>
    %672 = tpu.reciprocal %671 {approx = true} : vector<1x32xf32> -> vector<1x32xf32>
    %673 = arith.mulf %115, %672 : vector<1x32xf32>
    %674 = vector.broadcast %673 : vector<1x32xf32> to vector<8x32xf32>
    %675 = arith.mulf %667, %674 : vector<8x32xf32>
    %c40_i32 = arith.constant 40 : i32
    %cst_218 = arith.constant dense<0.000000e+00> : vector<8x32xf32>
    %676 = tpu.matmul %675, %110, %cst_218 {dimension_numbers = #tpu.dot_dimension_numbers<[1], [0], [0], [1], [0, 0, 1, 1], [], []>} : vector<8x32xf32>, vector<32x32xf32>, vector<8x32xf32> -> vector<8x32xf32>
    %cst_219 = arith.constant 9.99999993E-9 : f32
    %677 = vector.broadcast %cst_219 : f32 to vector<8x32xf32>
    %678 = arith.addf %676, %677 : vector<8x32xf32>
    %679 = tpu.reciprocal %678 {approx = true} : vector<8x32xf32> -> vector<8x32xf32>
    %680 = arith.mulf %111, %679 : vector<8x32xf32>
    %681 = arith.mulf %675, %680 : vector<8x32xf32>
    %cst_220 = arith.constant dense<0.000000e+00> : vector<32xf32>
    %682 = vector.multi_reduction <add>, %681, %cst_220 [0] : vector<8x32xf32> to vector<32xf32>
    %683 = vector.shape_cast %682 : vector<32xf32> to vector<1x32xf32>
    %cst_221 = arith.constant 9.99999993E-9 : f32
    %684 = vector.broadcast %cst_221 : f32 to vector<1x32xf32>
    %685 = arith.addf %683, %684 : vector<1x32xf32>
    %686 = tpu.reciprocal %685 {approx = true} : vector<1x32xf32> -> vector<1x32xf32>
    %687 = arith.mulf %115, %686 : vector<1x32xf32>
    %688 = vector.broadcast %687 : vector<1x32xf32> to vector<8x32xf32>
    %689 = arith.mulf %681, %688 : vector<8x32xf32>
    %c41_i32 = arith.constant 41 : i32
    %cst_222 = arith.constant dense<0.000000e+00> : vector<8x32xf32>
    %690 = tpu.matmul %689, %110, %cst_222 {dimension_numbers = #tpu.dot_dimension_numbers<[1], [0], [0], [1], [0, 0, 1, 1], [], []>} : vector<8x32xf32>, vector<32x32xf32>, vector<8x32xf32> -> vector<8x32xf32>
    %cst_223 = arith.constant 9.99999993E-9 : f32
    %691 = vector.broadcast %cst_223 : f32 to vector<8x32xf32>
    %692 = arith.addf %690, %691 : vector<8x32xf32>
    %693 = tpu.reciprocal %692 {approx = true} : vector<8x32xf32> -> vector<8x32xf32>
    %694 = arith.mulf %111, %693 : vector<8x32xf32>
    %695 = arith.mulf %689, %694 : vector<8x32xf32>
    %cst_224 = arith.constant dense<0.000000e+00> : vector<32xf32>
    %696 = vector.multi_reduction <add>, %695, %cst_224 [0] : vector<8x32xf32> to vector<32xf32>
    %697 = vector.shape_cast %696 : vector<32xf32> to vector<1x32xf32>
    %cst_225 = arith.constant 9.99999993E-9 : f32
    %698 = vector.broadcast %cst_225 : f32 to vector<1x32xf32>
    %699 = arith.addf %697, %698 : vector<1x32xf32>
    %700 = tpu.reciprocal %699 {approx = true} : vector<1x32xf32> -> vector<1x32xf32>
    %701 = arith.mulf %115, %700 : vector<1x32xf32>
    %702 = vector.broadcast %701 : vector<1x32xf32> to vector<8x32xf32>
    %703 = arith.mulf %695, %702 : vector<8x32xf32>
    %c42_i32 = arith.constant 42 : i32
    %cst_226 = arith.constant dense<0.000000e+00> : vector<8x32xf32>
    %704 = tpu.matmul %703, %110, %cst_226 {dimension_numbers = #tpu.dot_dimension_numbers<[1], [0], [0], [1], [0, 0, 1, 1], [], []>} : vector<8x32xf32>, vector<32x32xf32>, vector<8x32xf32> -> vector<8x32xf32>
    %cst_227 = arith.constant 9.99999993E-9 : f32
    %705 = vector.broadcast %cst_227 : f32 to vector<8x32xf32>
    %706 = arith.addf %704, %705 : vector<8x32xf32>
    %707 = tpu.reciprocal %706 {approx = true} : vector<8x32xf32> -> vector<8x32xf32>
    %708 = arith.mulf %111, %707 : vector<8x32xf32>
    %709 = arith.mulf %703, %708 : vector<8x32xf32>
    %cst_228 = arith.constant dense<0.000000e+00> : vector<32xf32>
    %710 = vector.multi_reduction <add>, %709, %cst_228 [0] : vector<8x32xf32> to vector<32xf32>
    %711 = vector.shape_cast %710 : vector<32xf32> to vector<1x32xf32>
    %cst_229 = arith.constant 9.99999993E-9 : f32
    %712 = vector.broadcast %cst_229 : f32 to vector<1x32xf32>
    %713 = arith.addf %711, %712 : vector<1x32xf32>
    %714 = tpu.reciprocal %713 {approx = true} : vector<1x32xf32> -> vector<1x32xf32>
    %715 = arith.mulf %115, %714 : vector<1x32xf32>
    %716 = vector.broadcast %715 : vector<1x32xf32> to vector<8x32xf32>
    %717 = arith.mulf %709, %716 : vector<8x32xf32>
    %c43_i32 = arith.constant 43 : i32
    %cst_230 = arith.constant dense<0.000000e+00> : vector<8x32xf32>
    %718 = tpu.matmul %717, %110, %cst_230 {dimension_numbers = #tpu.dot_dimension_numbers<[1], [0], [0], [1], [0, 0, 1, 1], [], []>} : vector<8x32xf32>, vector<32x32xf32>, vector<8x32xf32> -> vector<8x32xf32>
    %cst_231 = arith.constant 9.99999993E-9 : f32
    %719 = vector.broadcast %cst_231 : f32 to vector<8x32xf32>
    %720 = arith.addf %718, %719 : vector<8x32xf32>
    %721 = tpu.reciprocal %720 {approx = true} : vector<8x32xf32> -> vector<8x32xf32>
    %722 = arith.mulf %111, %721 : vector<8x32xf32>
    %723 = arith.mulf %717, %722 : vector<8x32xf32>
    %cst_232 = arith.constant dense<0.000000e+00> : vector<32xf32>
    %724 = vector.multi_reduction <add>, %723, %cst_232 [0] : vector<8x32xf32> to vector<32xf32>
    %725 = vector.shape_cast %724 : vector<32xf32> to vector<1x32xf32>
    %cst_233 = arith.constant 9.99999993E-9 : f32
    %726 = vector.broadcast %cst_233 : f32 to vector<1x32xf32>
    %727 = arith.addf %725, %726 : vector<1x32xf32>
    %728 = tpu.reciprocal %727 {approx = true} : vector<1x32xf32> -> vector<1x32xf32>
    %729 = arith.mulf %115, %728 : vector<1x32xf32>
    %730 = vector.broadcast %729 : vector<1x32xf32> to vector<8x32xf32>
    %731 = arith.mulf %723, %730 : vector<8x32xf32>
    %c44_i32 = arith.constant 44 : i32
    %cst_234 = arith.constant dense<0.000000e+00> : vector<8x32xf32>
    %732 = tpu.matmul %731, %110, %cst_234 {dimension_numbers = #tpu.dot_dimension_numbers<[1], [0], [0], [1], [0, 0, 1, 1], [], []>} : vector<8x32xf32>, vector<32x32xf32>, vector<8x32xf32> -> vector<8x32xf32>
    %cst_235 = arith.constant 9.99999993E-9 : f32
    %733 = vector.broadcast %cst_235 : f32 to vector<8x32xf32>
    %734 = arith.addf %732, %733 : vector<8x32xf32>
    %735 = tpu.reciprocal %734 {approx = true} : vector<8x32xf32> -> vector<8x32xf32>
    %736 = arith.mulf %111, %735 : vector<8x32xf32>
    %737 = arith.mulf %731, %736 : vector<8x32xf32>
    %cst_236 = arith.constant dense<0.000000e+00> : vector<32xf32>
    %738 = vector.multi_reduction <add>, %737, %cst_236 [0] : vector<8x32xf32> to vector<32xf32>
    %739 = vector.shape_cast %738 : vector<32xf32> to vector<1x32xf32>
    %cst_237 = arith.constant 9.99999993E-9 : f32
    %740 = vector.broadcast %cst_237 : f32 to vector<1x32xf32>
    %741 = arith.addf %739, %740 : vector<1x32xf32>
    %742 = tpu.reciprocal %741 {approx = true} : vector<1x32xf32> -> vector<1x32xf32>
    %743 = arith.mulf %115, %742 : vector<1x32xf32>
    %744 = vector.broadcast %743 : vector<1x32xf32> to vector<8x32xf32>
    %745 = arith.mulf %737, %744 : vector<8x32xf32>
    %c45_i32 = arith.constant 45 : i32
    %cst_238 = arith.constant dense<0.000000e+00> : vector<8x32xf32>
    %746 = tpu.matmul %745, %110, %cst_238 {dimension_numbers = #tpu.dot_dimension_numbers<[1], [0], [0], [1], [0, 0, 1, 1], [], []>} : vector<8x32xf32>, vector<32x32xf32>, vector<8x32xf32> -> vector<8x32xf32>
    %cst_239 = arith.constant 9.99999993E-9 : f32
    %747 = vector.broadcast %cst_239 : f32 to vector<8x32xf32>
    %748 = arith.addf %746, %747 : vector<8x32xf32>
    %749 = tpu.reciprocal %748 {approx = true} : vector<8x32xf32> -> vector<8x32xf32>
    %750 = arith.mulf %111, %749 : vector<8x32xf32>
    %751 = arith.mulf %745, %750 : vector<8x32xf32>
    %cst_240 = arith.constant dense<0.000000e+00> : vector<32xf32>
    %752 = vector.multi_reduction <add>, %751, %cst_240 [0] : vector<8x32xf32> to vector<32xf32>
    %753 = vector.shape_cast %752 : vector<32xf32> to vector<1x32xf32>
    %cst_241 = arith.constant 9.99999993E-9 : f32
    %754 = vector.broadcast %cst_241 : f32 to vector<1x32xf32>
    %755 = arith.addf %753, %754 : vector<1x32xf32>
    %756 = tpu.reciprocal %755 {approx = true} : vector<1x32xf32> -> vector<1x32xf32>
    %757 = arith.mulf %115, %756 : vector<1x32xf32>
    %758 = vector.broadcast %757 : vector<1x32xf32> to vector<8x32xf32>
    %759 = arith.mulf %751, %758 : vector<8x32xf32>
    %c46_i32 = arith.constant 46 : i32
    %cst_242 = arith.constant dense<0.000000e+00> : vector<8x32xf32>
    %760 = tpu.matmul %759, %110, %cst_242 {dimension_numbers = #tpu.dot_dimension_numbers<[1], [0], [0], [1], [0, 0, 1, 1], [], []>} : vector<8x32xf32>, vector<32x32xf32>, vector<8x32xf32> -> vector<8x32xf32>
    %cst_243 = arith.constant 9.99999993E-9 : f32
    %761 = vector.broadcast %cst_243 : f32 to vector<8x32xf32>
    %762 = arith.addf %760, %761 : vector<8x32xf32>
    %763 = tpu.reciprocal %762 {approx = true} : vector<8x32xf32> -> vector<8x32xf32>
    %764 = arith.mulf %111, %763 : vector<8x32xf32>
    %765 = arith.mulf %759, %764 : vector<8x32xf32>
    %cst_244 = arith.constant dense<0.000000e+00> : vector<32xf32>
    %766 = vector.multi_reduction <add>, %765, %cst_244 [0] : vector<8x32xf32> to vector<32xf32>
    %767 = vector.shape_cast %766 : vector<32xf32> to vector<1x32xf32>
    %cst_245 = arith.constant 9.99999993E-9 : f32
    %768 = vector.broadcast %cst_245 : f32 to vector<1x32xf32>
    %769 = arith.addf %767, %768 : vector<1x32xf32>
    %770 = tpu.reciprocal %769 {approx = true} : vector<1x32xf32> -> vector<1x32xf32>
    %771 = arith.mulf %115, %770 : vector<1x32xf32>
    %772 = vector.broadcast %771 : vector<1x32xf32> to vector<8x32xf32>
    %773 = arith.mulf %765, %772 : vector<8x32xf32>
    %c47_i32 = arith.constant 47 : i32
    %cst_246 = arith.constant dense<0.000000e+00> : vector<8x32xf32>
    %774 = tpu.matmul %773, %110, %cst_246 {dimension_numbers = #tpu.dot_dimension_numbers<[1], [0], [0], [1], [0, 0, 1, 1], [], []>} : vector<8x32xf32>, vector<32x32xf32>, vector<8x32xf32> -> vector<8x32xf32>
    %cst_247 = arith.constant 9.99999993E-9 : f32
    %775 = vector.broadcast %cst_247 : f32 to vector<8x32xf32>
    %776 = arith.addf %774, %775 : vector<8x32xf32>
    %777 = tpu.reciprocal %776 {approx = true} : vector<8x32xf32> -> vector<8x32xf32>
    %778 = arith.mulf %111, %777 : vector<8x32xf32>
    %779 = arith.mulf %773, %778 : vector<8x32xf32>
    %cst_248 = arith.constant dense<0.000000e+00> : vector<32xf32>
    %780 = vector.multi_reduction <add>, %779, %cst_248 [0] : vector<8x32xf32> to vector<32xf32>
    %781 = vector.shape_cast %780 : vector<32xf32> to vector<1x32xf32>
    %cst_249 = arith.constant 9.99999993E-9 : f32
    %782 = vector.broadcast %cst_249 : f32 to vector<1x32xf32>
    %783 = arith.addf %781, %782 : vector<1x32xf32>
    %784 = tpu.reciprocal %783 {approx = true} : vector<1x32xf32> -> vector<1x32xf32>
    %785 = arith.mulf %115, %784 : vector<1x32xf32>
    %786 = vector.broadcast %785 : vector<1x32xf32> to vector<8x32xf32>
    %787 = arith.mulf %779, %786 : vector<8x32xf32>
    %c48_i32 = arith.constant 48 : i32
    %cst_250 = arith.constant dense<0.000000e+00> : vector<8x32xf32>
    %788 = tpu.matmul %787, %110, %cst_250 {dimension_numbers = #tpu.dot_dimension_numbers<[1], [0], [0], [1], [0, 0, 1, 1], [], []>} : vector<8x32xf32>, vector<32x32xf32>, vector<8x32xf32> -> vector<8x32xf32>
    %cst_251 = arith.constant 9.99999993E-9 : f32
    %789 = vector.broadcast %cst_251 : f32 to vector<8x32xf32>
    %790 = arith.addf %788, %789 : vector<8x32xf32>
    %791 = tpu.reciprocal %790 {approx = true} : vector<8x32xf32> -> vector<8x32xf32>
    %792 = arith.mulf %111, %791 : vector<8x32xf32>
    %793 = arith.mulf %787, %792 : vector<8x32xf32>
    %cst_252 = arith.constant dense<0.000000e+00> : vector<32xf32>
    %794 = vector.multi_reduction <add>, %793, %cst_252 [0] : vector<8x32xf32> to vector<32xf32>
    %795 = vector.shape_cast %794 : vector<32xf32> to vector<1x32xf32>
    %cst_253 = arith.constant 9.99999993E-9 : f32
    %796 = vector.broadcast %cst_253 : f32 to vector<1x32xf32>
    %797 = arith.addf %795, %796 : vector<1x32xf32>
    %798 = tpu.reciprocal %797 {approx = true} : vector<1x32xf32> -> vector<1x32xf32>
    %799 = arith.mulf %115, %798 : vector<1x32xf32>
    %800 = vector.broadcast %799 : vector<1x32xf32> to vector<8x32xf32>
    %801 = arith.mulf %793, %800 : vector<8x32xf32>
    %cst_254 = arith.constant dense<0.000000e+00> : vector<8x32xf32>
    %802 = tpu.matmul %801, %110, %cst_254 {dimension_numbers = #tpu.dot_dimension_numbers<[1], [0], [0], [1], [0, 0, 1, 1], [], []>} : vector<8x32xf32>, vector<32x32xf32>, vector<8x32xf32> -> vector<8x32xf32>
    %cst_255 = arith.constant 9.99999993E-9 : f32
    %803 = vector.broadcast %cst_255 : f32 to vector<8x32xf32>
    %804 = arith.addf %802, %803 : vector<8x32xf32>
    %805 = arith.divf %111, %804 : vector<8x32xf32>
    %806 = arith.mulf %801, %805 : vector<8x32xf32>
    %cst_256 = arith.constant dense<0.000000e+00> : vector<32xf32>
    %807 = vector.multi_reduction <add>, %806, %cst_256 [0] : vector<8x32xf32> to vector<32xf32>
    %808 = vector.shape_cast %807 : vector<32xf32> to vector<1x32xf32>
    %cst_257 = arith.constant 9.99999993E-9 : f32
    %809 = vector.broadcast %cst_257 : f32 to vector<1x32xf32>
    %810 = arith.addf %808, %809 : vector<1x32xf32>
    %811 = arith.divf %115, %810 : vector<1x32xf32>
    %812 = vector.broadcast %811 : vector<1x32xf32> to vector<8x32xf32>
    %813 = arith.mulf %806, %812 : vector<8x32xf32>
    %c0_258 = arith.constant 0 : index
    %c0_259 = arith.constant 0 : index
    %c0_260 = arith.constant 0 : index
    %814 = vector.load %arg15[%c0_258, %c0_259, %c0_260] : memref<1x8x32xf32, #tpu.memory_space<vmem>>, vector<1x8x32xf32>
    %815 = vector.shape_cast %814 : vector<1x8x32xf32> to vector<8x32xf32>
    %816 = vector.shape_cast %813 : vector<8x32xf32> to vector<1x8x32xf32>
    tpu.vector_store %arg15[%c0_258, %c0_259, %c0_260], %816 {strides = array<i32>} : memref<1x8x32xf32, #tpu.memory_space<vmem>>, vector<1x8x32xf32>,
    %c0_261 = arith.constant 0 : index
    %c0_262 = arith.constant 0 : index
    %817 = vector.load %arg13[%c0_261, %c0_262] : memref<32x8xf32, #tpu.memory_space<vmem>>, vector<32x8xf32>
    %cst_263 = arith.constant dense<0.000000e+00> : vector<8x8xf32>
    %818 = tpu.matmul %813, %817, %cst_263 {dimension_numbers = #tpu.dot_dimension_numbers<[1], [0], [0], [1], [0, 0, 1, 1], [], []>} : vector<8x32xf32>, vector<32x8xf32>, vector<8x8xf32> -> vector<8x8xf32>
    %cst_264 = arith.constant dense<0.000000e+00> : vector<8x32xf32>
    %819 = tpu.matmul %818, %109, %cst_264 {dimension_numbers = #tpu.dot_dimension_numbers<[1], [0], [0], [1], [0, 0, 1, 1], [], []>} : vector<8x8xf32>, vector<8x32xf32>, vector<8x32xf32> -> vector<8x32xf32>
    %cst_265 = arith.constant 9.99999993E-9 : f32
    %820 = vector.broadcast %cst_265 : f32 to vector<8x32xf32>
    %821 = arith.addf %819, %820 : vector<8x32xf32>
    %822 = arith.divf %813, %821 : vector<8x32xf32>
    %823 = vector.shape_cast %52 : vector<1x4xf32> to vector<1x4xf32>
    %824 = vector.broadcast %823 : vector<1x4xf32> to vector<8x4xf32>
    %cst_266 = arith.constant dense<0.000000e+00> : vector<8x32xf32>
    %825 = tpu.matmul %824, %108, %cst_266 {dimension_numbers = #tpu.dot_dimension_numbers<[1], [0], [0], [1], [0, 0, 1, 1], [], []>} : vector<8x4xf32>, vector<4x32xf32>, vector<8x32xf32> -> vector<8x32xf32>
    %cst_267 = arith.constant 9.99999993E-9 : f32
    %826 = vector.broadcast %cst_267 : f32 to vector<8x32xf32>
    %827 = arith.addf %822, %826 : vector<8x32xf32>
    %828 = math.log %827 : vector<8x32xf32>
    %cst_268 = arith.constant 9.99999993E-9 : f32
    %829 = vector.broadcast %cst_268 : f32 to vector<8x32xf32>
    %830 = arith.addf %825, %829 : vector<8x32xf32>
    %831 = math.log %830 : vector<8x32xf32>
    %832 = arith.subf %828, %831 : vector<8x32xf32>
    %833 = arith.mulf %813, %832 : vector<8x32xf32>
    %cst_269 = arith.constant dense<0.000000e+00> : vector<8xf32>
    %834 = vector.multi_reduction <add>, %833, %cst_269 [1] : vector<8x32xf32> to vector<8xf32>
    %835 = vector.shape_cast %834 : vector<8xf32> to vector<8x1xf32>
    %836 = arith.addf %60, %68 : vector<8x1xf32>
    %837 = arith.subf %836, %835 : vector<8x1xf32>
    %cst_270 = arith.constant 0.000000e+00 : f32
    %838 = vector.broadcast %cst_270 : f32 to vector<8x1xf32>
    %839 = arith.maximumf %837, %838 : vector<8x1xf32>
    %840 = arith.subf %60, %839 : vector<8x1xf32>
    %cst_271 = arith.constant 0.000000e+00 : f32
    %841 = vector.broadcast %cst_271 : f32 to vector<8x1xf32>
    %842 = arith.maximumf %840, %841 : vector<8x1xf32>
    %843 = arith.subf %68, %839 : vector<8x1xf32>
    %cst_272 = arith.constant 0.000000e+00 : f32
    %844 = vector.broadcast %cst_272 : f32 to vector<8x1xf32>
    %845 = arith.maximumf %843, %844 : vector<8x1xf32>
    %846 = vector.shape_cast %76 : vector<8x1xf32> to vector<1x8x1xf32>
    %cst_273 = arith.constant dense<0.000000e+00> : vector<1xf32>
    %847 = vector.multi_reduction <add>, %846, %cst_273 [1, 2] : vector<1x8x1xf32> to vector<1xf32>
    %848 = vector.shape_cast %847 : vector<1xf32> to vector<1x1x1xf32>
    %849 = vector.extract %848[0, 0, 0] : f32 from vector<1x1x1xf32>
    %cst_274 = arith.constant 1.250000e-01 : f32
    %850 = arith.mulf %849, %cst_274 : f32
    %851 = vector.shape_cast %835 : vector<8x1xf32> to vector<1x8x1xf32>
    %cst_275 = arith.constant dense<0.000000e+00> : vector<1xf32>
    %852 = vector.multi_reduction <add>, %851, %cst_275 [1, 2] : vector<1x8x1xf32> to vector<1xf32>
    %853 = vector.shape_cast %852 : vector<1xf32> to vector<1x1x1xf32>
    %854 = vector.extract %853[0, 0, 0] : f32 from vector<1x1x1xf32>
    %cst_276 = arith.constant 1.250000e-01 : f32
    %855 = arith.mulf %854, %cst_276 : f32
    %856 = arith.subf %850, %855 : f32
    %cst_277 = arith.constant 0.000000e+00 : f32
    %857 = arith.maximumf %856, %cst_277 : f32
    %c0_278 = arith.constant 0 : index
    %c0_279 = arith.constant 0 : index
    %c0_280 = arith.constant 0 : index
    %858 = memref.load %arg16[%c0_278, %c0_279, %c0_280] : memref<1x1x8xf32, #tpu.memory_space<smem>>
    memref.store %855, %arg16[%c0_278, %c0_279, %c0_280] : memref<1x1x8xf32, #tpu.memory_space<smem>>
    %859 = vector.shape_cast %839 : vector<8x1xf32> to vector<1x8x1xf32>
    %cst_281 = arith.constant dense<0.000000e+00> : vector<1xf32>
    %860 = vector.multi_reduction <add>, %859, %cst_281 [1, 2] : vector<1x8x1xf32> to vector<1xf32>
    %861 = vector.shape_cast %860 : vector<1xf32> to vector<1x1x1xf32>
    %862 = vector.extract %861[0, 0, 0] : f32 from vector<1x1x1xf32>
    %cst_282 = arith.constant 1.250000e-01 : f32
    %863 = arith.mulf %862, %cst_282 : f32
    %c0_283 = arith.constant 0 : index
    %c0_284 = arith.constant 0 : index
    %c1 = arith.constant 1 : index
    %864 = memref.load %arg16[%c0_283, %c0_284, %c1] : memref<1x1x8xf32, #tpu.memory_space<smem>>
    memref.store %863, %arg16[%c0_283, %c0_284, %c1] : memref<1x1x8xf32, #tpu.memory_space<smem>>
    %865 = vector.shape_cast %842 : vector<8x1xf32> to vector<1x8x1xf32>
    %cst_285 = arith.constant dense<0.000000e+00> : vector<1xf32>
    %866 = vector.multi_reduction <add>, %865, %cst_285 [1, 2] : vector<1x8x1xf32> to vector<1xf32>
    %867 = vector.shape_cast %866 : vector<1xf32> to vector<1x1x1xf32>
    %868 = vector.extract %867[0, 0, 0] : f32 from vector<1x1x1xf32>
    %cst_286 = arith.constant 1.250000e-01 : f32
    %869 = arith.mulf %868, %cst_286 : f32
    %c0_287 = arith.constant 0 : index
    %c0_288 = arith.constant 0 : index
    %c2 = arith.constant 2 : index
    %870 = memref.load %arg16[%c0_287, %c0_288, %c2] : memref<1x1x8xf32, #tpu.memory_space<smem>>
    memref.store %869, %arg16[%c0_287, %c0_288, %c2] : memref<1x1x8xf32, #tpu.memory_space<smem>>
    %871 = vector.shape_cast %845 : vector<8x1xf32> to vector<1x8x1xf32>
    %cst_289 = arith.constant dense<0.000000e+00> : vector<1xf32>
    %872 = vector.multi_reduction <add>, %871, %cst_289 [1, 2] : vector<1x8x1xf32> to vector<1xf32>
    %873 = vector.shape_cast %872 : vector<1xf32> to vector<1x1x1xf32>
    %874 = vector.extract %873[0, 0, 0] : f32 from vector<1x1x1xf32>
    %cst_290 = arith.constant 1.250000e-01 : f32
    %875 = arith.mulf %874, %cst_290 : f32
    %c0_291 = arith.constant 0 : index
    %c0_292 = arith.constant 0 : index
    %c3 = arith.constant 3 : index
    %876 = memref.load %arg16[%c0_291, %c0_292, %c3] : memref<1x1x8xf32, #tpu.memory_space<smem>>
    memref.store %875, %arg16[%c0_291, %c0_292, %c3] : memref<1x1x8xf32, #tpu.memory_space<smem>>
    %c0_293 = arith.constant 0 : index
    %c0_294 = arith.constant 0 : index
    %c4 = arith.constant 4 : index
    %877 = memref.load %arg16[%c0_293, %c0_294, %c4] : memref<1x1x8xf32, #tpu.memory_space<smem>>
    memref.store %857, %arg16[%c0_293, %c0_294, %c4] : memref<1x1x8xf32, #tpu.memory_space<smem>>
    %cst_295 = arith.constant 0.000000e+00 : f32
    %c0_296 = arith.constant 0 : index
    %c0_297 = arith.constant 0 : index
    %c5 = arith.constant 5 : index
    %878 = memref.load %arg16[%c0_296, %c0_297, %c5] : memref<1x1x8xf32, #tpu.memory_space<smem>>
    memref.store %cst_295, %arg16[%c0_296, %c0_297, %c5] : memref<1x1x8xf32, #tpu.memory_space<smem>>
    %cst_298 = arith.constant 0.000000e+00 : f32
    %c0_299 = arith.constant 0 : index
    %c0_300 = arith.constant 0 : index
    %c6 = arith.constant 6 : index
    %879 = memref.load %arg16[%c0_299, %c0_300, %c6] : memref<1x1x8xf32, #tpu.memory_space<smem>>
    memref.store %cst_298, %arg16[%c0_299, %c0_300, %c6] : memref<1x1x8xf32, #tpu.memory_space<smem>>
    %cst_301 = arith.constant 0.000000e+00 : f32
    %c0_302 = arith.constant 0 : index
    %c0_303 = arith.constant 0 : index
    %c7 = arith.constant 7 : index
    %880 = memref.load %arg16[%c0_302, %c0_303, %c7] : memref<1x1x8xf32, #tpu.memory_space<smem>>
    memref.store %cst_301, %arg16[%c0_302, %c0_303, %c7] : memref<1x1x8xf32, #tpu.memory_space<smem>>
    return
  }
  func.func @transform_0(%arg0: i32) -> (i32, i32, i32) {
    %c0_i32 = arith.constant 0 : i32
    %c0_i32_0 = arith.constant 0 : i32
    %c0_i32_1 = arith.constant 0 : i32
    return %arg0, %c0_i32, %c0_i32_0 : i32, i32, i32
  }
  func.func @transform_1(%arg0: i32) -> (i32, i32) {
    %c0_i32 = arith.constant 0 : i32
    %c0_i32_0 = arith.constant 0 : i32
    %c0_i32_1 = arith.constant 0 : i32
    return %c0_i32, %c0_i32_0 : i32, i32
  }
  func.func @transform_2(%arg0: i32) -> (i32, i32) {
    %c0_i32 = arith.constant 0 : i32
    %c0_i32_0 = arith.constant 0 : i32
    %c0_i32_1 = arith.constant 0 : i32
    return %c0_i32, %c0_i32_0 : i32, i32
  }
  func.func @transform_3(%arg0: i32) -> (i32, i32) {
    %c0_i32 = arith.constant 0 : i32
    %c0_i32_0 = arith.constant 0 : i32
    %c0_i32_1 = arith.constant 0 : i32
    return %c0_i32, %c0_i32_0 : i32, i32
  }
  func.func @transform_4(%arg0: i32) -> (i32, i32) {
    %c0_i32 = arith.constant 0 : i32
    %c0_i32_0 = arith.constant 0 : i32
    %c0_i32_1 = arith.constant 0 : i32
    return %c0_i32, %c0_i32_0 : i32, i32
  }
  func.func @transform_5(%arg0: i32) -> (i32, i32) {
    %c0_i32 = arith.constant 0 : i32
    %c0_i32_0 = arith.constant 0 : i32
    %c0_i32_1 = arith.constant 0 : i32
    return %c0_i32, %c0_i32_0 : i32, i32
  }
  func.func @transform_6(%arg0: i32) -> (i32, i32) {
    %c0_i32 = arith.constant 0 : i32
    %c0_i32_0 = arith.constant 0 : i32
    %c0_i32_1 = arith.constant 0 : i32
    return %c0_i32, %c0_i32_0 : i32, i32
  }
  func.func @transform_7(%arg0: i32) -> (i32, i32) {
    %c0_i32 = arith.constant 0 : i32
    %c0_i32_0 = arith.constant 0 : i32
    %c0_i32_1 = arith.constant 0 : i32
    return %c0_i32, %c0_i32_0 : i32, i32
  }
  func.func @transform_8(%arg0: i32) -> (i32, i32) {
    %c0_i32 = arith.constant 0 : i32
    %c0_i32_0 = arith.constant 0 : i32
    %c0_i32_1 = arith.constant 0 : i32
    return %c0_i32, %c0_i32_0 : i32, i32
  }
  func.func @transform_9(%arg0: i32) -> (i32, i32) {
    %c0_i32 = arith.constant 0 : i32
    %c0_i32_0 = arith.constant 0 : i32
    %c0_i32_1 = arith.constant 0 : i32
    return %c0_i32, %c0_i32_0 : i32, i32
  }
  func.func @transform_10(%arg0: i32) -> (i32, i32) {
    %c0_i32 = arith.constant 0 : i32
    %c0_i32_0 = arith.constant 0 : i32
    %c0_i32_1 = arith.constant 0 : i32
    return %c0_i32, %c0_i32_0 : i32, i32
  }
  func.func @transform_11(%arg0: i32) -> (i32, i32) {
    %c0_i32 = arith.constant 0 : i32
    %c0_i32_0 = arith.constant 0 : i32
    %c0_i32_1 = arith.constant 0 : i32
    return %c0_i32, %c0_i32_0 : i32, i32
  }
  func.func @transform_12(%arg0: i32) -> (i32, i32) {
    %c0_i32 = arith.constant 0 : i32
    %c0_i32_0 = arith.constant 0 : i32
    %c0_i32_1 = arith.constant 0 : i32
    return %c0_i32, %c0_i32_0 : i32, i32
  }
  func.func @transform_13(%arg0: i32) -> (i32, i32) {
    %c0_i32 = arith.constant 0 : i32
    %c0_i32_0 = arith.constant 0 : i32
    %c0_i32_1 = arith.constant 0 : i32
    return %c0_i32, %c0_i32_0 : i32, i32
  }
  func.func @transform_14(%arg0: i32) -> (i32, i32, i32) {
    %c0_i32 = arith.constant 0 : i32
    %c0_i32_0 = arith.constant 0 : i32
    %c0_i32_1 = arith.constant 0 : i32
    return %arg0, %c0_i32, %c0_i32_0 : i32, i32, i32
  }
  func.func @transform_15(%arg0: i32) -> (i32, i32, i32) {
    %c0_i32 = arith.constant 0 : i32
    %c0_i32_0 = arith.constant 0 : i32
    %c0_i32_1 = arith.constant 0 : i32
    return %arg0, %c0_i32, %c0_i32_0 : i32, i32, i32
  }
}

</mosaic_0001>

<llo_original>
// kernel: ce_alignment_information_forward.1
$region0: #{ce_alignment_information_forward.1}
  #allocation0 [shape = 'u32[]', space=smem, size = 0x4, offset = 0x4, fixed_abs, tag = 'smem constant byte address 0x4 - core index']
  #allocation1 [shape = 'u32[144,128]{1,0:T(1,128)}', space=vmem, size = 0x12000, scoped, tag = 'internal scratch']
  %s0 = inlined_call_operand.vmem [shape: f32[1,8,32], index: 0, kind: input, shape index: {}]
  %s1 = inlined_call_operand.hbm [shape: f32[32,160], index: 1, kind: input, shape index: {}]
  %s2 = inlined_call_operand.vmem [shape: f32[1,160], index: 2, kind: input, shape index: {}]
  %s3 = inlined_call_operand.hbm [shape: f32[160,160], index: 3, kind: input, shape index: {}]
  %s4 = inlined_call_operand.vmem [shape: f32[1,160], index: 4, kind: input, shape index: {}]
  %s5 = inlined_call_operand.vmem [shape: f32[160,76], index: 5, kind: input, shape index: {}]
  %s6 = inlined_call_operand.vmem [shape: f32[1,76], index: 6, kind: input, shape index: {}]
  %s7 = inlined_call_operand.vmem [shape: f32[1,4], index: 7, kind: input, shape index: {}]
  %s8 = inlined_call_operand.vmem [shape: f32[64,8], index: 8, kind: input, shape index: {}]
  %s9 = inlined_call_operand.vmem [shape: f32[4,32], index: 9, kind: input, shape index: {}]
  %s10 = inlined_call_operand.vmem [shape: f32[32,32], index: 10, kind: input, shape index: {}, may-alias: {10,13}]
  %s11 = inlined_call_operand.vmem [shape: f32[8,32], index: 11, kind: input, shape index: {}]
  %s12 = inlined_call_operand.vmem [shape: f32[32,8], index: 12, kind: input, shape index: {}]
  %s13 = inlined_call_operand.vmem [shape: f32[32,32], index: 13, kind: input, shape index: {}, may-alias: {10,13}]
  %s14 = inlined_call_operand.vmem [shape: f32[1,8,32], index: 14, kind: output, shape index: {0}]
  %s15 = inlined_call_operand.vmem [shape: f32[1,1,8], index: 15, kind: output, shape index: {1}]
  %16 = xla_tuple %s14, %s15
  %s17 = sld [smem:[#allocation0]]
  $region82: #{ce_alignment_information_forward.1} parent=0
    _
  %s19 = ssub.s32 1, %s17
  %s20 = scalar_select 0, %s19, %s17
  $region1: #{ce_alignment_information_forward.1} parent=0
    #allocation2 [shape = 'u8[32768]{0}', space=vmem, size = 0x8000, scoped, tag = 'input window, operand 1, single buffered']
    #allocation3 [shape = 's32[1]{0}', space=sflag, size = 0x4, scoped, tag = 'scoped memory for ce_alignment_information_forward.1']
    #allocation4 [shape = 's32[1]{0}', space=sflag, size = 0x4, scoped, tag = 'scoped memory for ce_alignment_information_forward.1']
    #allocation5 [shape = 'u8[163840]{0}', space=vmem, size = 0x28000, scoped, tag = 'input window, operand 3, single buffered']
    #allocation6 [shape = 's32[1]{0}', space=sflag, size = 0x4, scoped, tag = 'scoped memory for ce_alignment_information_forward.1']
    #allocation7 [shape = 'u8[512]{0}', space=smem, size = 0x200, scoped, tag = 'output window, operand 1, single buffered']
    %21 = vsyncpa [#allocation3], 0
    %22 = vsyncpa [#allocation6], 0
    %23 = vsyncpa [#allocation4], 0
    // Predicated region
    $region2: #{ce_alignment_information_forward.1} parent=1 // pred_check
      _
    $region3: #{ce_alignment_information_forward.1} parent=1 // pred_check_branch
      %25 = sbr.rel (0) target = $region5
    $region4: #{ce_alignment_information_forward.1} parent=1 // pred_region
      _
    $region5: #{ce_alignment_information_forward.1} parent=1 // pred_fallthru
      _
    // Predicated region
    $region6: #{ce_alignment_information_forward.1} parent=1 // pred_check
      _
    $region7: #{ce_alignment_information_forward.1} parent=1 // pred_check_branch
      %27 = sbr.rel (0) target = $region9
    $region8: #{ce_alignment_information_forward.1} parent=1 // pred_region
      %s29 = ssub.s32 1024, 1024
      %30 = vsyncadd [#allocation3], %s29
      %s31 = sshll.u32 [#allocation2], 4
      %s32 = int_to_ptr.vmem [resolvable:$true] %s31
      %37 = dma.hbm_to_vmem [thread:$0]  %s1, 1024, %s32, [#allocation3], 256, 256, 16
    $region9: #{ce_alignment_information_forward.1} parent=1 // pred_fallthru
      _
    // Predicated region
    $region10: #{ce_alignment_information_forward.1} parent=1 // pred_check
      _
    $region11: #{ce_alignment_information_forward.1} parent=1 // pred_check_branch
      %39 = sbr.rel (0) target = $region13
    $region12: #{ce_alignment_information_forward.1} parent=1 // pred_region
      _
    $region13: #{ce_alignment_information_forward.1} parent=1 // pred_fallthru
      _
    // Predicated region
    $region14: #{ce_alignment_information_forward.1} parent=1 // pred_check
      _
    $region15: #{ce_alignment_information_forward.1} parent=1 // pred_check_branch
      %41 = sbr.rel (0) target = $region17
    $region16: #{ce_alignment_information_forward.1} parent=1 // pred_region
      %s43 = ssub.s32 5120, 5120
      %44 = vsyncadd [#allocation6], %s43
      %s45 = sshll.u32 [#allocation5], 4
      %s46 = int_to_ptr.vmem [resolvable:$true] %s45
      %51 = dma.hbm_to_vmem [thread:$0]  %s3, 5120, %s46, [#allocation6], 256, 256, 16
    $region17: #{ce_alignment_information_forward.1} parent=1 // pred_fallthru
      _
    // Predicated region
    $region18: #{ce_alignment_information_forward.1} parent=1 // pred_check
      _
    $region19: #{ce_alignment_information_forward.1} parent=1 // pred_check_branch
      %53 = sbr.rel (0) target = $region21
    $region20: #{ce_alignment_information_forward.1} parent=1 // pred_region
      _
    $region21: #{ce_alignment_information_forward.1} parent=1 // pred_fallthru
      _
    // Predicated region
    $region22: #{ce_alignment_information_forward.1} parent=1 // pred_check
      _
    $region23: #{ce_alignment_information_forward.1} parent=1 // pred_check_branch
      %55 = sbr.rel (0) target = $region25
    $region24: #{ce_alignment_information_forward.1} parent=1 // pred_region
      _
    $region25: #{ce_alignment_information_forward.1} parent=1 // pred_fallthru
      _
    // Predicated region
    $region26: #{ce_alignment_information_forward.1} parent=1 // pred_check
      _
    $region27: #{ce_alignment_information_forward.1} parent=1 // pred_check_branch
      %57 = sbr.rel (0) target = $region29
    $region28: #{ce_alignment_information_forward.1} parent=1 // pred_region
      _
    $region29: #{ce_alignment_information_forward.1} parent=1 // pred_fallthru
      _
    // Predicated region
    $region30: #{ce_alignment_information_forward.1} parent=1 // pred_check
      _
    $region31: #{ce_alignment_information_forward.1} parent=1 // pred_check_branch
      %59 = sbr.rel (0) target = $region33
    $region32: #{ce_alignment_information_forward.1} parent=1 // pred_region
      _
    $region33: #{ce_alignment_information_forward.1} parent=1 // pred_fallthru
      _
    // Predicated region
    $region34: #{ce_alignment_information_forward.1} parent=1 // pred_check
      _
    $region35: #{ce_alignment_information_forward.1} parent=1 // pred_check_branch
      %61 = sbr.rel (0) target = $region37
    $region36: #{ce_alignment_information_forward.1} parent=1 // pred_region
      _
    $region37: #{ce_alignment_information_forward.1} parent=1 // pred_fallthru
      _
    // Predicated region
    $region38: #{ce_alignment_information_forward.1} parent=1 // pred_check
      _
    $region39: #{ce_alignment_information_forward.1} parent=1 // pred_check_branch
      %63 = sbr.rel (0) target = $region41
    $region40: #{ce_alignment_information_forward.1} parent=1 // pred_region
      _
    $region41: #{ce_alignment_information_forward.1} parent=1 // pred_fallthru
      _
    // Predicated region
    $region42: #{ce_alignment_information_forward.1} parent=1 // pred_check
      _
    $region43: #{ce_alignment_information_forward.1} parent=1 // pred_check_branch
      %65 = sbr.rel (0) target = $region45
    $region44: #{ce_alignment_information_forward.1} parent=1 // pred_region
      _
    $region45: #{ce_alignment_information_forward.1} parent=1 // pred_fallthru
      _
    // Predicated region
    $region46: #{ce_alignment_information_forward.1} parent=1 // pred_check
      _
    $region47: #{ce_alignment_information_forward.1} parent=1 // pred_check_branch
      %67 = sbr.rel (0) target = $region49
    $region48: #{ce_alignment_information_forward.1} parent=1 // pred_region
      _
    $region49: #{ce_alignment_information_forward.1} parent=1 // pred_fallthru
      _
    // Predicated region
    $region50: #{ce_alignment_information_forward.1} parent=1 // pred_check
      _
    $region51: #{ce_alignment_information_forward.1} parent=1 // pred_check_branch
      %69 = sbr.rel (0) target = $region53
    $region52: #{ce_alignment_information_forward.1} parent=1 // pred_region
      _
    $region53: #{ce_alignment_information_forward.1} parent=1 // pred_fallthru
      _
    // Predicated region
    $region54: #{ce_alignment_information_forward.1} parent=1 // pred_check
      _
    $region55: #{ce_alignment_information_forward.1} parent=1 // pred_check_branch
      %71 = sbr.rel (0) target = $region57
    $region56: #{ce_alignment_information_forward.1} parent=1 // pred_region
      _
    $region57: #{ce_alignment_information_forward.1} parent=1 // pred_fallthru
      _
    // Predicated region
    $region58: #{ce_alignment_information_forward.1} parent=1 // pred_check
      _
    $region59: #{ce_alignment_information_forward.1} parent=1 // pred_check_branch
      %73 = sbr.rel (0) target = $region61
    $region60: #{ce_alignment_information_forward.1} parent=1 // pred_region
      %74 = dma.done [#allocation3], 1024
    $region61: #{ce_alignment_information_forward.1} parent=1 // pred_fallthru
      _
    // Predicated region
    $region62: #{ce_alignment_information_forward.1} parent=1 // pred_check
      _
    $region63: #{ce_alignment_information_forward.1} parent=1 // pred_check_branch
      %76 = sbr.rel (0) target = $region65
    $region64: #{ce_alignment_information_forward.1} parent=1 // pred_region
      %77 = dma.done [#allocation6], 5120
    $region65: #{ce_alignment_information_forward.1} parent=1 // pred_fallthru
      _
    %v78 = vld [vmem:[%s0] sm:$0xff]
    %v79 = vld [vmem:[#allocation2] sm:$0xff]
    %v80 = vld [vmem:[#allocation2 + $0x8] sm:$0xff]
    %v81 = vld [vmem:[#allocation2 + $0x10] sm:$0xff]
    %v82 = vld [vmem:[#allocation2 + $0x18] sm:$0xff]
    %v83 = vld [vmem:[#allocation2 + $0x20] sm:$0xff]
    %v84 = vld [vmem:[#allocation2 + $0x28] sm:$0xff]
    %v85 = vld [vmem:[#allocation2 + $0x30] sm:$0xff]
    %v86 = vld [vmem:[#allocation2 + $0x38] sm:$0xff]
    %v87 = vld [vmem:[%s2] sm:$0x3]
    %v89 = vlaneseq
    %v90 = vshrl.u32 %v89, 7
    %v91 = vsub.s32 0, %v90
    %v92 = vrot.slane %v87, %v91
    %v93 = vlaneseq
    %v94 = vshrl.u32 %v93, 7
    %v95 = vsub.s32 1, %v94
    %v96 = vrot.slane %v87, %v95
    %vm99 = vcmask 261120
    %v101 = vsel %vm99, %v78, 0
    %103 = vmatprep.subr.mxu0 %v80
    %104 = vmatpush1.msra.mxu0 %v79
    %105 = vmatprep.subr.mxu0 %v82
    %106 = vmatpush1.msra.mxu0 %v81
    %107 = vmatprep.subr.mxu0 %v84
    %108 = vmatpush1.msra.mxu0 %v83
    %109 = vmatprep.subr.mxu0 %v86
    %110 = vmatpush1.msra.mxu0 %v85
    %111 = vmatprep.subr.mxu0 0.0
    %112 = vmatpush1.msra.mxu0 0.0
    %113 = vmatprep.subr.mxu0 0.0
    %114 = vmatpush1.msra.mxu0 0.0
    %115 = vmatprep.subr.mxu0 0.0
    %116 = vmatpush1.msra.mxu0 0.0
    %117 = vmatprep.subr.mxu0 0.0
    %118 = vmatpush1.msra.mxu0 0.0
    %119 = vmatprep.subr.mxu0 0.0
    %120 = vmatpush1.msra.mxu0 0.0
    %121 = vmatprep.subr.mxu0 0.0
    %122 = vmatpush1.msra.mxu0 0.0
    %123 = vmatprep.subr.mxu0 0.0
    %124 = vmatpush1.msra.mxu0 0.0
    %125 = vmatprep.subr.mxu0 0.0
    %126 = vmatpush1.msra.mxu0 0.0
    %127 = vmatprep.subr.mxu0 0.0
    %128 = vmatpush1.msra.mxu0 0.0
    %129 = vmatprep.subr.mxu0 0.0
    %130 = vmatpush1.msra.mxu0 0.0
    %131 = vmatprep.subr.mxu0 0.0
    %132 = vmatpush1.msra.mxu0 0.0
    %133 = vmatprep.subr.mxu0 0.0
    %134 = vmatpush1.msra.mxu0 0.0
    %135 = vmatprep.subr.mxu0 0.0
    %136 = vmatpush1.msra.mxu0 0.0
    %137 = vmatprep.subr.mxu0 0.0
    %138 = vmatpush1.msra.mxu0 0.0
    %139 = vmatprep.subr.mxu0 0.0
    %140 = vmatpush1.msra.mxu0 0.0
    %141 = vmatprep.subr.mxu0 0.0
    %142 = vmatpush1.msra.mxu0 0.0
    %143 = vmatprep.subr.mxu0 0.0
    %144 = vmatpush1.msra.mxu0 0.0
    %145 = vmatprep.subr.mxu0 0.0
    %146 = vmatpush1.msra.mxu0 0.0
    %147 = vmatprep.subr.mxu0 0.0
    %148 = vmatpush1.msra.mxu0 0.0
    %149 = vmatprep.subr.mxu0 0.0
    %150 = vmatpush1.msra.mxu0 0.0
    %151 = vmatprep.subr.mxu0 0.0
    %152 = vmatpush1.msra.mxu0 0.0
    %153 = vmatprep.subr.mxu0 0.0
    %154 = vmatpush1.msra.mxu0 0.0
    %155 = vmatprep.subr.mxu0 0.0
    %156 = vmatpush1.msra.mxu0 0.0
    %157 = vmatprep.subr.mxu0 0.0
    %158 = vmatpush1.msra.mxu0 0.0
    %159 = vmatprep.subr.mxu0 0.0
    %160 = vmatpush1.msra.mxu0 0.0
    %161 = vmatprep.subr.mxu0 0.0
    %162 = vmatpush1.msra.mxu0 0.0
    %163 = vmatprep.subr.mxu0 0.0
    %164 = vmatpush1.msra.mxu0 0.0
    %165 = vmatprep.subr.mxu0 0.0
    %166 = vmatpush1.msra.mxu0 0.0
    %167 = vmatprep.mubr.f32.mxu0 0.0
    %168 = vmatmul.mubr.f32.gmra.mrb[0].mxu0 %v101
    %v169 = vpop.f32.mrb[0].mxu0
    %v170 = vadd.f32 %v92, %v169
    %v171 = vpop.f32.mrb[0].mxu0
    %v172 = vadd.f32 %v96, %v171
    %173 = vdwg.mxu0
    %v174 = vmax.f32 %v170, 0.0
    %v175 = vmax.f32 %v172, 0.0
    %v176 = vld [vmem:[#allocation5] sm:$0xff]
    %v177 = vld [vmem:[#allocation5 + $0x8] sm:$0xff]
    %v178 = vld [vmem:[#allocation5 + $0x10] sm:$0xff]
    %v179 = vld [vmem:[#allocation5 + $0x18] sm:$0xff]
    %v180 = vld [vmem:[#allocation5 + $0x20] sm:$0xff]
    %v181 = vld [vmem:[#allocation5 + $0x28] sm:$0xff]
    %v182 = vld [vmem:[#allocation5 + $0x30] sm:$0xff]
    %v183 = vld [vmem:[#allocation5 + $0x38] sm:$0xff]
    %v184 = vld [vmem:[#allocation5 + $0x40] sm:$0xff]
    %v185 = vld [vmem:[#allocation5 + $0x48] sm:$0xff]
    %v186 = vld [vmem:[#allocation5 + $0x50] sm:$0xff]
    %v187 = vld [vmem:[#allocation5 + $0x58] sm:$0xff]
    %v188 = vld [vmem:[#allocation5 + $0x60] sm:$0xff]
    %v189 = vld [vmem:[#allocation5 + $0x68] sm:$0xff]
    %v190 = vld [vmem:[#allocation5 + $0x70] sm:$0xff]
    %v191 = vld [vmem:[#allocation5 + $0x78] sm:$0xff]
    %v192 = vld [vmem:[#allocation5 + $0x80] sm:$0xff]
    %v193 = vld [vmem:[#allocation5 + $0x88] sm:$0xff]
    %v194 = vld [vmem:[#allocation5 + $0x90] sm:$0xff]
    %v195 = vld [vmem:[#allocation5 + $0x98] sm:$0xff]
    %v196 = vld [vmem:[#allocation5 + $0xa0] sm:$0xff]
    %v197 = vld [vmem:[#allocation5 + $0xa8] sm:$0xff]
    %v198 = vld [vmem:[#allocation5 + $0xb0] sm:$0xff]
    %v199 = vld [vmem:[#allocation5 + $0xb8] sm:$0xff]
    %v200 = vld [vmem:[#allocation5 + $0xc0] sm:$0xff]
    %v201 = vld [vmem:[#allocation5 + $0xc8] sm:$0xff]
    %v202 = vld [vmem:[#allocation5 + $0xd0] sm:$0xff]
    %v203 = vld [vmem:[#allocation5 + $0xd8] sm:$0xff]
    %v204 = vld [vmem:[#allocation5 + $0xe0] sm:$0xff]
    %v205 = vld [vmem:[#allocation5 + $0xe8] sm:$0xff]
    %v206 = vld [vmem:[#allocation5 + $0xf0] sm:$0xff]
    %v207 = vld [vmem:[#allocation5 + $0xf8] sm:$0xff]
    %v208 = vld [vmem:[#allocation5 + $0x100] sm:$0xff]
    %v209 = vld [vmem:[#allocation5 + $0x108] sm:$0xff]
    %v210 = vld [vmem:[#allocation5 + $0x110] sm:$0xff]
    %v211 = vld [vmem:[#allocation5 + $0x118] sm:$0xff]
    %v212 = vld [vmem:[#allocation5 + $0x120] sm:$0xff]
    %v213 = vld [vmem:[#allocation5 + $0x128] sm:$0xff]
    %v214 = vld [vmem:[#allocation5 + $0x130] sm:$0xff]
    %v215 = vld [vmem:[#allocation5 + $0x138] sm:$0xff]
    %v216 = vld [vmem:[%s4] sm:$0x3]
    %v218 = vlaneseq
    %v219 = vshrl.u32 %v218, 7
    %v220 = vsub.s32 0, %v219
    %v221 = vrot.slane %v216, %v220
    %v222 = vlaneseq
    %v223 = vshrl.u32 %v222, 7
    %v224 = vsub.s32 1, %v223
    %v225 = vrot.slane %v216, %v224
    %v229 = vsel %vm99, %v175, 0
    %231 = vmatprep.subr.mxu0 %v177
    %232 = vmatpush1.msra.mxu0 %v176
    %233 = vmatprep.subr.mxu0 %v179
    %234 = vmatpush1.msra.mxu0 %v178
    %235 = vmatprep.subr.mxu0 %v181
    %236 = vmatpush1.msra.mxu0 %v180
    %237 = vmatprep.subr.mxu0 %v183
    %238 = vmatpush1.msra.mxu0 %v182
    %239 = vmatprep.subr.mxu0 %v185
    %240 = vmatpush1.msra.mxu0 %v184
    %241 = vmatprep.subr.mxu0 %v187
    %242 = vmatpush1.msra.mxu0 %v186
    %243 = vmatprep.subr.mxu0 %v189
    %244 = vmatpush1.msra.mxu0 %v188
    %245 = vmatprep.subr.mxu0 %v191
    %246 = vmatpush1.msra.mxu0 %v190
    %247 = vmatprep.subr.mxu0 %v193
    %248 = vmatpush1.msra.mxu0 %v192
    %249 = vmatprep.subr.mxu0 %v195
    %250 = vmatpush1.msra.mxu0 %v194
    %251 = vmatprep.subr.mxu0 %v197
    %252 = vmatpush1.msra.mxu0 %v196
    %253 = vmatprep.subr.mxu0 %v199
    %254 = vmatpush1.msra.mxu0 %v198
    %255 = vmatprep.subr.mxu0 %v201
    %256 = vmatpush1.msra.mxu0 %v200
    %257 = vmatprep.subr.mxu0 %v203
    %258 = vmatpush1.msra.mxu0 %v202
    %259 = vmatprep.subr.mxu0 %v205
    %260 = vmatpush1.msra.mxu0 %v204
    %261 = vmatprep.subr.mxu0 %v207
    %262 = vmatpush1.msra.mxu0 %v206
    %263 = vmatprep.subr.mxu0 %v209
    %264 = vmatpush1.msra.mxu0 %v208
    %265 = vmatprep.subr.mxu0 %v211
    %266 = vmatpush1.msra.mxu0 %v210
    %267 = vmatprep.subr.mxu0 %v213
    %268 = vmatpush1.msra.mxu0 %v212
    %269 = vmatprep.subr.mxu0 %v215
    %270 = vmatpush1.msra.mxu0 %v214
    %271 = vmatprep.subr.mxu0 0.0
    %272 = vmatpush1.msra.mxu0 0.0
    %273 = vmatprep.subr.mxu0 0.0
    %274 = vmatpush1.msra.mxu0 0.0
    %275 = vmatprep.subr.mxu0 0.0
    %276 = vmatpush1.msra.mxu0 0.0
    %277 = vmatprep.subr.mxu0 0.0
    %278 = vmatpush1.msra.mxu0 0.0
    %279 = vmatprep.subr.mxu0 0.0
    %280 = vmatpush1.msra.mxu0 0.0
    %281 = vmatprep.subr.mxu0 0.0
    %282 = vmatpush1.msra.mxu0 0.0
    %283 = vmatprep.subr.mxu0 0.0
    %284 = vmatpush1.msra.mxu0 0.0
    %285 = vmatprep.subr.mxu0 0.0
    %286 = vmatpush1.msra.mxu0 0.0
    %287 = vmatprep.subr.mxu0 0.0
    %288 = vmatpush1.msra.mxu0 0.0
    %289 = vmatprep.subr.mxu0 0.0
    %290 = vmatpush1.msra.mxu0 0.0
    %291 = vmatprep.subr.mxu0 0.0
    %292 = vmatpush1.msra.mxu0 0.0
    %293 = vmatprep.subr.mxu0 0.0
    %294 = vmatpush1.msra.mxu0 0.0
    %295 = vmatprep.mubr.f32.mxu0 %v229
    %296 = vmatmul.mubr.f32.gmra.mrb[0].mxu0 %v174
    %v297 = vpop.f32.mrb[0].mxu0
    %v298 = vadd.f32 %v221, %v297
    %v299 = vpop.f32.mrb[0].mxu0
    %v300 = vadd.f32 %v225, %v299
    %301 = vdwg.mxu0
    %v302 = vmax.f32 %v298, 0.0
    %v303 = vmax.f32 %v300, 0.0
    %v304 = vld [vmem:[%s5] sm:$0xff]
    %v305 = vld [vmem:[%s5 + $0x8] sm:$0xff]
    %v306 = vld [vmem:[%s5 + $0x10] sm:$0xff]
    %v307 = vld [vmem:[%s5 + $0x18] sm:$0xff]
    %v308 = vld [vmem:[%s5 + $0x20] sm:$0xff]
    %v309 = vld [vmem:[%s5 + $0x28] sm:$0xff]
    %v310 = vld [vmem:[%s5 + $0x30] sm:$0xff]
    %v311 = vld [vmem:[%s5 + $0x38] sm:$0xff]
    %v312 = vld [vmem:[%s5 + $0x40] sm:$0xff]
    %v313 = vld [vmem:[%s5 + $0x48] sm:$0xff]
    %v314 = vld [vmem:[%s5 + $0x50] sm:$0xff]
    %v315 = vld [vmem:[%s5 + $0x58] sm:$0xff]
    %v316 = vld [vmem:[%s5 + $0x60] sm:$0xff]
    %v317 = vld [vmem:[%s5 + $0x68] sm:$0xff]
    %v318 = vld [vmem:[%s5 + $0x70] sm:$0xff]
    %v319 = vld [vmem:[%s5 + $0x78] sm:$0xff]
    %v320 = vld [vmem:[%s5 + $0x80] sm:$0xff]
    %v321 = vld [vmem:[%s5 + $0x88] sm:$0xff]
    %v322 = vld [vmem:[%s5 + $0x90] sm:$0xff]
    %v323 = vld [vmem:[%s5 + $0x98] sm:$0xff]
    %v324 = vld [vmem:[%s6] sm:$0x1]
    %v326 = vlaneseq
    %v327 = vshrl.u32 %v326, 7
    %v328 = vsub.s32 0, %v327
    %v329 = vrot.slane %v324, %v328
    %v332 = vsel %vm99, %v303, 0
    %334 = vmatprep.subr.mxu0 0.0
    %335 = vmatpush1.msra.mxu0 %v304
    %336 = vmatprep.subr.mxu0 0.0
    %337 = vmatpush1.msra.mxu0 %v305
    %338 = vmatprep.subr.mxu0 0.0
    %339 = vmatpush1.msra.mxu0 %v306
    %340 = vmatprep.subr.mxu0 0.0
    %341 = vmatpush1.msra.mxu0 %v307
    %342 = vmatprep.subr.mxu0 0.0
    %343 = vmatpush1.msra.mxu0 %v308
    %344 = vmatprep.subr.mxu0 0.0
    %345 = vmatpush1.msra.mxu0 %v309
    %346 = vmatprep.subr.mxu0 0.0
    %347 = vmatpush1.msra.mxu0 %v310
    %348 = vmatprep.subr.mxu0 0.0
    %349 = vmatpush1.msra.mxu0 %v311
    %350 = vmatprep.subr.mxu0 0.0
    %351 = vmatpush1.msra.mxu0 %v312
    %352 = vmatprep.subr.mxu0 0.0
    %353 = vmatpush1.msra.mxu0 %v313
    %354 = vmatprep.subr.mxu0 0.0
    %355 = vmatpush1.msra.mxu0 %v314
    %356 = vmatprep.subr.mxu0 0.0
    %357 = vmatpush1.msra.mxu0 %v315
    %358 = vmatprep.subr.mxu0 0.0
    %359 = vmatpush1.msra.mxu0 %v316
    %360 = vmatprep.subr.mxu0 0.0
    %361 = vmatpush1.msra.mxu0 %v317
    %362 = vmatprep.subr.mxu0 0.0
    %363 = vmatpush1.msra.mxu0 %v318
    %364 = vmatprep.subr.mxu0 0.0
    %365 = vmatpush1.msra.mxu0 %v319
    %366 = vmatprep.subr.mxu0 0.0
    %367 = vmatpush1.msra.mxu0 %v320
    %368 = vmatprep.subr.mxu0 0.0
    %369 = vmatpush1.msra.mxu0 %v321
    %370 = vmatprep.subr.mxu0 0.0
    %371 = vmatpush1.msra.mxu0 %v322
    %372 = vmatprep.subr.mxu0 0.0
    %373 = vmatpush1.msra.mxu0 %v323
    %374 = vmatprep.subr.mxu0 0.0
    %375 = vmatpush1.msra.mxu0 0.0
    %376 = vmatprep.subr.mxu0 0.0
    %377 = vmatpush1.msra.mxu0 0.0
    %378 = vmatprep.subr.mxu0 0.0
    %379 = vmatpush1.msra.mxu0 0.0
    %380 = vmatprep.subr.mxu0 0.0
    %381 = vmatpush1.msra.mxu0 0.0
    %382 = vmatprep.subr.mxu0 0.0
    %383 = vmatpush1.msra.mxu0 0.0
    %384 = vmatprep.subr.mxu0 0.0
    %385 = vmatpush1.msra.mxu0 0.0
    %386 = vmatprep.subr.mxu0 0.0
    %387 = vmatpush1.msra.mxu0 0.0
    %388 = vmatprep.subr.mxu0 0.0
    %389 = vmatpush1.msra.mxu0 0.0
    %390 = vmatprep.subr.mxu0 0.0
    %391 = vmatpush1.msra.mxu0 0.0
    %392 = vmatprep.subr.mxu0 0.0
    %393 = vmatpush1.msra.mxu0 0.0
    %394 = vmatprep.subr.mxu0 0.0
    %395 = vmatpush1.msra.mxu0 0.0
    %396 = vmatprep.subr.mxu0 0.0
    %397 = vmatpush1.msra.mxu0 0.0
    %398 = vmatprep.mubr.f32.mxu0 %v332
    %399 = vmatmul.mubr.f32.gmra.mrb[0].mxu0 %v302
    %v400 = vpop.f32.mrb[0].mxu0
    %v401 = vadd.f32 %v329, %v400
    %v402 = vpop.f32.mrb[0].mxu0
    %403 = vdwg.mxu0
    %vm404 = vcmask 556544
    %v405 = vsel %vm404, %v401, -inf
    %406 = vmax.xlane.f32.xlu0 %v405
    %v407 = vpop.xlane.xlu0 %406
    %v408 = vsub.f32 %v401, %v407
    %v409 = vmul.f32 %v408, 1.442695
    %v410 = vpow.pop %v409
    %412 = vrot.lane.b32.xlu0 %v410, 64
    %v413 = vpop.permute.xlu0 %412
    %vm415 = vcmask 31744
    %v416 = vsel %vm415, %v413, 0.0
    %417 = vadd.xlane.f32.xlu0 %v416
    %v418 = vpop.xlane.xlu0 %417
    %v419 = vrcp.pop %v418
    %v420 = vmul.f32 %v410, %v419
    %vm421 = vcmask 589344
    %v422 = vsel %vm421, %v401, -inf
    %423 = vmax.xlane.f32.xlu0 %v422
    %v424 = vpop.xlane.xlu0 %423
    %v425 = vsub.f32 %v401, %v424
    %v426 = vmul.f32 %v425, 1.442695
    %v427 = vpow.pop %v426
    %429 = vrot.lane.b32.xlu0 %v427, 60
    %v430 = vpop.permute.xlu0 %429
    %v432 = vsel %vm415, %v430, 0.0
    %433 = vadd.xlane.f32.xlu0 %v432
    %v434 = vpop.xlane.xlu0 %433
    %v435 = vrcp.pop %v434
    %v436 = vmul.f32 %v427, %v435
    %vm437 = vcmask 622144
    %v438 = vsel %vm437, %v401, -inf
    %439 = vmax.xlane.f32.xlu0 %v438
    %v440 = vpop.xlane.xlu0 %439
    %v441 = vsub.f32 %v401, %v440
    %v442 = vmul.f32 %v441, 1.442695
    %v443 = vpow.pop %v442
    %445 = vrot.lane.b32.xlu0 %v443, 56
    %v446 = vpop.permute.xlu0 %445
    %v448 = vsel %vm415, %v446, 0.0
    %449 = vadd.xlane.f32.xlu0 %v448
    %v450 = vpop.xlane.xlu0 %449
    %v451 = vrcp.pop %v450
    %v452 = vmul.f32 %v443, %v451
    %v453 = vld [vmem:[%s7] sm:$0x1]
    %v455 = vlaneseq
    %v456 = vshrl.u32 %v455, 7
    %v457 = vsub.s32 0, %v456
    %v458 = vrot.slane %v453, %v457
    %459 = vrot.lane.b32.xlu0 %v458, 64
    %v460 = vpop.permute.xlu0 %459
    %v462 = vrcp.pop %v460
    %v463 = vmul.f32 %v420, %v462
    %v464 = vadd.f32 %v463, 1e-08
    %v465 = vlog2.pop %v464
    %v466 = vmul.f32 %v465, 0.6931472
    %v467 = vmul.f32 %v420, %v466
    %469 = vrot.lane.b32.xlu0 %v467, 64
    %v470 = vpop.permute.xlu0 %469
    %v472 = vsel %vm415, %v470, 0.0
    %473 = vadd.xlane.f32.xlu0 %v472
    %v474 = vpop.xlane.xlu0 %473
    %475 = vrot.lane.b32.xlu0 %v458, 68
    %v476 = vpop.permute.xlu0 %475
    %v478 = vrcp.pop %v476
    %v479 = vmul.f32 %v436, %v478
    %v480 = vadd.f32 %v479, 1e-08
    %v481 = vlog2.pop %v480
    %v482 = vmul.f32 %v481, 0.6931472
    %v483 = vmul.f32 %v436, %v482
    %485 = vrot.lane.b32.xlu0 %v483, 60
    %v486 = vpop.permute.xlu0 %485
    %v488 = vsel %vm415, %v486, 0.0
    %489 = vadd.xlane.f32.xlu0 %v488
    %v490 = vpop.xlane.xlu0 %489
    %491 = vrot.lane.b32.xlu0 %v458, 72
    %v492 = vpop.permute.xlu0 %491
    %v494 = vrcp.pop %v492
    %v495 = vmul.f32 %v452, %v494
    %v496 = vadd.f32 %v495, 1e-08
    %v497 = vlog2.pop %v496
    %v498 = vmul.f32 %v497, 0.6931472
    %v499 = vmul.f32 %v452, %v498
    %501 = vrot.lane.b32.xlu0 %v499, 56
    %v502 = vpop.permute.xlu0 %501
    %v504 = vsel %vm415, %v502, 0.0
    %505 = vadd.xlane.f32.xlu0 %v504
    %v506 = vpop.xlane.xlu0 %505
    %v507 = vld [vmem:[%s8] sm:$0xff]
    %v508 = vld [vmem:[%s8 + $0x8] sm:$0xff]
    %v509 = vld [vmem:[%s8 + $0x10] sm:$0xff]
    %v510 = vld [vmem:[%s8 + $0x18] sm:$0xff]
    %v511 = vld [vmem:[%s8 + $0x20] sm:$0xff]
    %v512 = vld [vmem:[%s8 + $0x28] sm:$0xff]
    %v513 = vld [vmem:[%s8 + $0x30] sm:$0xff]
    %v514 = vld [vmem:[%s8 + $0x38] sm:$0xff]
    %vm515 = vcmask 523264
    %v517 = vsel %vm515, %v401, 0
    %519 = vmatprep.subr.mxu0 0.0
    %520 = vmatpush1.msra.mxu0 %v507
    %521 = vmatprep.subr.mxu0 0.0
    %522 = vmatpush1.msra.mxu0 %v508
    %523 = vmatprep.subr.mxu0 0.0
    %524 = vmatpush1.msra.mxu0 %v509
    %525 = vmatprep.subr.mxu0 0.0
    %526 = vmatpush1.msra.mxu0 %v510
    %527 = vmatprep.subr.mxu0 0.0
    %528 = vmatpush1.msra.mxu0 %v511
    %529 = vmatprep.subr.mxu0 0.0
    %530 = vmatpush1.msra.mxu0 %v512
    %531 = vmatprep.subr.mxu0 0.0
    %532 = vmatpush1.msra.mxu0 %v513
    %533 = vmatprep.subr.mxu0 0.0
    %534 = vmatpush1.msra.mxu0 %v514
    %535 = vmatprep.subr.mxu0 0.0
    %536 = vmatpush1.msra.mxu0 0.0
    %537 = vmatprep.subr.mxu0 0.0
    %538 = vmatpush1.msra.mxu0 0.0
    %539 = vmatprep.subr.mxu0 0.0
    %540 = vmatpush1.msra.mxu0 0.0
    %541 = vmatprep.subr.mxu0 0.0
    %542 = vmatpush1.msra.mxu0 0.0
    %543 = vmatprep.subr.mxu0 0.0
    %544 = vmatpush1.msra.mxu0 0.0
    %545 = vmatprep.subr.mxu0 0.0
    %546 = vmatpush1.msra.mxu0 0.0
    %547 = vmatprep.subr.mxu0 0.0
    %548 = vmatpush1.msra.mxu0 0.0
    %549 = vmatprep.subr.mxu0 0.0
    %550 = vmatpush1.msra.mxu0 0.0
    %551 = vmatprep.subr.mxu0 0.0
    %552 = vmatpush1.msra.mxu0 0.0
    %553 = vmatprep.subr.mxu0 0.0
    %554 = vmatpush1.msra.mxu0 0.0
    %555 = vmatprep.subr.mxu0 0.0
    %556 = vmatpush1.msra.mxu0 0.0
    %557 = vmatprep.subr.mxu0 0.0
    %558 = vmatpush1.msra.mxu0 0.0
    %559 = vmatprep.subr.mxu0 0.0
    %560 = vmatpush1.msra.mxu0 0.0
    %561 = vmatprep.subr.mxu0 0.0
    %562 = vmatpush1.msra.mxu0 0.0
    %563 = vmatprep.subr.mxu0 0.0
    %564 = vmatpush1.msra.mxu0 0.0
    %565 = vmatprep.subr.mxu0 0.0
    %566 = vmatpush1.msra.mxu0 0.0
    %567 = vmatprep.subr.mxu0 0.0
    %568 = vmatpush1.msra.mxu0 0.0
    %569 = vmatprep.subr.mxu0 0.0
    %570 = vmatpush1.msra.mxu0 0.0
    %571 = vmatprep.subr.mxu0 0.0
    %572 = vmatpush1.msra.mxu0 0.0
    %573 = vmatprep.subr.mxu0 0.0
    %574 = vmatpush1.msra.mxu0 0.0
    %575 = vmatprep.subr.mxu0 0.0
    %576 = vmatpush1.msra.mxu0 0.0
    %577 = vmatprep.subr.mxu0 0.0
    %578 = vmatpush1.msra.mxu0 0.0
    %579 = vmatprep.subr.mxu0 0.0
    %580 = vmatpush1.msra.mxu0 0.0
    %581 = vmatprep.subr.mxu0 0.0
    %582 = vmatpush1.msra.mxu0 0.0
    %583 = vmatprep.mubr.f32.mxu0 0.0
    %584 = vmatmul.mubr.f32.gmra.mrb[0].mxu0 %v517
    %v585 = vpop.f32.mrb[0].mxu0
    %v586 = vadd.f32 0.0, %v585
    %v587 = vpop.f32.mrb[0].mxu0
    %588 = vdwg.mxu0
    %v589 = vmul.f32 %v586, 0.125
    %vm590 = vcmask 64512
    %v592 = vsel %vm590, %v589, 0
    %v595 = vsel %vm590, %v507, 0
    %v598 = vsel %vm590, %v508, 0
    %v601 = vsel %vm590, %v509, 0
    %v604 = vsel %vm590, %v510, 0
    %v607 = vsel %vm590, %v511, 0
    %v610 = vsel %vm590, %v512, 0
    %v613 = vsel %vm590, %v513, 0
    %v616 = vsel %vm590, %v514, 0
    %618 = vmatprep.subr.mxu0 0.0
    %619 = vmatpush1.xpose.msra.mxu0 %v595
    %620 = vmatprep.subr.mxu0 0.0
    %621 = vmatpush1.xpose.msra.mxu0 %v598
    %622 = vmatprep.subr.mxu0 0.0
    %623 = vmatpush1.xpose.msra.mxu0 %v601
    %624 = vmatprep.subr.mxu0 0.0
    %625 = vmatpush1.xpose.msra.mxu0 %v604
    %626 = vmatprep.subr.mxu0 0.0
    %627 = vmatpush1.xpose.msra.mxu0 %v607
    %628 = vmatprep.subr.mxu0 0.0
    %629 = vmatpush1.xpose.msra.mxu0 %v610
    %630 = vmatprep.subr.mxu0 0.0
    %631 = vmatpush1.xpose.msra.mxu0 %v613
    %632 = vmatprep.subr.mxu0 0.0
    %633 = vmatpush1.xpose.msra.mxu0 %v616
    %634 = vmatprep.subr.mxu0 0.0
    %635 = vmatpush1.xpose.msra.mxu0 0.0
    %636 = vmatprep.subr.mxu0 0.0
    %637 = vmatpush1.xpose.msra.mxu0 0.0
    %638 = vmatprep.subr.mxu0 0.0
    %639 = vmatpush1.xpose.msra.mxu0 0.0
    %640 = vmatprep.subr.mxu0 0.0
    %641 = vmatpush1.xpose.msra.mxu0 0.0
    %642 = vmatprep.subr.mxu0 0.0
    %643 = vmatpush1.xpose.msra.mxu0 0.0
    %644 = vmatprep.subr.mxu0 0.0
    %645 = vmatpush1.xpose.msra.mxu0 0.0
    %646 = vmatprep.subr.mxu0 0.0
    %647 = vmatpush1.xpose.msra.mxu0 0.0
    %648 = vmatprep.subr.mxu0 0.0
    %649 = vmatpush1.xpose.msra.mxu0 0.0
    %650 = vmatprep.subr.mxu0 0.0
    %651 = vmatpush1.xpose.msra.mxu0 0.0
    %652 = vmatprep.subr.mxu0 0.0
    %653 = vmatpush1.xpose.msra.mxu0 0.0
    %654 = vmatprep.subr.mxu0 0.0
    %655 = vmatpush1.xpose.msra.mxu0 0.0
    %656 = vmatprep.subr.mxu0 0.0
    %657 = vmatpush1.xpose.msra.mxu0 0.0
    %658 = vmatprep.subr.mxu0 0.0
    %659 = vmatpush1.xpose.msra.mxu0 0.0
    %660 = vmatprep.subr.mxu0 0.0
    %661 = vmatpush1.xpose.msra.mxu0 0.0
    %662 = vmatprep.subr.mxu0 0.0
    %663 = vmatpush1.xpose.msra.mxu0 0.0
    %664 = vmatprep.subr.mxu0 0.0
    %665 = vmatpush1.xpose.msra.mxu0 0.0
    %666 = vmatprep.subr.mxu0 0.0
    %667 = vmatpush1.xpose.msra.mxu0 0.0
    %668 = vmatprep.subr.mxu0 0.0
    %669 = vmatpush1.xpose.msra.mxu0 0.0
    %670 = vmatprep.subr.mxu0 0.0
    %671 = vmatpush1.xpose.msra.mxu0 0.0
    %672 = vmatprep.subr.mxu0 0.0
    %673 = vmatpush1.xpose.msra.mxu0 0.0
    %674 = vmatprep.subr.mxu0 0.0
    %675 = vmatpush1.xpose.msra.mxu0 0.0
    %676 = vmatprep.subr.mxu0 0.0
    %677 = vmatpush1.xpose.msra.mxu0 0.0
    %678 = vmatprep.subr.mxu0 0.0
    %679 = vmatpush1.xpose.msra.mxu0 0.0
    %680 = vmatprep.subr.mxu0 0.0
    %681 = vmatpush1.xpose.msra.mxu0 0.0
    %682 = vmatprep.mubr.f32.mxu0 0.0
    %683 = vmatmul.mubr.f32.gmra.mrb[0].mxu0 %v592
    %v684 = vpop.f32.mrb[0].mxu0
    %v685 = vadd.f32 0.0, %v684
    %v686 = vpop.f32.mrb[0].mxu0
    %687 = vdwg.mxu0
    %v688 = vsub.f32 %v401, %v685
    %v689 = vmul.f32 %v688, %v688
    %v691 = vsel %vm515, %v689, 0
    %693 = vmatprep.subr.mxu0 0.0
    %694 = vmatpush1.msra.mxu0 %v507
    %695 = vmatprep.subr.mxu0 0.0
    %696 = vmatpush1.msra.mxu0 %v508
    %697 = vmatprep.subr.mxu0 0.0
    %698 = vmatpush1.msra.mxu0 %v509
    %699 = vmatprep.subr.mxu0 0.0
    %700 = vmatpush1.msra.mxu0 %v510
    %701 = vmatprep.subr.mxu0 0.0
    %702 = vmatpush1.msra.mxu0 %v511
    %703 = vmatprep.subr.mxu0 0.0
    %704 = vmatpush1.msra.mxu0 %v512
    %705 = vmatprep.subr.mxu0 0.0
    %706 = vmatpush1.msra.mxu0 %v513
    %707 = vmatprep.subr.mxu0 0.0
    %708 = vmatpush1.msra.mxu0 %v514
    %709 = vmatprep.subr.mxu0 0.0
    %710 = vmatpush1.msra.mxu0 0.0
    %711 = vmatprep.subr.mxu0 0.0
    %712 = vmatpush1.msra.mxu0 0.0
    %713 = vmatprep.subr.mxu0 0.0
    %714 = vmatpush1.msra.mxu0 0.0
    %715 = vmatprep.subr.mxu0 0.0
    %716 = vmatpush1.msra.mxu0 0.0
    %717 = vmatprep.subr.mxu0 0.0
    %718 = vmatpush1.msra.mxu0 0.0
    %719 = vmatprep.subr.mxu0 0.0
    %720 = vmatpush1.msra.mxu0 0.0
    %721 = vmatprep.subr.mxu0 0.0
    %722 = vmatpush1.msra.mxu0 0.0
    %723 = vmatprep.subr.mxu0 0.0
    %724 = vmatpush1.msra.mxu0 0.0
    %725 = vmatprep.subr.mxu0 0.0
    %726 = vmatpush1.msra.mxu0 0.0
    %727 = vmatprep.subr.mxu0 0.0
    %728 = vmatpush1.msra.mxu0 0.0
    %729 = vmatprep.subr.mxu0 0.0
    %730 = vmatpush1.msra.mxu0 0.0
    %731 = vmatprep.subr.mxu0 0.0
    %732 = vmatpush1.msra.mxu0 0.0
    %733 = vmatprep.subr.mxu0 0.0
    %734 = vmatpush1.msra.mxu0 0.0
    %735 = vmatprep.subr.mxu0 0.0
    %736 = vmatpush1.msra.mxu0 0.0
    %737 = vmatprep.subr.mxu0 0.0
    %738 = vmatpush1.msra.mxu0 0.0
    %739 = vmatprep.subr.mxu0 0.0
    %740 = vmatpush1.msra.mxu0 0.0
    %741 = vmatprep.subr.mxu0 0.0
    %742 = vmatpush1.msra.mxu0 0.0
    %743 = vmatprep.subr.mxu0 0.0
    %744 = vmatpush1.msra.mxu0 0.0
    %745 = vmatprep.subr.mxu0 0.0
    %746 = vmatpush1.msra.mxu0 0.0
    %747 = vmatprep.subr.mxu0 0.0
    %748 = vmatpush1.msra.mxu0 0.0
    %749 = vmatprep.subr.mxu0 0.0
    %750 = vmatpush1.msra.mxu0 0.0
    %751 = vmatprep.subr.mxu0 0.0
    %752 = vmatpush1.msra.mxu0 0.0
    %753 = vmatprep.subr.mxu0 0.0
    %754 = vmatpush1.msra.mxu0 0.0
    %755 = vmatprep.subr.mxu0 0.0
    %756 = vmatpush1.msra.mxu0 0.0
    %757 = vmatprep.mubr.f32.mxu0 0.0
    %758 = vmatmul.mubr.f32.gmra.mrb[0].mxu0 %v691
    %v759 = vpop.f32.mrb[0].mxu0
    %v760 = vadd.f32 0.0, %v759
    %v761 = vpop.f32.mrb[0].mxu0
    %762 = vdwg.mxu0
    %v763 = vmul.f32 %v760, 0.14285715
    %v764 = vadd.f32 %v763, 1e-08
    %v765 = vrsqrt.pop %v764
    %v767 = vsel %vm590, %v765, 0
    %769 = vmatprep.subr.mxu0 0.0
    %770 = vmatpush1.xpose.msra.mxu0 %v595
    %771 = vmatprep.subr.mxu0 0.0
    %772 = vmatpush1.xpose.msra.mxu0 %v598
    %773 = vmatprep.subr.mxu0 0.0
    %774 = vmatpush1.xpose.msra.mxu0 %v601
    %775 = vmatprep.subr.mxu0 0.0
    %776 = vmatpush1.xpose.msra.mxu0 %v604
    %777 = vmatprep.subr.mxu0 0.0
    %778 = vmatpush1.xpose.msra.mxu0 %v607
    %779 = vmatprep.subr.mxu0 0.0
    %780 = vmatpush1.xpose.msra.mxu0 %v610
    %781 = vmatprep.subr.mxu0 0.0
    %782 = vmatpush1.xpose.msra.mxu0 %v613
    %783 = vmatprep.subr.mxu0 0.0
    %784 = vmatpush1.xpose.msra.mxu0 %v616
    %785 = vmatprep.subr.mxu0 0.0
    %786 = vmatpush1.xpose.msra.mxu0 0.0
    %787 = vmatprep.subr.mxu0 0.0
    %788 = vmatpush1.xpose.msra.mxu0 0.0
    %789 = vmatprep.subr.mxu0 0.0
    %790 = vmatpush1.xpose.msra.mxu0 0.0
    %791 = vmatprep.subr.mxu0 0.0
    %792 = vmatpush1.xpose.msra.mxu0 0.0
    %793 = vmatprep.subr.mxu0 0.0
    %794 = vmatpush1.xpose.msra.mxu0 0.0
    %795 = vmatprep.subr.mxu0 0.0
    %796 = vmatpush1.xpose.msra.mxu0 0.0
    %797 = vmatprep.subr.mxu0 0.0
    %798 = vmatpush1.xpose.msra.mxu0 0.0
    %799 = vmatprep.subr.mxu0 0.0
    %800 = vmatpush1.xpose.msra.mxu0 0.0
    %801 = vmatprep.subr.mxu0 0.0
    %802 = vmatpush1.xpose.msra.mxu0 0.0
    %803 = vmatprep.subr.mxu0 0.0
    %804 = vmatpush1.xpose.msra.mxu0 0.0
    %805 = vmatprep.subr.mxu0 0.0
    %806 = vmatpush1.xpose.msra.mxu0 0.0
    %807 = vmatprep.subr.mxu0 0.0
    %808 = vmatpush1.xpose.msra.mxu0 0.0
    %809 = vmatprep.subr.mxu0 0.0
    %810 = vmatpush1.xpose.msra.mxu0 0.0
    %811 = vmatprep.subr.mxu0 0.0
    %812 = vmatpush1.xpose.msra.mxu0 0.0
    %813 = vmatprep.subr.mxu0 0.0
    %814 = vmatpush1.xpose.msra.mxu0 0.0
    %815 = vmatprep.subr.mxu0 0.0
    %816 = vmatpush1.xpose.msra.mxu0 0.0
    %817 = vmatprep.subr.mxu0 0.0
    %818 = vmatpush1.xpose.msra.mxu0 0.0
    %819 = vmatprep.subr.mxu0 0.0
    %820 = vmatpush1.xpose.msra.mxu0 0.0
    %821 = vmatprep.subr.mxu0 0.0
    %822 = vmatpush1.xpose.msra.mxu0 0.0
    %823 = vmatprep.subr.mxu0 0.0
    %824 = vmatpush1.xpose.msra.mxu0 0.0
    %825 = vmatprep.subr.mxu0 0.0
    %826 = vmatpush1.xpose.msra.mxu0 0.0
    %827 = vmatprep.subr.mxu0 0.0
    %828 = vmatpush1.xpose.msra.mxu0 0.0
    %829 = vmatprep.subr.mxu0 0.0
    %830 = vmatpush1.xpose.msra.mxu0 0.0
    %831 = vmatprep.subr.mxu0 0.0
    %832 = vmatpush1.xpose.msra.mxu0 0.0
    %833 = vmatprep.mubr.f32.mxu0 0.0
    %834 = vmatmul.mubr.f32.gmra.mrb[0].mxu0 %v767
    %v835 = vpop.f32.mrb[0].mxu0
    %v836 = vadd.f32 0.0, %v835
    %v837 = vpop.f32.mrb[0].mxu0
    %838 = vdwg.mxu0
    %v839 = vmul.f32 %v688, %v836
    %v840 = vld [vmem:[%s12] sm:$0xff]
    %v841 = vld [vmem:[%s12 + $0x8] sm:$0xff]
    %v842 = vld [vmem:[%s12 + $0x10] sm:$0xff]
    %v843 = vld [vmem:[%s12 + $0x18] sm:$0xff]
    %845 = vrot.lane.b32.xlu0 %v839, 96
    %v846 = vpop.permute.xlu0 %845
    %v849 = vsel %vm590, %v840, 0
    %v852 = vsel %vm590, %v841, 0
    %v855 = vsel %vm590, %v842, 0
    %v858 = vsel %vm590, %v843, 0
    %860 = vmatprep.subr.mxu0 0.0
    %861 = vmatpush1.msra.mxu0 %v846
    %862 = vmatprep.subr.mxu0 0.0
    %863 = vmatpush1.msra.mxu0 0.0
    %864 = vmatprep.subr.mxu0 0.0
    %865 = vmatpush1.msra.mxu0 0.0
    %866 = vmatprep.subr.mxu0 0.0
    %867 = vmatpush1.msra.mxu0 0.0
    %868 = vmatprep.subr.mxu0 0.0
    %869 = vmatpush1.msra.mxu0 0.0
    %870 = vmatprep.subr.mxu0 0.0
    %871 = vmatpush1.msra.mxu0 0.0
    %872 = vmatprep.subr.mxu0 0.0
    %873 = vmatpush1.msra.mxu0 0.0
    %874 = vmatprep.subr.mxu0 0.0
    %875 = vmatpush1.msra.mxu0 0.0
    %876 = vmatprep.subr.mxu0 0.0
    %877 = vmatpush1.msra.mxu0 0.0
    %878 = vmatprep.subr.mxu0 0.0
    %879 = vmatpush1.msra.mxu0 0.0
    %880 = vmatprep.subr.mxu0 0.0
    %881 = vmatpush1.msra.mxu0 0.0
    %882 = vmatprep.subr.mxu0 0.0
    %883 = vmatpush1.msra.mxu0 0.0
    %884 = vmatprep.subr.mxu0 0.0
    %885 = vmatpush1.msra.mxu0 0.0
    %886 = vmatprep.subr.mxu0 0.0
    %887 = vmatpush1.msra.mxu0 0.0
    %888 = vmatprep.subr.mxu0 0.0
    %889 = vmatpush1.msra.mxu0 0.0
    %890 = vmatprep.subr.mxu0 0.0
    %891 = vmatpush1.msra.mxu0 0.0
    %892 = vmatprep.subr.mxu0 0.0
    %893 = vmatpush1.msra.mxu0 0.0
    %894 = vmatprep.subr.mxu0 0.0
    %895 = vmatpush1.msra.mxu0 0.0
    %896 = vmatprep.subr.mxu0 0.0
    %897 = vmatpush1.msra.mxu0 0.0
    %898 = vmatprep.subr.mxu0 0.0
    %899 = vmatpush1.msra.mxu0 0.0
    %900 = vmatprep.subr.mxu0 0.0
    %901 = vmatpush1.msra.mxu0 0.0
    %902 = vmatprep.subr.mxu0 0.0
    %903 = vmatpush1.msra.mxu0 0.0
    %904 = vmatprep.subr.mxu0 0.0
    %905 = vmatpush1.msra.mxu0 0.0
    %906 = vmatprep.subr.mxu0 0.0
    %907 = vmatpush1.msra.mxu0 0.0
    %908 = vmatprep.subr.mxu0 0.0
    %909 = vmatpush1.msra.mxu0 0.0
    %910 = vmatprep.subr.mxu0 0.0
    %911 = vmatpush1.msra.mxu0 0.0
    %912 = vmatprep.subr.mxu0 0.0
    %913 = vmatpush1.msra.mxu0 0.0
    %914 = vmatprep.subr.mxu0 0.0
    %915 = vmatpush1.msra.mxu0 0.0
    %916 = vmatprep.subr.mxu0 0.0
    %917 = vmatpush1.msra.mxu0 0.0
    %918 = vmatprep.subr.mxu0 0.0
    %919 = vmatpush1.msra.mxu0 0.0
    %920 = vmatprep.subr.mxu0 0.0
    %921 = vmatpush1.msra.mxu0 0.0
    %922 = vmatprep.subr.mxu0 0.0
    %923 = vmatpush1.msra.mxu0 0.0
    %924 = vmatprep.mubr.f32.mxu0 0.0
    %925 = vmatmul.mubr.f32.gmra.mrb[0].mxu0 %v849
    %v926 = vpop.f32.mrb[0].mxu0
    %v927 = vadd.f32 0.0, %v926
    %v928 = vpop.f32.mrb[0].mxu0
    %929 = vmatprep.mubr.f32.mxu0 0.0
    %930 = vmatmul.mubr.f32.gmra.mrb[0].mxu0 %v852
    %v931 = vpop.f32.mrb[0].mxu0
    %v932 = vadd.f32 0.0, %v931
    %v933 = vpop.f32.mrb[0].mxu0
    %934 = vmatprep.mubr.f32.mxu0 0.0
    %935 = vmatmul.mubr.f32.gmra.mrb[0].mxu0 %v855
    %v936 = vpop.f32.mrb[0].mxu0
    %v937 = vadd.f32 0.0, %v936
    %v938 = vpop.f32.mrb[0].mxu0
    %939 = vmatprep.mubr.f32.mxu0 0.0
    %940 = vmatmul.mubr.f32.gmra.mrb[0].mxu0 %v858
    %v941 = vpop.f32.mrb[0].mxu0
    %v942 = vadd.f32 0.0, %v941
    %v943 = vpop.f32.mrb[0].mxu0
    %944 = vdwg.mxu0
    %v945 = vld [vmem:[%s13] sm:$0xff]
    %v946 = vld [vmem:[%s13 + $0x8] sm:$0xff]
    %v947 = vld [vmem:[%s13 + $0x10] sm:$0xff]
    %v948 = vld [vmem:[%s13 + $0x18] sm:$0xff]
    %v949 = vmul.f32 %v927, %v945
    %v950 = vmul.f32 %v932, %v946
    %v951 = vmul.f32 %v937, %v947
    %v952 = vmul.f32 %v942, %v948
    %v953 = vsel %vm99, %v839, 0
    %v956 = vsel %vm99, %v949, 0
    %v959 = vsel %vm99, %v950, 0
    %v962 = vsel %vm99, %v951, 0
    %v965 = vsel %vm99, %v952, 0
    %967 = vmatprep.subr.mxu0 0.0
    %968 = vmatpush1.xpose.msra.mxu0 %v956
    %969 = vmatprep.subr.mxu0 0.0
    %970 = vmatpush1.xpose.msra.mxu0 %v959
    %971 = vmatprep.subr.mxu0 0.0
    %972 = vmatpush1.xpose.msra.mxu0 %v962
    %973 = vmatprep.subr.mxu0 0.0
    %974 = vmatpush1.xpose.msra.mxu0 %v965
    %975 = vmatprep.subr.mxu0 0.0
    %976 = vmatpush1.xpose.msra.mxu0 0.0
    %977 = vmatprep.subr.mxu0 0.0
    %978 = vmatpush1.xpose.msra.mxu0 0.0
    %979 = vmatprep.subr.mxu0 0.0
    %980 = vmatpush1.xpose.msra.mxu0 0.0
    %981 = vmatprep.subr.mxu0 0.0
    %982 = vmatpush1.xpose.msra.mxu0 0.0
    %983 = vmatprep.subr.mxu0 0.0
    %984 = vmatpush1.xpose.msra.mxu0 0.0
    %985 = vmatprep.subr.mxu0 0.0
    %986 = vmatpush1.xpose.msra.mxu0 0.0
    %987 = vmatprep.subr.mxu0 0.0
    %988 = vmatpush1.xpose.msra.mxu0 0.0
    %989 = vmatprep.subr.mxu0 0.0
    %990 = vmatpush1.xpose.msra.mxu0 0.0
    %991 = vmatprep.subr.mxu0 0.0
    %992 = vmatpush1.xpose.msra.mxu0 0.0
    %993 = vmatprep.subr.mxu0 0.0
    %994 = vmatpush1.xpose.msra.mxu0 0.0
    %995 = vmatprep.subr.mxu0 0.0
    %996 = vmatpush1.xpose.msra.mxu0 0.0
    %997 = vmatprep.subr.mxu0 0.0
    %998 = vmatpush1.xpose.msra.mxu0 0.0
    %999 = vmatprep.subr.mxu0 0.0
    %1000 = vmatpush1.xpose.msra.mxu0 0.0
    %1001 = vmatprep.subr.mxu0 0.0
    %1002 = vmatpush1.xpose.msra.mxu0 0.0
    %1003 = vmatprep.subr.mxu0 0.0
    %1004 = vmatpush1.xpose.msra.mxu0 0.0
    %1005 = vmatprep.subr.mxu0 0.0
    %1006 = vmatpush1.xpose.msra.mxu0 0.0
    %1007 = vmatprep.subr.mxu0 0.0
    %1008 = vmatpush1.xpose.msra.mxu0 0.0
    %1009 = vmatprep.subr.mxu0 0.0
    %1010 = vmatpush1.xpose.msra.mxu0 0.0
    %1011 = vmatprep.subr.mxu0 0.0
    %1012 = vmatpush1.xpose.msra.mxu0 0.0
    %1013 = vmatprep.subr.mxu0 0.0
    %1014 = vmatpush1.xpose.msra.mxu0 0.0
    %1015 = vmatprep.subr.mxu0 0.0
    %1016 = vmatpush1.xpose.msra.mxu0 0.0
    %1017 = vmatprep.subr.mxu0 0.0
    %1018 = vmatpush1.xpose.msra.mxu0 0.0
    %1019 = vmatprep.subr.mxu0 0.0
    %1020 = vmatpush1.xpose.msra.mxu0 0.0
    %1021 = vmatprep.subr.mxu0 0.0
    %1022 = vmatpush1.xpose.msra.mxu0 0.0
    %1023 = vmatprep.subr.mxu0 0.0
    %1024 = vmatpush1.xpose.msra.mxu0 0.0
    %1025 = vmatprep.subr.mxu0 0.0
    %1026 = vmatpush1.xpose.msra.mxu0 0.0
    %1027 = vmatprep.subr.mxu0 0.0
    %1028 = vmatpush1.xpose.msra.mxu0 0.0
    %1029 = vmatprep.subr.mxu0 0.0
    %1030 = vmatpush1.xpose.msra.mxu0 0.0
    %1031 = vmatprep.mubr.f32.mxu0 0.0
    %1032 = vmatmul.mubr.f32.gmra.mrb[0].mxu0 %v953
    %v1033 = vpop.f32.mrb[0].mxu0
    %v1034 = vadd.f32 0.0, %v1033
    %v1035 = vpop.f32.mrb[0].mxu0
    %1036 = vdwg.mxu0
    %v1037 = vmul.f32 %v1034, 0.35355338
    %v1038 = vsel %vm99, %v1037, -inf
    %1039 = vmax.xlane.f32.xlu0 %v1038
    %v1040 = vpop.xlane.xlu0 %1039
    %v1041 = vrot.slane %v1040, 4
    %v1042 = vmax.f32 %v1040, %v1041
    %v1043 = vrot.slane %v1042, 2
    %v1044 = vmax.f32 %v1042, %v1043
    %v1045 = vrot.slane %v1044, 1
    %v1046 = vmax.f32 %v1044, %v1045
    %s1047 = vtos %v1046
    %v1048 = vstv %s1047
    %v1049 = vsub.f32 %v1037, %v1048
    %v1050 = vmul.f32 %v1049, 1.442695
    %v1051 = vpow.pop %v1050
    %v1052 = vld [vmem:[%s9] sm:$0xf]
    %v1053 = vld [vmem:[%s11] sm:$0xff]
    %v1054 = vld [vmem:[%s10] sm:$0xff]
    %v1055 = vld [vmem:[%s10 + $0x8] sm:$0xff]
    %v1056 = vld [vmem:[%s10 + $0x10] sm:$0xff]
    %v1057 = vld [vmem:[%s10 + $0x18] sm:$0xff]
    %1059 = vrot.lane.b32.xlu0 %v420, 64
    %v1060 = vpop.permute.xlu0 %1059
    %v1061 = vsel %vm415, %v1060, 0
    %vm1063 = vcmask 1043456
    %v1065 = vsel %vm1063, %v1052, 0
    %1067 = vmatprep.subr.mxu0 0.0
    %1068 = vmatpush1.msra.mxu0 %v1065
    %1069 = vmatprep.subr.mxu0 0.0
    %1070 = vmatpush1.msra.mxu0 0.0
    %1071 = vmatprep.subr.mxu0 0.0
    %1072 = vmatpush1.msra.mxu0 0.0
    %1073 = vmatprep.subr.mxu0 0.0
    %1074 = vmatpush1.msra.mxu0 0.0
    %1075 = vmatprep.subr.mxu0 0.0
    %1076 = vmatpush1.msra.mxu0 0.0
    %1077 = vmatprep.subr.mxu0 0.0
    %1078 = vmatpush1.msra.mxu0 0.0
    %1079 = vmatprep.subr.mxu0 0.0
    %1080 = vmatpush1.msra.mxu0 0.0
    %1081 = vmatprep.subr.mxu0 0.0
    %1082 = vmatpush1.msra.mxu0 0.0
    %1083 = vmatprep.subr.mxu0 0.0
    %1084 = vmatpush1.msra.mxu0 0.0
    %1085 = vmatprep.subr.mxu0 0.0
    %1086 = vmatpush1.msra.mxu0 0.0
    %1087 = vmatprep.subr.mxu0 0.0
    %1088 = vmatpush1.msra.mxu0 0.0
    %1089 = vmatprep.subr.mxu0 0.0
    %1090 = vmatpush1.msra.mxu0 0.0
    %1091 = vmatprep.subr.mxu0 0.0
    %1092 = vmatpush1.msra.mxu0 0.0
    %1093 = vmatprep.subr.mxu0 0.0
    %1094 = vmatpush1.msra.mxu0 0.0
    %1095 = vmatprep.subr.mxu0 0.0
    %1096 = vmatpush1.msra.mxu0 0.0
    %1097 = vmatprep.subr.mxu0 0.0
    %1098 = vmatpush1.msra.mxu0 0.0
    %1099 = vmatprep.subr.mxu0 0.0
    %1100 = vmatpush1.msra.mxu0 0.0
    %1101 = vmatprep.subr.mxu0 0.0
    %1102 = vmatpush1.msra.mxu0 0.0
    %1103 = vmatprep.subr.mxu0 0.0
    %1104 = vmatpush1.msra.mxu0 0.0
    %1105 = vmatprep.subr.mxu0 0.0
    %1106 = vmatpush1.msra.mxu0 0.0
    %1107 = vmatprep.subr.mxu0 0.0
    %1108 = vmatpush1.msra.mxu0 0.0
    %1109 = vmatprep.subr.mxu0 0.0
    %1110 = vmatpush1.msra.mxu0 0.0
    %1111 = vmatprep.subr.mxu0 0.0
    %1112 = vmatpush1.msra.mxu0 0.0
    %1113 = vmatprep.subr.mxu0 0.0
    %1114 = vmatpush1.msra.mxu0 0.0
    %1115 = vmatprep.subr.mxu0 0.0
    %1116 = vmatpush1.msra.mxu0 0.0
    %1117 = vmatprep.subr.mxu0 0.0
    %1118 = vmatpush1.msra.mxu0 0.0
    %1119 = vmatprep.subr.mxu0 0.0
    %1120 = vmatpush1.msra.mxu0 0.0
    %1121 = vmatprep.subr.mxu0 0.0
    %1122 = vmatpush1.msra.mxu0 0.0
    %1123 = vmatprep.subr.mxu0 0.0
    %1124 = vmatpush1.msra.mxu0 0.0
    %1125 = vmatprep.subr.mxu0 0.0
    %1126 = vmatpush1.msra.mxu0 0.0
    %1127 = vmatprep.subr.mxu0 0.0
    %1128 = vmatpush1.msra.mxu0 0.0
    %1129 = vmatprep.subr.mxu0 0.0
    %1130 = vmatpush1.msra.mxu0 0.0
    %1131 = vmatprep.mubr.f32.mxu0 0.0
    %1132 = vmatmul.mubr.f32.gmra.mrb[0].mxu0 %v1061
    %v1133 = vpop.f32.mrb[0].mxu0
    %v1134 = vadd.f32 0.0, %v1133
    %v1135 = vpop.f32.mrb[0].mxu0
    %1136 = vdwg.mxu0
    %1138 = vrot.lane.b32.xlu0 %v436, 60
    %v1139 = vpop.permute.xlu0 %1138
    %v1140 = vsel %vm415, %v1139, 0
    %1142 = vmatprep.subr.mxu0 0.0
    %1143 = vmatpush1.msra.mxu0 %v1065
    %1144 = vmatprep.subr.mxu0 0.0
    %1145 = vmatpush1.msra.mxu0 0.0
    %1146 = vmatprep.subr.mxu0 0.0
    %1147 = vmatpush1.msra.mxu0 0.0
    %1148 = vmatprep.subr.mxu0 0.0
    %1149 = vmatpush1.msra.mxu0 0.0
    %1150 = vmatprep.subr.mxu0 0.0
    %1151 = vmatpush1.msra.mxu0 0.0
    %1152 = vmatprep.subr.mxu0 0.0
    %1153 = vmatpush1.msra.mxu0 0.0
    %1154 = vmatprep.subr.mxu0 0.0
    %1155 = vmatpush1.msra.mxu0 0.0
    %1156 = vmatprep.subr.mxu0 0.0
    %1157 = vmatpush1.msra.mxu0 0.0
    %1158 = vmatprep.subr.mxu0 0.0
    %1159 = vmatpush1.msra.mxu0 0.0
    %1160 = vmatprep.subr.mxu0 0.0
    %1161 = vmatpush1.msra.mxu0 0.0
    %1162 = vmatprep.subr.mxu0 0.0
    %1163 = vmatpush1.msra.mxu0 0.0
    %1164 = vmatprep.subr.mxu0 0.0
    %1165 = vmatpush1.msra.mxu0 0.0
    %1166 = vmatprep.subr.mxu0 0.0
    %1167 = vmatpush1.msra.mxu0 0.0
    %1168 = vmatprep.subr.mxu0 0.0
    %1169 = vmatpush1.msra.mxu0 0.0
    %1170 = vmatprep.subr.mxu0 0.0
    %1171 = vmatpush1.msra.mxu0 0.0
    %1172 = vmatprep.subr.mxu0 0.0
    %1173 = vmatpush1.msra.mxu0 0.0
    %1174 = vmatprep.subr.mxu0 0.0
    %1175 = vmatpush1.msra.mxu0 0.0
    %1176 = vmatprep.subr.mxu0 0.0
    %1177 = vmatpush1.msra.mxu0 0.0
    %1178 = vmatprep.subr.mxu0 0.0
    %1179 = vmatpush1.msra.mxu0 0.0
    %1180 = vmatprep.subr.mxu0 0.0
    %1181 = vmatpush1.msra.mxu0 0.0
    %1182 = vmatprep.subr.mxu0 0.0
    %1183 = vmatpush1.msra.mxu0 0.0
    %1184 = vmatprep.subr.mxu0 0.0
    %1185 = vmatpush1.msra.mxu0 0.0
    %1186 = vmatprep.subr.mxu0 0.0
    %1187 = vmatpush1.msra.mxu0 0.0
    %1188 = vmatprep.subr.mxu0 0.0
    %1189 = vmatpush1.msra.mxu0 0.0
    %1190 = vmatprep.subr.mxu0 0.0
    %1191 = vmatpush1.msra.mxu0 0.0
    %1192 = vmatprep.subr.mxu0 0.0
    %1193 = vmatpush1.msra.mxu0 0.0
    %1194 = vmatprep.subr.mxu0 0.0
    %1195 = vmatpush1.msra.mxu0 0.0
    %1196 = vmatprep.subr.mxu0 0.0
    %1197 = vmatpush1.msra.mxu0 0.0
    %1198 = vmatprep.subr.mxu0 0.0
    %1199 = vmatpush1.msra.mxu0 0.0
    %1200 = vmatprep.subr.mxu0 0.0
    %1201 = vmatpush1.msra.mxu0 0.0
    %1202 = vmatprep.subr.mxu0 0.0
    %1203 = vmatpush1.msra.mxu0 0.0
    %1204 = vmatprep.subr.mxu0 0.0
    %1205 = vmatpush1.msra.mxu0 0.0
    %1206 = vmatprep.mubr.f32.mxu0 0.0
    %1207 = vmatmul.mubr.f32.gmra.mrb[0].mxu0 %v1140
    %v1208 = vpop.f32.mrb[0].mxu0
    %v1209 = vadd.f32 0.0, %v1208
    %v1210 = vpop.f32.mrb[0].mxu0
    %1211 = vdwg.mxu0
    %v1212 = vmul.f32 %v1209, %v1053
    %v1213 = vsel %vm99, %v1212, 0.0
    %v1214 = vrot.slane %v1213, 4
    %v1215 = vadd.f32 %v1213, %v1214
    %v1216 = vrot.slane %v1215, 2
    %v1217 = vadd.f32 %v1215, %v1216
    %v1218 = vrot.slane %v1217, 1
    %v1219 = vadd.f32 %v1217, %v1218
    %v1221 = vsel %vm99, %v1051, 0
    %1223 = vmatprep.subr.mxu0 0.0
    %1224 = vmatpush1.msra.mxu0 %v1054
    %1225 = vmatprep.subr.mxu0 0.0
    %1226 = vmatpush1.msra.mxu0 %v1055
    %1227 = vmatprep.subr.mxu0 0.0
    %1228 = vmatpush1.msra.mxu0 %v1056
    %1229 = vmatprep.subr.mxu0 0.0
    %1230 = vmatpush1.msra.mxu0 %v1057
    %1231 = vmatprep.subr.mxu0 0.0
    %1232 = vmatpush1.msra.mxu0 0.0
    %1233 = vmatprep.subr.mxu0 0.0
    %1234 = vmatpush1.msra.mxu0 0.0
    %1235 = vmatprep.subr.mxu0 0.0
    %1236 = vmatpush1.msra.mxu0 0.0
    %1237 = vmatprep.subr.mxu0 0.0
    %1238 = vmatpush1.msra.mxu0 0.0
    %1239 = vmatprep.subr.mxu0 0.0
    %1240 = vmatpush1.msra.mxu0 0.0
    %1241 = vmatprep.subr.mxu0 0.0
    %1242 = vmatpush1.msra.mxu0 0.0
    %1243 = vmatprep.subr.mxu0 0.0
    %1244 = vmatpush1.msra.mxu0 0.0
    %1245 = vmatprep.subr.mxu0 0.0
    %1246 = vmatpush1.msra.mxu0 0.0
    %1247 = vmatprep.subr.mxu0 0.0
    %1248 = vmatpush1.msra.mxu0 0.0
    %1249 = vmatprep.subr.mxu0 0.0
    %1250 = vmatpush1.msra.mxu0 0.0
    %1251 = vmatprep.subr.mxu0 0.0
    %1252 = vmatpush1.msra.mxu0 0.0
    %1253 = vmatprep.subr.mxu0 0.0
    %1254 = vmatpush1.msra.mxu0 0.0
    %1255 = vmatprep.subr.mxu0 0.0
    %1256 = vmatpush1.msra.mxu0 0.0
    %1257 = vmatprep.subr.mxu0 0.0
    %1258 = vmatpush1.msra.mxu0 0.0
    %1259 = vmatprep.subr.mxu0 0.0
    %1260 = vmatpush1.msra.mxu0 0.0
    %1261 = vmatprep.subr.mxu0 0.0
    %1262 = vmatpush1.msra.mxu0 0.0
    %1263 = vmatprep.subr.mxu0 0.0
    %1264 = vmatpush1.msra.mxu0 0.0
    %1265 = vmatprep.subr.mxu0 0.0
    %1266 = vmatpush1.msra.mxu0 0.0
    %1267 = vmatprep.subr.mxu0 0.0
    %1268 = vmatpush1.msra.mxu0 0.0
    %1269 = vmatprep.subr.mxu0 0.0
    %1270 = vmatpush1.msra.mxu0 0.0
    %1271 = vmatprep.subr.mxu0 0.0
    %1272 = vmatpush1.msra.mxu0 0.0
    %1273 = vmatprep.subr.mxu0 0.0
    %1274 = vmatpush1.msra.mxu0 0.0
    %1275 = vmatprep.subr.mxu0 0.0
    %1276 = vmatpush1.msra.mxu0 0.0
    %1277 = vmatprep.subr.mxu0 0.0
    %1278 = vmatpush1.msra.mxu0 0.0
    %1279 = vmatprep.subr.mxu0 0.0
    %1280 = vmatpush1.msra.mxu0 0.0
    %1281 = vmatprep.subr.mxu0 0.0
    %1282 = vmatpush1.msra.mxu0 0.0
    %1283 = vmatprep.subr.mxu0 0.0
    %1284 = vmatpush1.msra.mxu0 0.0
    %1285 = vmatprep.subr.mxu0 0.0
    %1286 = vmatpush1.msra.mxu0 0.0
    %1287 = vmatprep.mubr.f32.mxu0 0.0
    %1288 = vmatmul.mubr.f32.gmra.mrb[0].mxu0 %v1221
    %v1289 = vpop.f32.mrb[0].mxu0
    %v1290 = vadd.f32 1e-08, %v1289
    %v1291 = vpop.f32.mrb[0].mxu0
    %1292 = vdwg.mxu0
    %v1293 = vrcp.pop %v1290
    %v1294 = vmul.f32 %v1134, %v1293
    %v1295 = vmul.f32 %v1051, %v1294
    %v1296 = vsel %vm99, %v1295, 0.0
    %v1297 = vrot.slane %v1296, 4
    %v1298 = vadd.f32 %v1296, %v1297
    %v1299 = vrot.slane %v1298, 2
    %v1300 = vadd.f32 %v1298, %v1299
    %v1301 = vrot.slane %v1300, 1
    %v1302 = vadd.f32 %v1300, %v1301
    %v1303 = vadd.f32 %v1302, 1e-08
    %v1304 = vrcp.pop %v1303
    %v1305 = vmul.f32 %v1219, %v1304
    %v1306 = vmul.f32 %v1295, %v1305
    %v1308 = vsel %vm99, %v1306, 0
    %1310 = vmatprep.subr.mxu0 0.0
    %1311 = vmatpush1.msra.mxu0 %v1054
    %1312 = vmatprep.subr.mxu0 0.0
    %1313 = vmatpush1.msra.mxu0 %v1055
    %1314 = vmatprep.subr.mxu0 0.0
    %1315 = vmatpush1.msra.mxu0 %v1056
    %1316 = vmatprep.subr.mxu0 0.0
    %1317 = vmatpush1.msra.mxu0 %v1057
    %1318 = vmatprep.subr.mxu0 0.0
    %1319 = vmatpush1.msra.mxu0 0.0
    %1320 = vmatprep.subr.mxu0 0.0
    %1321 = vmatpush1.msra.mxu0 0.0
    %1322 = vmatprep.subr.mxu0 0.0
    %1323 = vmatpush1.msra.mxu0 0.0
    %1324 = vmatprep.subr.mxu0 0.0
    %1325 = vmatpush1.msra.mxu0 0.0
    %1326 = vmatprep.subr.mxu0 0.0
    %1327 = vmatpush1.msra.mxu0 0.0
    %1328 = vmatprep.subr.mxu0 0.0
    %1329 = vmatpush1.msra.mxu0 0.0
    %1330 = vmatprep.subr.mxu0 0.0
    %1331 = vmatpush1.msra.mxu0 0.0
    %1332 = vmatprep.subr.mxu0 0.0
    %1333 = vmatpush1.msra.mxu0 0.0
    %1334 = vmatprep.subr.mxu0 0.0
    %1335 = vmatpush1.msra.mxu0 0.0
    %1336 = vmatprep.subr.mxu0 0.0
    %1337 = vmatpush1.msra.mxu0 0.0
    %1338 = vmatprep.subr.mxu0 0.0
    %1339 = vmatpush1.msra.mxu0 0.0
    %1340 = vmatprep.subr.mxu0 0.0
    %1341 = vmatpush1.msra.mxu0 0.0
    %1342 = vmatprep.subr.mxu0 0.0
    %1343 = vmatpush1.msra.mxu0 0.0
    %1344 = vmatprep.subr.mxu0 0.0
    %1345 = vmatpush1.msra.mxu0 0.0
    %1346 = vmatprep.subr.mxu0 0.0
    %1347 = vmatpush1.msra.mxu0 0.0
    %1348 = vmatprep.subr.mxu0 0.0
    %1349 = vmatpush1.msra.mxu0 0.0
    %1350 = vmatprep.subr.mxu0 0.0
    %1351 = vmatpush1.msra.mxu0 0.0
    %1352 = vmatprep.subr.mxu0 0.0
    %1353 = vmatpush1.msra.mxu0 0.0
    %1354 = vmatprep.subr.mxu0 0.0
    %1355 = vmatpush1.msra.mxu0 0.0
    %1356 = vmatprep.subr.mxu0 0.0
    %1357 = vmatpush1.msra.mxu0 0.0
    %1358 = vmatprep.subr.mxu0 0.0
    %1359 = vmatpush1.msra.mxu0 0.0
    %1360 = vmatprep.subr.mxu0 0.0
    %1361 = vmatpush1.msra.mxu0 0.0
    %1362 = vmatprep.subr.mxu0 0.0
    %1363 = vmatpush1.msra.mxu0 0.0
    %1364 = vmatprep.subr.mxu0 0.0
    %1365 = vmatpush1.msra.mxu0 0.0
    %1366 = vmatprep.subr.mxu0 0.0
    %1367 = vmatpush1.msra.mxu0 0.0
    %1368 = vmatprep.subr.mxu0 0.0
    %1369 = vmatpush1.msra.mxu0 0.0
    %1370 = vmatprep.subr.mxu0 0.0
    %1371 = vmatpush1.msra.mxu0 0.0
    %1372 = vmatprep.subr.mxu0 0.0
    %1373 = vmatpush1.msra.mxu0 0.0
    %1374 = vmatprep.mubr.f32.mxu0 0.0
    %1375 = vmatmul.mubr.f32.gmra.mrb[0].mxu0 %v1308
    %v1376 = vpop.f32.mrb[0].mxu0
    %v1377 = vadd.f32 1e-08, %v1376
    %v1378 = vpop.f32.mrb[0].mxu0
    %1379 = vdwg.mxu0
    %v1380 = vrcp.pop %v1377
    %v1381 = vmul.f32 %v1134, %v1380
    %v1382 = vmul.f32 %v1306, %v1381
    %v1383 = vsel %vm99, %v1382, 0.0
    %v1384 = vrot.slane %v1383, 4
    %v1385 = vadd.f32 %v1383, %v1384
    %v1386 = vrot.slane %v1385, 2
    %v1387 = vadd.f32 %v1385, %v1386
    %v1388 = vrot.slane %v1387, 1
    %v1389 = vadd.f32 %v1387, %v1388
    %v1390 = vadd.f32 %v1389, 1e-08
    %v1391 = vrcp.pop %v1390
    %v1392 = vmul.f32 %v1219, %v1391
    %v1393 = vmul.f32 %v1382, %v1392
    %v1395 = vsel %vm99, %v1393, 0
    %1397 = vmatprep.subr.mxu0 0.0
    %1398 = vmatpush1.msra.mxu0 %v1054
    %1399 = vmatprep.subr.mxu0 0.0
    %1400 = vmatpush1.msra.mxu0 %v1055
    %1401 = vmatprep.subr.mxu0 0.0
    %1402 = vmatpush1.msra.mxu0 %v1056
    %1403 = vmatprep.subr.mxu0 0.0
    %1404 = vmatpush1.msra.mxu0 %v1057
    %1405 = vmatprep.subr.mxu0 0.0
    %1406 = vmatpush1.msra.mxu0 0.0
    %1407 = vmatprep.subr.mxu0 0.0
    %1408 = vmatpush1.msra.mxu0 0.0
    %1409 = vmatprep.subr.mxu0 0.0
    %1410 = vmatpush1.msra.mxu0 0.0
    %1411 = vmatprep.subr.mxu0 0.0
    %1412 = vmatpush1.msra.mxu0 0.0
    %1413 = vmatprep.subr.mxu0 0.0
    %1414 = vmatpush1.msra.mxu0 0.0
    %1415 = vmatprep.subr.mxu0 0.0
    %1416 = vmatpush1.msra.mxu0 0.0
    %1417 = vmatprep.subr.mxu0 0.0
    %1418 = vmatpush1.msra.mxu0 0.0
    %1419 = vmatprep.subr.mxu0 0.0
    %1420 = vmatpush1.msra.mxu0 0.0
    %1421 = vmatprep.subr.mxu0 0.0
    %1422 = vmatpush1.msra.mxu0 0.0
    %1423 = vmatprep.subr.mxu0 0.0
    %1424 = vmatpush1.msra.mxu0 0.0
    %1425 = vmatprep.subr.mxu0 0.0
    %1426 = vmatpush1.msra.mxu0 0.0
    %1427 = vmatprep.subr.mxu0 0.0
    %1428 = vmatpush1.msra.mxu0 0.0
    %1429 = vmatprep.subr.mxu0 0.0
    %1430 = vmatpush1.msra.mxu0 0.0
    %1431 = vmatprep.subr.mxu0 0.0
    %1432 = vmatpush1.msra.mxu0 0.0
    %1433 = vmatprep.subr.mxu0 0.0
    %1434 = vmatpush1.msra.mxu0 0.0
    %1435 = vmatprep.subr.mxu0 0.0
    %1436 = vmatpush1.msra.mxu0 0.0
    %1437 = vmatprep.subr.mxu0 0.0
    %1438 = vmatpush1.msra.mxu0 0.0
    %1439 = vmatprep.subr.mxu0 0.0
    %1440 = vmatpush1.msra.mxu0 0.0
    %1441 = vmatprep.subr.mxu0 0.0
    %1442 = vmatpush1.msra.mxu0 0.0
    %1443 = vmatprep.subr.mxu0 0.0
    %1444 = vmatpush1.msra.mxu0 0.0
    %1445 = vmatprep.subr.mxu0 0.0
    %1446 = vmatpush1.msra.mxu0 0.0
    %1447 = vmatprep.subr.mxu0 0.0
    %1448 = vmatpush1.msra.mxu0 0.0
    %1449 = vmatprep.subr.mxu0 0.0
    %1450 = vmatpush1.msra.mxu0 0.0
    %1451 = vmatprep.subr.mxu0 0.0
    %1452 = vmatpush1.msra.mxu0 0.0
    %1453 = vmatprep.subr.mxu0 0.0
    %1454 = vmatpush1.msra.mxu0 0.0
    %1455 = vmatprep.subr.mxu0 0.0
    %1456 = vmatpush1.msra.mxu0 0.0
    %1457 = vmatprep.subr.mxu0 0.0
    %1458 = vmatpush1.msra.mxu0 0.0
    %1459 = vmatprep.subr.mxu0 0.0
    %1460 = vmatpush1.msra.mxu0 0.0
    %1461 = vmatprep.mubr.f32.mxu0 0.0
    %1462 = vmatmul.mubr.f32.gmra.mrb[0].mxu0 %v1395
    %v1463 = vpop.f32.mrb[0].mxu0
    %v1464 = vadd.f32 1e-08, %v1463
    %v1465 = vpop.f32.mrb[0].mxu0
    %1466 = vdwg.mxu0
    %v1467 = vrcp.pop %v1464
    %v1468 = vmul.f32 %v1134, %v1467
    %v1469 = vmul.f32 %v1393, %v1468
    %v1470 = vsel %vm99, %v1469, 0.0
    %v1471 = vrot.slane %v1470, 4
    %v1472 = vadd.f32 %v1470, %v1471
    %v1473 = vrot.slane %v1472, 2
    %v1474 = vadd.f32 %v1472, %v1473
    %v1475 = vrot.slane %v1474, 1
    %v1476 = vadd.f32 %v1474, %v1475
    %v1477 = vadd.f32 %v1476, 1e-08
    %v1478 = vrcp.pop %v1477
    %v1479 = vmul.f32 %v1219, %v1478
    %v1480 = vmul.f32 %v1469, %v1479
    %v1482 = vsel %vm99, %v1480, 0
    %1484 = vmatprep.subr.mxu0 0.0
    %1485 = vmatpush1.msra.mxu0 %v1054
    %1486 = vmatprep.subr.mxu0 0.0
    %1487 = vmatpush1.msra.mxu0 %v1055
    %1488 = vmatprep.subr.mxu0 0.0
    %1489 = vmatpush1.msra.mxu0 %v1056
    %1490 = vmatprep.subr.mxu0 0.0
    %1491 = vmatpush1.msra.mxu0 %v1057
    %1492 = vmatprep.subr.mxu0 0.0
    %1493 = vmatpush1.msra.mxu0 0.0
    %1494 = vmatprep.subr.mxu0 0.0
    %1495 = vmatpush1.msra.mxu0 0.0
    %1496 = vmatprep.subr.mxu0 0.0
    %1497 = vmatpush1.msra.mxu0 0.0
    %1498 = vmatprep.subr.mxu0 0.0
    %1499 = vmatpush1.msra.mxu0 0.0
    %1500 = vmatprep.subr.mxu0 0.0
    %1501 = vmatpush1.msra.mxu0 0.0
    %1502 = vmatprep.subr.mxu0 0.0
    %1503 = vmatpush1.msra.mxu0 0.0
    %1504 = vmatprep.subr.mxu0 0.0
    %1505 = vmatpush1.msra.mxu0 0.0
    %1506 = vmatprep.subr.mxu0 0.0
    %1507 = vmatpush1.msra.mxu0 0.0
    %1508 = vmatprep.subr.mxu0 0.0
    %1509 = vmatpush1.msra.mxu0 0.0
    %1510 = vmatprep.subr.mxu0 0.0
    %1511 = vmatpush1.msra.mxu0 0.0
    %1512 = vmatprep.subr.mxu0 0.0
    %1513 = vmatpush1.msra.mxu0 0.0
    %1514 = vmatprep.subr.mxu0 0.0
    %1515 = vmatpush1.msra.mxu0 0.0
    %1516 = vmatprep.subr.mxu0 0.0
    %1517 = vmatpush1.msra.mxu0 0.0
    %1518 = vmatprep.subr.mxu0 0.0
    %1519 = vmatpush1.msra.mxu0 0.0
    %1520 = vmatprep.subr.mxu0 0.0
    %1521 = vmatpush1.msra.mxu0 0.0
    %1522 = vmatprep.subr.mxu0 0.0
    %1523 = vmatpush1.msra.mxu0 0.0
    %1524 = vmatprep.subr.mxu0 0.0
    %1525 = vmatpush1.msra.mxu0 0.0
    %1526 = vmatprep.subr.mxu0 0.0
    %1527 = vmatpush1.msra.mxu0 0.0
    %1528 = vmatprep.subr.mxu0 0.0
    %1529 = vmatpush1.msra.mxu0 0.0
    %1530 = vmatprep.subr.mxu0 0.0
    %1531 = vmatpush1.msra.mxu0 0.0
    %1532 = vmatprep.subr.mxu0 0.0
    %1533 = vmatpush1.msra.mxu0 0.0
    %1534 = vmatprep.subr.mxu0 0.0
    %1535 = vmatpush1.msra.mxu0 0.0
    %1536 = vmatprep.subr.mxu0 0.0
    %1537 = vmatpush1.msra.mxu0 0.0
    %1538 = vmatprep.subr.mxu0 0.0
    %1539 = vmatpush1.msra.mxu0 0.0
    %1540 = vmatprep.subr.mxu0 0.0
    %1541 = vmatpush1.msra.mxu0 0.0
    %1542 = vmatprep.subr.mxu0 0.0
    %1543 = vmatpush1.msra.mxu0 0.0
    %1544 = vmatprep.subr.mxu0 0.0
    %1545 = vmatpush1.msra.mxu0 0.0
    %1546 = vmatprep.subr.mxu0 0.0
    %1547 = vmatpush1.msra.mxu0 0.0
    %1548 = vmatprep.mubr.f32.mxu0 0.0
    %1549 = vmatmul.mubr.f32.gmra.mrb[0].mxu0 %v1482
    %v1550 = vpop.f32.mrb[0].mxu0
    %v1551 = vadd.f32 1e-08, %v1550
    %v1552 = vpop.f32.mrb[0].mxu0
    %1553 = vdwg.mxu0
    %v1554 = vrcp.pop %v1551
    %v1555 = vmul.f32 %v1134, %v1554
    %v1556 = vmul.f32 %v1480, %v1555
    %v1557 = vsel %vm99, %v1556, 0.0
    %v1558 = vrot.slane %v1557, 4
    %v1559 = vadd.f32 %v1557, %v1558
    %v1560 = vrot.slane %v1559, 2
    %v1561 = vadd.f32 %v1559, %v1560
    %v1562 = vrot.slane %v1561, 1
    %v1563 = vadd.f32 %v1561, %v1562
    %v1564 = vadd.f32 %v1563, 1e-08
    %v1565 = vrcp.pop %v1564
    %v1566 = vmul.f32 %v1219, %v1565
    %v1567 = vmul.f32 %v1556, %v1566
    %v1569 = vsel %vm99, %v1567, 0
    %1571 = vmatprep.subr.mxu0 0.0
    %1572 = vmatpush1.msra.mxu0 %v1054
    %1573 = vmatprep.subr.mxu0 0.0
    %1574 = vmatpush1.msra.mxu0 %v1055
    %1575 = vmatprep.subr.mxu0 0.0
    %1576 = vmatpush1.msra.mxu0 %v1056
    %1577 = vmatprep.subr.mxu0 0.0
    %1578 = vmatpush1.msra.mxu0 %v1057
    %1579 = vmatprep.subr.mxu0 0.0
    %1580 = vmatpush1.msra.mxu0 0.0
    %1581 = vmatprep.subr.mxu0 0.0
    %1582 = vmatpush1.msra.mxu0 0.0
    %1583 = vmatprep.subr.mxu0 0.0
    %1584 = vmatpush1.msra.mxu0 0.0
    %1585 = vmatprep.subr.mxu0 0.0
    %1586 = vmatpush1.msra.mxu0 0.0
    %1587 = vmatprep.subr.mxu0 0.0
    %1588 = vmatpush1.msra.mxu0 0.0
    %1589 = vmatprep.subr.mxu0 0.0
    %1590 = vmatpush1.msra.mxu0 0.0
    %1591 = vmatprep.subr.mxu0 0.0
    %1592 = vmatpush1.msra.mxu0 0.0
    %1593 = vmatprep.subr.mxu0 0.0
    %1594 = vmatpush1.msra.mxu0 0.0
    %1595 = vmatprep.subr.mxu0 0.0
    %1596 = vmatpush1.msra.mxu0 0.0
    %1597 = vmatprep.subr.mxu0 0.0
    %1598 = vmatpush1.msra.mxu0 0.0
    %1599 = vmatprep.subr.mxu0 0.0
    %1600 = vmatpush1.msra.mxu0 0.0
    %1601 = vmatprep.subr.mxu0 0.0
    %1602 = vmatpush1.msra.mxu0 0.0
    %1603 = vmatprep.subr.mxu0 0.0
    %1604 = vmatpush1.msra.mxu0 0.0
    %1605 = vmatprep.subr.mxu0 0.0
    %1606 = vmatpush1.msra.mxu0 0.0
    %1607 = vmatprep.subr.mxu0 0.0
    %1608 = vmatpush1.msra.mxu0 0.0
    %1609 = vmatprep.subr.mxu0 0.0
    %1610 = vmatpush1.msra.mxu0 0.0
    %1611 = vmatprep.subr.mxu0 0.0
    %1612 = vmatpush1.msra.mxu0 0.0
    %1613 = vmatprep.subr.mxu0 0.0
    %1614 = vmatpush1.msra.mxu0 0.0
    %1615 = vmatprep.subr.mxu0 0.0
    %1616 = vmatpush1.msra.mxu0 0.0
    %1617 = vmatprep.subr.mxu0 0.0
    %1618 = vmatpush1.msra.mxu0 0.0
    %1619 = vmatprep.subr.mxu0 0.0
    %1620 = vmatpush1.msra.mxu0 0.0
    %1621 = vmatprep.subr.mxu0 0.0
    %1622 = vmatpush1.msra.mxu0 0.0
    %1623 = vmatprep.subr.mxu0 0.0
    %1624 = vmatpush1.msra.mxu0 0.0
    %1625 = vmatprep.subr.mxu0 0.0
    %1626 = vmatpush1.msra.mxu0 0.0
    %1627 = vmatprep.subr.mxu0 0.0
    %1628 = vmatpush1.msra.mxu0 0.0
    %1629 = vmatprep.subr.mxu0 0.0
    %1630 = vmatpush1.msra.mxu0 0.0
    %1631 = vmatprep.subr.mxu0 0.0
    %1632 = vmatpush1.msra.mxu0 0.0
    %1633 = vmatprep.subr.mxu0 0.0
    %1634 = vmatpush1.msra.mxu0 0.0
    %1635 = vmatprep.mubr.f32.mxu0 0.0
    %1636 = vmatmul.mubr.f32.gmra.mrb[0].mxu0 %v1569
    %v1637 = vpop.f32.mrb[0].mxu0
    %v1638 = vadd.f32 1e-08, %v1637
    %v1639 = vpop.f32.mrb[0].mxu0
    %1640 = vdwg.mxu0
    %v1641 = vrcp.pop %v1638
    %v1642 = vmul.f32 %v1134, %v1641
    %v1643 = vmul.f32 %v1567, %v1642
    %v1644 = vsel %vm99, %v1643, 0.0
    %v1645 = vrot.slane %v1644, 4
    %v1646 = vadd.f32 %v1644, %v1645
    %v1647 = vrot.slane %v1646, 2
    %v1648 = vadd.f32 %v1646, %v1647
    %v1649 = vrot.slane %v1648, 1
    %v1650 = vadd.f32 %v1648, %v1649
    %v1651 = vadd.f32 %v1650, 1e-08
    %v1652 = vrcp.pop %v1651
    %v1653 = vmul.f32 %v1219, %v1652
    %v1654 = vmul.f32 %v1643, %v1653
    %v1656 = vsel %vm99, %v1654, 0
    %1658 = vmatprep.subr.mxu0 0.0
    %1659 = vmatpush1.msra.mxu0 %v1054
    %1660 = vmatprep.subr.mxu0 0.0
    %1661 = vmatpush1.msra.mxu0 %v1055
    %1662 = vmatprep.subr.mxu0 0.0
    %1663 = vmatpush1.msra.mxu0 %v1056
    %1664 = vmatprep.subr.mxu0 0.0
    %1665 = vmatpush1.msra.mxu0 %v1057
    %1666 = vmatprep.subr.mxu0 0.0
    %1667 = vmatpush1.msra.mxu0 0.0
    %1668 = vmatprep.subr.mxu0 0.0
    %1669 = vmatpush1.msra.mxu0 0.0
    %1670 = vmatprep.subr.mxu0 0.0
    %1671 = vmatpush1.msra.mxu0 0.0
    %1672 = vmatprep.subr.mxu0 0.0
    %1673 = vmatpush1.msra.mxu0 0.0
    %1674 = vmatprep.subr.mxu0 0.0
    %1675 = vmatpush1.msra.mxu0 0.0
    %1676 = vmatprep.subr.mxu0 0.0
    %1677 = vmatpush1.msra.mxu0 0.0
    %1678 = vmatprep.subr.mxu0 0.0
    %1679 = vmatpush1.msra.mxu0 0.0
    %1680 = vmatprep.subr.mxu0 0.0
    %1681 = vmatpush1.msra.mxu0 0.0
    %1682 = vmatprep.subr.mxu0 0.0
    %1683 = vmatpush1.msra.mxu0 0.0
    %1684 = vmatprep.subr.mxu0 0.0
    %1685 = vmatpush1.msra.mxu0 0.0
    %1686 = vmatprep.subr.mxu0 0.0
    %1687 = vmatpush1.msra.mxu0 0.0
    %1688 = vmatprep.subr.mxu0 0.0
    %1689 = vmatpush1.msra.mxu0 0.0
    %1690 = vmatprep.subr.mxu0 0.0
    %1691 = vmatpush1.msra.mxu0 0.0
    %1692 = vmatprep.subr.mxu0 0.0
    %1693 = vmatpush1.msra.mxu0 0.0
    %1694 = vmatprep.subr.mxu0 0.0
    %1695 = vmatpush1.msra.mxu0 0.0
    %1696 = vmatprep.subr.mxu0 0.0
    %1697 = vmatpush1.msra.mxu0 0.0
    %1698 = vmatprep.subr.mxu0 0.0
    %1699 = vmatpush1.msra.mxu0 0.0
    %1700 = vmatprep.subr.mxu0 0.0
    %1701 = vmatpush1.msra.mxu0 0.0
    %1702 = vmatprep.subr.mxu0 0.0
    %1703 = vmatpush1.msra.mxu0 0.0
    %1704 = vmatprep.subr.mxu0 0.0
    %1705 = vmatpush1.msra.mxu0 0.0
    %1706 = vmatprep.subr.mxu0 0.0
    %1707 = vmatpush1.msra.mxu0 0.0
    %1708 = vmatprep.subr.mxu0 0.0
    %1709 = vmatpush1.msra.mxu0 0.0
    %1710 = vmatprep.subr.mxu0 0.0
    %1711 = vmatpush1.msra.mxu0 0.0
    %1712 = vmatprep.subr.mxu0 0.0
    %1713 = vmatpush1.msra.mxu0 0.0
    %1714 = vmatprep.subr.mxu0 0.0
    %1715 = vmatpush1.msra.mxu0 0.0
    %1716 = vmatprep.subr.mxu0 0.0
    %1717 = vmatpush1.msra.mxu0 0.0
    %1718 = vmatprep.subr.mxu0 0.0
    %1719 = vmatpush1.msra.mxu0 0.0
    %1720 = vmatprep.subr.mxu0 0.0
    %1721 = vmatpush1.msra.mxu0 0.0
    %1722 = vmatprep.mubr.f32.mxu0 0.0
    %1723 = vmatmul.mubr.f32.gmra.mrb[0].mxu0 %v1656
    %v1724 = vpop.f32.mrb[0].mxu0
    %v1725 = vadd.f32 1e-08, %v1724
    %v1726 = vpop.f32.mrb[0].mxu0
    %1727 = vdwg.mxu0
    %v1728 = vrcp.pop %v1725
    %v1729 = vmul.f32 %v1134, %v1728
    %v1730 = vmul.f32 %v1654, %v1729
    %v1731 = vsel %vm99, %v1730, 0.0
    %v1732 = vrot.slane %v1731, 4
    %v1733 = vadd.f32 %v1731, %v1732
    %v1734 = vrot.slane %v1733, 2
    %v1735 = vadd.f32 %v1733, %v1734
    %v1736 = vrot.slane %v1735, 1
    %v1737 = vadd.f32 %v1735, %v1736
    %v1738 = vadd.f32 %v1737, 1e-08
    %v1739 = vrcp.pop %v1738
    %v1740 = vmul.f32 %v1219, %v1739
    %v1741 = vmul.f32 %v1730, %v1740
    %v1743 = vsel %vm99, %v1741, 0
    %1745 = vmatprep.subr.mxu0 0.0
    %1746 = vmatpush1.msra.mxu0 %v1054
    %1747 = vmatprep.subr.mxu0 0.0
    %1748 = vmatpush1.msra.mxu0 %v1055
    %1749 = vmatprep.subr.mxu0 0.0
    %1750 = vmatpush1.msra.mxu0 %v1056
    %1751 = vmatprep.subr.mxu0 0.0
    %1752 = vmatpush1.msra.mxu0 %v1057
    %1753 = vmatprep.subr.mxu0 0.0
    %1754 = vmatpush1.msra.mxu0 0.0
    %1755 = vmatprep.subr.mxu0 0.0
    %1756 = vmatpush1.msra.mxu0 0.0
    %1757 = vmatprep.subr.mxu0 0.0
    %1758 = vmatpush1.msra.mxu0 0.0
    %1759 = vmatprep.subr.mxu0 0.0
    %1760 = vmatpush1.msra.mxu0 0.0
    %1761 = vmatprep.subr.mxu0 0.0
    %1762 = vmatpush1.msra.mxu0 0.0
    %1763 = vmatprep.subr.mxu0 0.0
    %1764 = vmatpush1.msra.mxu0 0.0
    %1765 = vmatprep.subr.mxu0 0.0
    %1766 = vmatpush1.msra.mxu0 0.0
    %1767 = vmatprep.subr.mxu0 0.0
    %1768 = vmatpush1.msra.mxu0 0.0
    %1769 = vmatprep.subr.mxu0 0.0
    %1770 = vmatpush1.msra.mxu0 0.0
    %1771 = vmatprep.subr.mxu0 0.0
    %1772 = vmatpush1.msra.mxu0 0.0
    %1773 = vmatprep.subr.mxu0 0.0
    %1774 = vmatpush1.msra.mxu0 0.0
    %1775 = vmatprep.subr.mxu0 0.0
    %1776 = vmatpush1.msra.mxu0 0.0
    %1777 = vmatprep.subr.mxu0 0.0
    %1778 = vmatpush1.msra.mxu0 0.0
    %1779 = vmatprep.subr.mxu0 0.0
    %1780 = vmatpush1.msra.mxu0 0.0
    %1781 = vmatprep.subr.mxu0 0.0
    %1782 = vmatpush1.msra.mxu0 0.0
    %1783 = vmatprep.subr.mxu0 0.0
    %1784 = vmatpush1.msra.mxu0 0.0
    %1785 = vmatprep.subr.mxu0 0.0
    %1786 = vmatpush1.msra.mxu0 0.0
    %1787 = vmatprep.subr.mxu0 0.0
    %1788 = vmatpush1.msra.mxu0 0.0
    %1789 = vmatprep.subr.mxu0 0.0
    %1790 = vmatpush1.msra.mxu0 0.0
    %1791 = vmatprep.subr.mxu0 0.0
    %1792 = vmatpush1.msra.mxu0 0.0
    %1793 = vmatprep.subr.mxu0 0.0
    %1794 = vmatpush1.msra.mxu0 0.0
    %1795 = vmatprep.subr.mxu0 0.0
    %1796 = vmatpush1.msra.mxu0 0.0
    %1797 = vmatprep.subr.mxu0 0.0
    %1798 = vmatpush1.msra.mxu0 0.0
    %1799 = vmatprep.subr.mxu0 0.0
    %1800 = vmatpush1.msra.mxu0 0.0
    %1801 = vmatprep.subr.mxu0 0.0
    %1802 = vmatpush1.msra.mxu0 0.0
    %1803 = vmatprep.subr.mxu0 0.0
    %1804 = vmatpush1.msra.mxu0 0.0
    %1805 = vmatprep.subr.mxu0 0.0
    %1806 = vmatpush1.msra.mxu0 0.0
    %1807 = vmatprep.subr.mxu0 0.0
    %1808 = vmatpush1.msra.mxu0 0.0
    %1809 = vmatprep.mubr.f32.mxu0 0.0
    %1810 = vmatmul.mubr.f32.gmra.mrb[0].mxu0 %v1743
    %v1811 = vpop.f32.mrb[0].mxu0
    %v1812 = vadd.f32 1e-08, %v1811
    %v1813 = vpop.f32.mrb[0].mxu0
    %1814 = vdwg.mxu0
    %v1815 = vrcp.pop %v1812
    %v1816 = vmul.f32 %v1134, %v1815
    %v1817 = vmul.f32 %v1741, %v1816
    %v1818 = vsel %vm99, %v1817, 0.0
    %v1819 = vrot.slane %v1818, 4
    %v1820 = vadd.f32 %v1818, %v1819
    %v1821 = vrot.slane %v1820, 2
    %v1822 = vadd.f32 %v1820, %v1821
    %v1823 = vrot.slane %v1822, 1
    %v1824 = vadd.f32 %v1822, %v1823
    %v1825 = vadd.f32 %v1824, 1e-08
    %v1826 = vrcp.pop %v1825
    %v1827 = vmul.f32 %v1219, %v1826
    %v1828 = vmul.f32 %v1817, %v1827
    %v1830 = vsel %vm99, %v1828, 0
    %1832 = vmatprep.subr.mxu0 0.0
    %1833 = vmatpush1.msra.mxu0 %v1054
    %1834 = vmatprep.subr.mxu0 0.0
    %1835 = vmatpush1.msra.mxu0 %v1055
    %1836 = vmatprep.subr.mxu0 0.0
    %1837 = vmatpush1.msra.mxu0 %v1056
    %1838 = vmatprep.subr.mxu0 0.0
    %1839 = vmatpush1.msra.mxu0 %v1057
    %1840 = vmatprep.subr.mxu0 0.0
    %1841 = vmatpush1.msra.mxu0 0.0
    %1842 = vmatprep.subr.mxu0 0.0
    %1843 = vmatpush1.msra.mxu0 0.0
    %1844 = vmatprep.subr.mxu0 0.0
    %1845 = vmatpush1.msra.mxu0 0.0
    %1846 = vmatprep.subr.mxu0 0.0
    %1847 = vmatpush1.msra.mxu0 0.0
    %1848 = vmatprep.subr.mxu0 0.0
    %1849 = vmatpush1.msra.mxu0 0.0
    %1850 = vmatprep.subr.mxu0 0.0
    %1851 = vmatpush1.msra.mxu0 0.0
    %1852 = vmatprep.subr.mxu0 0.0
    %1853 = vmatpush1.msra.mxu0 0.0
    %1854 = vmatprep.subr.mxu0 0.0
    %1855 = vmatpush1.msra.mxu0 0.0
    %1856 = vmatprep.subr.mxu0 0.0
    %1857 = vmatpush1.msra.mxu0 0.0
    %1858 = vmatprep.subr.mxu0 0.0
    %1859 = vmatpush1.msra.mxu0 0.0
    %1860 = vmatprep.subr.mxu0 0.0
    %1861 = vmatpush1.msra.mxu0 0.0
    %1862 = vmatprep.subr.mxu0 0.0
    %1863 = vmatpush1.msra.mxu0 0.0
    %1864 = vmatprep.subr.mxu0 0.0
    %1865 = vmatpush1.msra.mxu0 0.0
    %1866 = vmatprep.subr.mxu0 0.0
    %1867 = vmatpush1.msra.mxu0 0.0
    %1868 = vmatprep.subr.mxu0 0.0
    %1869 = vmatpush1.msra.mxu0 0.0
    %1870 = vmatprep.subr.mxu0 0.0
    %1871 = vmatpush1.msra.mxu0 0.0
    %1872 = vmatprep.subr.mxu0 0.0
    %1873 = vmatpush1.msra.mxu0 0.0
    %1874 = vmatprep.subr.mxu0 0.0
    %1875 = vmatpush1.msra.mxu0 0.0
    %1876 = vmatprep.subr.mxu0 0.0
    %1877 = vmatpush1.msra.mxu0 0.0
    %1878 = vmatprep.subr.mxu0 0.0
    %1879 = vmatpush1.msra.mxu0 0.0
    %1880 = vmatprep.subr.mxu0 0.0
    %1881 = vmatpush1.msra.mxu0 0.0
    %1882 = vmatprep.subr.mxu0 0.0
    %1883 = vmatpush1.msra.mxu0 0.0
    %1884 = vmatprep.subr.mxu0 0.0
    %1885 = vmatpush1.msra.mxu0 0.0
    %1886 = vmatprep.subr.mxu0 0.0
    %1887 = vmatpush1.msra.mxu0 0.0
    %1888 = vmatprep.subr.mxu0 0.0
    %1889 = vmatpush1.msra.mxu0 0.0
    %1890 = vmatprep.subr.mxu0 0.0
    %1891 = vmatpush1.msra.mxu0 0.0
    %1892 = vmatprep.subr.mxu0 0.0
    %1893 = vmatpush1.msra.mxu0 0.0
    %1894 = vmatprep.subr.mxu0 0.0
    %1895 = vmatpush1.msra.mxu0 0.0
    %1896 = vmatprep.mubr.f32.mxu0 0.0
    %1897 = vmatmul.mubr.f32.gmra.mrb[0].mxu0 %v1830
    %v1898 = vpop.f32.mrb[0].mxu0
    %v1899 = vadd.f32 1e-08, %v1898
    %v1900 = vpop.f32.mrb[0].mxu0
    %1901 = vdwg.mxu0
    %v1902 = vrcp.pop %v1899
    %v1903 = vmul.f32 %v1134, %v1902
    %v1904 = vmul.f32 %v1828, %v1903
    %v1905 = vsel %vm99, %v1904, 0.0
    %v1906 = vrot.slane %v1905, 4
    %v1907 = vadd.f32 %v1905, %v1906
    %v1908 = vrot.slane %v1907, 2
    %v1909 = vadd.f32 %v1907, %v1908
    %v1910 = vrot.slane %v1909, 1
    %v1911 = vadd.f32 %v1909, %v1910
    %v1912 = vadd.f32 %v1911, 1e-08
    %v1913 = vrcp.pop %v1912
    %v1914 = vmul.f32 %v1219, %v1913
    %v1915 = vmul.f32 %v1904, %v1914
    %v1917 = vsel %vm99, %v1915, 0
    %1919 = vmatprep.subr.mxu0 0.0
    %1920 = vmatpush1.msra.mxu0 %v1054
    %1921 = vmatprep.subr.mxu0 0.0
    %1922 = vmatpush1.msra.mxu0 %v1055
    %1923 = vmatprep.subr.mxu0 0.0
    %1924 = vmatpush1.msra.mxu0 %v1056
    %1925 = vmatprep.subr.mxu0 0.0
    %1926 = vmatpush1.msra.mxu0 %v1057
    %1927 = vmatprep.subr.mxu0 0.0
    %1928 = vmatpush1.msra.mxu0 0.0
    %1929 = vmatprep.subr.mxu0 0.0
    %1930 = vmatpush1.msra.mxu0 0.0
    %1931 = vmatprep.subr.mxu0 0.0
    %1932 = vmatpush1.msra.mxu0 0.0
    %1933 = vmatprep.subr.mxu0 0.0
    %1934 = vmatpush1.msra.mxu0 0.0
    %1935 = vmatprep.subr.mxu0 0.0
    %1936 = vmatpush1.msra.mxu0 0.0
    %1937 = vmatprep.subr.mxu0 0.0
    %1938 = vmatpush1.msra.mxu0 0.0
    %1939 = vmatprep.subr.mxu0 0.0
    %1940 = vmatpush1.msra.mxu0 0.0
    %1941 = vmatprep.subr.mxu0 0.0
    %1942 = vmatpush1.msra.mxu0 0.0
    %1943 = vmatprep.subr.mxu0 0.0
    %1944 = vmatpush1.msra.mxu0 0.0
    %1945 = vmatprep.subr.mxu0 0.0
    %1946 = vmatpush1.msra.mxu0 0.0
    %1947 = vmatprep.subr.mxu0 0.0
    %1948 = vmatpush1.msra.mxu0 0.0
    %1949 = vmatprep.subr.mxu0 0.0
    %1950 = vmatpush1.msra.mxu0 0.0
    %1951 = vmatprep.subr.mxu0 0.0
    %1952 = vmatpush1.msra.mxu0 0.0
    %1953 = vmatprep.subr.mxu0 0.0
    %1954 = vmatpush1.msra.mxu0 0.0
    %1955 = vmatprep.subr.mxu0 0.0
    %1956 = vmatpush1.msra.mxu0 0.0
    %1957 = vmatprep.subr.mxu0 0.0
    %1958 = vmatpush1.msra.mxu0 0.0
    %1959 = vmatprep.subr.mxu0 0.0
    %1960 = vmatpush1.msra.mxu0 0.0
    %1961 = vmatprep.subr.mxu0 0.0
    %1962 = vmatpush1.msra.mxu0 0.0
    %1963 = vmatprep.subr.mxu0 0.0
    %1964 = vmatpush1.msra.mxu0 0.0
    %1965 = vmatprep.subr.mxu0 0.0
    %1966 = vmatpush1.msra.mxu0 0.0
    %1967 = vmatprep.subr.mxu0 0.0
    %1968 = vmatpush1.msra.mxu0 0.0
    %1969 = vmatprep.subr.mxu0 0.0
    %1970 = vmatpush1.msra.mxu0 0.0
    %1971 = vmatprep.subr.mxu0 0.0
    %1972 = vmatpush1.msra.mxu0 0.0
    %1973 = vmatprep.subr.mxu0 0.0
    %1974 = vmatpush1.msra.mxu0 0.0
    %1975 = vmatprep.subr.mxu0 0.0
    %1976 = vmatpush1.msra.mxu0 0.0
    %1977 = vmatprep.subr.mxu0 0.0
    %1978 = vmatpush1.msra.mxu0 0.0
    %1979 = vmatprep.subr.mxu0 0.0
    %1980 = vmatpush1.msra.mxu0 0.0
    %1981 = vmatprep.subr.mxu0 0.0
    %1982 = vmatpush1.msra.mxu0 0.0
    %1983 = vmatprep.mubr.f32.mxu0 0.0
    %1984 = vmatmul.mubr.f32.gmra.mrb[0].mxu0 %v1917
    %v1985 = vpop.f32.mrb[0].mxu0
    %v1986 = vadd.f32 1e-08, %v1985
    %v1987 = vpop.f32.mrb[0].mxu0
    %1988 = vdwg.mxu0
    %v1989 = vrcp.pop %v1986
    %v1990 = vmul.f32 %v1134, %v1989
    %v1991 = vmul.f32 %v1915, %v1990
    %v1992 = vsel %vm99, %v1991, 0.0
    %v1993 = vrot.slane %v1992, 4
    %v1994 = vadd.f32 %v1992, %v1993
    %v1995 = vrot.slane %v1994, 2
    %v1996 = vadd.f32 %v1994, %v1995
    %v1997 = vrot.slane %v1996, 1
    %v1998 = vadd.f32 %v1996, %v1997
    %v1999 = vadd.f32 %v1998, 1e-08
    %v2000 = vrcp.pop %v1999
    %v2001 = vmul.f32 %v1219, %v2000
    %v2002 = vmul.f32 %v1991, %v2001
    %v2004 = vsel %vm99, %v2002, 0
    %2006 = vmatprep.subr.mxu0 0.0
    %2007 = vmatpush1.msra.mxu0 %v1054
    %2008 = vmatprep.subr.mxu0 0.0
    %2009 = vmatpush1.msra.mxu0 %v1055
    %2010 = vmatprep.subr.mxu0 0.0
    %2011 = vmatpush1.msra.mxu0 %v1056
    %2012 = vmatprep.subr.mxu0 0.0
    %2013 = vmatpush1.msra.mxu0 %v1057
    %2014 = vmatprep.subr.mxu0 0.0
    %2015 = vmatpush1.msra.mxu0 0.0
    %2016 = vmatprep.subr.mxu0 0.0
    %2017 = vmatpush1.msra.mxu0 0.0
    %2018 = vmatprep.subr.mxu0 0.0
    %2019 = vmatpush1.msra.mxu0 0.0
    %2020 = vmatprep.subr.mxu0 0.0
    %2021 = vmatpush1.msra.mxu0 0.0
    %2022 = vmatprep.subr.mxu0 0.0
    %2023 = vmatpush1.msra.mxu0 0.0
    %2024 = vmatprep.subr.mxu0 0.0
    %2025 = vmatpush1.msra.mxu0 0.0
    %2026 = vmatprep.subr.mxu0 0.0
    %2027 = vmatpush1.msra.mxu0 0.0
    %2028 = vmatprep.subr.mxu0 0.0
    %2029 = vmatpush1.msra.mxu0 0.0
    %2030 = vmatprep.subr.mxu0 0.0
    %2031 = vmatpush1.msra.mxu0 0.0
    %2032 = vmatprep.subr.mxu0 0.0
    %2033 = vmatpush1.msra.mxu0 0.0
    %2034 = vmatprep.subr.mxu0 0.0
    %2035 = vmatpush1.msra.mxu0 0.0
    %2036 = vmatprep.subr.mxu0 0.0
    %2037 = vmatpush1.msra.mxu0 0.0
    %2038 = vmatprep.subr.mxu0 0.0
    %2039 = vmatpush1.msra.mxu0 0.0
    %2040 = vmatprep.subr.mxu0 0.0
    %2041 = vmatpush1.msra.mxu0 0.0
    %2042 = vmatprep.subr.mxu0 0.0
    %2043 = vmatpush1.msra.mxu0 0.0
    %2044 = vmatprep.subr.mxu0 0.0
    %2045 = vmatpush1.msra.mxu0 0.0
    %2046 = vmatprep.subr.mxu0 0.0
    %2047 = vmatpush1.msra.mxu0 0.0
    %2048 = vmatprep.subr.mxu0 0.0
    %2049 = vmatpush1.msra.mxu0 0.0
    %2050 = vmatprep.subr.mxu0 0.0
    %2051 = vmatpush1.msra.mxu0 0.0
    %2052 = vmatprep.subr.mxu0 0.0
    %2053 = vmatpush1.msra.mxu0 0.0
    %2054 = vmatprep.subr.mxu0 0.0
    %2055 = vmatpush1.msra.mxu0 0.0
    %2056 = vmatprep.subr.mxu0 0.0
    %2057 = vmatpush1.msra.mxu0 0.0
    %2058 = vmatprep.subr.mxu0 0.0
    %2059 = vmatpush1.msra.mxu0 0.0
    %2060 = vmatprep.subr.mxu0 0.0
    %2061 = vmatpush1.msra.mxu0 0.0
    %2062 = vmatprep.subr.mxu0 0.0
    %2063 = vmatpush1.msra.mxu0 0.0
    %2064 = vmatprep.subr.mxu0 0.0
    %2065 = vmatpush1.msra.mxu0 0.0
    %2066 = vmatprep.subr.mxu0 0.0
    %2067 = vmatpush1.msra.mxu0 0.0
    %2068 = vmatprep.subr.mxu0 0.0
    %2069 = vmatpush1.msra.mxu0 0.0
    %2070 = vmatprep.mubr.f32.mxu0 0.0
    %2071 = vmatmul.mubr.f32.gmra.mrb[0].mxu0 %v2004
    %v2072 = vpop.f32.mrb[0].mxu0
    %v2073 = vadd.f32 1e-08, %v2072
    %v2074 = vpop.f32.mrb[0].mxu0
    %2075 = vdwg.mxu0
    %v2076 = vrcp.pop %v2073
    %v2077 = vmul.f32 %v1134, %v2076
    %v2078 = vmul.f32 %v2002, %v2077
    %v2079 = vsel %vm99, %v2078, 0.0
    %v2080 = vrot.slane %v2079, 4
    %v2081 = vadd.f32 %v2079, %v2080
    %v2082 = vrot.slane %v2081, 2
    %v2083 = vadd.f32 %v2081, %v2082
    %v2084 = vrot.slane %v2083, 1
    %v2085 = vadd.f32 %v2083, %v2084
    %v2086 = vadd.f32 %v2085, 1e-08
    %v2087 = vrcp.pop %v2086
    %v2088 = vmul.f32 %v1219, %v2087
    %v2089 = vmul.f32 %v2078, %v2088
    %v2091 = vsel %vm99, %v2089, 0
    %2093 = vmatprep.subr.mxu0 0.0
    %2094 = vmatpush1.msra.mxu0 %v1054
    %2095 = vmatprep.subr.mxu0 0.0
    %2096 = vmatpush1.msra.mxu0 %v1055
    %2097 = vmatprep.subr.mxu0 0.0
    %2098 = vmatpush1.msra.mxu0 %v1056
    %2099 = vmatprep.subr.mxu0 0.0
    %2100 = vmatpush1.msra.mxu0 %v1057
    %2101 = vmatprep.subr.mxu0 0.0
    %2102 = vmatpush1.msra.mxu0 0.0
    %2103 = vmatprep.subr.mxu0 0.0
    %2104 = vmatpush1.msra.mxu0 0.0
    %2105 = vmatprep.subr.mxu0 0.0
    %2106 = vmatpush1.msra.mxu0 0.0
    %2107 = vmatprep.subr.mxu0 0.0
    %2108 = vmatpush1.msra.mxu0 0.0
    %2109 = vmatprep.subr.mxu0 0.0
    %2110 = vmatpush1.msra.mxu0 0.0
    %2111 = vmatprep.subr.mxu0 0.0
    %2112 = vmatpush1.msra.mxu0 0.0
    %2113 = vmatprep.subr.mxu0 0.0
    %2114 = vmatpush1.msra.mxu0 0.0
    %2115 = vmatprep.subr.mxu0 0.0
    %2116 = vmatpush1.msra.mxu0 0.0
    %2117 = vmatprep.subr.mxu0 0.0
    %2118 = vmatpush1.msra.mxu0 0.0
    %2119 = vmatprep.subr.mxu0 0.0
    %2120 = vmatpush1.msra.mxu0 0.0
    %2121 = vmatprep.subr.mxu0 0.0
    %2122 = vmatpush1.msra.mxu0 0.0
    %2123 = vmatprep.subr.mxu0 0.0
    %2124 = vmatpush1.msra.mxu0 0.0
    %2125 = vmatprep.subr.mxu0 0.0
    %2126 = vmatpush1.msra.mxu0 0.0
    %2127 = vmatprep.subr.mxu0 0.0
    %2128 = vmatpush1.msra.mxu0 0.0
    %2129 = vmatprep.subr.mxu0 0.0
    %2130 = vmatpush1.msra.mxu0 0.0
    %2131 = vmatprep.subr.mxu0 0.0
    %2132 = vmatpush1.msra.mxu0 0.0
    %2133 = vmatprep.subr.mxu0 0.0
    %2134 = vmatpush1.msra.mxu0 0.0
    %2135 = vmatprep.subr.mxu0 0.0
    %2136 = vmatpush1.msra.mxu0 0.0
    %2137 = vmatprep.subr.mxu0 0.0
    %2138 = vmatpush1.msra.mxu0 0.0
    %2139 = vmatprep.subr.mxu0 0.0
    %2140 = vmatpush1.msra.mxu0 0.0
    %2141 = vmatprep.subr.mxu0 0.0
    %2142 = vmatpush1.msra.mxu0 0.0
    %2143 = vmatprep.subr.mxu0 0.0
    %2144 = vmatpush1.msra.mxu0 0.0
    %2145 = vmatprep.subr.mxu0 0.0
    %2146 = vmatpush1.msra.mxu0 0.0
    %2147 = vmatprep.subr.mxu0 0.0
    %2148 = vmatpush1.msra.mxu0 0.0
    %2149 = vmatprep.subr.mxu0 0.0
    %2150 = vmatpush1.msra.mxu0 0.0
    %2151 = vmatprep.subr.mxu0 0.0
    %2152 = vmatpush1.msra.mxu0 0.0
    %2153 = vmatprep.subr.mxu0 0.0
    %2154 = vmatpush1.msra.mxu0 0.0
    %2155 = vmatprep.subr.mxu0 0.0
    %2156 = vmatpush1.msra.mxu0 0.0
    %2157 = vmatprep.mubr.f32.mxu0 0.0
    %2158 = vmatmul.mubr.f32.gmra.mrb[0].mxu0 %v2091
    %v2159 = vpop.f32.mrb[0].mxu0
    %v2160 = vadd.f32 1e-08, %v2159
    %v2161 = vpop.f32.mrb[0].mxu0
    %2162 = vdwg.mxu0
    %v2163 = vrcp.pop %v2160
    %v2164 = vmul.f32 %v1134, %v2163
    %v2165 = vmul.f32 %v2089, %v2164
    %v2166 = vsel %vm99, %v2165, 0.0
    %v2167 = vrot.slane %v2166, 4
    %v2168 = vadd.f32 %v2166, %v2167
    %v2169 = vrot.slane %v2168, 2
    %v2170 = vadd.f32 %v2168, %v2169
    %v2171 = vrot.slane %v2170, 1
    %v2172 = vadd.f32 %v2170, %v2171
    %v2173 = vadd.f32 %v2172, 1e-08
    %v2174 = vrcp.pop %v2173
    %v2175 = vmul.f32 %v1219, %v2174
    %v2176 = vmul.f32 %v2165, %v2175
    %v2178 = vsel %vm99, %v2176, 0
    %2180 = vmatprep.subr.mxu0 0.0
    %2181 = vmatpush1.msra.mxu0 %v1054
    %2182 = vmatprep.subr.mxu0 0.0
    %2183 = vmatpush1.msra.mxu0 %v1055
    %2184 = vmatprep.subr.mxu0 0.0
    %2185 = vmatpush1.msra.mxu0 %v1056
    %2186 = vmatprep.subr.mxu0 0.0
    %2187 = vmatpush1.msra.mxu0 %v1057
    %2188 = vmatprep.subr.mxu0 0.0
    %2189 = vmatpush1.msra.mxu0 0.0
    %2190 = vmatprep.subr.mxu0 0.0
    %2191 = vmatpush1.msra.mxu0 0.0
    %2192 = vmatprep.subr.mxu0 0.0
    %2193 = vmatpush1.msra.mxu0 0.0
    %2194 = vmatprep.subr.mxu0 0.0
    %2195 = vmatpush1.msra.mxu0 0.0
    %2196 = vmatprep.subr.mxu0 0.0
    %2197 = vmatpush1.msra.mxu0 0.0
    %2198 = vmatprep.subr.mxu0 0.0
    %2199 = vmatpush1.msra.mxu0 0.0
    %2200 = vmatprep.subr.mxu0 0.0
    %2201 = vmatpush1.msra.mxu0 0.0
    %2202 = vmatprep.subr.mxu0 0.0
    %2203 = vmatpush1.msra.mxu0 0.0
    %2204 = vmatprep.subr.mxu0 0.0
    %2205 = vmatpush1.msra.mxu0 0.0
    %2206 = vmatprep.subr.mxu0 0.0
    %2207 = vmatpush1.msra.mxu0 0.0
    %2208 = vmatprep.subr.mxu0 0.0
    %2209 = vmatpush1.msra.mxu0 0.0
    %2210 = vmatprep.subr.mxu0 0.0
    %2211 = vmatpush1.msra.mxu0 0.0
    %2212 = vmatprep.subr.mxu0 0.0
    %2213 = vmatpush1.msra.mxu0 0.0
    %2214 = vmatprep.subr.mxu0 0.0
    %2215 = vmatpush1.msra.mxu0 0.0
    %2216 = vmatprep.subr.mxu0 0.0
    %2217 = vmatpush1.msra.mxu0 0.0
    %2218 = vmatprep.subr.mxu0 0.0
    %2219 = vmatpush1.msra.mxu0 0.0
    %2220 = vmatprep.subr.mxu0 0.0
    %2221 = vmatpush1.msra.mxu0 0.0
    %2222 = vmatprep.subr.mxu0 0.0
    %2223 = vmatpush1.msra.mxu0 0.0
    %2224 = vmatprep.subr.mxu0 0.0
    %2225 = vmatpush1.msra.mxu0 0.0
    %2226 = vmatprep.subr.mxu0 0.0
    %2227 = vmatpush1.msra.mxu0 0.0
    %2228 = vmatprep.subr.mxu0 0.0
    %2229 = vmatpush1.msra.mxu0 0.0
    %2230 = vmatprep.subr.mxu0 0.0
    %2231 = vmatpush1.msra.mxu0 0.0
    %2232 = vmatprep.subr.mxu0 0.0
    %2233 = vmatpush1.msra.mxu0 0.0
    %2234 = vmatprep.subr.mxu0 0.0
    %2235 = vmatpush1.msra.mxu0 0.0
    %2236 = vmatprep.subr.mxu0 0.0
    %2237 = vmatpush1.msra.mxu0 0.0
    %2238 = vmatprep.subr.mxu0 0.0
    %2239 = vmatpush1.msra.mxu0 0.0
    %2240 = vmatprep.subr.mxu0 0.0
    %2241 = vmatpush1.msra.mxu0 0.0
    %2242 = vmatprep.subr.mxu0 0.0
    %2243 = vmatpush1.msra.mxu0 0.0
    %2244 = vmatprep.mubr.f32.mxu0 0.0
    %2245 = vmatmul.mubr.f32.gmra.mrb[0].mxu0 %v2178
    %v2246 = vpop.f32.mrb[0].mxu0
    %v2247 = vadd.f32 1e-08, %v2246
    %v2248 = vpop.f32.mrb[0].mxu0
    %2249 = vdwg.mxu0
    %v2250 = vrcp.pop %v2247
    %v2251 = vmul.f32 %v1134, %v2250
    %v2252 = vmul.f32 %v2176, %v2251
    %v2253 = vsel %vm99, %v2252, 0.0
    %v2254 = vrot.slane %v2253, 4
    %v2255 = vadd.f32 %v2253, %v2254
    %v2256 = vrot.slane %v2255, 2
    %v2257 = vadd.f32 %v2255, %v2256
    %v2258 = vrot.slane %v2257, 1
    %v2259 = vadd.f32 %v2257, %v2258
    %v2260 = vadd.f32 %v2259, 1e-08
    %v2261 = vrcp.pop %v2260
    %v2262 = vmul.f32 %v1219, %v2261
    %v2263 = vmul.f32 %v2252, %v2262
    %v2265 = vsel %vm99, %v2263, 0
    %2267 = vmatprep.subr.mxu0 0.0
    %2268 = vmatpush1.msra.mxu0 %v1054
    %2269 = vmatprep.subr.mxu0 0.0
    %2270 = vmatpush1.msra.mxu0 %v1055
    %2271 = vmatprep.subr.mxu0 0.0
    %2272 = vmatpush1.msra.mxu0 %v1056
    %2273 = vmatprep.subr.mxu0 0.0
    %2274 = vmatpush1.msra.mxu0 %v1057
    %2275 = vmatprep.subr.mxu0 0.0
    %2276 = vmatpush1.msra.mxu0 0.0
    %2277 = vmatprep.subr.mxu0 0.0
    %2278 = vmatpush1.msra.mxu0 0.0
    %2279 = vmatprep.subr.mxu0 0.0
    %2280 = vmatpush1.msra.mxu0 0.0
    %2281 = vmatprep.subr.mxu0 0.0
    %2282 = vmatpush1.msra.mxu0 0.0
    %2283 = vmatprep.subr.mxu0 0.0
    %2284 = vmatpush1.msra.mxu0 0.0
    %2285 = vmatprep.subr.mxu0 0.0
    %2286 = vmatpush1.msra.mxu0 0.0
    %2287 = vmatprep.subr.mxu0 0.0
    %2288 = vmatpush1.msra.mxu0 0.0
    %2289 = vmatprep.subr.mxu0 0.0
    %2290 = vmatpush1.msra.mxu0 0.0
    %2291 = vmatprep.subr.mxu0 0.0
    %2292 = vmatpush1.msra.mxu0 0.0
    %2293 = vmatprep.subr.mxu0 0.0
    %2294 = vmatpush1.msra.mxu0 0.0
    %2295 = vmatprep.subr.mxu0 0.0
    %2296 = vmatpush1.msra.mxu0 0.0
    %2297 = vmatprep.subr.mxu0 0.0
    %2298 = vmatpush1.msra.mxu0 0.0
    %2299 = vmatprep.subr.mxu0 0.0
    %2300 = vmatpush1.msra.mxu0 0.0
    %2301 = vmatprep.subr.mxu0 0.0
    %2302 = vmatpush1.msra.mxu0 0.0
    %2303 = vmatprep.subr.mxu0 0.0
    %2304 = vmatpush1.msra.mxu0 0.0
    %2305 = vmatprep.subr.mxu0 0.0
    %2306 = vmatpush1.msra.mxu0 0.0
    %2307 = vmatprep.subr.mxu0 0.0
    %2308 = vmatpush1.msra.mxu0 0.0
    %2309 = vmatprep.subr.mxu0 0.0
    %2310 = vmatpush1.msra.mxu0 0.0
    %2311 = vmatprep.subr.mxu0 0.0
    %2312 = vmatpush1.msra.mxu0 0.0
    %2313 = vmatprep.subr.mxu0 0.0
    %2314 = vmatpush1.msra.mxu0 0.0
    %2315 = vmatprep.subr.mxu0 0.0
    %2316 = vmatpush1.msra.mxu0 0.0
    %2317 = vmatprep.subr.mxu0 0.0
    %2318 = vmatpush1.msra.mxu0 0.0
    %2319 = vmatprep.subr.mxu0 0.0
    %2320 = vmatpush1.msra.mxu0 0.0
    %2321 = vmatprep.subr.mxu0 0.0
    %2322 = vmatpush1.msra.mxu0 0.0
    %2323 = vmatprep.subr.mxu0 0.0
    %2324 = vmatpush1.msra.mxu0 0.0
    %2325 = vmatprep.subr.mxu0 0.0
    %2326 = vmatpush1.msra.mxu0 0.0
    %2327 = vmatprep.subr.mxu0 0.0
    %2328 = vmatpush1.msra.mxu0 0.0
    %2329 = vmatprep.subr.mxu0 0.0
    %2330 = vmatpush1.msra.mxu0 0.0
    %2331 = vmatprep.mubr.f32.mxu0 0.0
    %2332 = vmatmul.mubr.f32.gmra.mrb[0].mxu0 %v2265
    %v2333 = vpop.f32.mrb[0].mxu0
    %v2334 = vadd.f32 1e-08, %v2333
    %v2335 = vpop.f32.mrb[0].mxu0
    %2336 = vdwg.mxu0
    %v2337 = vrcp.pop %v2334
    %v2338 = vmul.f32 %v1134, %v2337
    %v2339 = vmul.f32 %v2263, %v2338
    %v2340 = vsel %vm99, %v2339, 0.0
    %v2341 = vrot.slane %v2340, 4
    %v2342 = vadd.f32 %v2340, %v2341
    %v2343 = vrot.slane %v2342, 2
    %v2344 = vadd.f32 %v2342, %v2343
    %v2345 = vrot.slane %v2344, 1
    %v2346 = vadd.f32 %v2344, %v2345
    %v2347 = vadd.f32 %v2346, 1e-08
    %v2348 = vrcp.pop %v2347
    %v2349 = vmul.f32 %v1219, %v2348
    %v2350 = vmul.f32 %v2339, %v2349
    %v2352 = vsel %vm99, %v2350, 0
    %2354 = vmatprep.subr.mxu0 0.0
    %2355 = vmatpush1.msra.mxu0 %v1054
    %2356 = vmatprep.subr.mxu0 0.0
    %2357 = vmatpush1.msra.mxu0 %v1055
    %2358 = vmatprep.subr.mxu0 0.0
    %2359 = vmatpush1.msra.mxu0 %v1056
    %2360 = vmatprep.subr.mxu0 0.0
    %2361 = vmatpush1.msra.mxu0 %v1057
    %2362 = vmatprep.subr.mxu0 0.0
    %2363 = vmatpush1.msra.mxu0 0.0
    %2364 = vmatprep.subr.mxu0 0.0
    %2365 = vmatpush1.msra.mxu0 0.0
    %2366 = vmatprep.subr.mxu0 0.0
    %2367 = vmatpush1.msra.mxu0 0.0
    %2368 = vmatprep.subr.mxu0 0.0
    %2369 = vmatpush1.msra.mxu0 0.0
    %2370 = vmatprep.subr.mxu0 0.0
    %2371 = vmatpush1.msra.mxu0 0.0
    %2372 = vmatprep.subr.mxu0 0.0
    %2373 = vmatpush1.msra.mxu0 0.0
    %2374 = vmatprep.subr.mxu0 0.0
    %2375 = vmatpush1.msra.mxu0 0.0
    %2376 = vmatprep.subr.mxu0 0.0
    %2377 = vmatpush1.msra.mxu0 0.0
    %2378 = vmatprep.subr.mxu0 0.0
    %2379 = vmatpush1.msra.mxu0 0.0
    %2380 = vmatprep.subr.mxu0 0.0
    %2381 = vmatpush1.msra.mxu0 0.0
    %2382 = vmatprep.subr.mxu0 0.0
    %2383 = vmatpush1.msra.mxu0 0.0
    %2384 = vmatprep.subr.mxu0 0.0
    %2385 = vmatpush1.msra.mxu0 0.0
    %2386 = vmatprep.subr.mxu0 0.0
    %2387 = vmatpush1.msra.mxu0 0.0
    %2388 = vmatprep.subr.mxu0 0.0
    %2389 = vmatpush1.msra.mxu0 0.0
    %2390 = vmatprep.subr.mxu0 0.0
    %2391 = vmatpush1.msra.mxu0 0.0
    %2392 = vmatprep.subr.mxu0 0.0
    %2393 = vmatpush1.msra.mxu0 0.0
    %2394 = vmatprep.subr.mxu0 0.0
    %2395 = vmatpush1.msra.mxu0 0.0
    %2396 = vmatprep.subr.mxu0 0.0
    %2397 = vmatpush1.msra.mxu0 0.0
    %2398 = vmatprep.subr.mxu0 0.0
    %2399 = vmatpush1.msra.mxu0 0.0
    %2400 = vmatprep.subr.mxu0 0.0
    %2401 = vmatpush1.msra.mxu0 0.0
    %2402 = vmatprep.subr.mxu0 0.0
    %2403 = vmatpush1.msra.mxu0 0.0
    %2404 = vmatprep.subr.mxu0 0.0
    %2405 = vmatpush1.msra.mxu0 0.0
    %2406 = vmatprep.subr.mxu0 0.0
    %2407 = vmatpush1.msra.mxu0 0.0
    %2408 = vmatprep.subr.mxu0 0.0
    %2409 = vmatpush1.msra.mxu0 0.0
    %2410 = vmatprep.subr.mxu0 0.0
    %2411 = vmatpush1.msra.mxu0 0.0
    %2412 = vmatprep.subr.mxu0 0.0
    %2413 = vmatpush1.msra.mxu0 0.0
    %2414 = vmatprep.subr.mxu0 0.0
    %2415 = vmatpush1.msra.mxu0 0.0
    %2416 = vmatprep.subr.mxu0 0.0
    %2417 = vmatpush1.msra.mxu0 0.0
    %2418 = vmatprep.mubr.f32.mxu0 0.0
    %2419 = vmatmul.mubr.f32.gmra.mrb[0].mxu0 %v2352
    %v2420 = vpop.f32.mrb[0].mxu0
    %v2421 = vadd.f32 1e-08, %v2420
    %v2422 = vpop.f32.mrb[0].mxu0
    %2423 = vdwg.mxu0
    %v2424 = vrcp.pop %v2421
    %v2425 = vmul.f32 %v1134, %v2424
    %v2426 = vmul.f32 %v2350, %v2425
    %v2427 = vsel %vm99, %v2426, 0.0
    %v2428 = vrot.slane %v2427, 4
    %v2429 = vadd.f32 %v2427, %v2428
    %v2430 = vrot.slane %v2429, 2
    %v2431 = vadd.f32 %v2429, %v2430
    %v2432 = vrot.slane %v2431, 1
    %v2433 = vadd.f32 %v2431, %v2432
    %v2434 = vadd.f32 %v2433, 1e-08
    %v2435 = vrcp.pop %v2434
    %v2436 = vmul.f32 %v1219, %v2435
    %v2437 = vmul.f32 %v2426, %v2436
    %v2439 = vsel %vm99, %v2437, 0
    %2441 = vmatprep.subr.mxu0 0.0
    %2442 = vmatpush1.msra.mxu0 %v1054
    %2443 = vmatprep.subr.mxu0 0.0
    %2444 = vmatpush1.msra.mxu0 %v1055
    %2445 = vmatprep.subr.mxu0 0.0
    %2446 = vmatpush1.msra.mxu0 %v1056
    %2447 = vmatprep.subr.mxu0 0.0
    %2448 = vmatpush1.msra.mxu0 %v1057
    %2449 = vmatprep.subr.mxu0 0.0
    %2450 = vmatpush1.msra.mxu0 0.0
    %2451 = vmatprep.subr.mxu0 0.0
    %2452 = vmatpush1.msra.mxu0 0.0
    %2453 = vmatprep.subr.mxu0 0.0
    %2454 = vmatpush1.msra.mxu0 0.0
    %2455 = vmatprep.subr.mxu0 0.0
    %2456 = vmatpush1.msra.mxu0 0.0
    %2457 = vmatprep.subr.mxu0 0.0
    %2458 = vmatpush1.msra.mxu0 0.0
    %2459 = vmatprep.subr.mxu0 0.0
    %2460 = vmatpush1.msra.mxu0 0.0
    %2461 = vmatprep.subr.mxu0 0.0
    %2462 = vmatpush1.msra.mxu0 0.0
    %2463 = vmatprep.subr.mxu0 0.0
    %2464 = vmatpush1.msra.mxu0 0.0
    %2465 = vmatprep.subr.mxu0 0.0
    %2466 = vmatpush1.msra.mxu0 0.0
    %2467 = vmatprep.subr.mxu0 0.0
    %2468 = vmatpush1.msra.mxu0 0.0
    %2469 = vmatprep.subr.mxu0 0.0
    %2470 = vmatpush1.msra.mxu0 0.0
    %2471 = vmatprep.subr.mxu0 0.0
    %2472 = vmatpush1.msra.mxu0 0.0
    %2473 = vmatprep.subr.mxu0 0.0
    %2474 = vmatpush1.msra.mxu0 0.0
    %2475 = vmatprep.subr.mxu0 0.0
    %2476 = vmatpush1.msra.mxu0 0.0
    %2477 = vmatprep.subr.mxu0 0.0
    %2478 = vmatpush1.msra.mxu0 0.0
    %2479 = vmatprep.subr.mxu0 0.0
    %2480 = vmatpush1.msra.mxu0 0.0
    %2481 = vmatprep.subr.mxu0 0.0
    %2482 = vmatpush1.msra.mxu0 0.0
    %2483 = vmatprep.subr.mxu0 0.0
    %2484 = vmatpush1.msra.mxu0 0.0
    %2485 = vmatprep.subr.mxu0 0.0
    %2486 = vmatpush1.msra.mxu0 0.0
    %2487 = vmatprep.subr.mxu0 0.0
    %2488 = vmatpush1.msra.mxu0 0.0
    %2489 = vmatprep.subr.mxu0 0.0
    %2490 = vmatpush1.msra.mxu0 0.0
    %2491 = vmatprep.subr.mxu0 0.0
    %2492 = vmatpush1.msra.mxu0 0.0
    %2493 = vmatprep.subr.mxu0 0.0
    %2494 = vmatpush1.msra.mxu0 0.0
    %2495 = vmatprep.subr.mxu0 0.0
    %2496 = vmatpush1.msra.mxu0 0.0
    %2497 = vmatprep.subr.mxu0 0.0
    %2498 = vmatpush1.msra.mxu0 0.0
    %2499 = vmatprep.subr.mxu0 0.0
    %2500 = vmatpush1.msra.mxu0 0.0
    %2501 = vmatprep.subr.mxu0 0.0
    %2502 = vmatpush1.msra.mxu0 0.0
    %2503 = vmatprep.subr.mxu0 0.0
    %2504 = vmatpush1.msra.mxu0 0.0
    %2505 = vmatprep.mubr.f32.mxu0 0.0
    %2506 = vmatmul.mubr.f32.gmra.mrb[0].mxu0 %v2439
    %v2507 = vpop.f32.mrb[0].mxu0
    %v2508 = vadd.f32 1e-08, %v2507
    %v2509 = vpop.f32.mrb[0].mxu0
    %2510 = vdwg.mxu0
    %v2511 = vrcp.pop %v2508
    %v2512 = vmul.f32 %v1134, %v2511
    %v2513 = vmul.f32 %v2437, %v2512
    %v2514 = vsel %vm99, %v2513, 0.0
    %v2515 = vrot.slane %v2514, 4
    %v2516 = vadd.f32 %v2514, %v2515
    %v2517 = vrot.slane %v2516, 2
    %v2518 = vadd.f32 %v2516, %v2517
    %v2519 = vrot.slane %v2518, 1
    %v2520 = vadd.f32 %v2518, %v2519
    %v2521 = vadd.f32 %v2520, 1e-08
    %v2522 = vrcp.pop %v2521
    %v2523 = vmul.f32 %v1219, %v2522
    %v2524 = vmul.f32 %v2513, %v2523
    %v2526 = vsel %vm99, %v2524, 0
    %2528 = vmatprep.subr.mxu0 0.0
    %2529 = vmatpush1.msra.mxu0 %v1054
    %2530 = vmatprep.subr.mxu0 0.0
    %2531 = vmatpush1.msra.mxu0 %v1055
    %2532 = vmatprep.subr.mxu0 0.0
    %2533 = vmatpush1.msra.mxu0 %v1056
    %2534 = vmatprep.subr.mxu0 0.0
    %2535 = vmatpush1.msra.mxu0 %v1057
    %2536 = vmatprep.subr.mxu0 0.0
    %2537 = vmatpush1.msra.mxu0 0.0
    %2538 = vmatprep.subr.mxu0 0.0
    %2539 = vmatpush1.msra.mxu0 0.0
    %2540 = vmatprep.subr.mxu0 0.0
    %2541 = vmatpush1.msra.mxu0 0.0
    %2542 = vmatprep.subr.mxu0 0.0
    %2543 = vmatpush1.msra.mxu0 0.0
    %2544 = vmatprep.subr.mxu0 0.0
    %2545 = vmatpush1.msra.mxu0 0.0
    %2546 = vmatprep.subr.mxu0 0.0
    %2547 = vmatpush1.msra.mxu0 0.0
    %2548 = vmatprep.subr.mxu0 0.0
    %2549 = vmatpush1.msra.mxu0 0.0
    %2550 = vmatprep.subr.mxu0 0.0
    %2551 = vmatpush1.msra.mxu0 0.0
    %2552 = vmatprep.subr.mxu0 0.0
    %2553 = vmatpush1.msra.mxu0 0.0
    %2554 = vmatprep.subr.mxu0 0.0
    %2555 = vmatpush1.msra.mxu0 0.0
    %2556 = vmatprep.subr.mxu0 0.0
    %2557 = vmatpush1.msra.mxu0 0.0
    %2558 = vmatprep.subr.mxu0 0.0
    %2559 = vmatpush1.msra.mxu0 0.0
    %2560 = vmatprep.subr.mxu0 0.0
    %2561 = vmatpush1.msra.mxu0 0.0
    %2562 = vmatprep.subr.mxu0 0.0
    %2563 = vmatpush1.msra.mxu0 0.0
    %2564 = vmatprep.subr.mxu0 0.0
    %2565 = vmatpush1.msra.mxu0 0.0
    %2566 = vmatprep.subr.mxu0 0.0
    %2567 = vmatpush1.msra.mxu0 0.0
    %2568 = vmatprep.subr.mxu0 0.0
    %2569 = vmatpush1.msra.mxu0 0.0
    %2570 = vmatprep.subr.mxu0 0.0
    %2571 = vmatpush1.msra.mxu0 0.0
    %2572 = vmatprep.subr.mxu0 0.0
    %2573 = vmatpush1.msra.mxu0 0.0
    %2574 = vmatprep.subr.mxu0 0.0
    %2575 = vmatpush1.msra.mxu0 0.0
    %2576 = vmatprep.subr.mxu0 0.0
    %2577 = vmatpush1.msra.mxu0 0.0
    %2578 = vmatprep.subr.mxu0 0.0
    %2579 = vmatpush1.msra.mxu0 0.0
    %2580 = vmatprep.subr.mxu0 0.0
    %2581 = vmatpush1.msra.mxu0 0.0
    %2582 = vmatprep.subr.mxu0 0.0
    %2583 = vmatpush1.msra.mxu0 0.0
    %2584 = vmatprep.subr.mxu0 0.0
    %2585 = vmatpush1.msra.mxu0 0.0
    %2586 = vmatprep.subr.mxu0 0.0
    %2587 = vmatpush1.msra.mxu0 0.0
    %2588 = vmatprep.subr.mxu0 0.0
    %2589 = vmatpush1.msra.mxu0 0.0
    %2590 = vmatprep.subr.mxu0 0.0
    %2591 = vmatpush1.msra.mxu0 0.0
    %2592 = vmatprep.mubr.f32.mxu0 0.0
    %2593 = vmatmul.mubr.f32.gmra.mrb[0].mxu0 %v2526
    %v2594 = vpop.f32.mrb[0].mxu0
    %v2595 = vadd.f32 1e-08, %v2594
    %v2596 = vpop.f32.mrb[0].mxu0
    %2597 = vdwg.mxu0
    %v2598 = vrcp.pop %v2595
    %v2599 = vmul.f32 %v1134, %v2598
    %v2600 = vmul.f32 %v2524, %v2599
    %v2601 = vsel %vm99, %v2600, 0.0
    %v2602 = vrot.slane %v2601, 4
    %v2603 = vadd.f32 %v2601, %v2602
    %v2604 = vrot.slane %v2603, 2
    %v2605 = vadd.f32 %v2603, %v2604
    %v2606 = vrot.slane %v2605, 1
    %v2607 = vadd.f32 %v2605, %v2606
    %v2608 = vadd.f32 %v2607, 1e-08
    %v2609 = vrcp.pop %v2608
    %v2610 = vmul.f32 %v1219, %v2609
    %v2611 = vmul.f32 %v2600, %v2610
    %v2613 = vsel %vm99, %v2611, 0
    %2615 = vmatprep.subr.mxu0 0.0
    %2616 = vmatpush1.msra.mxu0 %v1054
    %2617 = vmatprep.subr.mxu0 0.0
    %2618 = vmatpush1.msra.mxu0 %v1055
    %2619 = vmatprep.subr.mxu0 0.0
    %2620 = vmatpush1.msra.mxu0 %v1056
    %2621 = vmatprep.subr.mxu0 0.0
    %2622 = vmatpush1.msra.mxu0 %v1057
    %2623 = vmatprep.subr.mxu0 0.0
    %2624 = vmatpush1.msra.mxu0 0.0
    %2625 = vmatprep.subr.mxu0 0.0
    %2626 = vmatpush1.msra.mxu0 0.0
    %2627 = vmatprep.subr.mxu0 0.0
    %2628 = vmatpush1.msra.mxu0 0.0
    %2629 = vmatprep.subr.mxu0 0.0
    %2630 = vmatpush1.msra.mxu0 0.0
    %2631 = vmatprep.subr.mxu0 0.0
    %2632 = vmatpush1.msra.mxu0 0.0
    %2633 = vmatprep.subr.mxu0 0.0
    %2634 = vmatpush1.msra.mxu0 0.0
    %2635 = vmatprep.subr.mxu0 0.0
    %2636 = vmatpush1.msra.mxu0 0.0
    %2637 = vmatprep.subr.mxu0 0.0
    %2638 = vmatpush1.msra.mxu0 0.0
    %2639 = vmatprep.subr.mxu0 0.0
    %2640 = vmatpush1.msra.mxu0 0.0
    %2641 = vmatprep.subr.mxu0 0.0
    %2642 = vmatpush1.msra.mxu0 0.0
    %2643 = vmatprep.subr.mxu0 0.0
    %2644 = vmatpush1.msra.mxu0 0.0
    %2645 = vmatprep.subr.mxu0 0.0
    %2646 = vmatpush1.msra.mxu0 0.0
    %2647 = vmatprep.subr.mxu0 0.0
    %2648 = vmatpush1.msra.mxu0 0.0
    %2649 = vmatprep.subr.mxu0 0.0
    %2650 = vmatpush1.msra.mxu0 0.0
    %2651 = vmatprep.subr.mxu0 0.0
    %2652 = vmatpush1.msra.mxu0 0.0
    %2653 = vmatprep.subr.mxu0 0.0
    %2654 = vmatpush1.msra.mxu0 0.0
    %2655 = vmatprep.subr.mxu0 0.0
    %2656 = vmatpush1.msra.mxu0 0.0
    %2657 = vmatprep.subr.mxu0 0.0
    %2658 = vmatpush1.msra.mxu0 0.0
    %2659 = vmatprep.subr.mxu0 0.0
    %2660 = vmatpush1.msra.mxu0 0.0
    %2661 = vmatprep.subr.mxu0 0.0
    %2662 = vmatpush1.msra.mxu0 0.0
    %2663 = vmatprep.subr.mxu0 0.0
    %2664 = vmatpush1.msra.mxu0 0.0
    %2665 = vmatprep.subr.mxu0 0.0
    %2666 = vmatpush1.msra.mxu0 0.0
    %2667 = vmatprep.subr.mxu0 0.0
    %2668 = vmatpush1.msra.mxu0 0.0
    %2669 = vmatprep.subr.mxu0 0.0
    %2670 = vmatpush1.msra.mxu0 0.0
    %2671 = vmatprep.subr.mxu0 0.0
    %2672 = vmatpush1.msra.mxu0 0.0
    %2673 = vmatprep.subr.mxu0 0.0
    %2674 = vmatpush1.msra.mxu0 0.0
    %2675 = vmatprep.subr.mxu0 0.0
    %2676 = vmatpush1.msra.mxu0 0.0
    %2677 = vmatprep.subr.mxu0 0.0
    %2678 = vmatpush1.msra.mxu0 0.0
    %2679 = vmatprep.mubr.f32.mxu0 0.0
    %2680 = vmatmul.mubr.f32.gmra.mrb[0].mxu0 %v2613
    %v2681 = vpop.f32.mrb[0].mxu0
    %v2682 = vadd.f32 1e-08, %v2681
    %v2683 = vpop.f32.mrb[0].mxu0
    %2684 = vdwg.mxu0
    %v2685 = vrcp.pop %v2682
    %v2686 = vmul.f32 %v1134, %v2685
    %v2687 = vmul.f32 %v2611, %v2686
    %v2688 = vsel %vm99, %v2687, 0.0
    %v2689 = vrot.slane %v2688, 4
    %v2690 = vadd.f32 %v2688, %v2689
    %v2691 = vrot.slane %v2690, 2
    %v2692 = vadd.f32 %v2690, %v2691
    %v2693 = vrot.slane %v2692, 1
    %v2694 = vadd.f32 %v2692, %v2693
    %v2695 = vadd.f32 %v2694, 1e-08
    %v2696 = vrcp.pop %v2695
    %v2697 = vmul.f32 %v1219, %v2696
    %v2698 = vmul.f32 %v2687, %v2697
    %v2700 = vsel %vm99, %v2698, 0
    %2702 = vmatprep.subr.mxu0 0.0
    %2703 = vmatpush1.msra.mxu0 %v1054
    %2704 = vmatprep.subr.mxu0 0.0
    %2705 = vmatpush1.msra.mxu0 %v1055
    %2706 = vmatprep.subr.mxu0 0.0
    %2707 = vmatpush1.msra.mxu0 %v1056
    %2708 = vmatprep.subr.mxu0 0.0
    %2709 = vmatpush1.msra.mxu0 %v1057
    %2710 = vmatprep.subr.mxu0 0.0
    %2711 = vmatpush1.msra.mxu0 0.0
    %2712 = vmatprep.subr.mxu0 0.0
    %2713 = vmatpush1.msra.mxu0 0.0
    %2714 = vmatprep.subr.mxu0 0.0
    %2715 = vmatpush1.msra.mxu0 0.0
    %2716 = vmatprep.subr.mxu0 0.0
    %2717 = vmatpush1.msra.mxu0 0.0
    %2718 = vmatprep.subr.mxu0 0.0
    %2719 = vmatpush1.msra.mxu0 0.0
    %2720 = vmatprep.subr.mxu0 0.0
    %2721 = vmatpush1.msra.mxu0 0.0
    %2722 = vmatprep.subr.mxu0 0.0
    %2723 = vmatpush1.msra.mxu0 0.0
    %2724 = vmatprep.subr.mxu0 0.0
    %2725 = vmatpush1.msra.mxu0 0.0
    %2726 = vmatprep.subr.mxu0 0.0
    %2727 = vmatpush1.msra.mxu0 0.0
    %2728 = vmatprep.subr.mxu0 0.0
    %2729 = vmatpush1.msra.mxu0 0.0
    %2730 = vmatprep.subr.mxu0 0.0
    %2731 = vmatpush1.msra.mxu0 0.0
    %2732 = vmatprep.subr.mxu0 0.0
    %2733 = vmatpush1.msra.mxu0 0.0
    %2734 = vmatprep.subr.mxu0 0.0
    %2735 = vmatpush1.msra.mxu0 0.0
    %2736 = vmatprep.subr.mxu0 0.0
    %2737 = vmatpush1.msra.mxu0 0.0
    %2738 = vmatprep.subr.mxu0 0.0
    %2739 = vmatpush1.msra.mxu0 0.0
    %2740 = vmatprep.subr.mxu0 0.0
    %2741 = vmatpush1.msra.mxu0 0.0
    %2742 = vmatprep.subr.mxu0 0.0
    %2743 = vmatpush1.msra.mxu0 0.0
    %2744 = vmatprep.subr.mxu0 0.0
    %2745 = vmatpush1.msra.mxu0 0.0
    %2746 = vmatprep.subr.mxu0 0.0
    %2747 = vmatpush1.msra.mxu0 0.0
    %2748 = vmatprep.subr.mxu0 0.0
    %2749 = vmatpush1.msra.mxu0 0.0
    %2750 = vmatprep.subr.mxu0 0.0
    %2751 = vmatpush1.msra.mxu0 0.0
    %2752 = vmatprep.subr.mxu0 0.0
    %2753 = vmatpush1.msra.mxu0 0.0
    %2754 = vmatprep.subr.mxu0 0.0
    %2755 = vmatpush1.msra.mxu0 0.0
    %2756 = vmatprep.subr.mxu0 0.0
    %2757 = vmatpush1.msra.mxu0 0.0
    %2758 = vmatprep.subr.mxu0 0.0
    %2759 = vmatpush1.msra.mxu0 0.0
    %2760 = vmatprep.subr.mxu0 0.0
    %2761 = vmatpush1.msra.mxu0 0.0
    %2762 = vmatprep.subr.mxu0 0.0
    %2763 = vmatpush1.msra.mxu0 0.0
    %2764 = vmatprep.subr.mxu0 0.0
    %2765 = vmatpush1.msra.mxu0 0.0
    %2766 = vmatprep.mubr.f32.mxu0 0.0
    %2767 = vmatmul.mubr.f32.gmra.mrb[0].mxu0 %v2700
    %v2768 = vpop.f32.mrb[0].mxu0
    %v2769 = vadd.f32 1e-08, %v2768
    %v2770 = vpop.f32.mrb[0].mxu0
    %2771 = vdwg.mxu0
    %v2772 = vrcp.pop %v2769
    %v2773 = vmul.f32 %v1134, %v2772
    %v2774 = vmul.f32 %v2698, %v2773
    %v2775 = vsel %vm99, %v2774, 0.0
    %v2776 = vrot.slane %v2775, 4
    %v2777 = vadd.f32 %v2775, %v2776
    %v2778 = vrot.slane %v2777, 2
    %v2779 = vadd.f32 %v2777, %v2778
    %v2780 = vrot.slane %v2779, 1
    %v2781 = vadd.f32 %v2779, %v2780
    %v2782 = vadd.f32 %v2781, 1e-08
    %v2783 = vrcp.pop %v2782
    %v2784 = vmul.f32 %v1219, %v2783
    %v2785 = vmul.f32 %v2774, %v2784
    %v2787 = vsel %vm99, %v2785, 0
    %2789 = vmatprep.subr.mxu0 0.0
    %2790 = vmatpush1.msra.mxu0 %v1054
    %2791 = vmatprep.subr.mxu0 0.0
    %2792 = vmatpush1.msra.mxu0 %v1055
    %2793 = vmatprep.subr.mxu0 0.0
    %2794 = vmatpush1.msra.mxu0 %v1056
    %2795 = vmatprep.subr.mxu0 0.0
    %2796 = vmatpush1.msra.mxu0 %v1057
    %2797 = vmatprep.subr.mxu0 0.0
    %2798 = vmatpush1.msra.mxu0 0.0
    %2799 = vmatprep.subr.mxu0 0.0
    %2800 = vmatpush1.msra.mxu0 0.0
    %2801 = vmatprep.subr.mxu0 0.0
    %2802 = vmatpush1.msra.mxu0 0.0
    %2803 = vmatprep.subr.mxu0 0.0
    %2804 = vmatpush1.msra.mxu0 0.0
    %2805 = vmatprep.subr.mxu0 0.0
    %2806 = vmatpush1.msra.mxu0 0.0
    %2807 = vmatprep.subr.mxu0 0.0
    %2808 = vmatpush1.msra.mxu0 0.0
    %2809 = vmatprep.subr.mxu0 0.0
    %2810 = vmatpush1.msra.mxu0 0.0
    %2811 = vmatprep.subr.mxu0 0.0
    %2812 = vmatpush1.msra.mxu0 0.0
    %2813 = vmatprep.subr.mxu0 0.0
    %2814 = vmatpush1.msra.mxu0 0.0
    %2815 = vmatprep.subr.mxu0 0.0
    %2816 = vmatpush1.msra.mxu0 0.0
    %2817 = vmatprep.subr.mxu0 0.0
    %2818 = vmatpush1.msra.mxu0 0.0
    %2819 = vmatprep.subr.mxu0 0.0
    %2820 = vmatpush1.msra.mxu0 0.0
    %2821 = vmatprep.subr.mxu0 0.0
    %2822 = vmatpush1.msra.mxu0 0.0
    %2823 = vmatprep.subr.mxu0 0.0
    %2824 = vmatpush1.msra.mxu0 0.0
    %2825 = vmatprep.subr.mxu0 0.0
    %2826 = vmatpush1.msra.mxu0 0.0
    %2827 = vmatprep.subr.mxu0 0.0
    %2828 = vmatpush1.msra.mxu0 0.0
    %2829 = vmatprep.subr.mxu0 0.0
    %2830 = vmatpush1.msra.mxu0 0.0
    %2831 = vmatprep.subr.mxu0 0.0
    %2832 = vmatpush1.msra.mxu0 0.0
    %2833 = vmatprep.subr.mxu0 0.0
    %2834 = vmatpush1.msra.mxu0 0.0
    %2835 = vmatprep.subr.mxu0 0.0
    %2836 = vmatpush1.msra.mxu0 0.0
    %2837 = vmatprep.subr.mxu0 0.0
    %2838 = vmatpush1.msra.mxu0 0.0
    %2839 = vmatprep.subr.mxu0 0.0
    %2840 = vmatpush1.msra.mxu0 0.0
    %2841 = vmatprep.subr.mxu0 0.0
    %2842 = vmatpush1.msra.mxu0 0.0
    %2843 = vmatprep.subr.mxu0 0.0
    %2844 = vmatpush1.msra.mxu0 0.0
    %2845 = vmatprep.subr.mxu0 0.0
    %2846 = vmatpush1.msra.mxu0 0.0
    %2847 = vmatprep.subr.mxu0 0.0
    %2848 = vmatpush1.msra.mxu0 0.0
    %2849 = vmatprep.subr.mxu0 0.0
    %2850 = vmatpush1.msra.mxu0 0.0
    %2851 = vmatprep.subr.mxu0 0.0
    %2852 = vmatpush1.msra.mxu0 0.0
    %2853 = vmatprep.mubr.f32.mxu0 0.0
    %2854 = vmatmul.mubr.f32.gmra.mrb[0].mxu0 %v2787
    %v2855 = vpop.f32.mrb[0].mxu0
    %v2856 = vadd.f32 1e-08, %v2855
    %v2857 = vpop.f32.mrb[0].mxu0
    %2858 = vdwg.mxu0
    %v2859 = vrcp.pop %v2856
    %v2860 = vmul.f32 %v1134, %v2859
    %v2861 = vmul.f32 %v2785, %v2860
    %v2862 = vsel %vm99, %v2861, 0.0
    %v2863 = vrot.slane %v2862, 4
    %v2864 = vadd.f32 %v2862, %v2863
    %v2865 = vrot.slane %v2864, 2
    %v2866 = vadd.f32 %v2864, %v2865
    %v2867 = vrot.slane %v2866, 1
    %v2868 = vadd.f32 %v2866, %v2867
    %v2869 = vadd.f32 %v2868, 1e-08
    %v2870 = vrcp.pop %v2869
    %v2871 = vmul.f32 %v1219, %v2870
    %v2872 = vmul.f32 %v2861, %v2871
    %v2874 = vsel %vm99, %v2872, 0
    %2876 = vmatprep.subr.mxu0 0.0
    %2877 = vmatpush1.msra.mxu0 %v1054
    %2878 = vmatprep.subr.mxu0 0.0
    %2879 = vmatpush1.msra.mxu0 %v1055
    %2880 = vmatprep.subr.mxu0 0.0
    %2881 = vmatpush1.msra.mxu0 %v1056
    %2882 = vmatprep.subr.mxu0 0.0
    %2883 = vmatpush1.msra.mxu0 %v1057
    %2884 = vmatprep.subr.mxu0 0.0
    %2885 = vmatpush1.msra.mxu0 0.0
    %2886 = vmatprep.subr.mxu0 0.0
    %2887 = vmatpush1.msra.mxu0 0.0
    %2888 = vmatprep.subr.mxu0 0.0
    %2889 = vmatpush1.msra.mxu0 0.0
    %2890 = vmatprep.subr.mxu0 0.0
    %2891 = vmatpush1.msra.mxu0 0.0
    %2892 = vmatprep.subr.mxu0 0.0
    %2893 = vmatpush1.msra.mxu0 0.0
    %2894 = vmatprep.subr.mxu0 0.0
    %2895 = vmatpush1.msra.mxu0 0.0
    %2896 = vmatprep.subr.mxu0 0.0
    %2897 = vmatpush1.msra.mxu0 0.0
    %2898 = vmatprep.subr.mxu0 0.0
    %2899 = vmatpush1.msra.mxu0 0.0
    %2900 = vmatprep.subr.mxu0 0.0
    %2901 = vmatpush1.msra.mxu0 0.0
    %2902 = vmatprep.subr.mxu0 0.0
    %2903 = vmatpush1.msra.mxu0 0.0
    %2904 = vmatprep.subr.mxu0 0.0
    %2905 = vmatpush1.msra.mxu0 0.0
    %2906 = vmatprep.subr.mxu0 0.0
    %2907 = vmatpush1.msra.mxu0 0.0
    %2908 = vmatprep.subr.mxu0 0.0
    %2909 = vmatpush1.msra.mxu0 0.0
    %2910 = vmatprep.subr.mxu0 0.0
    %2911 = vmatpush1.msra.mxu0 0.0
    %2912 = vmatprep.subr.mxu0 0.0
    %2913 = vmatpush1.msra.mxu0 0.0
    %2914 = vmatprep.subr.mxu0 0.0
    %2915 = vmatpush1.msra.mxu0 0.0
    %2916 = vmatprep.subr.mxu0 0.0
    %2917 = vmatpush1.msra.mxu0 0.0
    %2918 = vmatprep.subr.mxu0 0.0
    %2919 = vmatpush1.msra.mxu0 0.0
    %2920 = vmatprep.subr.mxu0 0.0
    %2921 = vmatpush1.msra.mxu0 0.0
    %2922 = vmatprep.subr.mxu0 0.0
    %2923 = vmatpush1.msra.mxu0 0.0
    %2924 = vmatprep.subr.mxu0 0.0
    %2925 = vmatpush1.msra.mxu0 0.0
    %2926 = vmatprep.subr.mxu0 0.0
    %2927 = vmatpush1.msra.mxu0 0.0
    %2928 = vmatprep.subr.mxu0 0.0
    %2929 = vmatpush1.msra.mxu0 0.0
    %2930 = vmatprep.subr.mxu0 0.0
    %2931 = vmatpush1.msra.mxu0 0.0
    %2932 = vmatprep.subr.mxu0 0.0
    %2933 = vmatpush1.msra.mxu0 0.0
    %2934 = vmatprep.subr.mxu0 0.0
    %2935 = vmatpush1.msra.mxu0 0.0
    %2936 = vmatprep.subr.mxu0 0.0
    %2937 = vmatpush1.msra.mxu0 0.0
    %2938 = vmatprep.subr.mxu0 0.0
    %2939 = vmatpush1.msra.mxu0 0.0
    %2940 = vmatprep.mubr.f32.mxu0 0.0
    %2941 = vmatmul.mubr.f32.gmra.mrb[0].mxu0 %v2874
    %v2942 = vpop.f32.mrb[0].mxu0
    %v2943 = vadd.f32 1e-08, %v2942
    %v2944 = vpop.f32.mrb[0].mxu0
    %2945 = vdwg.mxu0
    %v2946 = vrcp.pop %v2943
    %v2947 = vmul.f32 %v1134, %v2946
    %v2948 = vmul.f32 %v2872, %v2947
    %v2949 = vsel %vm99, %v2948, 0.0
    %v2950 = vrot.slane %v2949, 4
    %v2951 = vadd.f32 %v2949, %v2950
    %v2952 = vrot.slane %v2951, 2
    %v2953 = vadd.f32 %v2951, %v2952
    %v2954 = vrot.slane %v2953, 1
    %v2955 = vadd.f32 %v2953, %v2954
    %v2956 = vadd.f32 %v2955, 1e-08
    %v2957 = vrcp.pop %v2956
    %v2958 = vmul.f32 %v1219, %v2957
    %v2959 = vmul.f32 %v2948, %v2958
    %v2961 = vsel %vm99, %v2959, 0
    %2963 = vmatprep.subr.mxu0 0.0
    %2964 = vmatpush1.msra.mxu0 %v1054
    %2965 = vmatprep.subr.mxu0 0.0
    %2966 = vmatpush1.msra.mxu0 %v1055
    %2967 = vmatprep.subr.mxu0 0.0
    %2968 = vmatpush1.msra.mxu0 %v1056
    %2969 = vmatprep.subr.mxu0 0.0
    %2970 = vmatpush1.msra.mxu0 %v1057
    %2971 = vmatprep.subr.mxu0 0.0
    %2972 = vmatpush1.msra.mxu0 0.0
    %2973 = vmatprep.subr.mxu0 0.0
    %2974 = vmatpush1.msra.mxu0 0.0
    %2975 = vmatprep.subr.mxu0 0.0
    %2976 = vmatpush1.msra.mxu0 0.0
    %2977 = vmatprep.subr.mxu0 0.0
    %2978 = vmatpush1.msra.mxu0 0.0
    %2979 = vmatprep.subr.mxu0 0.0
    %2980 = vmatpush1.msra.mxu0 0.0
    %2981 = vmatprep.subr.mxu0 0.0
    %2982 = vmatpush1.msra.mxu0 0.0
    %2983 = vmatprep.subr.mxu0 0.0
    %2984 = vmatpush1.msra.mxu0 0.0
    %2985 = vmatprep.subr.mxu0 0.0
    %2986 = vmatpush1.msra.mxu0 0.0
    %2987 = vmatprep.subr.mxu0 0.0
    %2988 = vmatpush1.msra.mxu0 0.0
    %2989 = vmatprep.subr.mxu0 0.0
    %2990 = vmatpush1.msra.mxu0 0.0
    %2991 = vmatprep.subr.mxu0 0.0
    %2992 = vmatpush1.msra.mxu0 0.0
    %2993 = vmatprep.subr.mxu0 0.0
    %2994 = vmatpush1.msra.mxu0 0.0
    %2995 = vmatprep.subr.mxu0 0.0
    %2996 = vmatpush1.msra.mxu0 0.0
    %2997 = vmatprep.subr.mxu0 0.0
    %2998 = vmatpush1.msra.mxu0 0.0
    %2999 = vmatprep.subr.mxu0 0.0
    %3000 = vmatpush1.msra.mxu0 0.0
    %3001 = vmatprep.subr.mxu0 0.0
    %3002 = vmatpush1.msra.mxu0 0.0
    %3003 = vmatprep.subr.mxu0 0.0
    %3004 = vmatpush1.msra.mxu0 0.0
    %3005 = vmatprep.subr.mxu0 0.0
    %3006 = vmatpush1.msra.mxu0 0.0
    %3007 = vmatprep.subr.mxu0 0.0
    %3008 = vmatpush1.msra.mxu0 0.0
    %3009 = vmatprep.subr.mxu0 0.0
    %3010 = vmatpush1.msra.mxu0 0.0
    %3011 = vmatprep.subr.mxu0 0.0
    %3012 = vmatpush1.msra.mxu0 0.0
    %3013 = vmatprep.subr.mxu0 0.0
    %3014 = vmatpush1.msra.mxu0 0.0
    %3015 = vmatprep.subr.mxu0 0.0
    %3016 = vmatpush1.msra.mxu0 0.0
    %3017 = vmatprep.subr.mxu0 0.0
    %3018 = vmatpush1.msra.mxu0 0.0
    %3019 = vmatprep.subr.mxu0 0.0
    %3020 = vmatpush1.msra.mxu0 0.0
    %3021 = vmatprep.subr.mxu0 0.0
    %3022 = vmatpush1.msra.mxu0 0.0
    %3023 = vmatprep.subr.mxu0 0.0
    %3024 = vmatpush1.msra.mxu0 0.0
    %3025 = vmatprep.subr.mxu0 0.0
    %3026 = vmatpush1.msra.mxu0 0.0
    %3027 = vmatprep.mubr.f32.mxu0 0.0
    %3028 = vmatmul.mubr.f32.gmra.mrb[0].mxu0 %v2961
    %v3029 = vpop.f32.mrb[0].mxu0
    %v3030 = vadd.f32 1e-08, %v3029
    %v3031 = vpop.f32.mrb[0].mxu0
    %3032 = vdwg.mxu0
    %v3033 = vrcp.pop %v3030
    %v3034 = vmul.f32 %v1134, %v3033
    %v3035 = vmul.f32 %v2959, %v3034
    %v3036 = vsel %vm99, %v3035, 0.0
    %v3037 = vrot.slane %v3036, 4
    %v3038 = vadd.f32 %v3036, %v3037
    %v3039 = vrot.slane %v3038, 2
    %v3040 = vadd.f32 %v3038, %v3039
    %v3041 = vrot.slane %v3040, 1
    %v3042 = vadd.f32 %v3040, %v3041
    %v3043 = vadd.f32 %v3042, 1e-08
    %v3044 = vrcp.pop %v3043
    %v3045 = vmul.f32 %v1219, %v3044
    %v3046 = vmul.f32 %v3035, %v3045
    %v3048 = vsel %vm99, %v3046, 0
    %3050 = vmatprep.subr.mxu0 0.0
    %3051 = vmatpush1.msra.mxu0 %v1054
    %3052 = vmatprep.subr.mxu0 0.0
    %3053 = vmatpush1.msra.mxu0 %v1055
    %3054 = vmatprep.subr.mxu0 0.0
    %3055 = vmatpush1.msra.mxu0 %v1056
    %3056 = vmatprep.subr.mxu0 0.0
    %3057 = vmatpush1.msra.mxu0 %v1057
    %3058 = vmatprep.subr.mxu0 0.0
    %3059 = vmatpush1.msra.mxu0 0.0
    %3060 = vmatprep.subr.mxu0 0.0
    %3061 = vmatpush1.msra.mxu0 0.0
    %3062 = vmatprep.subr.mxu0 0.0
    %3063 = vmatpush1.msra.mxu0 0.0
    %3064 = vmatprep.subr.mxu0 0.0
    %3065 = vmatpush1.msra.mxu0 0.0
    %3066 = vmatprep.subr.mxu0 0.0
    %3067 = vmatpush1.msra.mxu0 0.0
    %3068 = vmatprep.subr.mxu0 0.0
    %3069 = vmatpush1.msra.mxu0 0.0
    %3070 = vmatprep.subr.mxu0 0.0
    %3071 = vmatpush1.msra.mxu0 0.0
    %3072 = vmatprep.subr.mxu0 0.0
    %3073 = vmatpush1.msra.mxu0 0.0
    %3074 = vmatprep.subr.mxu0 0.0
    %3075 = vmatpush1.msra.mxu0 0.0
    %3076 = vmatprep.subr.mxu0 0.0
    %3077 = vmatpush1.msra.mxu0 0.0
    %3078 = vmatprep.subr.mxu0 0.0
    %3079 = vmatpush1.msra.mxu0 0.0
    %3080 = vmatprep.subr.mxu0 0.0
    %3081 = vmatpush1.msra.mxu0 0.0
    %3082 = vmatprep.subr.mxu0 0.0
    %3083 = vmatpush1.msra.mxu0 0.0
    %3084 = vmatprep.subr.mxu0 0.0
    %3085 = vmatpush1.msra.mxu0 0.0
    %3086 = vmatprep.subr.mxu0 0.0
    %3087 = vmatpush1.msra.mxu0 0.0
    %3088 = vmatprep.subr.mxu0 0.0
    %3089 = vmatpush1.msra.mxu0 0.0
    %3090 = vmatprep.subr.mxu0 0.0
    %3091 = vmatpush1.msra.mxu0 0.0
    %3092 = vmatprep.subr.mxu0 0.0
    %3093 = vmatpush1.msra.mxu0 0.0
    %3094 = vmatprep.subr.mxu0 0.0
    %3095 = vmatpush1.msra.mxu0 0.0
    %3096 = vmatprep.subr.mxu0 0.0
    %3097 = vmatpush1.msra.mxu0 0.0
    %3098 = vmatprep.subr.mxu0 0.0
    %3099 = vmatpush1.msra.mxu0 0.0
    %3100 = vmatprep.subr.mxu0 0.0
    %3101 = vmatpush1.msra.mxu0 0.0
    %3102 = vmatprep.subr.mxu0 0.0
    %3103 = vmatpush1.msra.mxu0 0.0
    %3104 = vmatprep.subr.mxu0 0.0
    %3105 = vmatpush1.msra.mxu0 0.0
    %3106 = vmatprep.subr.mxu0 0.0
    %3107 = vmatpush1.msra.mxu0 0.0
    %3108 = vmatprep.subr.mxu0 0.0
    %3109 = vmatpush1.msra.mxu0 0.0
    %3110 = vmatprep.subr.mxu0 0.0
    %3111 = vmatpush1.msra.mxu0 0.0
    %3112 = vmatprep.subr.mxu0 0.0
    %3113 = vmatpush1.msra.mxu0 0.0
    %3114 = vmatprep.mubr.f32.mxu0 0.0
    %3115 = vmatmul.mubr.f32.gmra.mrb[0].mxu0 %v3048
    %v3116 = vpop.f32.mrb[0].mxu0
    %v3117 = vadd.f32 1e-08, %v3116
    %v3118 = vpop.f32.mrb[0].mxu0
    %3119 = vdwg.mxu0
    %v3120 = vrcp.pop %v3117
    %v3121 = vmul.f32 %v1134, %v3120
    %v3122 = vmul.f32 %v3046, %v3121
    %v3123 = vsel %vm99, %v3122, 0.0
    %v3124 = vrot.slane %v3123, 4
    %v3125 = vadd.f32 %v3123, %v3124
    %v3126 = vrot.slane %v3125, 2
    %v3127 = vadd.f32 %v3125, %v3126
    %v3128 = vrot.slane %v3127, 1
    %v3129 = vadd.f32 %v3127, %v3128
    %v3130 = vadd.f32 %v3129, 1e-08
    %v3131 = vrcp.pop %v3130
    %v3132 = vmul.f32 %v1219, %v3131
    %v3133 = vmul.f32 %v3122, %v3132
    %v3135 = vsel %vm99, %v3133, 0
    %3137 = vmatprep.subr.mxu0 0.0
    %3138 = vmatpush1.msra.mxu0 %v1054
    %3139 = vmatprep.subr.mxu0 0.0
    %3140 = vmatpush1.msra.mxu0 %v1055
    %3141 = vmatprep.subr.mxu0 0.0
    %3142 = vmatpush1.msra.mxu0 %v1056
    %3143 = vmatprep.subr.mxu0 0.0
    %3144 = vmatpush1.msra.mxu0 %v1057
    %3145 = vmatprep.subr.mxu0 0.0
    %3146 = vmatpush1.msra.mxu0 0.0
    %3147 = vmatprep.subr.mxu0 0.0
    %3148 = vmatpush1.msra.mxu0 0.0
    %3149 = vmatprep.subr.mxu0 0.0
    %3150 = vmatpush1.msra.mxu0 0.0
    %3151 = vmatprep.subr.mxu0 0.0
    %3152 = vmatpush1.msra.mxu0 0.0
    %3153 = vmatprep.subr.mxu0 0.0
    %3154 = vmatpush1.msra.mxu0 0.0
    %3155 = vmatprep.subr.mxu0 0.0
    %3156 = vmatpush1.msra.mxu0 0.0
    %3157 = vmatprep.subr.mxu0 0.0
    %3158 = vmatpush1.msra.mxu0 0.0
    %3159 = vmatprep.subr.mxu0 0.0
    %3160 = vmatpush1.msra.mxu0 0.0
    %3161 = vmatprep.subr.mxu0 0.0
    %3162 = vmatpush1.msra.mxu0 0.0
    %3163 = vmatprep.subr.mxu0 0.0
    %3164 = vmatpush1.msra.mxu0 0.0
    %3165 = vmatprep.subr.mxu0 0.0
    %3166 = vmatpush1.msra.mxu0 0.0
    %3167 = vmatprep.subr.mxu0 0.0
    %3168 = vmatpush1.msra.mxu0 0.0
    %3169 = vmatprep.subr.mxu0 0.0
    %3170 = vmatpush1.msra.mxu0 0.0
    %3171 = vmatprep.subr.mxu0 0.0
    %3172 = vmatpush1.msra.mxu0 0.0
    %3173 = vmatprep.subr.mxu0 0.0
    %3174 = vmatpush1.msra.mxu0 0.0
    %3175 = vmatprep.subr.mxu0 0.0
    %3176 = vmatpush1.msra.mxu0 0.0
    %3177 = vmatprep.subr.mxu0 0.0
    %3178 = vmatpush1.msra.mxu0 0.0
    %3179 = vmatprep.subr.mxu0 0.0
    %3180 = vmatpush1.msra.mxu0 0.0
    %3181 = vmatprep.subr.mxu0 0.0
    %3182 = vmatpush1.msra.mxu0 0.0
    %3183 = vmatprep.subr.mxu0 0.0
    %3184 = vmatpush1.msra.mxu0 0.0
    %3185 = vmatprep.subr.mxu0 0.0
    %3186 = vmatpush1.msra.mxu0 0.0
    %3187 = vmatprep.subr.mxu0 0.0
    %3188 = vmatpush1.msra.mxu0 0.0
    %3189 = vmatprep.subr.mxu0 0.0
    %3190 = vmatpush1.msra.mxu0 0.0
    %3191 = vmatprep.subr.mxu0 0.0
    %3192 = vmatpush1.msra.mxu0 0.0
    %3193 = vmatprep.subr.mxu0 0.0
    %3194 = vmatpush1.msra.mxu0 0.0
    %3195 = vmatprep.subr.mxu0 0.0
    %3196 = vmatpush1.msra.mxu0 0.0
    %3197 = vmatprep.subr.mxu0 0.0
    %3198 = vmatpush1.msra.mxu0 0.0
    %3199 = vmatprep.subr.mxu0 0.0
    %3200 = vmatpush1.msra.mxu0 0.0
    %3201 = vmatprep.mubr.f32.mxu0 0.0
    %3202 = vmatmul.mubr.f32.gmra.mrb[0].mxu0 %v3135
    %v3203 = vpop.f32.mrb[0].mxu0
    %v3204 = vadd.f32 1e-08, %v3203
    %v3205 = vpop.f32.mrb[0].mxu0
    %3206 = vdwg.mxu0
    %v3207 = vrcp.pop %v3204
    %v3208 = vmul.f32 %v1134, %v3207
    %v3209 = vmul.f32 %v3133, %v3208
    %v3210 = vsel %vm99, %v3209, 0.0
    %v3211 = vrot.slane %v3210, 4
    %v3212 = vadd.f32 %v3210, %v3211
    %v3213 = vrot.slane %v3212, 2
    %v3214 = vadd.f32 %v3212, %v3213
    %v3215 = vrot.slane %v3214, 1
    %v3216 = vadd.f32 %v3214, %v3215
    %v3217 = vadd.f32 %v3216, 1e-08
    %v3218 = vrcp.pop %v3217
    %v3219 = vmul.f32 %v1219, %v3218
    %v3220 = vmul.f32 %v3209, %v3219
    %v3222 = vsel %vm99, %v3220, 0
    %3224 = vmatprep.subr.mxu0 0.0
    %3225 = vmatpush1.msra.mxu0 %v1054
    %3226 = vmatprep.subr.mxu0 0.0
    %3227 = vmatpush1.msra.mxu0 %v1055
    %3228 = vmatprep.subr.mxu0 0.0
    %3229 = vmatpush1.msra.mxu0 %v1056
    %3230 = vmatprep.subr.mxu0 0.0
    %3231 = vmatpush1.msra.mxu0 %v1057
    %3232 = vmatprep.subr.mxu0 0.0
    %3233 = vmatpush1.msra.mxu0 0.0
    %3234 = vmatprep.subr.mxu0 0.0
    %3235 = vmatpush1.msra.mxu0 0.0
    %3236 = vmatprep.subr.mxu0 0.0
    %3237 = vmatpush1.msra.mxu0 0.0
    %3238 = vmatprep.subr.mxu0 0.0
    %3239 = vmatpush1.msra.mxu0 0.0
    %3240 = vmatprep.subr.mxu0 0.0
    %3241 = vmatpush1.msra.mxu0 0.0
    %3242 = vmatprep.subr.mxu0 0.0
    %3243 = vmatpush1.msra.mxu0 0.0
    %3244 = vmatprep.subr.mxu0 0.0
    %3245 = vmatpush1.msra.mxu0 0.0
    %3246 = vmatprep.subr.mxu0 0.0
    %3247 = vmatpush1.msra.mxu0 0.0
    %3248 = vmatprep.subr.mxu0 0.0
    %3249 = vmatpush1.msra.mxu0 0.0
    %3250 = vmatprep.subr.mxu0 0.0
    %3251 = vmatpush1.msra.mxu0 0.0
    %3252 = vmatprep.subr.mxu0 0.0
    %3253 = vmatpush1.msra.mxu0 0.0
    %3254 = vmatprep.subr.mxu0 0.0
    %3255 = vmatpush1.msra.mxu0 0.0
    %3256 = vmatprep.subr.mxu0 0.0
    %3257 = vmatpush1.msra.mxu0 0.0
    %3258 = vmatprep.subr.mxu0 0.0
    %3259 = vmatpush1.msra.mxu0 0.0
    %3260 = vmatprep.subr.mxu0 0.0
    %3261 = vmatpush1.msra.mxu0 0.0
    %3262 = vmatprep.subr.mxu0 0.0
    %3263 = vmatpush1.msra.mxu0 0.0
    %3264 = vmatprep.subr.mxu0 0.0
    %3265 = vmatpush1.msra.mxu0 0.0
    %3266 = vmatprep.subr.mxu0 0.0
    %3267 = vmatpush1.msra.mxu0 0.0
    %3268 = vmatprep.subr.mxu0 0.0
    %3269 = vmatpush1.msra.mxu0 0.0
    %3270 = vmatprep.subr.mxu0 0.0
    %3271 = vmatpush1.msra.mxu0 0.0
    %3272 = vmatprep.subr.mxu0 0.0
    %3273 = vmatpush1.msra.mxu0 0.0
    %3274 = vmatprep.subr.mxu0 0.0
    %3275 = vmatpush1.msra.mxu0 0.0
    %3276 = vmatprep.subr.mxu0 0.0
    %3277 = vmatpush1.msra.mxu0 0.0
    %3278 = vmatprep.subr.mxu0 0.0
    %3279 = vmatpush1.msra.mxu0 0.0
    %3280 = vmatprep.subr.mxu0 0.0
    %3281 = vmatpush1.msra.mxu0 0.0
    %3282 = vmatprep.subr.mxu0 0.0
    %3283 = vmatpush1.msra.mxu0 0.0
    %3284 = vmatprep.subr.mxu0 0.0
    %3285 = vmatpush1.msra.mxu0 0.0
    %3286 = vmatprep.subr.mxu0 0.0
    %3287 = vmatpush1.msra.mxu0 0.0
    %3288 = vmatprep.mubr.f32.mxu0 0.0
    %3289 = vmatmul.mubr.f32.gmra.mrb[0].mxu0 %v3222
    %v3290 = vpop.f32.mrb[0].mxu0
    %v3291 = vadd.f32 1e-08, %v3290
    %v3292 = vpop.f32.mrb[0].mxu0
    %3293 = vdwg.mxu0
    %v3294 = vrcp.pop %v3291
    %v3295 = vmul.f32 %v1134, %v3294
    %v3296 = vmul.f32 %v3220, %v3295
    %v3297 = vsel %vm99, %v3296, 0.0
    %v3298 = vrot.slane %v3297, 4
    %v3299 = vadd.f32 %v3297, %v3298
    %v3300 = vrot.slane %v3299, 2
    %v3301 = vadd.f32 %v3299, %v3300
    %v3302 = vrot.slane %v3301, 1
    %v3303 = vadd.f32 %v3301, %v3302
    %v3304 = vadd.f32 %v3303, 1e-08
    %v3305 = vrcp.pop %v3304
    %v3306 = vmul.f32 %v1219, %v3305
    %v3307 = vmul.f32 %v3296, %v3306
    %v3309 = vsel %vm99, %v3307, 0
    %3311 = vmatprep.subr.mxu0 0.0
    %3312 = vmatpush1.msra.mxu0 %v1054
    %3313 = vmatprep.subr.mxu0 0.0
    %3314 = vmatpush1.msra.mxu0 %v1055
    %3315 = vmatprep.subr.mxu0 0.0
    %3316 = vmatpush1.msra.mxu0 %v1056
    %3317 = vmatprep.subr.mxu0 0.0
    %3318 = vmatpush1.msra.mxu0 %v1057
    %3319 = vmatprep.subr.mxu0 0.0
    %3320 = vmatpush1.msra.mxu0 0.0
    %3321 = vmatprep.subr.mxu0 0.0
    %3322 = vmatpush1.msra.mxu0 0.0
    %3323 = vmatprep.subr.mxu0 0.0
    %3324 = vmatpush1.msra.mxu0 0.0
    %3325 = vmatprep.subr.mxu0 0.0
    %3326 = vmatpush1.msra.mxu0 0.0
    %3327 = vmatprep.subr.mxu0 0.0
    %3328 = vmatpush1.msra.mxu0 0.0
    %3329 = vmatprep.subr.mxu0 0.0
    %3330 = vmatpush1.msra.mxu0 0.0
    %3331 = vmatprep.subr.mxu0 0.0
    %3332 = vmatpush1.msra.mxu0 0.0
    %3333 = vmatprep.subr.mxu0 0.0
    %3334 = vmatpush1.msra.mxu0 0.0
    %3335 = vmatprep.subr.mxu0 0.0
    %3336 = vmatpush1.msra.mxu0 0.0
    %3337 = vmatprep.subr.mxu0 0.0
    %3338 = vmatpush1.msra.mxu0 0.0
    %3339 = vmatprep.subr.mxu0 0.0
    %3340 = vmatpush1.msra.mxu0 0.0
    %3341 = vmatprep.subr.mxu0 0.0
    %3342 = vmatpush1.msra.mxu0 0.0
    %3343 = vmatprep.subr.mxu0 0.0
    %3344 = vmatpush1.msra.mxu0 0.0
    %3345 = vmatprep.subr.mxu0 0.0
    %3346 = vmatpush1.msra.mxu0 0.0
    %3347 = vmatprep.subr.mxu0 0.0
    %3348 = vmatpush1.msra.mxu0 0.0
    %3349 = vmatprep.subr.mxu0 0.0
    %3350 = vmatpush1.msra.mxu0 0.0
    %3351 = vmatprep.subr.mxu0 0.0
    %3352 = vmatpush1.msra.mxu0 0.0
    %3353 = vmatprep.subr.mxu0 0.0
    %3354 = vmatpush1.msra.mxu0 0.0
    %3355 = vmatprep.subr.mxu0 0.0
    %3356 = vmatpush1.msra.mxu0 0.0
    %3357 = vmatprep.subr.mxu0 0.0
    %3358 = vmatpush1.msra.mxu0 0.0
    %3359 = vmatprep.subr.mxu0 0.0
    %3360 = vmatpush1.msra.mxu0 0.0
    %3361 = vmatprep.subr.mxu0 0.0
    %3362 = vmatpush1.msra.mxu0 0.0
    %3363 = vmatprep.subr.mxu0 0.0
    %3364 = vmatpush1.msra.mxu0 0.0
    %3365 = vmatprep.subr.mxu0 0.0
    %3366 = vmatpush1.msra.mxu0 0.0
    %3367 = vmatprep.subr.mxu0 0.0
    %3368 = vmatpush1.msra.mxu0 0.0
    %3369 = vmatprep.subr.mxu0 0.0
    %3370 = vmatpush1.msra.mxu0 0.0
    %3371 = vmatprep.subr.mxu0 0.0
    %3372 = vmatpush1.msra.mxu0 0.0
    %3373 = vmatprep.subr.mxu0 0.0
    %3374 = vmatpush1.msra.mxu0 0.0
    %3375 = vmatprep.mubr.f32.mxu0 0.0
    %3376 = vmatmul.mubr.f32.gmra.mrb[0].mxu0 %v3309
    %v3377 = vpop.f32.mrb[0].mxu0
    %v3378 = vadd.f32 1e-08, %v3377
    %v3379 = vpop.f32.mrb[0].mxu0
    %3380 = vdwg.mxu0
    %v3381 = vrcp.pop %v3378
    %v3382 = vmul.f32 %v1134, %v3381
    %v3383 = vmul.f32 %v3307, %v3382
    %v3384 = vsel %vm99, %v3383, 0.0
    %v3385 = vrot.slane %v3384, 4
    %v3386 = vadd.f32 %v3384, %v3385
    %v3387 = vrot.slane %v3386, 2
    %v3388 = vadd.f32 %v3386, %v3387
    %v3389 = vrot.slane %v3388, 1
    %v3390 = vadd.f32 %v3388, %v3389
    %v3391 = vadd.f32 %v3390, 1e-08
    %v3392 = vrcp.pop %v3391
    %v3393 = vmul.f32 %v1219, %v3392
    %v3394 = vmul.f32 %v3383, %v3393
    %v3396 = vsel %vm99, %v3394, 0
    %3398 = vmatprep.subr.mxu0 0.0
    %3399 = vmatpush1.msra.mxu0 %v1054
    %3400 = vmatprep.subr.mxu0 0.0
    %3401 = vmatpush1.msra.mxu0 %v1055
    %3402 = vmatprep.subr.mxu0 0.0
    %3403 = vmatpush1.msra.mxu0 %v1056
    %3404 = vmatprep.subr.mxu0 0.0
    %3405 = vmatpush1.msra.mxu0 %v1057
    %3406 = vmatprep.subr.mxu0 0.0
    %3407 = vmatpush1.msra.mxu0 0.0
    %3408 = vmatprep.subr.mxu0 0.0
    %3409 = vmatpush1.msra.mxu0 0.0
    %3410 = vmatprep.subr.mxu0 0.0
    %3411 = vmatpush1.msra.mxu0 0.0
    %3412 = vmatprep.subr.mxu0 0.0
    %3413 = vmatpush1.msra.mxu0 0.0
    %3414 = vmatprep.subr.mxu0 0.0
    %3415 = vmatpush1.msra.mxu0 0.0
    %3416 = vmatprep.subr.mxu0 0.0
    %3417 = vmatpush1.msra.mxu0 0.0
    %3418 = vmatprep.subr.mxu0 0.0
    %3419 = vmatpush1.msra.mxu0 0.0
    %3420 = vmatprep.subr.mxu0 0.0
    %3421 = vmatpush1.msra.mxu0 0.0
    %3422 = vmatprep.subr.mxu0 0.0
    %3423 = vmatpush1.msra.mxu0 0.0
    %3424 = vmatprep.subr.mxu0 0.0
    %3425 = vmatpush1.msra.mxu0 0.0
    %3426 = vmatprep.subr.mxu0 0.0
    %3427 = vmatpush1.msra.mxu0 0.0
    %3428 = vmatprep.subr.mxu0 0.0
    %3429 = vmatpush1.msra.mxu0 0.0
    %3430 = vmatprep.subr.mxu0 0.0
    %3431 = vmatpush1.msra.mxu0 0.0
    %3432 = vmatprep.subr.mxu0 0.0
    %3433 = vmatpush1.msra.mxu0 0.0
    %3434 = vmatprep.subr.mxu0 0.0
    %3435 = vmatpush1.msra.mxu0 0.0
    %3436 = vmatprep.subr.mxu0 0.0
    %3437 = vmatpush1.msra.mxu0 0.0
    %3438 = vmatprep.subr.mxu0 0.0
    %3439 = vmatpush1.msra.mxu0 0.0
    %3440 = vmatprep.subr.mxu0 0.0
    %3441 = vmatpush1.msra.mxu0 0.0
    %3442 = vmatprep.subr.mxu0 0.0
    %3443 = vmatpush1.msra.mxu0 0.0
    %3444 = vmatprep.subr.mxu0 0.0
    %3445 = vmatpush1.msra.mxu0 0.0
    %3446 = vmatprep.subr.mxu0 0.0
    %3447 = vmatpush1.msra.mxu0 0.0
    %3448 = vmatprep.subr.mxu0 0.0
    %3449 = vmatpush1.msra.mxu0 0.0
    %3450 = vmatprep.subr.mxu0 0.0
    %3451 = vmatpush1.msra.mxu0 0.0
    %3452 = vmatprep.subr.mxu0 0.0
    %3453 = vmatpush1.msra.mxu0 0.0
    %3454 = vmatprep.subr.mxu0 0.0
    %3455 = vmatpush1.msra.mxu0 0.0
    %3456 = vmatprep.subr.mxu0 0.0
    %3457 = vmatpush1.msra.mxu0 0.0
    %3458 = vmatprep.subr.mxu0 0.0
    %3459 = vmatpush1.msra.mxu0 0.0
    %3460 = vmatprep.subr.mxu0 0.0
    %3461 = vmatpush1.msra.mxu0 0.0
    %3462 = vmatprep.mubr.f32.mxu0 0.0
    %3463 = vmatmul.mubr.f32.gmra.mrb[0].mxu0 %v3396
    %v3464 = vpop.f32.mrb[0].mxu0
    %v3465 = vadd.f32 1e-08, %v3464
    %v3466 = vpop.f32.mrb[0].mxu0
    %3467 = vdwg.mxu0
    %v3468 = vrcp.pop %v3465
    %v3469 = vmul.f32 %v1134, %v3468
    %v3470 = vmul.f32 %v3394, %v3469
    %v3471 = vsel %vm99, %v3470, 0.0
    %v3472 = vrot.slane %v3471, 4
    %v3473 = vadd.f32 %v3471, %v3472
    %v3474 = vrot.slane %v3473, 2
    %v3475 = vadd.f32 %v3473, %v3474
    %v3476 = vrot.slane %v3475, 1
    %v3477 = vadd.f32 %v3475, %v3476
    %v3478 = vadd.f32 %v3477, 1e-08
    %v3479 = vrcp.pop %v3478
    %v3480 = vmul.f32 %v1219, %v3479
    %v3481 = vmul.f32 %v3470, %v3480
    %v3483 = vsel %vm99, %v3481, 0
    %3485 = vmatprep.subr.mxu0 0.0
    %3486 = vmatpush1.msra.mxu0 %v1054
    %3487 = vmatprep.subr.mxu0 0.0
    %3488 = vmatpush1.msra.mxu0 %v1055
    %3489 = vmatprep.subr.mxu0 0.0
    %3490 = vmatpush1.msra.mxu0 %v1056
    %3491 = vmatprep.subr.mxu0 0.0
    %3492 = vmatpush1.msra.mxu0 %v1057
    %3493 = vmatprep.subr.mxu0 0.0
    %3494 = vmatpush1.msra.mxu0 0.0
    %3495 = vmatprep.subr.mxu0 0.0
    %3496 = vmatpush1.msra.mxu0 0.0
    %3497 = vmatprep.subr.mxu0 0.0
    %3498 = vmatpush1.msra.mxu0 0.0
    %3499 = vmatprep.subr.mxu0 0.0
    %3500 = vmatpush1.msra.mxu0 0.0
    %3501 = vmatprep.subr.mxu0 0.0
    %3502 = vmatpush1.msra.mxu0 0.0
    %3503 = vmatprep.subr.mxu0 0.0
    %3504 = vmatpush1.msra.mxu0 0.0
    %3505 = vmatprep.subr.mxu0 0.0
    %3506 = vmatpush1.msra.mxu0 0.0
    %3507 = vmatprep.subr.mxu0 0.0
    %3508 = vmatpush1.msra.mxu0 0.0
    %3509 = vmatprep.subr.mxu0 0.0
    %3510 = vmatpush1.msra.mxu0 0.0
    %3511 = vmatprep.subr.mxu0 0.0
    %3512 = vmatpush1.msra.mxu0 0.0
    %3513 = vmatprep.subr.mxu0 0.0
    %3514 = vmatpush1.msra.mxu0 0.0
    %3515 = vmatprep.subr.mxu0 0.0
    %3516 = vmatpush1.msra.mxu0 0.0
    %3517 = vmatprep.subr.mxu0 0.0
    %3518 = vmatpush1.msra.mxu0 0.0
    %3519 = vmatprep.subr.mxu0 0.0
    %3520 = vmatpush1.msra.mxu0 0.0
    %3521 = vmatprep.subr.mxu0 0.0
    %3522 = vmatpush1.msra.mxu0 0.0
    %3523 = vmatprep.subr.mxu0 0.0
    %3524 = vmatpush1.msra.mxu0 0.0
    %3525 = vmatprep.subr.mxu0 0.0
    %3526 = vmatpush1.msra.mxu0 0.0
    %3527 = vmatprep.subr.mxu0 0.0
    %3528 = vmatpush1.msra.mxu0 0.0
    %3529 = vmatprep.subr.mxu0 0.0
    %3530 = vmatpush1.msra.mxu0 0.0
    %3531 = vmatprep.subr.mxu0 0.0
    %3532 = vmatpush1.msra.mxu0 0.0
    %3533 = vmatprep.subr.mxu0 0.0
    %3534 = vmatpush1.msra.mxu0 0.0
    %3535 = vmatprep.subr.mxu0 0.0
    %3536 = vmatpush1.msra.mxu0 0.0
    %3537 = vmatprep.subr.mxu0 0.0
    %3538 = vmatpush1.msra.mxu0 0.0
    %3539 = vmatprep.subr.mxu0 0.0
    %3540 = vmatpush1.msra.mxu0 0.0
    %3541 = vmatprep.subr.mxu0 0.0
    %3542 = vmatpush1.msra.mxu0 0.0
    %3543 = vmatprep.subr.mxu0 0.0
    %3544 = vmatpush1.msra.mxu0 0.0
    %3545 = vmatprep.subr.mxu0 0.0
    %3546 = vmatpush1.msra.mxu0 0.0
    %3547 = vmatprep.subr.mxu0 0.0
    %3548 = vmatpush1.msra.mxu0 0.0
    %3549 = vmatprep.mubr.f32.mxu0 0.0
    %3550 = vmatmul.mubr.f32.gmra.mrb[0].mxu0 %v3483
    %v3551 = vpop.f32.mrb[0].mxu0
    %v3552 = vadd.f32 1e-08, %v3551
    %v3553 = vpop.f32.mrb[0].mxu0
    %3554 = vdwg.mxu0
    %v3555 = vrcp.pop %v3552
    %v3556 = vmul.f32 %v1134, %v3555
    %v3557 = vmul.f32 %v3481, %v3556
    %v3558 = vsel %vm99, %v3557, 0.0
    %v3559 = vrot.slane %v3558, 4
    %v3560 = vadd.f32 %v3558, %v3559
    %v3561 = vrot.slane %v3560, 2
    %v3562 = vadd.f32 %v3560, %v3561
    %v3563 = vrot.slane %v3562, 1
    %v3564 = vadd.f32 %v3562, %v3563
    %v3565 = vadd.f32 %v3564, 1e-08
    %v3566 = vrcp.pop %v3565
    %v3567 = vmul.f32 %v1219, %v3566
    %v3568 = vmul.f32 %v3557, %v3567
    %v3570 = vsel %vm99, %v3568, 0
    %3572 = vmatprep.subr.mxu0 0.0
    %3573 = vmatpush1.msra.mxu0 %v1054
    %3574 = vmatprep.subr.mxu0 0.0
    %3575 = vmatpush1.msra.mxu0 %v1055
    %3576 = vmatprep.subr.mxu0 0.0
    %3577 = vmatpush1.msra.mxu0 %v1056
    %3578 = vmatprep.subr.mxu0 0.0
    %3579 = vmatpush1.msra.mxu0 %v1057
    %3580 = vmatprep.subr.mxu0 0.0
    %3581 = vmatpush1.msra.mxu0 0.0
    %3582 = vmatprep.subr.mxu0 0.0
    %3583 = vmatpush1.msra.mxu0 0.0
    %3584 = vmatprep.subr.mxu0 0.0
    %3585 = vmatpush1.msra.mxu0 0.0
    %3586 = vmatprep.subr.mxu0 0.0
    %3587 = vmatpush1.msra.mxu0 0.0
    %3588 = vmatprep.subr.mxu0 0.0
    %3589 = vmatpush1.msra.mxu0 0.0
    %3590 = vmatprep.subr.mxu0 0.0
    %3591 = vmatpush1.msra.mxu0 0.0
    %3592 = vmatprep.subr.mxu0 0.0
    %3593 = vmatpush1.msra.mxu0 0.0
    %3594 = vmatprep.subr.mxu0 0.0
    %3595 = vmatpush1.msra.mxu0 0.0
    %3596 = vmatprep.subr.mxu0 0.0
    %3597 = vmatpush1.msra.mxu0 0.0
    %3598 = vmatprep.subr.mxu0 0.0
    %3599 = vmatpush1.msra.mxu0 0.0
    %3600 = vmatprep.subr.mxu0 0.0
    %3601 = vmatpush1.msra.mxu0 0.0
    %3602 = vmatprep.subr.mxu0 0.0
    %3603 = vmatpush1.msra.mxu0 0.0
    %3604 = vmatprep.subr.mxu0 0.0
    %3605 = vmatpush1.msra.mxu0 0.0
    %3606 = vmatprep.subr.mxu0 0.0
    %3607 = vmatpush1.msra.mxu0 0.0
    %3608 = vmatprep.subr.mxu0 0.0
    %3609 = vmatpush1.msra.mxu0 0.0
    %3610 = vmatprep.subr.mxu0 0.0
    %3611 = vmatpush1.msra.mxu0 0.0
    %3612 = vmatprep.subr.mxu0 0.0
    %3613 = vmatpush1.msra.mxu0 0.0
    %3614 = vmatprep.subr.mxu0 0.0
    %3615 = vmatpush1.msra.mxu0 0.0
    %3616 = vmatprep.subr.mxu0 0.0
    %3617 = vmatpush1.msra.mxu0 0.0
    %3618 = vmatprep.subr.mxu0 0.0
    %3619 = vmatpush1.msra.mxu0 0.0
    %3620 = vmatprep.subr.mxu0 0.0
    %3621 = vmatpush1.msra.mxu0 0.0
    %3622 = vmatprep.subr.mxu0 0.0
    %3623 = vmatpush1.msra.mxu0 0.0
    %3624 = vmatprep.subr.mxu0 0.0
    %3625 = vmatpush1.msra.mxu0 0.0
    %3626 = vmatprep.subr.mxu0 0.0
    %3627 = vmatpush1.msra.mxu0 0.0
    %3628 = vmatprep.subr.mxu0 0.0
    %3629 = vmatpush1.msra.mxu0 0.0
    %3630 = vmatprep.subr.mxu0 0.0
    %3631 = vmatpush1.msra.mxu0 0.0
    %3632 = vmatprep.subr.mxu0 0.0
    %3633 = vmatpush1.msra.mxu0 0.0
    %3634 = vmatprep.subr.mxu0 0.0
    %3635 = vmatpush1.msra.mxu0 0.0
    %3636 = vmatprep.mubr.f32.mxu0 0.0
    %3637 = vmatmul.mubr.f32.gmra.mrb[0].mxu0 %v3570
    %v3638 = vpop.f32.mrb[0].mxu0
    %v3639 = vadd.f32 1e-08, %v3638
    %v3640 = vpop.f32.mrb[0].mxu0
    %3641 = vdwg.mxu0
    %v3642 = vrcp.pop %v3639
    %v3643 = vmul.f32 %v1134, %v3642
    %v3644 = vmul.f32 %v3568, %v3643
    %v3645 = vsel %vm99, %v3644, 0.0
    %v3646 = vrot.slane %v3645, 4
    %v3647 = vadd.f32 %v3645, %v3646
    %v3648 = vrot.slane %v3647, 2
    %v3649 = vadd.f32 %v3647, %v3648
    %v3650 = vrot.slane %v3649, 1
    %v3651 = vadd.f32 %v3649, %v3650
    %v3652 = vadd.f32 %v3651, 1e-08
    %v3653 = vrcp.pop %v3652
    %v3654 = vmul.f32 %v1219, %v3653
    %v3655 = vmul.f32 %v3644, %v3654
    %v3657 = vsel %vm99, %v3655, 0
    %3659 = vmatprep.subr.mxu0 0.0
    %3660 = vmatpush1.msra.mxu0 %v1054
    %3661 = vmatprep.subr.mxu0 0.0
    %3662 = vmatpush1.msra.mxu0 %v1055
    %3663 = vmatprep.subr.mxu0 0.0
    %3664 = vmatpush1.msra.mxu0 %v1056
    %3665 = vmatprep.subr.mxu0 0.0
    %3666 = vmatpush1.msra.mxu0 %v1057
    %3667 = vmatprep.subr.mxu0 0.0
    %3668 = vmatpush1.msra.mxu0 0.0
    %3669 = vmatprep.subr.mxu0 0.0
    %3670 = vmatpush1.msra.mxu0 0.0
    %3671 = vmatprep.subr.mxu0 0.0
    %3672 = vmatpush1.msra.mxu0 0.0
    %3673 = vmatprep.subr.mxu0 0.0
    %3674 = vmatpush1.msra.mxu0 0.0
    %3675 = vmatprep.subr.mxu0 0.0
    %3676 = vmatpush1.msra.mxu0 0.0
    %3677 = vmatprep.subr.mxu0 0.0
    %3678 = vmatpush1.msra.mxu0 0.0
    %3679 = vmatprep.subr.mxu0 0.0
    %3680 = vmatpush1.msra.mxu0 0.0
    %3681 = vmatprep.subr.mxu0 0.0
    %3682 = vmatpush1.msra.mxu0 0.0
    %3683 = vmatprep.subr.mxu0 0.0
    %3684 = vmatpush1.msra.mxu0 0.0
    %3685 = vmatprep.subr.mxu0 0.0
    %3686 = vmatpush1.msra.mxu0 0.0
    %3687 = vmatprep.subr.mxu0 0.0
    %3688 = vmatpush1.msra.mxu0 0.0
    %3689 = vmatprep.subr.mxu0 0.0
    %3690 = vmatpush1.msra.mxu0 0.0
    %3691 = vmatprep.subr.mxu0 0.0
    %3692 = vmatpush1.msra.mxu0 0.0
    %3693 = vmatprep.subr.mxu0 0.0
    %3694 = vmatpush1.msra.mxu0 0.0
    %3695 = vmatprep.subr.mxu0 0.0
    %3696 = vmatpush1.msra.mxu0 0.0
    %3697 = vmatprep.subr.mxu0 0.0
    %3698 = vmatpush1.msra.mxu0 0.0
    %3699 = vmatprep.subr.mxu0 0.0
    %3700 = vmatpush1.msra.mxu0 0.0
    %3701 = vmatprep.subr.mxu0 0.0
    %3702 = vmatpush1.msra.mxu0 0.0
    %3703 = vmatprep.subr.mxu0 0.0
    %3704 = vmatpush1.msra.mxu0 0.0
    %3705 = vmatprep.subr.mxu0 0.0
    %3706 = vmatpush1.msra.mxu0 0.0
    %3707 = vmatprep.subr.mxu0 0.0
    %3708 = vmatpush1.msra.mxu0 0.0
    %3709 = vmatprep.subr.mxu0 0.0
    %3710 = vmatpush1.msra.mxu0 0.0
    %3711 = vmatprep.subr.mxu0 0.0
    %3712 = vmatpush1.msra.mxu0 0.0
    %3713 = vmatprep.subr.mxu0 0.0
    %3714 = vmatpush1.msra.mxu0 0.0
    %3715 = vmatprep.subr.mxu0 0.0
    %3716 = vmatpush1.msra.mxu0 0.0
    %3717 = vmatprep.subr.mxu0 0.0
    %3718 = vmatpush1.msra.mxu0 0.0
    %3719 = vmatprep.subr.mxu0 0.0
    %3720 = vmatpush1.msra.mxu0 0.0
    %3721 = vmatprep.subr.mxu0 0.0
    %3722 = vmatpush1.msra.mxu0 0.0
    %3723 = vmatprep.mubr.f32.mxu0 0.0
    %3724 = vmatmul.mubr.f32.gmra.mrb[0].mxu0 %v3657
    %v3725 = vpop.f32.mrb[0].mxu0
    %v3726 = vadd.f32 1e-08, %v3725
    %v3727 = vpop.f32.mrb[0].mxu0
    %3728 = vdwg.mxu0
    %v3729 = vrcp.pop %v3726
    %v3730 = vmul.f32 %v1134, %v3729
    %v3731 = vmul.f32 %v3655, %v3730
    %v3732 = vsel %vm99, %v3731, 0.0
    %v3733 = vrot.slane %v3732, 4
    %v3734 = vadd.f32 %v3732, %v3733
    %v3735 = vrot.slane %v3734, 2
    %v3736 = vadd.f32 %v3734, %v3735
    %v3737 = vrot.slane %v3736, 1
    %v3738 = vadd.f32 %v3736, %v3737
    %v3739 = vadd.f32 %v3738, 1e-08
    %v3740 = vrcp.pop %v3739
    %v3741 = vmul.f32 %v1219, %v3740
    %v3742 = vmul.f32 %v3731, %v3741
    %v3744 = vsel %vm99, %v3742, 0
    %3746 = vmatprep.subr.mxu0 0.0
    %3747 = vmatpush1.msra.mxu0 %v1054
    %3748 = vmatprep.subr.mxu0 0.0
    %3749 = vmatpush1.msra.mxu0 %v1055
    %3750 = vmatprep.subr.mxu0 0.0
    %3751 = vmatpush1.msra.mxu0 %v1056
    %3752 = vmatprep.subr.mxu0 0.0
    %3753 = vmatpush1.msra.mxu0 %v1057
    %3754 = vmatprep.subr.mxu0 0.0
    %3755 = vmatpush1.msra.mxu0 0.0
    %3756 = vmatprep.subr.mxu0 0.0
    %3757 = vmatpush1.msra.mxu0 0.0
    %3758 = vmatprep.subr.mxu0 0.0
    %3759 = vmatpush1.msra.mxu0 0.0
    %3760 = vmatprep.subr.mxu0 0.0
    %3761 = vmatpush1.msra.mxu0 0.0
    %3762 = vmatprep.subr.mxu0 0.0
    %3763 = vmatpush1.msra.mxu0 0.0
    %3764 = vmatprep.subr.mxu0 0.0
    %3765 = vmatpush1.msra.mxu0 0.0
    %3766 = vmatprep.subr.mxu0 0.0
    %3767 = vmatpush1.msra.mxu0 0.0
    %3768 = vmatprep.subr.mxu0 0.0
    %3769 = vmatpush1.msra.mxu0 0.0
    %3770 = vmatprep.subr.mxu0 0.0
    %3771 = vmatpush1.msra.mxu0 0.0
    %3772 = vmatprep.subr.mxu0 0.0
    %3773 = vmatpush1.msra.mxu0 0.0
    %3774 = vmatprep.subr.mxu0 0.0
    %3775 = vmatpush1.msra.mxu0 0.0
    %3776 = vmatprep.subr.mxu0 0.0
    %3777 = vmatpush1.msra.mxu0 0.0
    %3778 = vmatprep.subr.mxu0 0.0
    %3779 = vmatpush1.msra.mxu0 0.0
    %3780 = vmatprep.subr.mxu0 0.0
    %3781 = vmatpush1.msra.mxu0 0.0
    %3782 = vmatprep.subr.mxu0 0.0
    %3783 = vmatpush1.msra.mxu0 0.0
    %3784 = vmatprep.subr.mxu0 0.0
    %3785 = vmatpush1.msra.mxu0 0.0
    %3786 = vmatprep.subr.mxu0 0.0
    %3787 = vmatpush1.msra.mxu0 0.0
    %3788 = vmatprep.subr.mxu0 0.0
    %3789 = vmatpush1.msra.mxu0 0.0
    %3790 = vmatprep.subr.mxu0 0.0
    %3791 = vmatpush1.msra.mxu0 0.0
    %3792 = vmatprep.subr.mxu0 0.0
    %3793 = vmatpush1.msra.mxu0 0.0
    %3794 = vmatprep.subr.mxu0 0.0
    %3795 = vmatpush1.msra.mxu0 0.0
    %3796 = vmatprep.subr.mxu0 0.0
    %3797 = vmatpush1.msra.mxu0 0.0
    %3798 = vmatprep.subr.mxu0 0.0
    %3799 = vmatpush1.msra.mxu0 0.0
    %3800 = vmatprep.subr.mxu0 0.0
    %3801 = vmatpush1.msra.mxu0 0.0
    %3802 = vmatprep.subr.mxu0 0.0
    %3803 = vmatpush1.msra.mxu0 0.0
    %3804 = vmatprep.subr.mxu0 0.0
    %3805 = vmatpush1.msra.mxu0 0.0
    %3806 = vmatprep.subr.mxu0 0.0
    %3807 = vmatpush1.msra.mxu0 0.0
    %3808 = vmatprep.subr.mxu0 0.0
    %3809 = vmatpush1.msra.mxu0 0.0
    %3810 = vmatprep.mubr.f32.mxu0 0.0
    %3811 = vmatmul.mubr.f32.gmra.mrb[0].mxu0 %v3744
    %v3812 = vpop.f32.mrb[0].mxu0
    %v3813 = vadd.f32 1e-08, %v3812
    %v3814 = vpop.f32.mrb[0].mxu0
    %3815 = vdwg.mxu0
    %v3816 = vrcp.pop %v3813
    %v3817 = vmul.f32 %v1134, %v3816
    %v3818 = vmul.f32 %v3742, %v3817
    %v3819 = vsel %vm99, %v3818, 0.0
    %v3820 = vrot.slane %v3819, 4
    %v3821 = vadd.f32 %v3819, %v3820
    %v3822 = vrot.slane %v3821, 2
    %v3823 = vadd.f32 %v3821, %v3822
    %v3824 = vrot.slane %v3823, 1
    %v3825 = vadd.f32 %v3823, %v3824
    %v3826 = vadd.f32 %v3825, 1e-08
    %v3827 = vrcp.pop %v3826
    %v3828 = vmul.f32 %v1219, %v3827
    %v3829 = vmul.f32 %v3818, %v3828
    %v3831 = vsel %vm99, %v3829, 0
    %3833 = vmatprep.subr.mxu0 0.0
    %3834 = vmatpush1.msra.mxu0 %v1054
    %3835 = vmatprep.subr.mxu0 0.0
    %3836 = vmatpush1.msra.mxu0 %v1055
    %3837 = vmatprep.subr.mxu0 0.0
    %3838 = vmatpush1.msra.mxu0 %v1056
    %3839 = vmatprep.subr.mxu0 0.0
    %3840 = vmatpush1.msra.mxu0 %v1057
    %3841 = vmatprep.subr.mxu0 0.0
    %3842 = vmatpush1.msra.mxu0 0.0
    %3843 = vmatprep.subr.mxu0 0.0
    %3844 = vmatpush1.msra.mxu0 0.0
    %3845 = vmatprep.subr.mxu0 0.0
    %3846 = vmatpush1.msra.mxu0 0.0
    %3847 = vmatprep.subr.mxu0 0.0
    %3848 = vmatpush1.msra.mxu0 0.0
    %3849 = vmatprep.subr.mxu0 0.0
    %3850 = vmatpush1.msra.mxu0 0.0
    %3851 = vmatprep.subr.mxu0 0.0
    %3852 = vmatpush1.msra.mxu0 0.0
    %3853 = vmatprep.subr.mxu0 0.0
    %3854 = vmatpush1.msra.mxu0 0.0
    %3855 = vmatprep.subr.mxu0 0.0
    %3856 = vmatpush1.msra.mxu0 0.0
    %3857 = vmatprep.subr.mxu0 0.0
    %3858 = vmatpush1.msra.mxu0 0.0
    %3859 = vmatprep.subr.mxu0 0.0
    %3860 = vmatpush1.msra.mxu0 0.0
    %3861 = vmatprep.subr.mxu0 0.0
    %3862 = vmatpush1.msra.mxu0 0.0
    %3863 = vmatprep.subr.mxu0 0.0
    %3864 = vmatpush1.msra.mxu0 0.0
    %3865 = vmatprep.subr.mxu0 0.0
    %3866 = vmatpush1.msra.mxu0 0.0
    %3867 = vmatprep.subr.mxu0 0.0
    %3868 = vmatpush1.msra.mxu0 0.0
    %3869 = vmatprep.subr.mxu0 0.0
    %3870 = vmatpush1.msra.mxu0 0.0
    %3871 = vmatprep.subr.mxu0 0.0
    %3872 = vmatpush1.msra.mxu0 0.0
    %3873 = vmatprep.subr.mxu0 0.0
    %3874 = vmatpush1.msra.mxu0 0.0
    %3875 = vmatprep.subr.mxu0 0.0
    %3876 = vmatpush1.msra.mxu0 0.0
    %3877 = vmatprep.subr.mxu0 0.0
    %3878 = vmatpush1.msra.mxu0 0.0
    %3879 = vmatprep.subr.mxu0 0.0
    %3880 = vmatpush1.msra.mxu0 0.0
    %3881 = vmatprep.subr.mxu0 0.0
    %3882 = vmatpush1.msra.mxu0 0.0
    %3883 = vmatprep.subr.mxu0 0.0
    %3884 = vmatpush1.msra.mxu0 0.0
    %3885 = vmatprep.subr.mxu0 0.0
    %3886 = vmatpush1.msra.mxu0 0.0
    %3887 = vmatprep.subr.mxu0 0.0
    %3888 = vmatpush1.msra.mxu0 0.0
    %3889 = vmatprep.subr.mxu0 0.0
    %3890 = vmatpush1.msra.mxu0 0.0
    %3891 = vmatprep.subr.mxu0 0.0
    %3892 = vmatpush1.msra.mxu0 0.0
    %3893 = vmatprep.subr.mxu0 0.0
    %3894 = vmatpush1.msra.mxu0 0.0
    %3895 = vmatprep.subr.mxu0 0.0
    %3896 = vmatpush1.msra.mxu0 0.0
    %3897 = vmatprep.mubr.f32.mxu0 0.0
    %3898 = vmatmul.mubr.f32.gmra.mrb[0].mxu0 %v3831
    %v3899 = vpop.f32.mrb[0].mxu0
    %v3900 = vadd.f32 1e-08, %v3899
    %v3901 = vpop.f32.mrb[0].mxu0
    %3902 = vdwg.mxu0
    %v3903 = vrcp.pop %v3900
    %v3904 = vmul.f32 %v1134, %v3903
    %v3905 = vmul.f32 %v3829, %v3904
    %v3906 = vsel %vm99, %v3905, 0.0
    %v3907 = vrot.slane %v3906, 4
    %v3908 = vadd.f32 %v3906, %v3907
    %v3909 = vrot.slane %v3908, 2
    %v3910 = vadd.f32 %v3908, %v3909
    %v3911 = vrot.slane %v3910, 1
    %v3912 = vadd.f32 %v3910, %v3911
    %v3913 = vadd.f32 %v3912, 1e-08
    %v3914 = vrcp.pop %v3913
    %v3915 = vmul.f32 %v1219, %v3914
    %v3916 = vmul.f32 %v3905, %v3915
    %v3918 = vsel %vm99, %v3916, 0
    %3920 = vmatprep.subr.mxu0 0.0
    %3921 = vmatpush1.msra.mxu0 %v1054
    %3922 = vmatprep.subr.mxu0 0.0
    %3923 = vmatpush1.msra.mxu0 %v1055
    %3924 = vmatprep.subr.mxu0 0.0
    %3925 = vmatpush1.msra.mxu0 %v1056
    %3926 = vmatprep.subr.mxu0 0.0
    %3927 = vmatpush1.msra.mxu0 %v1057
    %3928 = vmatprep.subr.mxu0 0.0
    %3929 = vmatpush1.msra.mxu0 0.0
    %3930 = vmatprep.subr.mxu0 0.0
    %3931 = vmatpush1.msra.mxu0 0.0
    %3932 = vmatprep.subr.mxu0 0.0
    %3933 = vmatpush1.msra.mxu0 0.0
    %3934 = vmatprep.subr.mxu0 0.0
    %3935 = vmatpush1.msra.mxu0 0.0
    %3936 = vmatprep.subr.mxu0 0.0
    %3937 = vmatpush1.msra.mxu0 0.0
    %3938 = vmatprep.subr.mxu0 0.0
    %3939 = vmatpush1.msra.mxu0 0.0
    %3940 = vmatprep.subr.mxu0 0.0
    %3941 = vmatpush1.msra.mxu0 0.0
    %3942 = vmatprep.subr.mxu0 0.0
    %3943 = vmatpush1.msra.mxu0 0.0
    %3944 = vmatprep.subr.mxu0 0.0
    %3945 = vmatpush1.msra.mxu0 0.0
    %3946 = vmatprep.subr.mxu0 0.0
    %3947 = vmatpush1.msra.mxu0 0.0
    %3948 = vmatprep.subr.mxu0 0.0
    %3949 = vmatpush1.msra.mxu0 0.0
    %3950 = vmatprep.subr.mxu0 0.0
    %3951 = vmatpush1.msra.mxu0 0.0
    %3952 = vmatprep.subr.mxu0 0.0
    %3953 = vmatpush1.msra.mxu0 0.0
    %3954 = vmatprep.subr.mxu0 0.0
    %3955 = vmatpush1.msra.mxu0 0.0
    %3956 = vmatprep.subr.mxu0 0.0
    %3957 = vmatpush1.msra.mxu0 0.0
    %3958 = vmatprep.subr.mxu0 0.0
    %3959 = vmatpush1.msra.mxu0 0.0
    %3960 = vmatprep.subr.mxu0 0.0
    %3961 = vmatpush1.msra.mxu0 0.0
    %3962 = vmatprep.subr.mxu0 0.0
    %3963 = vmatpush1.msra.mxu0 0.0
    %3964 = vmatprep.subr.mxu0 0.0
    %3965 = vmatpush1.msra.mxu0 0.0
    %3966 = vmatprep.subr.mxu0 0.0
    %3967 = vmatpush1.msra.mxu0 0.0
    %3968 = vmatprep.subr.mxu0 0.0
    %3969 = vmatpush1.msra.mxu0 0.0
    %3970 = vmatprep.subr.mxu0 0.0
    %3971 = vmatpush1.msra.mxu0 0.0
    %3972 = vmatprep.subr.mxu0 0.0
    %3973 = vmatpush1.msra.mxu0 0.0
    %3974 = vmatprep.subr.mxu0 0.0
    %3975 = vmatpush1.msra.mxu0 0.0
    %3976 = vmatprep.subr.mxu0 0.0
    %3977 = vmatpush1.msra.mxu0 0.0
    %3978 = vmatprep.subr.mxu0 0.0
    %3979 = vmatpush1.msra.mxu0 0.0
    %3980 = vmatprep.subr.mxu0 0.0
    %3981 = vmatpush1.msra.mxu0 0.0
    %3982 = vmatprep.subr.mxu0 0.0
    %3983 = vmatpush1.msra.mxu0 0.0
    %3984 = vmatprep.mubr.f32.mxu0 0.0
    %3985 = vmatmul.mubr.f32.gmra.mrb[0].mxu0 %v3918
    %v3986 = vpop.f32.mrb[0].mxu0
    %v3987 = vadd.f32 1e-08, %v3986
    %v3988 = vpop.f32.mrb[0].mxu0
    %3989 = vdwg.mxu0
    %v3990 = vrcp.pop %v3987
    %v3991 = vmul.f32 %v1134, %v3990
    %v3992 = vmul.f32 %v3916, %v3991
    %v3993 = vsel %vm99, %v3992, 0.0
    %v3994 = vrot.slane %v3993, 4
    %v3995 = vadd.f32 %v3993, %v3994
    %v3996 = vrot.slane %v3995, 2
    %v3997 = vadd.f32 %v3995, %v3996
    %v3998 = vrot.slane %v3997, 1
    %v3999 = vadd.f32 %v3997, %v3998
    %v4000 = vadd.f32 %v3999, 1e-08
    %v4001 = vrcp.pop %v4000
    %v4002 = vmul.f32 %v1219, %v4001
    %v4003 = vmul.f32 %v3992, %v4002
    %v4005 = vsel %vm99, %v4003, 0
    %4007 = vmatprep.subr.mxu0 0.0
    %4008 = vmatpush1.msra.mxu0 %v1054
    %4009 = vmatprep.subr.mxu0 0.0
    %4010 = vmatpush1.msra.mxu0 %v1055
    %4011 = vmatprep.subr.mxu0 0.0
    %4012 = vmatpush1.msra.mxu0 %v1056
    %4013 = vmatprep.subr.mxu0 0.0
    %4014 = vmatpush1.msra.mxu0 %v1057
    %4015 = vmatprep.subr.mxu0 0.0
    %4016 = vmatpush1.msra.mxu0 0.0
    %4017 = vmatprep.subr.mxu0 0.0
    %4018 = vmatpush1.msra.mxu0 0.0
    %4019 = vmatprep.subr.mxu0 0.0
    %4020 = vmatpush1.msra.mxu0 0.0
    %4021 = vmatprep.subr.mxu0 0.0
    %4022 = vmatpush1.msra.mxu0 0.0
    %4023 = vmatprep.subr.mxu0 0.0
    %4024 = vmatpush1.msra.mxu0 0.0
    %4025 = vmatprep.subr.mxu0 0.0
    %4026 = vmatpush1.msra.mxu0 0.0
    %4027 = vmatprep.subr.mxu0 0.0
    %4028 = vmatpush1.msra.mxu0 0.0
    %4029 = vmatprep.subr.mxu0 0.0
    %4030 = vmatpush1.msra.mxu0 0.0
    %4031 = vmatprep.subr.mxu0 0.0
    %4032 = vmatpush1.msra.mxu0 0.0
    %4033 = vmatprep.subr.mxu0 0.0
    %4034 = vmatpush1.msra.mxu0 0.0
    %4035 = vmatprep.subr.mxu0 0.0
    %4036 = vmatpush1.msra.mxu0 0.0
    %4037 = vmatprep.subr.mxu0 0.0
    %4038 = vmatpush1.msra.mxu0 0.0
    %4039 = vmatprep.subr.mxu0 0.0
    %4040 = vmatpush1.msra.mxu0 0.0
    %4041 = vmatprep.subr.mxu0 0.0
    %4042 = vmatpush1.msra.mxu0 0.0
    %4043 = vmatprep.subr.mxu0 0.0
    %4044 = vmatpush1.msra.mxu0 0.0
    %4045 = vmatprep.subr.mxu0 0.0
    %4046 = vmatpush1.msra.mxu0 0.0
    %4047 = vmatprep.subr.mxu0 0.0
    %4048 = vmatpush1.msra.mxu0 0.0
    %4049 = vmatprep.subr.mxu0 0.0
    %4050 = vmatpush1.msra.mxu0 0.0
    %4051 = vmatprep.subr.mxu0 0.0
    %4052 = vmatpush1.msra.mxu0 0.0
    %4053 = vmatprep.subr.mxu0 0.0
    %4054 = vmatpush1.msra.mxu0 0.0
    %4055 = vmatprep.subr.mxu0 0.0
    %4056 = vmatpush1.msra.mxu0 0.0
    %4057 = vmatprep.subr.mxu0 0.0
    %4058 = vmatpush1.msra.mxu0 0.0
    %4059 = vmatprep.subr.mxu0 0.0
    %4060 = vmatpush1.msra.mxu0 0.0
    %4061 = vmatprep.subr.mxu0 0.0
    %4062 = vmatpush1.msra.mxu0 0.0
    %4063 = vmatprep.subr.mxu0 0.0
    %4064 = vmatpush1.msra.mxu0 0.0
    %4065 = vmatprep.subr.mxu0 0.0
    %4066 = vmatpush1.msra.mxu0 0.0
    %4067 = vmatprep.subr.mxu0 0.0
    %4068 = vmatpush1.msra.mxu0 0.0
    %4069 = vmatprep.subr.mxu0 0.0
    %4070 = vmatpush1.msra.mxu0 0.0
    %4071 = vmatprep.mubr.f32.mxu0 0.0
    %4072 = vmatmul.mubr.f32.gmra.mrb[0].mxu0 %v4005
    %v4073 = vpop.f32.mrb[0].mxu0
    %v4074 = vadd.f32 1e-08, %v4073
    %v4075 = vpop.f32.mrb[0].mxu0
    %4076 = vdwg.mxu0
    %v4077 = vrcp.pop %v4074
    %v4078 = vmul.f32 %v1134, %v4077
    %v4079 = vmul.f32 %v4003, %v4078
    %v4080 = vsel %vm99, %v4079, 0.0
    %v4081 = vrot.slane %v4080, 4
    %v4082 = vadd.f32 %v4080, %v4081
    %v4083 = vrot.slane %v4082, 2
    %v4084 = vadd.f32 %v4082, %v4083
    %v4085 = vrot.slane %v4084, 1
    %v4086 = vadd.f32 %v4084, %v4085
    %v4087 = vadd.f32 %v4086, 1e-08
    %v4088 = vrcp.pop %v4087
    %v4089 = vmul.f32 %v1219, %v4088
    %v4090 = vmul.f32 %v4079, %v4089
    %v4092 = vsel %vm99, %v4090, 0
    %4094 = vmatprep.subr.mxu0 0.0
    %4095 = vmatpush1.msra.mxu0 %v1054
    %4096 = vmatprep.subr.mxu0 0.0
    %4097 = vmatpush1.msra.mxu0 %v1055
    %4098 = vmatprep.subr.mxu0 0.0
    %4099 = vmatpush1.msra.mxu0 %v1056
    %4100 = vmatprep.subr.mxu0 0.0
    %4101 = vmatpush1.msra.mxu0 %v1057
    %4102 = vmatprep.subr.mxu0 0.0
    %4103 = vmatpush1.msra.mxu0 0.0
    %4104 = vmatprep.subr.mxu0 0.0
    %4105 = vmatpush1.msra.mxu0 0.0
    %4106 = vmatprep.subr.mxu0 0.0
    %4107 = vmatpush1.msra.mxu0 0.0
    %4108 = vmatprep.subr.mxu0 0.0
    %4109 = vmatpush1.msra.mxu0 0.0
    %4110 = vmatprep.subr.mxu0 0.0
    %4111 = vmatpush1.msra.mxu0 0.0
    %4112 = vmatprep.subr.mxu0 0.0
    %4113 = vmatpush1.msra.mxu0 0.0
    %4114 = vmatprep.subr.mxu0 0.0
    %4115 = vmatpush1.msra.mxu0 0.0
    %4116 = vmatprep.subr.mxu0 0.0
    %4117 = vmatpush1.msra.mxu0 0.0
    %4118 = vmatprep.subr.mxu0 0.0
    %4119 = vmatpush1.msra.mxu0 0.0
    %4120 = vmatprep.subr.mxu0 0.0
    %4121 = vmatpush1.msra.mxu0 0.0
    %4122 = vmatprep.subr.mxu0 0.0
    %4123 = vmatpush1.msra.mxu0 0.0
    %4124 = vmatprep.subr.mxu0 0.0
    %4125 = vmatpush1.msra.mxu0 0.0
    %4126 = vmatprep.subr.mxu0 0.0
    %4127 = vmatpush1.msra.mxu0 0.0
    %4128 = vmatprep.subr.mxu0 0.0
    %4129 = vmatpush1.msra.mxu0 0.0
    %4130 = vmatprep.subr.mxu0 0.0
    %4131 = vmatpush1.msra.mxu0 0.0
    %4132 = vmatprep.subr.mxu0 0.0
    %4133 = vmatpush1.msra.mxu0 0.0
    %4134 = vmatprep.subr.mxu0 0.0
    %4135 = vmatpush1.msra.mxu0 0.0
    %4136 = vmatprep.subr.mxu0 0.0
    %4137 = vmatpush1.msra.mxu0 0.0
    %4138 = vmatprep.subr.mxu0 0.0
    %4139 = vmatpush1.msra.mxu0 0.0
    %4140 = vmatprep.subr.mxu0 0.0
    %4141 = vmatpush1.msra.mxu0 0.0
    %4142 = vmatprep.subr.mxu0 0.0
    %4143 = vmatpush1.msra.mxu0 0.0
    %4144 = vmatprep.subr.mxu0 0.0
    %4145 = vmatpush1.msra.mxu0 0.0
    %4146 = vmatprep.subr.mxu0 0.0
    %4147 = vmatpush1.msra.mxu0 0.0
    %4148 = vmatprep.subr.mxu0 0.0
    %4149 = vmatpush1.msra.mxu0 0.0
    %4150 = vmatprep.subr.mxu0 0.0
    %4151 = vmatpush1.msra.mxu0 0.0
    %4152 = vmatprep.subr.mxu0 0.0
    %4153 = vmatpush1.msra.mxu0 0.0
    %4154 = vmatprep.subr.mxu0 0.0
    %4155 = vmatpush1.msra.mxu0 0.0
    %4156 = vmatprep.subr.mxu0 0.0
    %4157 = vmatpush1.msra.mxu0 0.0
    %4158 = vmatprep.mubr.f32.mxu0 0.0
    %4159 = vmatmul.mubr.f32.gmra.mrb[0].mxu0 %v4092
    %v4160 = vpop.f32.mrb[0].mxu0
    %v4161 = vadd.f32 1e-08, %v4160
    %v4162 = vpop.f32.mrb[0].mxu0
    %4163 = vdwg.mxu0
    %v4164 = vrcp.pop %v4161
    %v4165 = vmul.f32 %v1134, %v4164
    %v4166 = vmul.f32 %v4090, %v4165
    %v4167 = vsel %vm99, %v4166, 0.0
    %v4168 = vrot.slane %v4167, 4
    %v4169 = vadd.f32 %v4167, %v4168
    %v4170 = vrot.slane %v4169, 2
    %v4171 = vadd.f32 %v4169, %v4170
    %v4172 = vrot.slane %v4171, 1
    %v4173 = vadd.f32 %v4171, %v4172
    %v4174 = vadd.f32 %v4173, 1e-08
    %v4175 = vrcp.pop %v4174
    %v4176 = vmul.f32 %v1219, %v4175
    %v4177 = vmul.f32 %v4166, %v4176
    %v4179 = vsel %vm99, %v4177, 0
    %4181 = vmatprep.subr.mxu0 0.0
    %4182 = vmatpush1.msra.mxu0 %v1054
    %4183 = vmatprep.subr.mxu0 0.0
    %4184 = vmatpush1.msra.mxu0 %v1055
    %4185 = vmatprep.subr.mxu0 0.0
    %4186 = vmatpush1.msra.mxu0 %v1056
    %4187 = vmatprep.subr.mxu0 0.0
    %4188 = vmatpush1.msra.mxu0 %v1057
    %4189 = vmatprep.subr.mxu0 0.0
    %4190 = vmatpush1.msra.mxu0 0.0
    %4191 = vmatprep.subr.mxu0 0.0
    %4192 = vmatpush1.msra.mxu0 0.0
    %4193 = vmatprep.subr.mxu0 0.0
    %4194 = vmatpush1.msra.mxu0 0.0
    %4195 = vmatprep.subr.mxu0 0.0
    %4196 = vmatpush1.msra.mxu0 0.0
    %4197 = vmatprep.subr.mxu0 0.0
    %4198 = vmatpush1.msra.mxu0 0.0
    %4199 = vmatprep.subr.mxu0 0.0
    %4200 = vmatpush1.msra.mxu0 0.0
    %4201 = vmatprep.subr.mxu0 0.0
    %4202 = vmatpush1.msra.mxu0 0.0
    %4203 = vmatprep.subr.mxu0 0.0
    %4204 = vmatpush1.msra.mxu0 0.0
    %4205 = vmatprep.subr.mxu0 0.0
    %4206 = vmatpush1.msra.mxu0 0.0
    %4207 = vmatprep.subr.mxu0 0.0
    %4208 = vmatpush1.msra.mxu0 0.0
    %4209 = vmatprep.subr.mxu0 0.0
    %4210 = vmatpush1.msra.mxu0 0.0
    %4211 = vmatprep.subr.mxu0 0.0
    %4212 = vmatpush1.msra.mxu0 0.0
    %4213 = vmatprep.subr.mxu0 0.0
    %4214 = vmatpush1.msra.mxu0 0.0
    %4215 = vmatprep.subr.mxu0 0.0
    %4216 = vmatpush1.msra.mxu0 0.0
    %4217 = vmatprep.subr.mxu0 0.0
    %4218 = vmatpush1.msra.mxu0 0.0
    %4219 = vmatprep.subr.mxu0 0.0
    %4220 = vmatpush1.msra.mxu0 0.0
    %4221 = vmatprep.subr.mxu0 0.0
    %4222 = vmatpush1.msra.mxu0 0.0
    %4223 = vmatprep.subr.mxu0 0.0
    %4224 = vmatpush1.msra.mxu0 0.0
    %4225 = vmatprep.subr.mxu0 0.0
    %4226 = vmatpush1.msra.mxu0 0.0
    %4227 = vmatprep.subr.mxu0 0.0
    %4228 = vmatpush1.msra.mxu0 0.0
    %4229 = vmatprep.subr.mxu0 0.0
    %4230 = vmatpush1.msra.mxu0 0.0
    %4231 = vmatprep.subr.mxu0 0.0
    %4232 = vmatpush1.msra.mxu0 0.0
    %4233 = vmatprep.subr.mxu0 0.0
    %4234 = vmatpush1.msra.mxu0 0.0
    %4235 = vmatprep.subr.mxu0 0.0
    %4236 = vmatpush1.msra.mxu0 0.0
    %4237 = vmatprep.subr.mxu0 0.0
    %4238 = vmatpush1.msra.mxu0 0.0
    %4239 = vmatprep.subr.mxu0 0.0
    %4240 = vmatpush1.msra.mxu0 0.0
    %4241 = vmatprep.subr.mxu0 0.0
    %4242 = vmatpush1.msra.mxu0 0.0
    %4243 = vmatprep.subr.mxu0 0.0
    %4244 = vmatpush1.msra.mxu0 0.0
    %4245 = vmatprep.mubr.f32.mxu0 0.0
    %4246 = vmatmul.mubr.f32.gmra.mrb[0].mxu0 %v4179
    %v4247 = vpop.f32.mrb[0].mxu0
    %v4248 = vadd.f32 1e-08, %v4247
    %v4249 = vpop.f32.mrb[0].mxu0
    %4250 = vdwg.mxu0
    %v4251 = vrcp.pop %v4248
    %v4252 = vmul.f32 %v1134, %v4251
    %v4253 = vmul.f32 %v4177, %v4252
    %v4254 = vsel %vm99, %v4253, 0.0
    %v4255 = vrot.slane %v4254, 4
    %v4256 = vadd.f32 %v4254, %v4255
    %v4257 = vrot.slane %v4256, 2
    %v4258 = vadd.f32 %v4256, %v4257
    %v4259 = vrot.slane %v4258, 1
    %v4260 = vadd.f32 %v4258, %v4259
    %v4261 = vadd.f32 %v4260, 1e-08
    %v4262 = vrcp.pop %v4261
    %v4263 = vmul.f32 %v1219, %v4262
    %v4264 = vmul.f32 %v4253, %v4263
    %v4266 = vsel %vm99, %v4264, 0
    %4268 = vmatprep.subr.mxu0 0.0
    %4269 = vmatpush1.msra.mxu0 %v1054
    %4270 = vmatprep.subr.mxu0 0.0
    %4271 = vmatpush1.msra.mxu0 %v1055
    %4272 = vmatprep.subr.mxu0 0.0
    %4273 = vmatpush1.msra.mxu0 %v1056
    %4274 = vmatprep.subr.mxu0 0.0
    %4275 = vmatpush1.msra.mxu0 %v1057
    %4276 = vmatprep.subr.mxu0 0.0
    %4277 = vmatpush1.msra.mxu0 0.0
    %4278 = vmatprep.subr.mxu0 0.0
    %4279 = vmatpush1.msra.mxu0 0.0
    %4280 = vmatprep.subr.mxu0 0.0
    %4281 = vmatpush1.msra.mxu0 0.0
    %4282 = vmatprep.subr.mxu0 0.0
    %4283 = vmatpush1.msra.mxu0 0.0
    %4284 = vmatprep.subr.mxu0 0.0
    %4285 = vmatpush1.msra.mxu0 0.0
    %4286 = vmatprep.subr.mxu0 0.0
    %4287 = vmatpush1.msra.mxu0 0.0
    %4288 = vmatprep.subr.mxu0 0.0
    %4289 = vmatpush1.msra.mxu0 0.0
    %4290 = vmatprep.subr.mxu0 0.0
    %4291 = vmatpush1.msra.mxu0 0.0
    %4292 = vmatprep.subr.mxu0 0.0
    %4293 = vmatpush1.msra.mxu0 0.0
    %4294 = vmatprep.subr.mxu0 0.0
    %4295 = vmatpush1.msra.mxu0 0.0
    %4296 = vmatprep.subr.mxu0 0.0
    %4297 = vmatpush1.msra.mxu0 0.0
    %4298 = vmatprep.subr.mxu0 0.0
    %4299 = vmatpush1.msra.mxu0 0.0
    %4300 = vmatprep.subr.mxu0 0.0
    %4301 = vmatpush1.msra.mxu0 0.0
    %4302 = vmatprep.subr.mxu0 0.0
    %4303 = vmatpush1.msra.mxu0 0.0
    %4304 = vmatprep.subr.mxu0 0.0
    %4305 = vmatpush1.msra.mxu0 0.0
    %4306 = vmatprep.subr.mxu0 0.0
    %4307 = vmatpush1.msra.mxu0 0.0
    %4308 = vmatprep.subr.mxu0 0.0
    %4309 = vmatpush1.msra.mxu0 0.0
    %4310 = vmatprep.subr.mxu0 0.0
    %4311 = vmatpush1.msra.mxu0 0.0
    %4312 = vmatprep.subr.mxu0 0.0
    %4313 = vmatpush1.msra.mxu0 0.0
    %4314 = vmatprep.subr.mxu0 0.0
    %4315 = vmatpush1.msra.mxu0 0.0
    %4316 = vmatprep.subr.mxu0 0.0
    %4317 = vmatpush1.msra.mxu0 0.0
    %4318 = vmatprep.subr.mxu0 0.0
    %4319 = vmatpush1.msra.mxu0 0.0
    %4320 = vmatprep.subr.mxu0 0.0
    %4321 = vmatpush1.msra.mxu0 0.0
    %4322 = vmatprep.subr.mxu0 0.0
    %4323 = vmatpush1.msra.mxu0 0.0
    %4324 = vmatprep.subr.mxu0 0.0
    %4325 = vmatpush1.msra.mxu0 0.0
    %4326 = vmatprep.subr.mxu0 0.0
    %4327 = vmatpush1.msra.mxu0 0.0
    %4328 = vmatprep.subr.mxu0 0.0
    %4329 = vmatpush1.msra.mxu0 0.0
    %4330 = vmatprep.subr.mxu0 0.0
    %4331 = vmatpush1.msra.mxu0 0.0
    %4332 = vmatprep.mubr.f32.mxu0 0.0
    %4333 = vmatmul.mubr.f32.gmra.mrb[0].mxu0 %v4266
    %v4334 = vpop.f32.mrb[0].mxu0
    %v4335 = vadd.f32 1e-08, %v4334
    %v4336 = vpop.f32.mrb[0].mxu0
    %4337 = vdwg.mxu0
    %v4338 = vrcp.pop %v4335
    %v4339 = vmul.f32 %v1134, %v4338
    %v4340 = vmul.f32 %v4264, %v4339
    %v4341 = vsel %vm99, %v4340, 0.0
    %v4342 = vrot.slane %v4341, 4
    %v4343 = vadd.f32 %v4341, %v4342
    %v4344 = vrot.slane %v4343, 2
    %v4345 = vadd.f32 %v4343, %v4344
    %v4346 = vrot.slane %v4345, 1
    %v4347 = vadd.f32 %v4345, %v4346
    %v4348 = vadd.f32 %v4347, 1e-08
    %v4349 = vrcp.pop %v4348
    %v4350 = vmul.f32 %v1219, %v4349
    %v4351 = vmul.f32 %v4340, %v4350
    %v4353 = vsel %vm99, %v4351, 0
    %4355 = vmatprep.subr.mxu0 0.0
    %4356 = vmatpush1.msra.mxu0 %v1054
    %4357 = vmatprep.subr.mxu0 0.0
    %4358 = vmatpush1.msra.mxu0 %v1055
    %4359 = vmatprep.subr.mxu0 0.0
    %4360 = vmatpush1.msra.mxu0 %v1056
    %4361 = vmatprep.subr.mxu0 0.0
    %4362 = vmatpush1.msra.mxu0 %v1057
    %4363 = vmatprep.subr.mxu0 0.0
    %4364 = vmatpush1.msra.mxu0 0.0
    %4365 = vmatprep.subr.mxu0 0.0
    %4366 = vmatpush1.msra.mxu0 0.0
    %4367 = vmatprep.subr.mxu0 0.0
    %4368 = vmatpush1.msra.mxu0 0.0
    %4369 = vmatprep.subr.mxu0 0.0
    %4370 = vmatpush1.msra.mxu0 0.0
    %4371 = vmatprep.subr.mxu0 0.0
    %4372 = vmatpush1.msra.mxu0 0.0
    %4373 = vmatprep.subr.mxu0 0.0
    %4374 = vmatpush1.msra.mxu0 0.0
    %4375 = vmatprep.subr.mxu0 0.0
    %4376 = vmatpush1.msra.mxu0 0.0
    %4377 = vmatprep.subr.mxu0 0.0
    %4378 = vmatpush1.msra.mxu0 0.0
    %4379 = vmatprep.subr.mxu0 0.0
    %4380 = vmatpush1.msra.mxu0 0.0
    %4381 = vmatprep.subr.mxu0 0.0
    %4382 = vmatpush1.msra.mxu0 0.0
    %4383 = vmatprep.subr.mxu0 0.0
    %4384 = vmatpush1.msra.mxu0 0.0
    %4385 = vmatprep.subr.mxu0 0.0
    %4386 = vmatpush1.msra.mxu0 0.0
    %4387 = vmatprep.subr.mxu0 0.0
    %4388 = vmatpush1.msra.mxu0 0.0
    %4389 = vmatprep.subr.mxu0 0.0
    %4390 = vmatpush1.msra.mxu0 0.0
    %4391 = vmatprep.subr.mxu0 0.0
    %4392 = vmatpush1.msra.mxu0 0.0
    %4393 = vmatprep.subr.mxu0 0.0
    %4394 = vmatpush1.msra.mxu0 0.0
    %4395 = vmatprep.subr.mxu0 0.0
    %4396 = vmatpush1.msra.mxu0 0.0
    %4397 = vmatprep.subr.mxu0 0.0
    %4398 = vmatpush1.msra.mxu0 0.0
    %4399 = vmatprep.subr.mxu0 0.0
    %4400 = vmatpush1.msra.mxu0 0.0
    %4401 = vmatprep.subr.mxu0 0.0
    %4402 = vmatpush1.msra.mxu0 0.0
    %4403 = vmatprep.subr.mxu0 0.0
    %4404 = vmatpush1.msra.mxu0 0.0
    %4405 = vmatprep.subr.mxu0 0.0
    %4406 = vmatpush1.msra.mxu0 0.0
    %4407 = vmatprep.subr.mxu0 0.0
    %4408 = vmatpush1.msra.mxu0 0.0
    %4409 = vmatprep.subr.mxu0 0.0
    %4410 = vmatpush1.msra.mxu0 0.0
    %4411 = vmatprep.subr.mxu0 0.0
    %4412 = vmatpush1.msra.mxu0 0.0
    %4413 = vmatprep.subr.mxu0 0.0
    %4414 = vmatpush1.msra.mxu0 0.0
    %4415 = vmatprep.subr.mxu0 0.0
    %4416 = vmatpush1.msra.mxu0 0.0
    %4417 = vmatprep.subr.mxu0 0.0
    %4418 = vmatpush1.msra.mxu0 0.0
    %4419 = vmatprep.mubr.f32.mxu0 0.0
    %4420 = vmatmul.mubr.f32.gmra.mrb[0].mxu0 %v4353
    %v4421 = vpop.f32.mrb[0].mxu0
    %v4422 = vadd.f32 1e-08, %v4421
    %v4423 = vpop.f32.mrb[0].mxu0
    %4424 = vdwg.mxu0
    %v4425 = vrcp.pop %v4422
    %v4426 = vmul.f32 %v1134, %v4425
    %v4427 = vmul.f32 %v4351, %v4426
    %v4428 = vsel %vm99, %v4427, 0.0
    %v4429 = vrot.slane %v4428, 4
    %v4430 = vadd.f32 %v4428, %v4429
    %v4431 = vrot.slane %v4430, 2
    %v4432 = vadd.f32 %v4430, %v4431
    %v4433 = vrot.slane %v4432, 1
    %v4434 = vadd.f32 %v4432, %v4433
    %v4435 = vadd.f32 %v4434, 1e-08
    %v4436 = vrcp.pop %v4435
    %v4437 = vmul.f32 %v1219, %v4436
    %v4438 = vmul.f32 %v4427, %v4437
    %v4440 = vsel %vm99, %v4438, 0
    %4442 = vmatprep.subr.mxu0 0.0
    %4443 = vmatpush1.msra.mxu0 %v1054
    %4444 = vmatprep.subr.mxu0 0.0
    %4445 = vmatpush1.msra.mxu0 %v1055
    %4446 = vmatprep.subr.mxu0 0.0
    %4447 = vmatpush1.msra.mxu0 %v1056
    %4448 = vmatprep.subr.mxu0 0.0
    %4449 = vmatpush1.msra.mxu0 %v1057
    %4450 = vmatprep.subr.mxu0 0.0
    %4451 = vmatpush1.msra.mxu0 0.0
    %4452 = vmatprep.subr.mxu0 0.0
    %4453 = vmatpush1.msra.mxu0 0.0
    %4454 = vmatprep.subr.mxu0 0.0
    %4455 = vmatpush1.msra.mxu0 0.0
    %4456 = vmatprep.subr.mxu0 0.0
    %4457 = vmatpush1.msra.mxu0 0.0
    %4458 = vmatprep.subr.mxu0 0.0
    %4459 = vmatpush1.msra.mxu0 0.0
    %4460 = vmatprep.subr.mxu0 0.0
    %4461 = vmatpush1.msra.mxu0 0.0
    %4462 = vmatprep.subr.mxu0 0.0
    %4463 = vmatpush1.msra.mxu0 0.0
    %4464 = vmatprep.subr.mxu0 0.0
    %4465 = vmatpush1.msra.mxu0 0.0
    %4466 = vmatprep.subr.mxu0 0.0
    %4467 = vmatpush1.msra.mxu0 0.0
    %4468 = vmatprep.subr.mxu0 0.0
    %4469 = vmatpush1.msra.mxu0 0.0
    %4470 = vmatprep.subr.mxu0 0.0
    %4471 = vmatpush1.msra.mxu0 0.0
    %4472 = vmatprep.subr.mxu0 0.0
    %4473 = vmatpush1.msra.mxu0 0.0
    %4474 = vmatprep.subr.mxu0 0.0
    %4475 = vmatpush1.msra.mxu0 0.0
    %4476 = vmatprep.subr.mxu0 0.0
    %4477 = vmatpush1.msra.mxu0 0.0
    %4478 = vmatprep.subr.mxu0 0.0
    %4479 = vmatpush1.msra.mxu0 0.0
    %4480 = vmatprep.subr.mxu0 0.0
    %4481 = vmatpush1.msra.mxu0 0.0
    %4482 = vmatprep.subr.mxu0 0.0
    %4483 = vmatpush1.msra.mxu0 0.0
    %4484 = vmatprep.subr.mxu0 0.0
    %4485 = vmatpush1.msra.mxu0 0.0
    %4486 = vmatprep.subr.mxu0 0.0
    %4487 = vmatpush1.msra.mxu0 0.0
    %4488 = vmatprep.subr.mxu0 0.0
    %4489 = vmatpush1.msra.mxu0 0.0
    %4490 = vmatprep.subr.mxu0 0.0
    %4491 = vmatpush1.msra.mxu0 0.0
    %4492 = vmatprep.subr.mxu0 0.0
    %4493 = vmatpush1.msra.mxu0 0.0
    %4494 = vmatprep.subr.mxu0 0.0
    %4495 = vmatpush1.msra.mxu0 0.0
    %4496 = vmatprep.subr.mxu0 0.0
    %4497 = vmatpush1.msra.mxu0 0.0
    %4498 = vmatprep.subr.mxu0 0.0
    %4499 = vmatpush1.msra.mxu0 0.0
    %4500 = vmatprep.subr.mxu0 0.0
    %4501 = vmatpush1.msra.mxu0 0.0
    %4502 = vmatprep.subr.mxu0 0.0
    %4503 = vmatpush1.msra.mxu0 0.0
    %4504 = vmatprep.subr.mxu0 0.0
    %4505 = vmatpush1.msra.mxu0 0.0
    %4506 = vmatprep.mubr.f32.mxu0 0.0
    %4507 = vmatmul.mubr.f32.gmra.mrb[0].mxu0 %v4440
    %v4508 = vpop.f32.mrb[0].mxu0
    %v4509 = vadd.f32 1e-08, %v4508
    %v4510 = vpop.f32.mrb[0].mxu0
    %4511 = vdwg.mxu0
    %v4512 = vrcp.pop %v4509
    %v4513 = vmul.f32 %v1134, %v4512
    %v4514 = vmul.f32 %v4438, %v4513
    %v4515 = vsel %vm99, %v4514, 0.0
    %v4516 = vrot.slane %v4515, 4
    %v4517 = vadd.f32 %v4515, %v4516
    %v4518 = vrot.slane %v4517, 2
    %v4519 = vadd.f32 %v4517, %v4518
    %v4520 = vrot.slane %v4519, 1
    %v4521 = vadd.f32 %v4519, %v4520
    %v4522 = vadd.f32 %v4521, 1e-08
    %v4523 = vrcp.pop %v4522
    %v4524 = vmul.f32 %v1219, %v4523
    %v4525 = vmul.f32 %v4514, %v4524
    %v4527 = vsel %vm99, %v4525, 0
    %4529 = vmatprep.subr.mxu0 0.0
    %4530 = vmatpush1.msra.mxu0 %v1054
    %4531 = vmatprep.subr.mxu0 0.0
    %4532 = vmatpush1.msra.mxu0 %v1055
    %4533 = vmatprep.subr.mxu0 0.0
    %4534 = vmatpush1.msra.mxu0 %v1056
    %4535 = vmatprep.subr.mxu0 0.0
    %4536 = vmatpush1.msra.mxu0 %v1057
    %4537 = vmatprep.subr.mxu0 0.0
    %4538 = vmatpush1.msra.mxu0 0.0
    %4539 = vmatprep.subr.mxu0 0.0
    %4540 = vmatpush1.msra.mxu0 0.0
    %4541 = vmatprep.subr.mxu0 0.0
    %4542 = vmatpush1.msra.mxu0 0.0
    %4543 = vmatprep.subr.mxu0 0.0
    %4544 = vmatpush1.msra.mxu0 0.0
    %4545 = vmatprep.subr.mxu0 0.0
    %4546 = vmatpush1.msra.mxu0 0.0
    %4547 = vmatprep.subr.mxu0 0.0
    %4548 = vmatpush1.msra.mxu0 0.0
    %4549 = vmatprep.subr.mxu0 0.0
    %4550 = vmatpush1.msra.mxu0 0.0
    %4551 = vmatprep.subr.mxu0 0.0
    %4552 = vmatpush1.msra.mxu0 0.0
    %4553 = vmatprep.subr.mxu0 0.0
    %4554 = vmatpush1.msra.mxu0 0.0
    %4555 = vmatprep.subr.mxu0 0.0
    %4556 = vmatpush1.msra.mxu0 0.0
    %4557 = vmatprep.subr.mxu0 0.0
    %4558 = vmatpush1.msra.mxu0 0.0
    %4559 = vmatprep.subr.mxu0 0.0
    %4560 = vmatpush1.msra.mxu0 0.0
    %4561 = vmatprep.subr.mxu0 0.0
    %4562 = vmatpush1.msra.mxu0 0.0
    %4563 = vmatprep.subr.mxu0 0.0
    %4564 = vmatpush1.msra.mxu0 0.0
    %4565 = vmatprep.subr.mxu0 0.0
    %4566 = vmatpush1.msra.mxu0 0.0
    %4567 = vmatprep.subr.mxu0 0.0
    %4568 = vmatpush1.msra.mxu0 0.0
    %4569 = vmatprep.subr.mxu0 0.0
    %4570 = vmatpush1.msra.mxu0 0.0
    %4571 = vmatprep.subr.mxu0 0.0
    %4572 = vmatpush1.msra.mxu0 0.0
    %4573 = vmatprep.subr.mxu0 0.0
    %4574 = vmatpush1.msra.mxu0 0.0
    %4575 = vmatprep.subr.mxu0 0.0
    %4576 = vmatpush1.msra.mxu0 0.0
    %4577 = vmatprep.subr.mxu0 0.0
    %4578 = vmatpush1.msra.mxu0 0.0
    %4579 = vmatprep.subr.mxu0 0.0
    %4580 = vmatpush1.msra.mxu0 0.0
    %4581 = vmatprep.subr.mxu0 0.0
    %4582 = vmatpush1.msra.mxu0 0.0
    %4583 = vmatprep.subr.mxu0 0.0
    %4584 = vmatpush1.msra.mxu0 0.0
    %4585 = vmatprep.subr.mxu0 0.0
    %4586 = vmatpush1.msra.mxu0 0.0
    %4587 = vmatprep.subr.mxu0 0.0
    %4588 = vmatpush1.msra.mxu0 0.0
    %4589 = vmatprep.subr.mxu0 0.0
    %4590 = vmatpush1.msra.mxu0 0.0
    %4591 = vmatprep.subr.mxu0 0.0
    %4592 = vmatpush1.msra.mxu0 0.0
    %4593 = vmatprep.mubr.f32.mxu0 0.0
    %4594 = vmatmul.mubr.f32.gmra.mrb[0].mxu0 %v4527
    %v4595 = vpop.f32.mrb[0].mxu0
    %v4596 = vadd.f32 1e-08, %v4595
    %v4597 = vpop.f32.mrb[0].mxu0
    %4598 = vdwg.mxu0
    %v4599 = vrcp.pop %v4596
    %v4600 = vmul.f32 %v1134, %v4599
    %v4601 = vmul.f32 %v4525, %v4600
    %v4602 = vsel %vm99, %v4601, 0.0
    %v4603 = vrot.slane %v4602, 4
    %v4604 = vadd.f32 %v4602, %v4603
    %v4605 = vrot.slane %v4604, 2
    %v4606 = vadd.f32 %v4604, %v4605
    %v4607 = vrot.slane %v4606, 1
    %v4608 = vadd.f32 %v4606, %v4607
    %v4609 = vadd.f32 %v4608, 1e-08
    %v4610 = vrcp.pop %v4609
    %v4611 = vmul.f32 %v1219, %v4610
    %v4612 = vmul.f32 %v4601, %v4611
    %v4614 = vsel %vm99, %v4612, 0
    %4616 = vmatprep.subr.mxu0 0.0
    %4617 = vmatpush1.msra.mxu0 %v1054
    %4618 = vmatprep.subr.mxu0 0.0
    %4619 = vmatpush1.msra.mxu0 %v1055
    %4620 = vmatprep.subr.mxu0 0.0
    %4621 = vmatpush1.msra.mxu0 %v1056
    %4622 = vmatprep.subr.mxu0 0.0
    %4623 = vmatpush1.msra.mxu0 %v1057
    %4624 = vmatprep.subr.mxu0 0.0
    %4625 = vmatpush1.msra.mxu0 0.0
    %4626 = vmatprep.subr.mxu0 0.0
    %4627 = vmatpush1.msra.mxu0 0.0
    %4628 = vmatprep.subr.mxu0 0.0
    %4629 = vmatpush1.msra.mxu0 0.0
    %4630 = vmatprep.subr.mxu0 0.0
    %4631 = vmatpush1.msra.mxu0 0.0
    %4632 = vmatprep.subr.mxu0 0.0
    %4633 = vmatpush1.msra.mxu0 0.0
    %4634 = vmatprep.subr.mxu0 0.0
    %4635 = vmatpush1.msra.mxu0 0.0
    %4636 = vmatprep.subr.mxu0 0.0
    %4637 = vmatpush1.msra.mxu0 0.0
    %4638 = vmatprep.subr.mxu0 0.0
    %4639 = vmatpush1.msra.mxu0 0.0
    %4640 = vmatprep.subr.mxu0 0.0
    %4641 = vmatpush1.msra.mxu0 0.0
    %4642 = vmatprep.subr.mxu0 0.0
    %4643 = vmatpush1.msra.mxu0 0.0
    %4644 = vmatprep.subr.mxu0 0.0
    %4645 = vmatpush1.msra.mxu0 0.0
    %4646 = vmatprep.subr.mxu0 0.0
    %4647 = vmatpush1.msra.mxu0 0.0
    %4648 = vmatprep.subr.mxu0 0.0
    %4649 = vmatpush1.msra.mxu0 0.0
    %4650 = vmatprep.subr.mxu0 0.0
    %4651 = vmatpush1.msra.mxu0 0.0
    %4652 = vmatprep.subr.mxu0 0.0
    %4653 = vmatpush1.msra.mxu0 0.0
    %4654 = vmatprep.subr.mxu0 0.0
    %4655 = vmatpush1.msra.mxu0 0.0
    %4656 = vmatprep.subr.mxu0 0.0
    %4657 = vmatpush1.msra.mxu0 0.0
    %4658 = vmatprep.subr.mxu0 0.0
    %4659 = vmatpush1.msra.mxu0 0.0
    %4660 = vmatprep.subr.mxu0 0.0
    %4661 = vmatpush1.msra.mxu0 0.0
    %4662 = vmatprep.subr.mxu0 0.0
    %4663 = vmatpush1.msra.mxu0 0.0
    %4664 = vmatprep.subr.mxu0 0.0
    %4665 = vmatpush1.msra.mxu0 0.0
    %4666 = vmatprep.subr.mxu0 0.0
    %4667 = vmatpush1.msra.mxu0 0.0
    %4668 = vmatprep.subr.mxu0 0.0
    %4669 = vmatpush1.msra.mxu0 0.0
    %4670 = vmatprep.subr.mxu0 0.0
    %4671 = vmatpush1.msra.mxu0 0.0
    %4672 = vmatprep.subr.mxu0 0.0
    %4673 = vmatpush1.msra.mxu0 0.0
    %4674 = vmatprep.subr.mxu0 0.0
    %4675 = vmatpush1.msra.mxu0 0.0
    %4676 = vmatprep.subr.mxu0 0.0
    %4677 = vmatpush1.msra.mxu0 0.0
    %4678 = vmatprep.subr.mxu0 0.0
    %4679 = vmatpush1.msra.mxu0 0.0
    %4680 = vmatprep.mubr.f32.mxu0 0.0
    %4681 = vmatmul.mubr.f32.gmra.mrb[0].mxu0 %v4614
    %v4682 = vpop.f32.mrb[0].mxu0
    %v4683 = vadd.f32 1e-08, %v4682
    %v4684 = vpop.f32.mrb[0].mxu0
    %4685 = vdwg.mxu0
    %v4686 = vrcp.pop %v4683
    %v4687 = vmul.f32 %v1134, %v4686
    %v4688 = vmul.f32 %v4612, %v4687
    %v4689 = vsel %vm99, %v4688, 0.0
    %v4690 = vrot.slane %v4689, 4
    %v4691 = vadd.f32 %v4689, %v4690
    %v4692 = vrot.slane %v4691, 2
    %v4693 = vadd.f32 %v4691, %v4692
    %v4694 = vrot.slane %v4693, 1
    %v4695 = vadd.f32 %v4693, %v4694
    %v4696 = vadd.f32 %v4695, 1e-08
    %v4697 = vrcp.pop %v4696
    %v4698 = vmul.f32 %v1219, %v4697
    %v4699 = vmul.f32 %v4688, %v4698
    %v4701 = vsel %vm99, %v4699, 0
    %4703 = vmatprep.subr.mxu0 0.0
    %4704 = vmatpush1.msra.mxu0 %v1054
    %4705 = vmatprep.subr.mxu0 0.0
    %4706 = vmatpush1.msra.mxu0 %v1055
    %4707 = vmatprep.subr.mxu0 0.0
    %4708 = vmatpush1.msra.mxu0 %v1056
    %4709 = vmatprep.subr.mxu0 0.0
    %4710 = vmatpush1.msra.mxu0 %v1057
    %4711 = vmatprep.subr.mxu0 0.0
    %4712 = vmatpush1.msra.mxu0 0.0
    %4713 = vmatprep.subr.mxu0 0.0
    %4714 = vmatpush1.msra.mxu0 0.0
    %4715 = vmatprep.subr.mxu0 0.0
    %4716 = vmatpush1.msra.mxu0 0.0
    %4717 = vmatprep.subr.mxu0 0.0
    %4718 = vmatpush1.msra.mxu0 0.0
    %4719 = vmatprep.subr.mxu0 0.0
    %4720 = vmatpush1.msra.mxu0 0.0
    %4721 = vmatprep.subr.mxu0 0.0
    %4722 = vmatpush1.msra.mxu0 0.0
    %4723 = vmatprep.subr.mxu0 0.0
    %4724 = vmatpush1.msra.mxu0 0.0
    %4725 = vmatprep.subr.mxu0 0.0
    %4726 = vmatpush1.msra.mxu0 0.0
    %4727 = vmatprep.subr.mxu0 0.0
    %4728 = vmatpush1.msra.mxu0 0.0
    %4729 = vmatprep.subr.mxu0 0.0
    %4730 = vmatpush1.msra.mxu0 0.0
    %4731 = vmatprep.subr.mxu0 0.0
    %4732 = vmatpush1.msra.mxu0 0.0
    %4733 = vmatprep.subr.mxu0 0.0
    %4734 = vmatpush1.msra.mxu0 0.0
    %4735 = vmatprep.subr.mxu0 0.0
    %4736 = vmatpush1.msra.mxu0 0.0
    %4737 = vmatprep.subr.mxu0 0.0
    %4738 = vmatpush1.msra.mxu0 0.0
    %4739 = vmatprep.subr.mxu0 0.0
    %4740 = vmatpush1.msra.mxu0 0.0
    %4741 = vmatprep.subr.mxu0 0.0
    %4742 = vmatpush1.msra.mxu0 0.0
    %4743 = vmatprep.subr.mxu0 0.0
    %4744 = vmatpush1.msra.mxu0 0.0
    %4745 = vmatprep.subr.mxu0 0.0
    %4746 = vmatpush1.msra.mxu0 0.0
    %4747 = vmatprep.subr.mxu0 0.0
    %4748 = vmatpush1.msra.mxu0 0.0
    %4749 = vmatprep.subr.mxu0 0.0
    %4750 = vmatpush1.msra.mxu0 0.0
    %4751 = vmatprep.subr.mxu0 0.0
    %4752 = vmatpush1.msra.mxu0 0.0
    %4753 = vmatprep.subr.mxu0 0.0
    %4754 = vmatpush1.msra.mxu0 0.0
    %4755 = vmatprep.subr.mxu0 0.0
    %4756 = vmatpush1.msra.mxu0 0.0
    %4757 = vmatprep.subr.mxu0 0.0
    %4758 = vmatpush1.msra.mxu0 0.0
    %4759 = vmatprep.subr.mxu0 0.0
    %4760 = vmatpush1.msra.mxu0 0.0
    %4761 = vmatprep.subr.mxu0 0.0
    %4762 = vmatpush1.msra.mxu0 0.0
    %4763 = vmatprep.subr.mxu0 0.0
    %4764 = vmatpush1.msra.mxu0 0.0
    %4765 = vmatprep.subr.mxu0 0.0
    %4766 = vmatpush1.msra.mxu0 0.0
    %4767 = vmatprep.mubr.f32.mxu0 0.0
    %4768 = vmatmul.mubr.f32.gmra.mrb[0].mxu0 %v4701
    %v4769 = vpop.f32.mrb[0].mxu0
    %v4770 = vadd.f32 1e-08, %v4769
    %v4771 = vpop.f32.mrb[0].mxu0
    %4772 = vdwg.mxu0
    %v4773 = vrcp.pop %v4770
    %v4774 = vmul.f32 %v1134, %v4773
    %v4775 = vmul.f32 %v4699, %v4774
    %v4776 = vsel %vm99, %v4775, 0.0
    %v4777 = vrot.slane %v4776, 4
    %v4778 = vadd.f32 %v4776, %v4777
    %v4779 = vrot.slane %v4778, 2
    %v4780 = vadd.f32 %v4778, %v4779
    %v4781 = vrot.slane %v4780, 1
    %v4782 = vadd.f32 %v4780, %v4781
    %v4783 = vadd.f32 %v4782, 1e-08
    %v4784 = vrcp.pop %v4783
    %v4785 = vmul.f32 %v1219, %v4784
    %v4786 = vmul.f32 %v4775, %v4785
    %v4788 = vsel %vm99, %v4786, 0
    %4790 = vmatprep.subr.mxu0 0.0
    %4791 = vmatpush1.msra.mxu0 %v1054
    %4792 = vmatprep.subr.mxu0 0.0
    %4793 = vmatpush1.msra.mxu0 %v1055
    %4794 = vmatprep.subr.mxu0 0.0
    %4795 = vmatpush1.msra.mxu0 %v1056
    %4796 = vmatprep.subr.mxu0 0.0
    %4797 = vmatpush1.msra.mxu0 %v1057
    %4798 = vmatprep.subr.mxu0 0.0
    %4799 = vmatpush1.msra.mxu0 0.0
    %4800 = vmatprep.subr.mxu0 0.0
    %4801 = vmatpush1.msra.mxu0 0.0
    %4802 = vmatprep.subr.mxu0 0.0
    %4803 = vmatpush1.msra.mxu0 0.0
    %4804 = vmatprep.subr.mxu0 0.0
    %4805 = vmatpush1.msra.mxu0 0.0
    %4806 = vmatprep.subr.mxu0 0.0
    %4807 = vmatpush1.msra.mxu0 0.0
    %4808 = vmatprep.subr.mxu0 0.0
    %4809 = vmatpush1.msra.mxu0 0.0
    %4810 = vmatprep.subr.mxu0 0.0
    %4811 = vmatpush1.msra.mxu0 0.0
    %4812 = vmatprep.subr.mxu0 0.0
    %4813 = vmatpush1.msra.mxu0 0.0
    %4814 = vmatprep.subr.mxu0 0.0
    %4815 = vmatpush1.msra.mxu0 0.0
    %4816 = vmatprep.subr.mxu0 0.0
    %4817 = vmatpush1.msra.mxu0 0.0
    %4818 = vmatprep.subr.mxu0 0.0
    %4819 = vmatpush1.msra.mxu0 0.0
    %4820 = vmatprep.subr.mxu0 0.0
    %4821 = vmatpush1.msra.mxu0 0.0
    %4822 = vmatprep.subr.mxu0 0.0
    %4823 = vmatpush1.msra.mxu0 0.0
    %4824 = vmatprep.subr.mxu0 0.0
    %4825 = vmatpush1.msra.mxu0 0.0
    %4826 = vmatprep.subr.mxu0 0.0
    %4827 = vmatpush1.msra.mxu0 0.0
    %4828 = vmatprep.subr.mxu0 0.0
    %4829 = vmatpush1.msra.mxu0 0.0
    %4830 = vmatprep.subr.mxu0 0.0
    %4831 = vmatpush1.msra.mxu0 0.0
    %4832 = vmatprep.subr.mxu0 0.0
    %4833 = vmatpush1.msra.mxu0 0.0
    %4834 = vmatprep.subr.mxu0 0.0
    %4835 = vmatpush1.msra.mxu0 0.0
    %4836 = vmatprep.subr.mxu0 0.0
    %4837 = vmatpush1.msra.mxu0 0.0
    %4838 = vmatprep.subr.mxu0 0.0
    %4839 = vmatpush1.msra.mxu0 0.0
    %4840 = vmatprep.subr.mxu0 0.0
    %4841 = vmatpush1.msra.mxu0 0.0
    %4842 = vmatprep.subr.mxu0 0.0
    %4843 = vmatpush1.msra.mxu0 0.0
    %4844 = vmatprep.subr.mxu0 0.0
    %4845 = vmatpush1.msra.mxu0 0.0
    %4846 = vmatprep.subr.mxu0 0.0
    %4847 = vmatpush1.msra.mxu0 0.0
    %4848 = vmatprep.subr.mxu0 0.0
    %4849 = vmatpush1.msra.mxu0 0.0
    %4850 = vmatprep.subr.mxu0 0.0
    %4851 = vmatpush1.msra.mxu0 0.0
    %4852 = vmatprep.subr.mxu0 0.0
    %4853 = vmatpush1.msra.mxu0 0.0
    %4854 = vmatprep.mubr.f32.mxu0 0.0
    %4855 = vmatmul.mubr.f32.gmra.mrb[0].mxu0 %v4788
    %v4856 = vpop.f32.mrb[0].mxu0
    %v4857 = vadd.f32 1e-08, %v4856
    %v4858 = vpop.f32.mrb[0].mxu0
    %4859 = vdwg.mxu0
    %v4860 = vrcp.pop %v4857
    %v4861 = vmul.f32 %v1134, %v4860
    %v4862 = vmul.f32 %v4786, %v4861
    %v4863 = vsel %vm99, %v4862, 0.0
    %v4864 = vrot.slane %v4863, 4
    %v4865 = vadd.f32 %v4863, %v4864
    %v4866 = vrot.slane %v4865, 2
    %v4867 = vadd.f32 %v4865, %v4866
    %v4868 = vrot.slane %v4867, 1
    %v4869 = vadd.f32 %v4867, %v4868
    %v4870 = vadd.f32 %v4869, 1e-08
    %v4871 = vrcp.pop %v4870
    %v4872 = vmul.f32 %v1219, %v4871
    %v4873 = vmul.f32 %v4862, %v4872
    %v4875 = vsel %vm99, %v4873, 0
    %4877 = vmatprep.subr.mxu0 0.0
    %4878 = vmatpush1.msra.mxu0 %v1054
    %4879 = vmatprep.subr.mxu0 0.0
    %4880 = vmatpush1.msra.mxu0 %v1055
    %4881 = vmatprep.subr.mxu0 0.0
    %4882 = vmatpush1.msra.mxu0 %v1056
    %4883 = vmatprep.subr.mxu0 0.0
    %4884 = vmatpush1.msra.mxu0 %v1057
    %4885 = vmatprep.subr.mxu0 0.0
    %4886 = vmatpush1.msra.mxu0 0.0
    %4887 = vmatprep.subr.mxu0 0.0
    %4888 = vmatpush1.msra.mxu0 0.0
    %4889 = vmatprep.subr.mxu0 0.0
    %4890 = vmatpush1.msra.mxu0 0.0
    %4891 = vmatprep.subr.mxu0 0.0
    %4892 = vmatpush1.msra.mxu0 0.0
    %4893 = vmatprep.subr.mxu0 0.0
    %4894 = vmatpush1.msra.mxu0 0.0
    %4895 = vmatprep.subr.mxu0 0.0
    %4896 = vmatpush1.msra.mxu0 0.0
    %4897 = vmatprep.subr.mxu0 0.0
    %4898 = vmatpush1.msra.mxu0 0.0
    %4899 = vmatprep.subr.mxu0 0.0
    %4900 = vmatpush1.msra.mxu0 0.0
    %4901 = vmatprep.subr.mxu0 0.0
    %4902 = vmatpush1.msra.mxu0 0.0
    %4903 = vmatprep.subr.mxu0 0.0
    %4904 = vmatpush1.msra.mxu0 0.0
    %4905 = vmatprep.subr.mxu0 0.0
    %4906 = vmatpush1.msra.mxu0 0.0
    %4907 = vmatprep.subr.mxu0 0.0
    %4908 = vmatpush1.msra.mxu0 0.0
    %4909 = vmatprep.subr.mxu0 0.0
    %4910 = vmatpush1.msra.mxu0 0.0
    %4911 = vmatprep.subr.mxu0 0.0
    %4912 = vmatpush1.msra.mxu0 0.0
    %4913 = vmatprep.subr.mxu0 0.0
    %4914 = vmatpush1.msra.mxu0 0.0
    %4915 = vmatprep.subr.mxu0 0.0
    %4916 = vmatpush1.msra.mxu0 0.0
    %4917 = vmatprep.subr.mxu0 0.0
    %4918 = vmatpush1.msra.mxu0 0.0
    %4919 = vmatprep.subr.mxu0 0.0
    %4920 = vmatpush1.msra.mxu0 0.0
    %4921 = vmatprep.subr.mxu0 0.0
    %4922 = vmatpush1.msra.mxu0 0.0
    %4923 = vmatprep.subr.mxu0 0.0
    %4924 = vmatpush1.msra.mxu0 0.0
    %4925 = vmatprep.subr.mxu0 0.0
    %4926 = vmatpush1.msra.mxu0 0.0
    %4927 = vmatprep.subr.mxu0 0.0
    %4928 = vmatpush1.msra.mxu0 0.0
    %4929 = vmatprep.subr.mxu0 0.0
    %4930 = vmatpush1.msra.mxu0 0.0
    %4931 = vmatprep.subr.mxu0 0.0
    %4932 = vmatpush1.msra.mxu0 0.0
    %4933 = vmatprep.subr.mxu0 0.0
    %4934 = vmatpush1.msra.mxu0 0.0
    %4935 = vmatprep.subr.mxu0 0.0
    %4936 = vmatpush1.msra.mxu0 0.0
    %4937 = vmatprep.subr.mxu0 0.0
    %4938 = vmatpush1.msra.mxu0 0.0
    %4939 = vmatprep.subr.mxu0 0.0
    %4940 = vmatpush1.msra.mxu0 0.0
    %4941 = vmatprep.mubr.f32.mxu0 0.0
    %4942 = vmatmul.mubr.f32.gmra.mrb[0].mxu0 %v4875
    %v4943 = vpop.f32.mrb[0].mxu0
    %v4944 = vadd.f32 1e-08, %v4943
    %v4945 = vpop.f32.mrb[0].mxu0
    %4946 = vdwg.mxu0
    %v4947 = vrcp.pop %v4944
    %v4948 = vmul.f32 %v1134, %v4947
    %v4949 = vmul.f32 %v4873, %v4948
    %v4950 = vsel %vm99, %v4949, 0.0
    %v4951 = vrot.slane %v4950, 4
    %v4952 = vadd.f32 %v4950, %v4951
    %v4953 = vrot.slane %v4952, 2
    %v4954 = vadd.f32 %v4952, %v4953
    %v4955 = vrot.slane %v4954, 1
    %v4956 = vadd.f32 %v4954, %v4955
    %v4957 = vadd.f32 %v4956, 1e-08
    %v4958 = vrcp.pop %v4957
    %v4959 = vmul.f32 %v1219, %v4958
    %v4960 = vmul.f32 %v4949, %v4959
    %v4962 = vsel %vm99, %v4960, 0
    %4964 = vmatprep.subr.mxu0 0.0
    %4965 = vmatpush1.msra.mxu0 %v1054
    %4966 = vmatprep.subr.mxu0 0.0
    %4967 = vmatpush1.msra.mxu0 %v1055
    %4968 = vmatprep.subr.mxu0 0.0
    %4969 = vmatpush1.msra.mxu0 %v1056
    %4970 = vmatprep.subr.mxu0 0.0
    %4971 = vmatpush1.msra.mxu0 %v1057
    %4972 = vmatprep.subr.mxu0 0.0
    %4973 = vmatpush1.msra.mxu0 0.0
    %4974 = vmatprep.subr.mxu0 0.0
    %4975 = vmatpush1.msra.mxu0 0.0
    %4976 = vmatprep.subr.mxu0 0.0
    %4977 = vmatpush1.msra.mxu0 0.0
    %4978 = vmatprep.subr.mxu0 0.0
    %4979 = vmatpush1.msra.mxu0 0.0
    %4980 = vmatprep.subr.mxu0 0.0
    %4981 = vmatpush1.msra.mxu0 0.0
    %4982 = vmatprep.subr.mxu0 0.0
    %4983 = vmatpush1.msra.mxu0 0.0
    %4984 = vmatprep.subr.mxu0 0.0
    %4985 = vmatpush1.msra.mxu0 0.0
    %4986 = vmatprep.subr.mxu0 0.0
    %4987 = vmatpush1.msra.mxu0 0.0
    %4988 = vmatprep.subr.mxu0 0.0
    %4989 = vmatpush1.msra.mxu0 0.0
    %4990 = vmatprep.subr.mxu0 0.0
    %4991 = vmatpush1.msra.mxu0 0.0
    %4992 = vmatprep.subr.mxu0 0.0
    %4993 = vmatpush1.msra.mxu0 0.0
    %4994 = vmatprep.subr.mxu0 0.0
    %4995 = vmatpush1.msra.mxu0 0.0
    %4996 = vmatprep.subr.mxu0 0.0
    %4997 = vmatpush1.msra.mxu0 0.0
    %4998 = vmatprep.subr.mxu0 0.0
    %4999 = vmatpush1.msra.mxu0 0.0
    %5000 = vmatprep.subr.mxu0 0.0
    %5001 = vmatpush1.msra.mxu0 0.0
    %5002 = vmatprep.subr.mxu0 0.0
    %5003 = vmatpush1.msra.mxu0 0.0
    %5004 = vmatprep.subr.mxu0 0.0
    %5005 = vmatpush1.msra.mxu0 0.0
    %5006 = vmatprep.subr.mxu0 0.0
    %5007 = vmatpush1.msra.mxu0 0.0
    %5008 = vmatprep.subr.mxu0 0.0
    %5009 = vmatpush1.msra.mxu0 0.0
    %5010 = vmatprep.subr.mxu0 0.0
    %5011 = vmatpush1.msra.mxu0 0.0
    %5012 = vmatprep.subr.mxu0 0.0
    %5013 = vmatpush1.msra.mxu0 0.0
    %5014 = vmatprep.subr.mxu0 0.0
    %5015 = vmatpush1.msra.mxu0 0.0
    %5016 = vmatprep.subr.mxu0 0.0
    %5017 = vmatpush1.msra.mxu0 0.0
    %5018 = vmatprep.subr.mxu0 0.0
    %5019 = vmatpush1.msra.mxu0 0.0
    %5020 = vmatprep.subr.mxu0 0.0
    %5021 = vmatpush1.msra.mxu0 0.0
    %5022 = vmatprep.subr.mxu0 0.0
    %5023 = vmatpush1.msra.mxu0 0.0
    %5024 = vmatprep.subr.mxu0 0.0
    %5025 = vmatpush1.msra.mxu0 0.0
    %5026 = vmatprep.subr.mxu0 0.0
    %5027 = vmatpush1.msra.mxu0 0.0
    %5028 = vmatprep.mubr.f32.mxu0 0.0
    %5029 = vmatmul.mubr.f32.gmra.mrb[0].mxu0 %v4962
    %v5030 = vpop.f32.mrb[0].mxu0
    %v5031 = vadd.f32 1e-08, %v5030
    %v5032 = vpop.f32.mrb[0].mxu0
    %5033 = vdwg.mxu0
    %v5034 = vrcp.pop %v5031
    %v5035 = vmul.f32 %v1134, %v5034
    %v5036 = vmul.f32 %v4960, %v5035
    %v5037 = vsel %vm99, %v5036, 0.0
    %v5038 = vrot.slane %v5037, 4
    %v5039 = vadd.f32 %v5037, %v5038
    %v5040 = vrot.slane %v5039, 2
    %v5041 = vadd.f32 %v5039, %v5040
    %v5042 = vrot.slane %v5041, 1
    %v5043 = vadd.f32 %v5041, %v5042
    %v5044 = vadd.f32 %v5043, 1e-08
    %v5045 = vrcp.pop %v5044
    %v5046 = vmul.f32 %v1219, %v5045
    %v5047 = vmul.f32 %v5036, %v5046
    %v5049 = vsel %vm99, %v5047, 0
    %5051 = vmatprep.subr.mxu0 0.0
    %5052 = vmatpush1.msra.mxu0 %v1054
    %5053 = vmatprep.subr.mxu0 0.0
    %5054 = vmatpush1.msra.mxu0 %v1055
    %5055 = vmatprep.subr.mxu0 0.0
    %5056 = vmatpush1.msra.mxu0 %v1056
    %5057 = vmatprep.subr.mxu0 0.0
    %5058 = vmatpush1.msra.mxu0 %v1057
    %5059 = vmatprep.subr.mxu0 0.0
    %5060 = vmatpush1.msra.mxu0 0.0
    %5061 = vmatprep.subr.mxu0 0.0
    %5062 = vmatpush1.msra.mxu0 0.0
    %5063 = vmatprep.subr.mxu0 0.0
    %5064 = vmatpush1.msra.mxu0 0.0
    %5065 = vmatprep.subr.mxu0 0.0
    %5066 = vmatpush1.msra.mxu0 0.0
    %5067 = vmatprep.subr.mxu0 0.0
    %5068 = vmatpush1.msra.mxu0 0.0
    %5069 = vmatprep.subr.mxu0 0.0
    %5070 = vmatpush1.msra.mxu0 0.0
    %5071 = vmatprep.subr.mxu0 0.0
    %5072 = vmatpush1.msra.mxu0 0.0
    %5073 = vmatprep.subr.mxu0 0.0
    %5074 = vmatpush1.msra.mxu0 0.0
    %5075 = vmatprep.subr.mxu0 0.0
    %5076 = vmatpush1.msra.mxu0 0.0
    %5077 = vmatprep.subr.mxu0 0.0
    %5078 = vmatpush1.msra.mxu0 0.0
    %5079 = vmatprep.subr.mxu0 0.0
    %5080 = vmatpush1.msra.mxu0 0.0
    %5081 = vmatprep.subr.mxu0 0.0
    %5082 = vmatpush1.msra.mxu0 0.0
    %5083 = vmatprep.subr.mxu0 0.0
    %5084 = vmatpush1.msra.mxu0 0.0
    %5085 = vmatprep.subr.mxu0 0.0
    %5086 = vmatpush1.msra.mxu0 0.0
    %5087 = vmatprep.subr.mxu0 0.0
    %5088 = vmatpush1.msra.mxu0 0.0
    %5089 = vmatprep.subr.mxu0 0.0
    %5090 = vmatpush1.msra.mxu0 0.0
    %5091 = vmatprep.subr.mxu0 0.0
    %5092 = vmatpush1.msra.mxu0 0.0
    %5093 = vmatprep.subr.mxu0 0.0
    %5094 = vmatpush1.msra.mxu0 0.0
    %5095 = vmatprep.subr.mxu0 0.0
    %5096 = vmatpush1.msra.mxu0 0.0
    %5097 = vmatprep.subr.mxu0 0.0
    %5098 = vmatpush1.msra.mxu0 0.0
    %5099 = vmatprep.subr.mxu0 0.0
    %5100 = vmatpush1.msra.mxu0 0.0
    %5101 = vmatprep.subr.mxu0 0.0
    %5102 = vmatpush1.msra.mxu0 0.0
    %5103 = vmatprep.subr.mxu0 0.0
    %5104 = vmatpush1.msra.mxu0 0.0
    %5105 = vmatprep.subr.mxu0 0.0
    %5106 = vmatpush1.msra.mxu0 0.0
    %5107 = vmatprep.subr.mxu0 0.0
    %5108 = vmatpush1.msra.mxu0 0.0
    %5109 = vmatprep.subr.mxu0 0.0
    %5110 = vmatpush1.msra.mxu0 0.0
    %5111 = vmatprep.subr.mxu0 0.0
    %5112 = vmatpush1.msra.mxu0 0.0
    %5113 = vmatprep.subr.mxu0 0.0
    %5114 = vmatpush1.msra.mxu0 0.0
    %5115 = vmatprep.mubr.f32.mxu0 0.0
    %5116 = vmatmul.mubr.f32.gmra.mrb[0].mxu0 %v5049
    %v5117 = vpop.f32.mrb[0].mxu0
    %v5118 = vadd.f32 1e-08, %v5117
    %v5119 = vpop.f32.mrb[0].mxu0
    %5120 = vdwg.mxu0
    %v5121 = vrcp.pop %v5118
    %v5122 = vmul.f32 %v1134, %v5121
    %v5123 = vmul.f32 %v5047, %v5122
    %v5124 = vsel %vm99, %v5123, 0.0
    %v5125 = vrot.slane %v5124, 4
    %v5126 = vadd.f32 %v5124, %v5125
    %v5127 = vrot.slane %v5126, 2
    %v5128 = vadd.f32 %v5126, %v5127
    %v5129 = vrot.slane %v5128, 1
    %v5130 = vadd.f32 %v5128, %v5129
    %v5131 = vadd.f32 %v5130, 1e-08
    %v5132 = vrcp.pop %v5131
    %v5133 = vmul.f32 %v1219, %v5132
    %v5134 = vmul.f32 %v5123, %v5133
    %v5136 = vsel %vm99, %v5134, 0
    %5138 = vmatprep.subr.mxu0 0.0
    %5139 = vmatpush1.msra.mxu0 %v1054
    %5140 = vmatprep.subr.mxu0 0.0
    %5141 = vmatpush1.msra.mxu0 %v1055
    %5142 = vmatprep.subr.mxu0 0.0
    %5143 = vmatpush1.msra.mxu0 %v1056
    %5144 = vmatprep.subr.mxu0 0.0
    %5145 = vmatpush1.msra.mxu0 %v1057
    %5146 = vmatprep.subr.mxu0 0.0
    %5147 = vmatpush1.msra.mxu0 0.0
    %5148 = vmatprep.subr.mxu0 0.0
    %5149 = vmatpush1.msra.mxu0 0.0
    %5150 = vmatprep.subr.mxu0 0.0
    %5151 = vmatpush1.msra.mxu0 0.0
    %5152 = vmatprep.subr.mxu0 0.0
    %5153 = vmatpush1.msra.mxu0 0.0
    %5154 = vmatprep.subr.mxu0 0.0
    %5155 = vmatpush1.msra.mxu0 0.0
    %5156 = vmatprep.subr.mxu0 0.0
    %5157 = vmatpush1.msra.mxu0 0.0
    %5158 = vmatprep.subr.mxu0 0.0
    %5159 = vmatpush1.msra.mxu0 0.0
    %5160 = vmatprep.subr.mxu0 0.0
    %5161 = vmatpush1.msra.mxu0 0.0
    %5162 = vmatprep.subr.mxu0 0.0
    %5163 = vmatpush1.msra.mxu0 0.0
    %5164 = vmatprep.subr.mxu0 0.0
    %5165 = vmatpush1.msra.mxu0 0.0
    %5166 = vmatprep.subr.mxu0 0.0
    %5167 = vmatpush1.msra.mxu0 0.0
    %5168 = vmatprep.subr.mxu0 0.0
    %5169 = vmatpush1.msra.mxu0 0.0
    %5170 = vmatprep.subr.mxu0 0.0
    %5171 = vmatpush1.msra.mxu0 0.0
    %5172 = vmatprep.subr.mxu0 0.0
    %5173 = vmatpush1.msra.mxu0 0.0
    %5174 = vmatprep.subr.mxu0 0.0
    %5175 = vmatpush1.msra.mxu0 0.0
    %5176 = vmatprep.subr.mxu0 0.0
    %5177 = vmatpush1.msra.mxu0 0.0
    %5178 = vmatprep.subr.mxu0 0.0
    %5179 = vmatpush1.msra.mxu0 0.0
    %5180 = vmatprep.subr.mxu0 0.0
    %5181 = vmatpush1.msra.mxu0 0.0
    %5182 = vmatprep.subr.mxu0 0.0
    %5183 = vmatpush1.msra.mxu0 0.0
    %5184 = vmatprep.subr.mxu0 0.0
    %5185 = vmatpush1.msra.mxu0 0.0
    %5186 = vmatprep.subr.mxu0 0.0
    %5187 = vmatpush1.msra.mxu0 0.0
    %5188 = vmatprep.subr.mxu0 0.0
    %5189 = vmatpush1.msra.mxu0 0.0
    %5190 = vmatprep.subr.mxu0 0.0
    %5191 = vmatpush1.msra.mxu0 0.0
    %5192 = vmatprep.subr.mxu0 0.0
    %5193 = vmatpush1.msra.mxu0 0.0
    %5194 = vmatprep.subr.mxu0 0.0
    %5195 = vmatpush1.msra.mxu0 0.0
    %5196 = vmatprep.subr.mxu0 0.0
    %5197 = vmatpush1.msra.mxu0 0.0
    %5198 = vmatprep.subr.mxu0 0.0
    %5199 = vmatpush1.msra.mxu0 0.0
    %5200 = vmatprep.subr.mxu0 0.0
    %5201 = vmatpush1.msra.mxu0 0.0
    %5202 = vmatprep.mubr.f32.mxu0 0.0
    %5203 = vmatmul.mubr.f32.gmra.mrb[0].mxu0 %v5136
    %v5204 = vpop.f32.mrb[0].mxu0
    %v5205 = vadd.f32 1e-08, %v5204
    %v5206 = vpop.f32.mrb[0].mxu0
    %5207 = vdwg.mxu0
    %v5208 = vrcp.pop %v5205
    %v5209 = vmul.f32 %v1134, %v5208
    %v5210 = vmul.f32 %v5134, %v5209
    %v5211 = vsel %vm99, %v5210, 0.0
    %v5212 = vrot.slane %v5211, 4
    %v5213 = vadd.f32 %v5211, %v5212
    %v5214 = vrot.slane %v5213, 2
    %v5215 = vadd.f32 %v5213, %v5214
    %v5216 = vrot.slane %v5215, 1
    %v5217 = vadd.f32 %v5215, %v5216
    %v5218 = vadd.f32 %v5217, 1e-08
    %v5219 = vrcp.pop %v5218
    %v5220 = vmul.f32 %v1219, %v5219
    %v5221 = vmul.f32 %v5210, %v5220
    %v5223 = vsel %vm99, %v5221, 0
    %5225 = vmatprep.subr.mxu0 0.0
    %5226 = vmatpush1.msra.mxu0 %v1054
    %5227 = vmatprep.subr.mxu0 0.0
    %5228 = vmatpush1.msra.mxu0 %v1055
    %5229 = vmatprep.subr.mxu0 0.0
    %5230 = vmatpush1.msra.mxu0 %v1056
    %5231 = vmatprep.subr.mxu0 0.0
    %5232 = vmatpush1.msra.mxu0 %v1057
    %5233 = vmatprep.subr.mxu0 0.0
    %5234 = vmatpush1.msra.mxu0 0.0
    %5235 = vmatprep.subr.mxu0 0.0
    %5236 = vmatpush1.msra.mxu0 0.0
    %5237 = vmatprep.subr.mxu0 0.0
    %5238 = vmatpush1.msra.mxu0 0.0
    %5239 = vmatprep.subr.mxu0 0.0
    %5240 = vmatpush1.msra.mxu0 0.0
    %5241 = vmatprep.subr.mxu0 0.0
    %5242 = vmatpush1.msra.mxu0 0.0
    %5243 = vmatprep.subr.mxu0 0.0
    %5244 = vmatpush1.msra.mxu0 0.0
    %5245 = vmatprep.subr.mxu0 0.0
    %5246 = vmatpush1.msra.mxu0 0.0
    %5247 = vmatprep.subr.mxu0 0.0
    %5248 = vmatpush1.msra.mxu0 0.0
    %5249 = vmatprep.subr.mxu0 0.0
    %5250 = vmatpush1.msra.mxu0 0.0
    %5251 = vmatprep.subr.mxu0 0.0
    %5252 = vmatpush1.msra.mxu0 0.0
    %5253 = vmatprep.subr.mxu0 0.0
    %5254 = vmatpush1.msra.mxu0 0.0
    %5255 = vmatprep.subr.mxu0 0.0
    %5256 = vmatpush1.msra.mxu0 0.0
    %5257 = vmatprep.subr.mxu0 0.0
    %5258 = vmatpush1.msra.mxu0 0.0
    %5259 = vmatprep.subr.mxu0 0.0
    %5260 = vmatpush1.msra.mxu0 0.0
    %5261 = vmatprep.subr.mxu0 0.0
    %5262 = vmatpush1.msra.mxu0 0.0
    %5263 = vmatprep.subr.mxu0 0.0
    %5264 = vmatpush1.msra.mxu0 0.0
    %5265 = vmatprep.subr.mxu0 0.0
    %5266 = vmatpush1.msra.mxu0 0.0
    %5267 = vmatprep.subr.mxu0 0.0
    %5268 = vmatpush1.msra.mxu0 0.0
    %5269 = vmatprep.subr.mxu0 0.0
    %5270 = vmatpush1.msra.mxu0 0.0
    %5271 = vmatprep.subr.mxu0 0.0
    %5272 = vmatpush1.msra.mxu0 0.0
    %5273 = vmatprep.subr.mxu0 0.0
    %5274 = vmatpush1.msra.mxu0 0.0
    %5275 = vmatprep.subr.mxu0 0.0
    %5276 = vmatpush1.msra.mxu0 0.0
    %5277 = vmatprep.subr.mxu0 0.0
    %5278 = vmatpush1.msra.mxu0 0.0
    %5279 = vmatprep.subr.mxu0 0.0
    %5280 = vmatpush1.msra.mxu0 0.0
    %5281 = vmatprep.subr.mxu0 0.0
    %5282 = vmatpush1.msra.mxu0 0.0
    %5283 = vmatprep.subr.mxu0 0.0
    %5284 = vmatpush1.msra.mxu0 0.0
    %5285 = vmatprep.subr.mxu0 0.0
    %5286 = vmatpush1.msra.mxu0 0.0
    %5287 = vmatprep.subr.mxu0 0.0
    %5288 = vmatpush1.msra.mxu0 0.0
    %5289 = vmatprep.mubr.f32.mxu0 0.0
    %5290 = vmatmul.mubr.f32.gmra.mrb[0].mxu0 %v5223
    %v5291 = vpop.f32.mrb[0].mxu0
    %v5292 = vadd.f32 1e-08, %v5291
    %v5293 = vpop.f32.mrb[0].mxu0
    %5294 = vdwg.mxu0
    %v5295 = vrcp.pop %v5292
    %v5296 = vmul.f32 %v1134, %v5295
    %v5297 = vmul.f32 %v5221, %v5296
    %v5298 = vsel %vm99, %v5297, 0.0
    %v5299 = vrot.slane %v5298, 4
    %v5300 = vadd.f32 %v5298, %v5299
    %v5301 = vrot.slane %v5300, 2
    %v5302 = vadd.f32 %v5300, %v5301
    %v5303 = vrot.slane %v5302, 1
    %v5304 = vadd.f32 %v5302, %v5303
    %v5305 = vadd.f32 %v5304, 1e-08
    %v5306 = vrcp.pop %v5305
    %v5307 = vmul.f32 %v1219, %v5306
    %v5308 = vmul.f32 %v5297, %v5307
    %v5310 = vsel %vm99, %v5308, 0
    %5312 = vmatprep.subr.mxu0 0.0
    %5313 = vmatpush1.msra.mxu0 %v1054
    %5314 = vmatprep.subr.mxu0 0.0
    %5315 = vmatpush1.msra.mxu0 %v1055
    %5316 = vmatprep.subr.mxu0 0.0
    %5317 = vmatpush1.msra.mxu0 %v1056
    %5318 = vmatprep.subr.mxu0 0.0
    %5319 = vmatpush1.msra.mxu0 %v1057
    %5320 = vmatprep.subr.mxu0 0.0
    %5321 = vmatpush1.msra.mxu0 0.0
    %5322 = vmatprep.subr.mxu0 0.0
    %5323 = vmatpush1.msra.mxu0 0.0
    %5324 = vmatprep.subr.mxu0 0.0
    %5325 = vmatpush1.msra.mxu0 0.0
    %5326 = vmatprep.subr.mxu0 0.0
    %5327 = vmatpush1.msra.mxu0 0.0
    %5328 = vmatprep.subr.mxu0 0.0
    %5329 = vmatpush1.msra.mxu0 0.0
    %5330 = vmatprep.subr.mxu0 0.0
    %5331 = vmatpush1.msra.mxu0 0.0
    %5332 = vmatprep.subr.mxu0 0.0
    %5333 = vmatpush1.msra.mxu0 0.0
    %5334 = vmatprep.subr.mxu0 0.0
    %5335 = vmatpush1.msra.mxu0 0.0
    %5336 = vmatprep.subr.mxu0 0.0
    %5337 = vmatpush1.msra.mxu0 0.0
    %5338 = vmatprep.subr.mxu0 0.0
    %5339 = vmatpush1.msra.mxu0 0.0
    %5340 = vmatprep.subr.mxu0 0.0
    %5341 = vmatpush1.msra.mxu0 0.0
    %5342 = vmatprep.subr.mxu0 0.0
    %5343 = vmatpush1.msra.mxu0 0.0
    %5344 = vmatprep.subr.mxu0 0.0
    %5345 = vmatpush1.msra.mxu0 0.0
    %5346 = vmatprep.subr.mxu0 0.0
    %5347 = vmatpush1.msra.mxu0 0.0
    %5348 = vmatprep.subr.mxu0 0.0
    %5349 = vmatpush1.msra.mxu0 0.0
    %5350 = vmatprep.subr.mxu0 0.0
    %5351 = vmatpush1.msra.mxu0 0.0
    %5352 = vmatprep.subr.mxu0 0.0
    %5353 = vmatpush1.msra.mxu0 0.0
    %5354 = vmatprep.subr.mxu0 0.0
    %5355 = vmatpush1.msra.mxu0 0.0
    %5356 = vmatprep.subr.mxu0 0.0
    %5357 = vmatpush1.msra.mxu0 0.0
    %5358 = vmatprep.subr.mxu0 0.0
    %5359 = vmatpush1.msra.mxu0 0.0
    %5360 = vmatprep.subr.mxu0 0.0
    %5361 = vmatpush1.msra.mxu0 0.0
    %5362 = vmatprep.subr.mxu0 0.0
    %5363 = vmatpush1.msra.mxu0 0.0
    %5364 = vmatprep.subr.mxu0 0.0
    %5365 = vmatpush1.msra.mxu0 0.0
    %5366 = vmatprep.subr.mxu0 0.0
    %5367 = vmatpush1.msra.mxu0 0.0
    %5368 = vmatprep.subr.mxu0 0.0
    %5369 = vmatpush1.msra.mxu0 0.0
    %5370 = vmatprep.subr.mxu0 0.0
    %5371 = vmatpush1.msra.mxu0 0.0
    %5372 = vmatprep.subr.mxu0 0.0
    %5373 = vmatpush1.msra.mxu0 0.0
    %5374 = vmatprep.subr.mxu0 0.0
    %5375 = vmatpush1.msra.mxu0 0.0
    %5376 = vmatprep.mubr.f32.mxu0 0.0
    %5377 = vmatmul.mubr.f32.gmra.mrb[0].mxu0 %v5310
    %v5378 = vpop.f32.mrb[0].mxu0
    %v5379 = vadd.f32 1e-08, %v5378
    %v5380 = vpop.f32.mrb[0].mxu0
    %5381 = vdwg.mxu0
    %v5382 = vrcp.pop %v5379
    %v5383 = vmul.f32 %v1134, %v5382
    %v5384 = vmul.f32 %v5308, %v5383
    %v5385 = vsel %vm99, %v5384, 0.0
    %v5386 = vrot.slane %v5385, 4
    %v5387 = vadd.f32 %v5385, %v5386
    %v5388 = vrot.slane %v5387, 2
    %v5389 = vadd.f32 %v5387, %v5388
    %v5390 = vrot.slane %v5389, 1
    %v5391 = vadd.f32 %v5389, %v5390
    %v5392 = vadd.f32 %v5391, 1e-08
    %v5393 = vrcp.pop %v5392
    %v5394 = vmul.f32 %v1219, %v5393
    %v5395 = vmul.f32 %v5384, %v5394
    %v5397 = vsel %vm99, %v5395, 0
    %5399 = vmatprep.subr.mxu0 0.0
    %5400 = vmatpush1.msra.mxu0 %v1054
    %5401 = vmatprep.subr.mxu0 0.0
    %5402 = vmatpush1.msra.mxu0 %v1055
    %5403 = vmatprep.subr.mxu0 0.0
    %5404 = vmatpush1.msra.mxu0 %v1056
    %5405 = vmatprep.subr.mxu0 0.0
    %5406 = vmatpush1.msra.mxu0 %v1057
    %5407 = vmatprep.subr.mxu0 0.0
    %5408 = vmatpush1.msra.mxu0 0.0
    %5409 = vmatprep.subr.mxu0 0.0
    %5410 = vmatpush1.msra.mxu0 0.0
    %5411 = vmatprep.subr.mxu0 0.0
    %5412 = vmatpush1.msra.mxu0 0.0
    %5413 = vmatprep.subr.mxu0 0.0
    %5414 = vmatpush1.msra.mxu0 0.0
    %5415 = vmatprep.subr.mxu0 0.0
    %5416 = vmatpush1.msra.mxu0 0.0
    %5417 = vmatprep.subr.mxu0 0.0
    %5418 = vmatpush1.msra.mxu0 0.0
    %5419 = vmatprep.subr.mxu0 0.0
    %5420 = vmatpush1.msra.mxu0 0.0
    %5421 = vmatprep.subr.mxu0 0.0
    %5422 = vmatpush1.msra.mxu0 0.0
    %5423 = vmatprep.subr.mxu0 0.0
    %5424 = vmatpush1.msra.mxu0 0.0
    %5425 = vmatprep.subr.mxu0 0.0
    %5426 = vmatpush1.msra.mxu0 0.0
    %5427 = vmatprep.subr.mxu0 0.0
    %5428 = vmatpush1.msra.mxu0 0.0
    %5429 = vmatprep.subr.mxu0 0.0
    %5430 = vmatpush1.msra.mxu0 0.0
    %5431 = vmatprep.subr.mxu0 0.0
    %5432 = vmatpush1.msra.mxu0 0.0
    %5433 = vmatprep.subr.mxu0 0.0
    %5434 = vmatpush1.msra.mxu0 0.0
    %5435 = vmatprep.subr.mxu0 0.0
    %5436 = vmatpush1.msra.mxu0 0.0
    %5437 = vmatprep.subr.mxu0 0.0
    %5438 = vmatpush1.msra.mxu0 0.0
    %5439 = vmatprep.subr.mxu0 0.0
    %5440 = vmatpush1.msra.mxu0 0.0
    %5441 = vmatprep.subr.mxu0 0.0
    %5442 = vmatpush1.msra.mxu0 0.0
    %5443 = vmatprep.subr.mxu0 0.0
    %5444 = vmatpush1.msra.mxu0 0.0
    %5445 = vmatprep.subr.mxu0 0.0
    %5446 = vmatpush1.msra.mxu0 0.0
    %5447 = vmatprep.subr.mxu0 0.0
    %5448 = vmatpush1.msra.mxu0 0.0
    %5449 = vmatprep.subr.mxu0 0.0
    %5450 = vmatpush1.msra.mxu0 0.0
    %5451 = vmatprep.subr.mxu0 0.0
    %5452 = vmatpush1.msra.mxu0 0.0
    %5453 = vmatprep.subr.mxu0 0.0
    %5454 = vmatpush1.msra.mxu0 0.0
    %5455 = vmatprep.subr.mxu0 0.0
    %5456 = vmatpush1.msra.mxu0 0.0
    %5457 = vmatprep.subr.mxu0 0.0
    %5458 = vmatpush1.msra.mxu0 0.0
    %5459 = vmatprep.subr.mxu0 0.0
    %5460 = vmatpush1.msra.mxu0 0.0
    %5461 = vmatprep.subr.mxu0 0.0
    %5462 = vmatpush1.msra.mxu0 0.0
    %5463 = vmatprep.mubr.f32.mxu0 0.0
    %5464 = vmatmul.mubr.f32.gmra.mrb[0].mxu0 %v5397
    %v5465 = vpop.f32.mrb[0].mxu0
    %v5466 = vadd.f32 1e-08, %v5465
    %v5467 = vpop.f32.mrb[0].mxu0
    %5468 = vdwg.mxu0
    %v5469 = vrcp.pop %v5466
    %v5470 = vmul.f32 %v1134, %v5469
    %v5471 = vmul.f32 %v5395, %v5470
    %v5472 = vsel %vm99, %v5471, 0.0
    %v5473 = vrot.slane %v5472, 4
    %v5474 = vadd.f32 %v5472, %v5473
    %v5475 = vrot.slane %v5474, 2
    %v5476 = vadd.f32 %v5474, %v5475
    %v5477 = vrot.slane %v5476, 1
    %v5478 = vadd.f32 %v5476, %v5477
    %v5479 = vadd.f32 %v5478, 1e-08
    %v5480 = vrcp.pop %v5479
    %v5481 = vmul.f32 %v1219, %v5480
    %v5482 = vmul.f32 %v5471, %v5481
    %v5484 = vsel %vm99, %v5482, 0
    %5486 = vmatprep.subr.mxu0 0.0
    %5487 = vmatpush1.msra.mxu0 %v1054
    %5488 = vmatprep.subr.mxu0 0.0
    %5489 = vmatpush1.msra.mxu0 %v1055
    %5490 = vmatprep.subr.mxu0 0.0
    %5491 = vmatpush1.msra.mxu0 %v1056
    %5492 = vmatprep.subr.mxu0 0.0
    %5493 = vmatpush1.msra.mxu0 %v1057
    %5494 = vmatprep.subr.mxu0 0.0
    %5495 = vmatpush1.msra.mxu0 0.0
    %5496 = vmatprep.subr.mxu0 0.0
    %5497 = vmatpush1.msra.mxu0 0.0
    %5498 = vmatprep.subr.mxu0 0.0
    %5499 = vmatpush1.msra.mxu0 0.0
    %5500 = vmatprep.subr.mxu0 0.0
    %5501 = vmatpush1.msra.mxu0 0.0
    %5502 = vmatprep.subr.mxu0 0.0
    %5503 = vmatpush1.msra.mxu0 0.0
    %5504 = vmatprep.subr.mxu0 0.0
    %5505 = vmatpush1.msra.mxu0 0.0
    %5506 = vmatprep.subr.mxu0 0.0
    %5507 = vmatpush1.msra.mxu0 0.0
    %5508 = vmatprep.subr.mxu0 0.0
    %5509 = vmatpush1.msra.mxu0 0.0
    %5510 = vmatprep.subr.mxu0 0.0
    %5511 = vmatpush1.msra.mxu0 0.0
    %5512 = vmatprep.subr.mxu0 0.0
    %5513 = vmatpush1.msra.mxu0 0.0
    %5514 = vmatprep.subr.mxu0 0.0
    %5515 = vmatpush1.msra.mxu0 0.0
    %5516 = vmatprep.subr.mxu0 0.0
    %5517 = vmatpush1.msra.mxu0 0.0
    %5518 = vmatprep.subr.mxu0 0.0
    %5519 = vmatpush1.msra.mxu0 0.0
    %5520 = vmatprep.subr.mxu0 0.0
    %5521 = vmatpush1.msra.mxu0 0.0
    %5522 = vmatprep.subr.mxu0 0.0
    %5523 = vmatpush1.msra.mxu0 0.0
    %5524 = vmatprep.subr.mxu0 0.0
    %5525 = vmatpush1.msra.mxu0 0.0
    %5526 = vmatprep.subr.mxu0 0.0
    %5527 = vmatpush1.msra.mxu0 0.0
    %5528 = vmatprep.subr.mxu0 0.0
    %5529 = vmatpush1.msra.mxu0 0.0
    %5530 = vmatprep.subr.mxu0 0.0
    %5531 = vmatpush1.msra.mxu0 0.0
    %5532 = vmatprep.subr.mxu0 0.0
    %5533 = vmatpush1.msra.mxu0 0.0
    %5534 = vmatprep.subr.mxu0 0.0
    %5535 = vmatpush1.msra.mxu0 0.0
    %5536 = vmatprep.subr.mxu0 0.0
    %5537 = vmatpush1.msra.mxu0 0.0
    %5538 = vmatprep.subr.mxu0 0.0
    %5539 = vmatpush1.msra.mxu0 0.0
    %5540 = vmatprep.subr.mxu0 0.0
    %5541 = vmatpush1.msra.mxu0 0.0
    %5542 = vmatprep.subr.mxu0 0.0
    %5543 = vmatpush1.msra.mxu0 0.0
    %5544 = vmatprep.subr.mxu0 0.0
    %5545 = vmatpush1.msra.mxu0 0.0
    %5546 = vmatprep.subr.mxu0 0.0
    %5547 = vmatpush1.msra.mxu0 0.0
    %5548 = vmatprep.subr.mxu0 0.0
    %5549 = vmatpush1.msra.mxu0 0.0
    %5550 = vmatprep.mubr.f32.mxu0 0.0
    %5551 = vmatmul.mubr.f32.gmra.mrb[0].mxu0 %v5484
    %v5552 = vpop.f32.mrb[0].mxu0
    %v5553 = vadd.f32 1e-08, %v5552
    %v5554 = vpop.f32.mrb[0].mxu0
    %5555 = vdwg.mxu0
    %v5556 = vrcp.pop %v5553
    %v5557 = vmul.f32 %v1134, %v5556
    %v5558 = vmul.f32 %v5482, %v5557
    %v5559 = vsel %vm99, %v5558, 0.0
    %v5560 = vrot.slane %v5559, 4
    %v5561 = vadd.f32 %v5559, %v5560
    %v5562 = vrot.slane %v5561, 2
    %v5563 = vadd.f32 %v5561, %v5562
    %v5564 = vrot.slane %v5563, 1
    %v5565 = vadd.f32 %v5563, %v5564
    %v5566 = vadd.f32 %v5565, 1e-08
    %v5567 = vrcp.pop %v5566
    %v5568 = vmul.f32 %v1219, %v5567
    %v5569 = vmul.f32 %v5558, %v5568
    %5570 = vst.msk [vmem:[%s14] sm:$0xff] %vm99, %v5569
    %v5571 = vld [vmem:[%s12] sm:$0xff]
    %v5572 = vld [vmem:[%s12 + $0x8] sm:$0xff]
    %v5573 = vld [vmem:[%s12 + $0x10] sm:$0xff]
    %v5574 = vld [vmem:[%s12 + $0x18] sm:$0xff]
    %v5576 = vsel %vm99, %v5569, 0
    %5578 = vmatprep.subr.mxu0 0.0
    %5579 = vmatpush1.msra.mxu0 %v5571
    %5580 = vmatprep.subr.mxu0 0.0
    %5581 = vmatpush1.msra.mxu0 %v5572
    %5582 = vmatprep.subr.mxu0 0.0
    %5583 = vmatpush1.msra.mxu0 %v5573
    %5584 = vmatprep.subr.mxu0 0.0
    %5585 = vmatpush1.msra.mxu0 %v5574
    %5586 = vmatprep.subr.mxu0 0.0
    %5587 = vmatpush1.msra.mxu0 0.0
    %5588 = vmatprep.subr.mxu0 0.0
    %5589 = vmatpush1.msra.mxu0 0.0
    %5590 = vmatprep.subr.mxu0 0.0
    %5591 = vmatpush1.msra.mxu0 0.0
    %5592 = vmatprep.subr.mxu0 0.0
    %5593 = vmatpush1.msra.mxu0 0.0
    %5594 = vmatprep.subr.mxu0 0.0
    %5595 = vmatpush1.msra.mxu0 0.0
    %5596 = vmatprep.subr.mxu0 0.0
    %5597 = vmatpush1.msra.mxu0 0.0
    %5598 = vmatprep.subr.mxu0 0.0
    %5599 = vmatpush1.msra.mxu0 0.0
    %5600 = vmatprep.subr.mxu0 0.0
    %5601 = vmatpush1.msra.mxu0 0.0
    %5602 = vmatprep.subr.mxu0 0.0
    %5603 = vmatpush1.msra.mxu0 0.0
    %5604 = vmatprep.subr.mxu0 0.0
    %5605 = vmatpush1.msra.mxu0 0.0
    %5606 = vmatprep.subr.mxu0 0.0
    %5607 = vmatpush1.msra.mxu0 0.0
    %5608 = vmatprep.subr.mxu0 0.0
    %5609 = vmatpush1.msra.mxu0 0.0
    %5610 = vmatprep.subr.mxu0 0.0
    %5611 = vmatpush1.msra.mxu0 0.0
    %5612 = vmatprep.subr.mxu0 0.0
    %5613 = vmatpush1.msra.mxu0 0.0
    %5614 = vmatprep.subr.mxu0 0.0
    %5615 = vmatpush1.msra.mxu0 0.0
    %5616 = vmatprep.subr.mxu0 0.0
    %5617 = vmatpush1.msra.mxu0 0.0
    %5618 = vmatprep.subr.mxu0 0.0
    %5619 = vmatpush1.msra.mxu0 0.0
    %5620 = vmatprep.subr.mxu0 0.0
    %5621 = vmatpush1.msra.mxu0 0.0
    %5622 = vmatprep.subr.mxu0 0.0
    %5623 = vmatpush1.msra.mxu0 0.0
    %5624 = vmatprep.subr.mxu0 0.0
    %5625 = vmatpush1.msra.mxu0 0.0
    %5626 = vmatprep.subr.mxu0 0.0
    %5627 = vmatpush1.msra.mxu0 0.0
    %5628 = vmatprep.subr.mxu0 0.0
    %5629 = vmatpush1.msra.mxu0 0.0
    %5630 = vmatprep.subr.mxu0 0.0
    %5631 = vmatpush1.msra.mxu0 0.0
    %5632 = vmatprep.subr.mxu0 0.0
    %5633 = vmatpush1.msra.mxu0 0.0
    %5634 = vmatprep.subr.mxu0 0.0
    %5635 = vmatpush1.msra.mxu0 0.0
    %5636 = vmatprep.subr.mxu0 0.0
    %5637 = vmatpush1.msra.mxu0 0.0
    %5638 = vmatprep.subr.mxu0 0.0
    %5639 = vmatpush1.msra.mxu0 0.0
    %5640 = vmatprep.subr.mxu0 0.0
    %5641 = vmatpush1.msra.mxu0 0.0
    %5642 = vmatprep.mubr.f32.mxu0 0.0
    %5643 = vmatmul.mubr.f32.gmra.mrb[0].mxu0 %v5576
    %v5644 = vpop.f32.mrb[0].mxu0
    %v5645 = vadd.f32 0.0, %v5644
    %v5646 = vpop.f32.mrb[0].mxu0
    %5647 = vdwg.mxu0
    %v5649 = vsel %vm590, %v5645, 0
    %5651 = vmatprep.subr.mxu0 0.0
    %5652 = vmatpush1.msra.mxu0 %v1053
    %5653 = vmatprep.subr.mxu0 0.0
    %5654 = vmatpush1.msra.mxu0 0.0
    %5655 = vmatprep.subr.mxu0 0.0
    %5656 = vmatpush1.msra.mxu0 0.0
    %5657 = vmatprep.subr.mxu0 0.0
    %5658 = vmatpush1.msra.mxu0 0.0
    %5659 = vmatprep.subr.mxu0 0.0
    %5660 = vmatpush1.msra.mxu0 0.0
    %5661 = vmatprep.subr.mxu0 0.0
    %5662 = vmatpush1.msra.mxu0 0.0
    %5663 = vmatprep.subr.mxu0 0.0
    %5664 = vmatpush1.msra.mxu0 0.0
    %5665 = vmatprep.subr.mxu0 0.0
    %5666 = vmatpush1.msra.mxu0 0.0
    %5667 = vmatprep.subr.mxu0 0.0
    %5668 = vmatpush1.msra.mxu0 0.0
    %5669 = vmatprep.subr.mxu0 0.0
    %5670 = vmatpush1.msra.mxu0 0.0
    %5671 = vmatprep.subr.mxu0 0.0
    %5672 = vmatpush1.msra.mxu0 0.0
    %5673 = vmatprep.subr.mxu0 0.0
    %5674 = vmatpush1.msra.mxu0 0.0
    %5675 = vmatprep.subr.mxu0 0.0
    %5676 = vmatpush1.msra.mxu0 0.0
    %5677 = vmatprep.subr.mxu0 0.0
    %5678 = vmatpush1.msra.mxu0 0.0
    %5679 = vmatprep.subr.mxu0 0.0
    %5680 = vmatpush1.msra.mxu0 0.0
    %5681 = vmatprep.subr.mxu0 0.0
    %5682 = vmatpush1.msra.mxu0 0.0
    %5683 = vmatprep.subr.mxu0 0.0
    %5684 = vmatpush1.msra.mxu0 0.0
    %5685 = vmatprep.subr.mxu0 0.0
    %5686 = vmatpush1.msra.mxu0 0.0
    %5687 = vmatprep.subr.mxu0 0.0
    %5688 = vmatpush1.msra.mxu0 0.0
    %5689 = vmatprep.subr.mxu0 0.0
    %5690 = vmatpush1.msra.mxu0 0.0
    %5691 = vmatprep.subr.mxu0 0.0
    %5692 = vmatpush1.msra.mxu0 0.0
    %5693 = vmatprep.subr.mxu0 0.0
    %5694 = vmatpush1.msra.mxu0 0.0
    %5695 = vmatprep.subr.mxu0 0.0
    %5696 = vmatpush1.msra.mxu0 0.0
    %5697 = vmatprep.subr.mxu0 0.0
    %5698 = vmatpush1.msra.mxu0 0.0
    %5699 = vmatprep.subr.mxu0 0.0
    %5700 = vmatpush1.msra.mxu0 0.0
    %5701 = vmatprep.subr.mxu0 0.0
    %5702 = vmatpush1.msra.mxu0 0.0
    %5703 = vmatprep.subr.mxu0 0.0
    %5704 = vmatpush1.msra.mxu0 0.0
    %5705 = vmatprep.subr.mxu0 0.0
    %5706 = vmatpush1.msra.mxu0 0.0
    %5707 = vmatprep.subr.mxu0 0.0
    %5708 = vmatpush1.msra.mxu0 0.0
    %5709 = vmatprep.subr.mxu0 0.0
    %5710 = vmatpush1.msra.mxu0 0.0
    %5711 = vmatprep.subr.mxu0 0.0
    %5712 = vmatpush1.msra.mxu0 0.0
    %5713 = vmatprep.subr.mxu0 0.0
    %5714 = vmatpush1.msra.mxu0 0.0
    %5715 = vmatprep.mubr.f32.mxu0 0.0
    %5716 = vmatmul.mubr.f32.gmra.mrb[0].mxu0 %v5649
    %v5717 = vpop.f32.mrb[0].mxu0
    %v5718 = vadd.f32 1e-08, %v5717
    %v5719 = vpop.f32.mrb[0].mxu0
    %5720 = vdwg.mxu0
    %v5721 = vrcp.pop %v5718
    %v5722 = vmul.f32 %v5569, %v5721
    %v5723 = vadd.f32 %v5722, 1e-08
    %v5724 = vlog2.pop %v5723
    %v5725 = vmul.f32 %v5724, 0.6931472
    %v5726 = vsel %vm415, %v458, 0
    %5728 = vmatprep.subr.mxu0 0.0
    %5729 = vmatpush1.msra.mxu0 %v1065
    %5730 = vmatprep.subr.mxu0 0.0
    %5731 = vmatpush1.msra.mxu0 0.0
    %5732 = vmatprep.subr.mxu0 0.0
    %5733 = vmatpush1.msra.mxu0 0.0
    %5734 = vmatprep.subr.mxu0 0.0
    %5735 = vmatpush1.msra.mxu0 0.0
    %5736 = vmatprep.subr.mxu0 0.0
    %5737 = vmatpush1.msra.mxu0 0.0
    %5738 = vmatprep.subr.mxu0 0.0
    %5739 = vmatpush1.msra.mxu0 0.0
    %5740 = vmatprep.subr.mxu0 0.0
    %5741 = vmatpush1.msra.mxu0 0.0
    %5742 = vmatprep.subr.mxu0 0.0
    %5743 = vmatpush1.msra.mxu0 0.0
    %5744 = vmatprep.subr.mxu0 0.0
    %5745 = vmatpush1.msra.mxu0 0.0
    %5746 = vmatprep.subr.mxu0 0.0
    %5747 = vmatpush1.msra.mxu0 0.0
    %5748 = vmatprep.subr.mxu0 0.0
    %5749 = vmatpush1.msra.mxu0 0.0
    %5750 = vmatprep.subr.mxu0 0.0
    %5751 = vmatpush1.msra.mxu0 0.0
    %5752 = vmatprep.subr.mxu0 0.0
    %5753 = vmatpush1.msra.mxu0 0.0
    %5754 = vmatprep.subr.mxu0 0.0
    %5755 = vmatpush1.msra.mxu0 0.0
    %5756 = vmatprep.subr.mxu0 0.0
    %5757 = vmatpush1.msra.mxu0 0.0
    %5758 = vmatprep.subr.mxu0 0.0
    %5759 = vmatpush1.msra.mxu0 0.0
    %5760 = vmatprep.subr.mxu0 0.0
    %5761 = vmatpush1.msra.mxu0 0.0
    %5762 = vmatprep.subr.mxu0 0.0
    %5763 = vmatpush1.msra.mxu0 0.0
    %5764 = vmatprep.subr.mxu0 0.0
    %5765 = vmatpush1.msra.mxu0 0.0
    %5766 = vmatprep.subr.mxu0 0.0
    %5767 = vmatpush1.msra.mxu0 0.0
    %5768 = vmatprep.subr.mxu0 0.0
    %5769 = vmatpush1.msra.mxu0 0.0
    %5770 = vmatprep.subr.mxu0 0.0
    %5771 = vmatpush1.msra.mxu0 0.0
    %5772 = vmatprep.subr.mxu0 0.0
    %5773 = vmatpush1.msra.mxu0 0.0
    %5774 = vmatprep.subr.mxu0 0.0
    %5775 = vmatpush1.msra.mxu0 0.0
    %5776 = vmatprep.subr.mxu0 0.0
    %5777 = vmatpush1.msra.mxu0 0.0
    %5778 = vmatprep.subr.mxu0 0.0
    %5779 = vmatpush1.msra.mxu0 0.0
    %5780 = vmatprep.subr.mxu0 0.0
    %5781 = vmatpush1.msra.mxu0 0.0
    %5782 = vmatprep.subr.mxu0 0.0
    %5783 = vmatpush1.msra.mxu0 0.0
    %5784 = vmatprep.subr.mxu0 0.0
    %5785 = vmatpush1.msra.mxu0 0.0
    %5786 = vmatprep.subr.mxu0 0.0
    %5787 = vmatpush1.msra.mxu0 0.0
    %5788 = vmatprep.subr.mxu0 0.0
    %5789 = vmatpush1.msra.mxu0 0.0
    %5790 = vmatprep.subr.mxu0 0.0
    %5791 = vmatpush1.msra.mxu0 0.0
    %5792 = vmatprep.mubr.f32.mxu0 0.0
    %5793 = vmatmul.mubr.f32.gmra.mrb[0].mxu0 %v5726
    %v5794 = vpop.f32.mrb[0].mxu0
    %v5795 = vadd.f32 1e-08, %v5794
    %v5796 = vpop.f32.mrb[0].mxu0
    %5797 = vdwg.mxu0
    %v5798 = vlog2.pop %v5795
    %v5799 = vmul.f32 %v5798, 0.6931472
    %v5800 = vsub.f32 %v5725, %v5799
    %v5801 = vmul.f32 %v5569, %v5800
    %v5802 = vsel %vm99, %v5801, 0.0
    %5803 = vadd.xlane.f32.xlu0 %v5802
    %v5804 = vpop.xlane.xlu0 %5803
    %v5805 = vadd.f32 %v474, %v490
    %v5806 = vsub.f32 %v5805, %v5804
    %v5807 = vmax.f32 %v5806, 0.0
    %v5808 = vsub.f32 %v474, %v5807
    %v5809 = vmax.f32 %v5808, 0.0
    %v5810 = vsub.f32 %v490, %v5807
    %v5811 = vmax.f32 %v5810, 0.0
    %vm5812 = vcmask 7168
    %v5813 = vsel %vm5812, %v506, 0.0
    %5814 = vadd.xlane.f32.xlu0 %v5813
    %v5815 = vpop.xlane.xlu0 %5814
    %v5816 = vrot.slane %v5815, 4
    %v5817 = vadd.f32 %v5815, %v5816
    %v5818 = vrot.slane %v5817, 2
    %v5819 = vadd.f32 %v5817, %v5818
    %v5820 = vrot.slane %v5819, 1
    %v5821 = vadd.f32 %v5819, %v5820
    %s5822 = vtos %v5821
    %s5823 = smul.f32 %s5822, 0.125
    %v5824 = vsel %vm5812, %v5804, 0.0
    %5825 = vadd.xlane.f32.xlu0 %v5824
    %v5826 = vpop.xlane.xlu0 %5825
    %v5827 = vrot.slane %v5826, 4
    %v5828 = vadd.f32 %v5826, %v5827
    %v5829 = vrot.slane %v5828, 2
    %v5830 = vadd.f32 %v5828, %v5829
    %v5831 = vrot.slane %v5830, 1
    %v5832 = vadd.f32 %v5830, %v5831
    %s5833 = vtos %v5832
    %s5834 = smul.f32 %s5833, 0.125
    %s5835 = ssub.f32 %s5823, %s5834
    %s5836 = smax.f32 %s5835, 0.0
    %s5837 = scalar_lea.smem [#allocation7], 0
    %5838 = sst [smem:[%s5837]] %s5834
    %v5839 = vsel %vm5812, %v5807, 0.0
    %5840 = vadd.xlane.f32.xlu0 %v5839
    %v5841 = vpop.xlane.xlu0 %5840
    %v5842 = vrot.slane %v5841, 4
    %v5843 = vadd.f32 %v5841, %v5842
    %v5844 = vrot.slane %v5843, 2
    %v5845 = vadd.f32 %v5843, %v5844
    %v5846 = vrot.slane %v5845, 1
    %v5847 = vadd.f32 %v5845, %v5846
    %s5848 = vtos %v5847
    %s5849 = smul.f32 %s5848, 0.125
    %s5850 = scalar_lea.smem [#allocation7], 1
    %5851 = sst [smem:[%s5850]] %s5849
    %v5852 = vsel %vm5812, %v5809, 0.0
    %5853 = vadd.xlane.f32.xlu0 %v5852
    %v5854 = vpop.xlane.xlu0 %5853
    %v5855 = vrot.slane %v5854, 4
    %v5856 = vadd.f32 %v5854, %v5855
    %v5857 = vrot.slane %v5856, 2
    %v5858 = vadd.f32 %v5856, %v5857
    %v5859 = vrot.slane %v5858, 1
    %v5860 = vadd.f32 %v5858, %v5859
    %s5861 = vtos %v5860
    %s5862 = smul.f32 %s5861, 0.125
    %s5863 = scalar_lea.smem [#allocation7], 2
    %5864 = sst [smem:[%s5863]] %s5862
    %v5865 = vsel %vm5812, %v5811, 0.0
    %5866 = vadd.xlane.f32.xlu0 %v5865
    %v5867 = vpop.xlane.xlu0 %5866
    %v5868 = vrot.slane %v5867, 4
    %v5869 = vadd.f32 %v5867, %v5868
    %v5870 = vrot.slane %v5869, 2
    %v5871 = vadd.f32 %v5869, %v5870
    %v5872 = vrot.slane %v5871, 1
    %v5873 = vadd.f32 %v5871, %v5872
    %s5874 = vtos %v5873
    %s5875 = smul.f32 %s5874, 0.125
    %s5876 = scalar_lea.smem [#allocation7], 3
    %5877 = sst [smem:[%s5876]] %s5875
    %s5878 = scalar_lea.smem [#allocation7], 4
    %5879 = sst [smem:[%s5878]] %s5836
    %s5880 = scalar_lea.smem [#allocation7], 5
    %5881 = sst [smem:[%s5880]] 0.0
    %s5882 = scalar_lea.smem [#allocation7], 6
    %5883 = sst [smem:[%s5882]] 0.0
    %s5884 = scalar_lea.smem [#allocation7], 7
    %5885 = sst [smem:[%s5884]] 0.0
    // Predicated region
    $region66: #{ce_alignment_information_forward.1} parent=1 // pred_check
      _
    $region67: #{ce_alignment_information_forward.1} parent=1 // pred_check_branch
      %5887 = sbr.rel (0) target = $region69
    $region68: #{ce_alignment_information_forward.1} parent=1 // pred_region
      _
    $region69: #{ce_alignment_information_forward.1} parent=1 // pred_fallthru
      _
    // Predicated region
    $region70: #{ce_alignment_information_forward.1} parent=1 // pred_check
      _
    $region71: #{ce_alignment_information_forward.1} parent=1 // pred_check_branch
      %5889 = sbr.rel (0) target = $region73
    $region72: #{ce_alignment_information_forward.1} parent=1 // pred_region
      %s5891 = ssub.s32 16, 16
      %5892 = vsyncadd [#allocation4], %s5891
      %s5894 = sshll.u32 %s15, 4
      %s5895 = int_to_ptr.vmem [resolvable:$true] %s5894
      %5897 = dma.smem_to_vmem [#allocation7], 16, %s5895, [#allocation4]
    $region73: #{ce_alignment_information_forward.1} parent=1 // pred_fallthru
      _
    // Predicated region
    $region74: #{ce_alignment_information_forward.1} parent=1 // pred_check
      _
    $region75: #{ce_alignment_information_forward.1} parent=1 // pred_check_branch
      %5899 = sbr.rel (0) target = $region77
    $region76: #{ce_alignment_information_forward.1} parent=1 // pred_region
      _
    $region77: #{ce_alignment_information_forward.1} parent=1 // pred_fallthru
      _
    // Predicated region
    $region78: #{ce_alignment_information_forward.1} parent=1 // pred_check
      _
    $region79: #{ce_alignment_information_forward.1} parent=1 // pred_check_branch
      %5901 = sbr.rel (0) target = $region81
    $region80: #{ce_alignment_information_forward.1} parent=1 // pred_region
      %5902 = dma.done [#allocation4], 16
    $region81: #{ce_alignment_information_forward.1} parent=1 // pred_fallthru
      _
    %5903 = sfence
    %5904 = vsyncpa [#allocation3], 1
    %5905 = vsyncpa [#allocation6], 1
    %5906 = vsyncpa [#allocation4], 1

</llo_original>
